<compile_context>
chip_gen: v7x
topology: tpu7x:2x2x1
jax: 0.10.0
libtpu: 0.0.40
codegen_flags: <defaults>
</compile_context>

<pallas_src>
import functools

import jax
import jax.numpy as jnp
from jax.experimental import pallas as pl
from jax.experimental.pallas import tpu as pltpu

D_MODEL = 128
NHEAD = 4
DIM_FF = 128
FC1_OUT = 1024
NUM_LAYERS = 6
LN_EPS = 1e-5

# rows of the packed per-layer vector slab (each row is width D_MODEL == DIM_FF)
_ROW_BQ, _ROW_BK, _ROW_BV, _ROW_BO = 0, 1, 2, 3
_ROW_B1, _ROW_B2 = 4, 5
_ROW_LN1W, _ROW_LN1B, _ROW_LN2W, _ROW_LN2B = 6, 7, 8, 9
_SLAB_ROWS = 16  # padded to a multiple of 8 sublanes


def _layer_norm(x, w, b):
    mu = jnp.mean(x, axis=-1, keepdims=True)
    var = jnp.mean((x - mu) ** 2, axis=-1, keepdims=True)
    return (x - mu) * jax.lax.rsqrt(var + LN_EPS) * w + b


def fused_embedder_kernel(num_layers, nhead,
                          x_ref, maskadd_ref,
                          wqkv_ref, wo_ref, w1_ref, w2_ref, vecs_ref,
                          fc1w_ref, fc1b_ref,
                          out_ref):
    """All encoder layers + fc1/ReLU for a single batch element (one grid step)."""
    x = x_ref[0]                     # (S, D)  f32
    maskadd = maskadd_ref[0]         # (1, S)  f32 additive key-padding mask (0 / -1e9)
    S, D = x.shape
    hd = D // nhead
    scale = 1.0 / float(hd) ** 0.5
    bf16 = jnp.bfloat16

    for l in range(num_layers):      # static loop: weights resident in VMEM
        vecs = vecs_ref[l]           # (16, D) f32 packed bias/LN slab
        bq = vecs[_ROW_BQ:_ROW_BQ + 1]
        bk = vecs[_ROW_BK:_ROW_BK + 1]
        bv = vecs[_ROW_BV:_ROW_BV + 1]
        bo = vecs[_ROW_BO:_ROW_BO + 1]
        b1 = vecs[_ROW_B1:_ROW_B1 + 1]
        b2 = vecs[_ROW_B2:_ROW_B2 + 1]
        ln1w = vecs[_ROW_LN1W:_ROW_LN1W + 1]
        ln1b = vecs[_ROW_LN1B:_ROW_LN1B + 1]
        ln2w = vecs[_ROW_LN2W:_ROW_LN2W + 1]
        ln2b = vecs[_ROW_LN2B:_ROW_LN2B + 1]

        # ---- fused QKV projection: one (S,D)@(D,3D) MXU push -------------------
        qkv = jnp.dot(x.astype(bf16), wqkv_ref[l],
                      preferred_element_type=jnp.float32)          # (S, 3D) f32
        q = qkv[:, 0:D] + bq
        k = qkv[:, D:2 * D] + bk
        v = qkv[:, 2 * D:3 * D] + bv

        # ---- multi-head attention, Wo folded into the head loop ----------------
        wo_l = wo_ref[l]                                            # (D, D) bf16
        attn = jnp.zeros((S, D), jnp.float32)
        for h in range(nhead):                                      # static loop
            lo = h * hd
            qh = q[:, lo:lo + hd].astype(bf16)
            kh = k[:, lo:lo + hd].astype(bf16)
            vh = v[:, lo:lo + hd].astype(bf16)
            # scores = qh @ kh.T  (f32 accumulation), mask added in f32
            s = jax.lax.dot_general(qh, kh, (((1,), (1,)), ((), ())),
                                    preferred_element_type=jnp.float32) * scale
            s = s + maskadd
            s = s - jnp.max(s, axis=-1, keepdims=True)
            p = jnp.exp(s)
            p = p * pl.reciprocal(jnp.sum(p, axis=-1, keepdims=True), approx=True)
            ctx = jnp.dot(p.astype(bf16), vh,
                          preferred_element_type=jnp.float32)       # (S, hd)
            attn = attn + jnp.dot(ctx.astype(bf16), wo_l[lo:lo + hd, :],
                                  preferred_element_type=jnp.float32)  # (S, D)
        attn = attn + bo

        # ---- residual + LayerNorm1 (dropout = identity) ------------------------
        x1 = _layer_norm(x + attn, ln1w, ln1b)

        # ---- feed-forward: linear2(relu(linear1(x1))) ---------------------------
        h1 = jnp.maximum(
            jnp.dot(x1.astype(bf16), w1_ref[l],
                    preferred_element_type=jnp.float32) + b1, 0.0)
        h2 = jnp.dot(h1.astype(bf16), w2_ref[l],
                     preferred_element_type=jnp.float32) + b2
        x = _layer_norm(x1 + h2, ln2w, ln2b)

    # ---- final fc1 + ReLU -------------------------------------------------------
    y = jnp.dot(x.astype(bf16), fc1w_ref[...],
                preferred_element_type=jnp.float32) + fc1b_ref[...]
    out_ref[0] = jnp.maximum(y, 0.0)


def _full_spec(arr):
    n = arr.ndim
    return pl.BlockSpec(arr.shape, lambda b, _n=n: (0,) * _n)


def eeg_embedder_forward(input_embeddings_batch, input_masks_invert, params):
    """input_embeddings_batch: (B, S, D); input_masks_invert: (B, S), 1 = masked."""
    B, S, D = input_embeddings_batch.shape
    # Additive key-padding mask, kept in f32 and added to f32-accumulated scores.
    mask_add = jnp.where(input_masks_invert.astype(bool), -1e9, 0.0)
    mask_add = mask_add.astype(jnp.float32)[:, None, :]             # (B, 1, S)
    x = input_embeddings_batch.astype(jnp.float32)

    kernel = functools.partial(fused_embedder_kernel, NUM_LAYERS, NHEAD)
    weights = (params['wqkv'], params['wo'], params['w1'], params['w2'],
               params['vecs'], params['fc1_w'], params['fc1_b'])

    return pl.pallas_call(
        kernel,
        out_shape=jax.ShapeDtypeStruct((B, S, FC1_OUT), jnp.float32),
        grid=(B,),
        in_specs=[pl.BlockSpec((1, S, D), lambda b: (b, 0, 0)),
                  pl.BlockSpec((1, 1, S), lambda b: (b, 0, 0))]
                 + [_full_spec(w) for w in weights],
        out_specs=pl.BlockSpec((1, S, FC1_OUT), lambda b: (b, 0, 0)),
        compiler_params=pltpu.CompilerParams(
            dimension_semantics=("parallel",)),                      # 2-TC shard on v7x
    )(x, mask_add, *weights)


def init_params(key):
    def dense(k, shape, scale=0.02):
        return scale * jax.random.normal(k, shape, jnp.float32)

    wqkv_l, wo_l, w1_l, w2_l, vecs_l = [], [], [], [], []
    for i in range(NUM_LAYERS):
        k = jax.random.fold_in(key, i)
        ks = jax.random.split(k, 6)
        wq = dense(ks[0], (D_MODEL, D_MODEL))
        wk = dense(ks[1], (D_MODEL, D_MODEL))
        wv = dense(ks[2], (D_MODEL, D_MODEL))
        wqkv_l.append(jnp.concatenate([wq, wk, wv], axis=1))         # (D, 3D)
        wo_l.append(dense(ks[3], (D_MODEL, D_MODEL)))                # (D, D)
        w1_l.append(dense(ks[4], (D_MODEL, DIM_FF)))
        w2_l.append(dense(ks[5], (DIM_FF, D_MODEL)))
        # packed bias/LN slab: biases = 0, LN weights = 1
        slab = jnp.zeros((_SLAB_ROWS, D_MODEL), jnp.float32)
        slab = slab.at[_ROW_LN1W].set(1.0).at[_ROW_LN2W].set(1.0)
        vecs_l.append(slab)

    kfc = jax.random.fold_in(key, 1000)
    return dict(
        wqkv=jnp.stack(wqkv_l).astype(jnp.bfloat16),   # (L, D, 3D)
        wo=jnp.stack(wo_l).astype(jnp.bfloat16),       # (L, D, D)
        w1=jnp.stack(w1_l).astype(jnp.bfloat16),       # (L, D, FF)
        w2=jnp.stack(w2_l).astype(jnp.bfloat16),       # (L, FF, D)
        vecs=jnp.stack(vecs_l),                        # (L, 16, D) f32
        fc1_w=dense(kfc, (D_MODEL, FC1_OUT)).astype(jnp.bfloat16),
        fc1_b=jnp.zeros((1, FC1_OUT), jnp.float32),
    )


if __name__ == "__main__":
    B, S = 2, 8
    key = jax.random.PRNGKey(0)
    kx, kp = jax.random.split(key)
    x = jax.random.normal(kx, (B, S, D_MODEL), jnp.float32)
    # 1 = masked (invert mask); mask the tail of the second sequence.
    input_masks_invert = jnp.zeros((B, S), jnp.int32).at[1, 6:].set(1)
    params = init_params(kp)

    out = eeg_embedder_forward(x, input_masks_invert, params)
    out = jax.block_until_ready(out)
    assert out.shape == (B, S, FC1_OUT), out.shape
    assert bool(jnp.all(jnp.isfinite(out))) and bool(jnp.all(out >= 0.0))
    print("KERNEL_OK")
</pallas_src>

<mosaic_0001>
module attributes {stable_mosaic.version = 11 : i64} {
  func.func @fused_embedder_kernel(%arg0: i32, %arg1: memref<1x8x128xf32, #tpu.memory_space<vmem>>, %arg2: memref<1x1x8xf32, #tpu.memory_space<vmem>>, %arg3: memref<6x128x384xbf16, #tpu.memory_space<vmem>>, %arg4: memref<6x128x128xbf16, #tpu.memory_space<vmem>>, %arg5: memref<6x128x128xbf16, #tpu.memory_space<vmem>>, %arg6: memref<6x128x128xbf16, #tpu.memory_space<vmem>>, %arg7: memref<6x16x128xf32, #tpu.memory_space<vmem>>, %arg8: memref<128x1024xbf16, #tpu.memory_space<vmem>>, %arg9: memref<1x1024xf32, #tpu.memory_space<vmem>>, %arg10: memref<1x8x1024xf32, #tpu.memory_space<vmem>>) attributes {dimension_semantics = [#tpu.dimension_semantics<parallel>], iteration_bounds = array<i64: 2>, scalar_prefetch = 0 : i64, scratch_operands = 0 : i64, tpu.core_type = #tpu.core_type<tc>, window_params = [{transform_indices = @transform_0, window_bounds = array<i64: 1, 8, 128>}, {transform_indices = @transform_1, window_bounds = array<i64: 1, 1, 8>}, {pipeline_mode = #tpu.pipeline_mode<synchronous>, transform_indices = @transform_2, window_bounds = array<i64: 6, 128, 384>}, {pipeline_mode = #tpu.pipeline_mode<synchronous>, transform_indices = @transform_3, window_bounds = array<i64: 6, 128, 128>}, {pipeline_mode = #tpu.pipeline_mode<synchronous>, transform_indices = @transform_4, window_bounds = array<i64: 6, 128, 128>}, {pipeline_mode = #tpu.pipeline_mode<synchronous>, transform_indices = @transform_5, window_bounds = array<i64: 6, 128, 128>}, {pipeline_mode = #tpu.pipeline_mode<synchronous>, transform_indices = @transform_6, window_bounds = array<i64: 6, 16, 128>}, {pipeline_mode = #tpu.pipeline_mode<synchronous>, transform_indices = @transform_7, window_bounds = array<i64: 128, 1024>}, {pipeline_mode = #tpu.pipeline_mode<synchronous>, transform_indices = @transform_8, window_bounds = array<i64: 1, 1024>}, {transform_indices = @transform_9, window_bounds = array<i64: 1, 8, 1024>}]} {
    %c0 = arith.constant 0 : index
    %c0_0 = arith.constant 0 : index
    %c0_1 = arith.constant 0 : index
    %0 = vector.load %arg1[%c0, %c0_0, %c0_1] : memref<1x8x128xf32, #tpu.memory_space<vmem>>, vector<1x8x128xf32>
    %1 = vector.shape_cast %0 : vector<1x8x128xf32> to vector<8x128xf32>
    %c0_2 = arith.constant 0 : index
    %c0_3 = arith.constant 0 : index
    %c0_4 = arith.constant 0 : index
    %2 = vector.load %arg2[%c0_2, %c0_3, %c0_4] : memref<1x1x8xf32, #tpu.memory_space<vmem>>, vector<1x1x8xf32>
    %3 = vector.shape_cast %2 : vector<1x1x8xf32> to vector<1x8xf32>
    %c0_5 = arith.constant 0 : index
    %c0_6 = arith.constant 0 : index
    %c0_7 = arith.constant 0 : index
    %4 = vector.load %arg7[%c0_5, %c0_6, %c0_7] : memref<6x16x128xf32, #tpu.memory_space<vmem>>, vector<1x16x128xf32>
    %5 = vector.shape_cast %4 : vector<1x16x128xf32> to vector<16x128xf32>
    %6 = vector.extract_strided_slice %5 {offsets = [0, 0], sizes = [1, 128], strides = [1, 1]} : vector<16x128xf32> to vector<1x128xf32>
    %7 = vector.extract_strided_slice %5 {offsets = [1, 0], sizes = [1, 128], strides = [1, 1]} : vector<16x128xf32> to vector<1x128xf32>
    %8 = vector.extract_strided_slice %5 {offsets = [2, 0], sizes = [1, 128], strides = [1, 1]} : vector<16x128xf32> to vector<1x128xf32>
    %9 = vector.extract_strided_slice %5 {offsets = [3, 0], sizes = [1, 128], strides = [1, 1]} : vector<16x128xf32> to vector<1x128xf32>
    %10 = vector.extract_strided_slice %5 {offsets = [4, 0], sizes = [1, 128], strides = [1, 1]} : vector<16x128xf32> to vector<1x128xf32>
    %11 = vector.extract_strided_slice %5 {offsets = [5, 0], sizes = [1, 128], strides = [1, 1]} : vector<16x128xf32> to vector<1x128xf32>
    %12 = vector.extract_strided_slice %5 {offsets = [6, 0], sizes = [1, 128], strides = [1, 1]} : vector<16x128xf32> to vector<1x128xf32>
    %13 = vector.extract_strided_slice %5 {offsets = [7, 0], sizes = [1, 128], strides = [1, 1]} : vector<16x128xf32> to vector<1x128xf32>
    %14 = vector.extract_strided_slice %5 {offsets = [8, 0], sizes = [1, 128], strides = [1, 1]} : vector<16x128xf32> to vector<1x128xf32>
    %15 = vector.extract_strided_slice %5 {offsets = [9, 0], sizes = [1, 128], strides = [1, 1]} : vector<16x128xf32> to vector<1x128xf32>
    %16 = arith.truncf %1 : vector<8x128xf32> to vector<8x128xbf16>
    %c0_8 = arith.constant 0 : index
    %c0_9 = arith.constant 0 : index
    %c0_10 = arith.constant 0 : index
    %17 = vector.load %arg3[%c0_8, %c0_9, %c0_10] : memref<6x128x384xbf16, #tpu.memory_space<vmem>>, vector<1x128x384xbf16>
    %18 = vector.shape_cast %17 : vector<1x128x384xbf16> to vector<128x384xbf16>
    %cst = arith.constant dense<0.000000e+00> : vector<8x384xf32>
    %19 = tpu.matmul %16, %18, %cst {dimension_numbers = #tpu.dot_dimension_numbers<[1], [0], [0], [1], [0, 0, 1, 1], [], []>} : vector<8x128xbf16>, vector<128x384xbf16>, vector<8x384xf32> -> vector<8x384xf32>
    %20 = vector.extract_strided_slice %19 {offsets = [0, 0], sizes = [8, 128], strides = [1, 1]} : vector<8x384xf32> to vector<8x128xf32>
    %21 = vector.broadcast %6 : vector<1x128xf32> to vector<8x128xf32>
    %22 = arith.addf %20, %21 : vector<8x128xf32>
    %23 = vector.extract_strided_slice %19 {offsets = [0, 128], sizes = [8, 128], strides = [1, 1]} : vector<8x384xf32> to vector<8x128xf32>
    %24 = vector.broadcast %7 : vector<1x128xf32> to vector<8x128xf32>
    %25 = arith.addf %23, %24 : vector<8x128xf32>
    %26 = vector.extract_strided_slice %19 {offsets = [0, 256], sizes = [8, 128], strides = [1, 1]} : vector<8x384xf32> to vector<8x128xf32>
    %27 = vector.broadcast %8 : vector<1x128xf32> to vector<8x128xf32>
    %28 = arith.addf %26, %27 : vector<8x128xf32>
    %c0_11 = arith.constant 0 : index
    %c0_12 = arith.constant 0 : index
    %c0_13 = arith.constant 0 : index
    %29 = vector.load %arg4[%c0_11, %c0_12, %c0_13] : memref<6x128x128xbf16, #tpu.memory_space<vmem>>, vector<1x128x128xbf16>
    %30 = vector.shape_cast %29 : vector<1x128x128xbf16> to vector<128x128xbf16>
    %cst_14 = arith.constant 0.000000e+00 : f32
    %31 = vector.broadcast %cst_14 : f32 to vector<8x128xf32>
    %32 = vector.extract_strided_slice %22 {offsets = [0, 0], sizes = [8, 32], strides = [1, 1]} : vector<8x128xf32> to vector<8x32xf32>
    %33 = arith.truncf %32 : vector<8x32xf32> to vector<8x32xbf16>
    %34 = vector.extract_strided_slice %25 {offsets = [0, 0], sizes = [8, 32], strides = [1, 1]} : vector<8x128xf32> to vector<8x32xf32>
    %35 = arith.truncf %34 : vector<8x32xf32> to vector<8x32xbf16>
    %36 = vector.extract_strided_slice %28 {offsets = [0, 0], sizes = [8, 32], strides = [1, 1]} : vector<8x128xf32> to vector<8x32xf32>
    %37 = arith.truncf %36 : vector<8x32xf32> to vector<8x32xbf16>
    %cst_15 = arith.constant dense<0.000000e+00> : vector<8x8xf32>
    %38 = tpu.matmul %33, %35, %cst_15 {dimension_numbers = #tpu.dot_dimension_numbers<[1], [1], [0], [0], [0, 0, 1, 0], [], []>} : vector<8x32xbf16>, vector<8x32xbf16>, vector<8x8xf32> -> vector<8x8xf32>
    %cst_16 = arith.constant 0.176776692 : f32
    %39 = vector.broadcast %cst_16 : f32 to vector<8x8xf32>
    %40 = arith.mulf %38, %39 : vector<8x8xf32>
    %41 = vector.broadcast %3 : vector<1x8xf32> to vector<8x8xf32>
    %42 = arith.addf %40, %41 : vector<8x8xf32>
    %cst_17 = arith.constant dense<0xFF800000> : vector<8xf32>
    %43 = vector.multi_reduction <maximumf>, %42, %cst_17 [1] : vector<8x8xf32> to vector<8xf32>
    %44 = vector.shape_cast %43 : vector<8xf32> to vector<8x1xf32>
    %45 = vector.broadcast %44 : vector<8x1xf32> to vector<8x8xf32>
    %46 = arith.subf %42, %45 : vector<8x8xf32>
    %47 = math.exp %46 : vector<8x8xf32>
    %cst_18 = arith.constant dense<0.000000e+00> : vector<8xf32>
    %48 = vector.multi_reduction <add>, %47, %cst_18 [1] : vector<8x8xf32> to vector<8xf32>
    %49 = vector.shape_cast %48 : vector<8xf32> to vector<8x1xf32>
    %50 = tpu.reciprocal %49 {approx = true} : vector<8x1xf32> -> vector<8x1xf32>
    %51 = vector.broadcast %50 : vector<8x1xf32> to vector<8x8xf32>
    %52 = arith.mulf %47, %51 : vector<8x8xf32>
    %53 = arith.truncf %52 : vector<8x8xf32> to vector<8x8xbf16>
    %cst_19 = arith.constant dense<0.000000e+00> : vector<8x32xf32>
    %54 = tpu.matmul %53, %37, %cst_19 {dimension_numbers = #tpu.dot_dimension_numbers<[1], [0], [0], [1], [0, 0, 1, 1], [], []>} : vector<8x8xbf16>, vector<8x32xbf16>, vector<8x32xf32> -> vector<8x32xf32>
    %55 = arith.truncf %54 : vector<8x32xf32> to vector<8x32xbf16>
    %56 = vector.extract_strided_slice %30 {offsets = [0, 0], sizes = [32, 128], strides = [1, 1]} : vector<128x128xbf16> to vector<32x128xbf16>
    %cst_20 = arith.constant dense<0.000000e+00> : vector<8x128xf32>
    %57 = tpu.matmul %55, %56, %cst_20 {dimension_numbers = #tpu.dot_dimension_numbers<[1], [0], [0], [1], [0, 0, 1, 1], [], []>} : vector<8x32xbf16>, vector<32x128xbf16>, vector<8x128xf32> -> vector<8x128xf32>
    %58 = arith.addf %31, %57 : vector<8x128xf32>
    %59 = vector.extract_strided_slice %22 {offsets = [0, 32], sizes = [8, 32], strides = [1, 1]} : vector<8x128xf32> to vector<8x32xf32>
    %60 = arith.truncf %59 : vector<8x32xf32> to vector<8x32xbf16>
    %61 = vector.extract_strided_slice %25 {offsets = [0, 32], sizes = [8, 32], strides = [1, 1]} : vector<8x128xf32> to vector<8x32xf32>
    %62 = arith.truncf %61 : vector<8x32xf32> to vector<8x32xbf16>
    %63 = vector.extract_strided_slice %28 {offsets = [0, 32], sizes = [8, 32], strides = [1, 1]} : vector<8x128xf32> to vector<8x32xf32>
    %64 = arith.truncf %63 : vector<8x32xf32> to vector<8x32xbf16>
    %cst_21 = arith.constant dense<0.000000e+00> : vector<8x8xf32>
    %65 = tpu.matmul %60, %62, %cst_21 {dimension_numbers = #tpu.dot_dimension_numbers<[1], [1], [0], [0], [0, 0, 1, 0], [], []>} : vector<8x32xbf16>, vector<8x32xbf16>, vector<8x8xf32> -> vector<8x8xf32>
    %cst_22 = arith.constant 0.176776692 : f32
    %66 = vector.broadcast %cst_22 : f32 to vector<8x8xf32>
    %67 = arith.mulf %65, %66 : vector<8x8xf32>
    %68 = vector.broadcast %3 : vector<1x8xf32> to vector<8x8xf32>
    %69 = arith.addf %67, %68 : vector<8x8xf32>
    %cst_23 = arith.constant dense<0xFF800000> : vector<8xf32>
    %70 = vector.multi_reduction <maximumf>, %69, %cst_23 [1] : vector<8x8xf32> to vector<8xf32>
    %71 = vector.shape_cast %70 : vector<8xf32> to vector<8x1xf32>
    %72 = vector.broadcast %71 : vector<8x1xf32> to vector<8x8xf32>
    %73 = arith.subf %69, %72 : vector<8x8xf32>
    %74 = math.exp %73 : vector<8x8xf32>
    %cst_24 = arith.constant dense<0.000000e+00> : vector<8xf32>
    %75 = vector.multi_reduction <add>, %74, %cst_24 [1] : vector<8x8xf32> to vector<8xf32>
    %76 = vector.shape_cast %75 : vector<8xf32> to vector<8x1xf32>
    %77 = tpu.reciprocal %76 {approx = true} : vector<8x1xf32> -> vector<8x1xf32>
    %78 = vector.broadcast %77 : vector<8x1xf32> to vector<8x8xf32>
    %79 = arith.mulf %74, %78 : vector<8x8xf32>
    %80 = arith.truncf %79 : vector<8x8xf32> to vector<8x8xbf16>
    %cst_25 = arith.constant dense<0.000000e+00> : vector<8x32xf32>
    %81 = tpu.matmul %80, %64, %cst_25 {dimension_numbers = #tpu.dot_dimension_numbers<[1], [0], [0], [1], [0, 0, 1, 1], [], []>} : vector<8x8xbf16>, vector<8x32xbf16>, vector<8x32xf32> -> vector<8x32xf32>
    %82 = arith.truncf %81 : vector<8x32xf32> to vector<8x32xbf16>
    %83 = vector.extract_strided_slice %30 {offsets = [32, 0], sizes = [32, 128], strides = [1, 1]} : vector<128x128xbf16> to vector<32x128xbf16>
    %cst_26 = arith.constant dense<0.000000e+00> : vector<8x128xf32>
    %84 = tpu.matmul %82, %83, %cst_26 {dimension_numbers = #tpu.dot_dimension_numbers<[1], [0], [0], [1], [0, 0, 1, 1], [], []>} : vector<8x32xbf16>, vector<32x128xbf16>, vector<8x128xf32> -> vector<8x128xf32>
    %85 = arith.addf %58, %84 : vector<8x128xf32>
    %86 = vector.extract_strided_slice %22 {offsets = [0, 64], sizes = [8, 32], strides = [1, 1]} : vector<8x128xf32> to vector<8x32xf32>
    %87 = arith.truncf %86 : vector<8x32xf32> to vector<8x32xbf16>
    %88 = vector.extract_strided_slice %25 {offsets = [0, 64], sizes = [8, 32], strides = [1, 1]} : vector<8x128xf32> to vector<8x32xf32>
    %89 = arith.truncf %88 : vector<8x32xf32> to vector<8x32xbf16>
    %90 = vector.extract_strided_slice %28 {offsets = [0, 64], sizes = [8, 32], strides = [1, 1]} : vector<8x128xf32> to vector<8x32xf32>
    %91 = arith.truncf %90 : vector<8x32xf32> to vector<8x32xbf16>
    %cst_27 = arith.constant dense<0.000000e+00> : vector<8x8xf32>
    %92 = tpu.matmul %87, %89, %cst_27 {dimension_numbers = #tpu.dot_dimension_numbers<[1], [1], [0], [0], [0, 0, 1, 0], [], []>} : vector<8x32xbf16>, vector<8x32xbf16>, vector<8x8xf32> -> vector<8x8xf32>
    %cst_28 = arith.constant 0.176776692 : f32
    %93 = vector.broadcast %cst_28 : f32 to vector<8x8xf32>
    %94 = arith.mulf %92, %93 : vector<8x8xf32>
    %95 = vector.broadcast %3 : vector<1x8xf32> to vector<8x8xf32>
    %96 = arith.addf %94, %95 : vector<8x8xf32>
    %cst_29 = arith.constant dense<0xFF800000> : vector<8xf32>
    %97 = vector.multi_reduction <maximumf>, %96, %cst_29 [1] : vector<8x8xf32> to vector<8xf32>
    %98 = vector.shape_cast %97 : vector<8xf32> to vector<8x1xf32>
    %99 = vector.broadcast %98 : vector<8x1xf32> to vector<8x8xf32>
    %100 = arith.subf %96, %99 : vector<8x8xf32>
    %101 = math.exp %100 : vector<8x8xf32>
    %cst_30 = arith.constant dense<0.000000e+00> : vector<8xf32>
    %102 = vector.multi_reduction <add>, %101, %cst_30 [1] : vector<8x8xf32> to vector<8xf32>
    %103 = vector.shape_cast %102 : vector<8xf32> to vector<8x1xf32>
    %104 = tpu.reciprocal %103 {approx = true} : vector<8x1xf32> -> vector<8x1xf32>
    %105 = vector.broadcast %104 : vector<8x1xf32> to vector<8x8xf32>
    %106 = arith.mulf %101, %105 : vector<8x8xf32>
    %107 = arith.truncf %106 : vector<8x8xf32> to vector<8x8xbf16>
    %cst_31 = arith.constant dense<0.000000e+00> : vector<8x32xf32>
    %108 = tpu.matmul %107, %91, %cst_31 {dimension_numbers = #tpu.dot_dimension_numbers<[1], [0], [0], [1], [0, 0, 1, 1], [], []>} : vector<8x8xbf16>, vector<8x32xbf16>, vector<8x32xf32> -> vector<8x32xf32>
    %109 = arith.truncf %108 : vector<8x32xf32> to vector<8x32xbf16>
    %110 = vector.extract_strided_slice %30 {offsets = [64, 0], sizes = [32, 128], strides = [1, 1]} : vector<128x128xbf16> to vector<32x128xbf16>
    %cst_32 = arith.constant dense<0.000000e+00> : vector<8x128xf32>
    %111 = tpu.matmul %109, %110, %cst_32 {dimension_numbers = #tpu.dot_dimension_numbers<[1], [0], [0], [1], [0, 0, 1, 1], [], []>} : vector<8x32xbf16>, vector<32x128xbf16>, vector<8x128xf32> -> vector<8x128xf32>
    %112 = arith.addf %85, %111 : vector<8x128xf32>
    %113 = vector.extract_strided_slice %22 {offsets = [0, 96], sizes = [8, 32], strides = [1, 1]} : vector<8x128xf32> to vector<8x32xf32>
    %114 = arith.truncf %113 : vector<8x32xf32> to vector<8x32xbf16>
    %115 = vector.extract_strided_slice %25 {offsets = [0, 96], sizes = [8, 32], strides = [1, 1]} : vector<8x128xf32> to vector<8x32xf32>
    %116 = arith.truncf %115 : vector<8x32xf32> to vector<8x32xbf16>
    %117 = vector.extract_strided_slice %28 {offsets = [0, 96], sizes = [8, 32], strides = [1, 1]} : vector<8x128xf32> to vector<8x32xf32>
    %118 = arith.truncf %117 : vector<8x32xf32> to vector<8x32xbf16>
    %cst_33 = arith.constant dense<0.000000e+00> : vector<8x8xf32>
    %119 = tpu.matmul %114, %116, %cst_33 {dimension_numbers = #tpu.dot_dimension_numbers<[1], [1], [0], [0], [0, 0, 1, 0], [], []>} : vector<8x32xbf16>, vector<8x32xbf16>, vector<8x8xf32> -> vector<8x8xf32>
    %cst_34 = arith.constant 0.176776692 : f32
    %120 = vector.broadcast %cst_34 : f32 to vector<8x8xf32>
    %121 = arith.mulf %119, %120 : vector<8x8xf32>
    %122 = vector.broadcast %3 : vector<1x8xf32> to vector<8x8xf32>
    %123 = arith.addf %121, %122 : vector<8x8xf32>
    %cst_35 = arith.constant dense<0xFF800000> : vector<8xf32>
    %124 = vector.multi_reduction <maximumf>, %123, %cst_35 [1] : vector<8x8xf32> to vector<8xf32>
    %125 = vector.shape_cast %124 : vector<8xf32> to vector<8x1xf32>
    %126 = vector.broadcast %125 : vector<8x1xf32> to vector<8x8xf32>
    %127 = arith.subf %123, %126 : vector<8x8xf32>
    %128 = math.exp %127 : vector<8x8xf32>
    %cst_36 = arith.constant dense<0.000000e+00> : vector<8xf32>
    %129 = vector.multi_reduction <add>, %128, %cst_36 [1] : vector<8x8xf32> to vector<8xf32>
    %130 = vector.shape_cast %129 : vector<8xf32> to vector<8x1xf32>
    %131 = tpu.reciprocal %130 {approx = true} : vector<8x1xf32> -> vector<8x1xf32>
    %132 = vector.broadcast %131 : vector<8x1xf32> to vector<8x8xf32>
    %133 = arith.mulf %128, %132 : vector<8x8xf32>
    %134 = arith.truncf %133 : vector<8x8xf32> to vector<8x8xbf16>
    %cst_37 = arith.constant dense<0.000000e+00> : vector<8x32xf32>
    %135 = tpu.matmul %134, %118, %cst_37 {dimension_numbers = #tpu.dot_dimension_numbers<[1], [0], [0], [1], [0, 0, 1, 1], [], []>} : vector<8x8xbf16>, vector<8x32xbf16>, vector<8x32xf32> -> vector<8x32xf32>
    %136 = arith.truncf %135 : vector<8x32xf32> to vector<8x32xbf16>
    %137 = vector.extract_strided_slice %30 {offsets = [96, 0], sizes = [32, 128], strides = [1, 1]} : vector<128x128xbf16> to vector<32x128xbf16>
    %cst_38 = arith.constant dense<0.000000e+00> : vector<8x128xf32>
    %138 = tpu.matmul %136, %137, %cst_38 {dimension_numbers = #tpu.dot_dimension_numbers<[1], [0], [0], [1], [0, 0, 1, 1], [], []>} : vector<8x32xbf16>, vector<32x128xbf16>, vector<8x128xf32> -> vector<8x128xf32>
    %139 = arith.addf %112, %138 : vector<8x128xf32>
    %140 = vector.broadcast %9 : vector<1x128xf32> to vector<8x128xf32>
    %141 = arith.addf %139, %140 : vector<8x128xf32>
    %142 = arith.addf %1, %141 : vector<8x128xf32>
    %cst_39 = arith.constant dense<0.000000e+00> : vector<8xf32>
    %143 = vector.multi_reduction <add>, %142, %cst_39 [1] : vector<8x128xf32> to vector<8xf32>
    %144 = vector.shape_cast %143 : vector<8xf32> to vector<8x1xf32>
    %cst_40 = arith.constant 1.280000e+02 : f32
    %145 = vector.broadcast %cst_40 : f32 to vector<8x1xf32>
    %146 = arith.divf %144, %145 : vector<8x1xf32>
    %147 = vector.broadcast %146 : vector<8x1xf32> to vector<8x128xf32>
    %148 = arith.subf %142, %147 : vector<8x128xf32>
    %149 = arith.mulf %148, %148 : vector<8x128xf32>
    %cst_41 = arith.constant dense<0.000000e+00> : vector<8xf32>
    %150 = vector.multi_reduction <add>, %149, %cst_41 [1] : vector<8x128xf32> to vector<8xf32>
    %151 = vector.shape_cast %150 : vector<8xf32> to vector<8x1xf32>
    %cst_42 = arith.constant 1.280000e+02 : f32
    %152 = vector.broadcast %cst_42 : f32 to vector<8x1xf32>
    %153 = arith.divf %151, %152 : vector<8x1xf32>
    %154 = vector.broadcast %146 : vector<8x1xf32> to vector<8x128xf32>
    %155 = arith.subf %142, %154 : vector<8x128xf32>
    %cst_43 = arith.constant 9.99999974E-6 : f32
    %156 = vector.broadcast %cst_43 : f32 to vector<8x1xf32>
    %157 = arith.addf %153, %156 : vector<8x1xf32>
    %158 = math.rsqrt %157 : vector<8x1xf32>
    %159 = vector.broadcast %158 : vector<8x1xf32> to vector<8x128xf32>
    %160 = arith.mulf %155, %159 : vector<8x128xf32>
    %161 = vector.broadcast %12 : vector<1x128xf32> to vector<8x128xf32>
    %162 = arith.mulf %160, %161 : vector<8x128xf32>
    %163 = vector.broadcast %13 : vector<1x128xf32> to vector<8x128xf32>
    %164 = arith.addf %162, %163 : vector<8x128xf32>
    %165 = arith.truncf %164 : vector<8x128xf32> to vector<8x128xbf16>
    %c0_44 = arith.constant 0 : index
    %c0_45 = arith.constant 0 : index
    %c0_46 = arith.constant 0 : index
    %166 = vector.load %arg5[%c0_44, %c0_45, %c0_46] : memref<6x128x128xbf16, #tpu.memory_space<vmem>>, vector<1x128x128xbf16>
    %167 = vector.shape_cast %166 : vector<1x128x128xbf16> to vector<128x128xbf16>
    %cst_47 = arith.constant dense<0.000000e+00> : vector<8x128xf32>
    %168 = tpu.matmul %165, %167, %cst_47 {dimension_numbers = #tpu.dot_dimension_numbers<[1], [0], [0], [1], [0, 0, 1, 1], [], []>} : vector<8x128xbf16>, vector<128x128xbf16>, vector<8x128xf32> -> vector<8x128xf32>
    %169 = vector.broadcast %10 : vector<1x128xf32> to vector<8x128xf32>
    %170 = arith.addf %168, %169 : vector<8x128xf32>
    %cst_48 = arith.constant 0.000000e+00 : f32
    %171 = vector.broadcast %cst_48 : f32 to vector<8x128xf32>
    %172 = arith.maximumf %170, %171 : vector<8x128xf32>
    %173 = arith.truncf %172 : vector<8x128xf32> to vector<8x128xbf16>
    %c0_49 = arith.constant 0 : index
    %c0_50 = arith.constant 0 : index
    %c0_51 = arith.constant 0 : index
    %174 = vector.load %arg6[%c0_49, %c0_50, %c0_51] : memref<6x128x128xbf16, #tpu.memory_space<vmem>>, vector<1x128x128xbf16>
    %175 = vector.shape_cast %174 : vector<1x128x128xbf16> to vector<128x128xbf16>
    %cst_52 = arith.constant dense<0.000000e+00> : vector<8x128xf32>
    %176 = tpu.matmul %173, %175, %cst_52 {dimension_numbers = #tpu.dot_dimension_numbers<[1], [0], [0], [1], [0, 0, 1, 1], [], []>} : vector<8x128xbf16>, vector<128x128xbf16>, vector<8x128xf32> -> vector<8x128xf32>
    %177 = vector.broadcast %11 : vector<1x128xf32> to vector<8x128xf32>
    %178 = arith.addf %176, %177 : vector<8x128xf32>
    %179 = arith.addf %164, %178 : vector<8x128xf32>
    %cst_53 = arith.constant dense<0.000000e+00> : vector<8xf32>
    %180 = vector.multi_reduction <add>, %179, %cst_53 [1] : vector<8x128xf32> to vector<8xf32>
    %181 = vector.shape_cast %180 : vector<8xf32> to vector<8x1xf32>
    %cst_54 = arith.constant 1.280000e+02 : f32
    %182 = vector.broadcast %cst_54 : f32 to vector<8x1xf32>
    %183 = arith.divf %181, %182 : vector<8x1xf32>
    %184 = vector.broadcast %183 : vector<8x1xf32> to vector<8x128xf32>
    %185 = arith.subf %179, %184 : vector<8x128xf32>
    %186 = arith.mulf %185, %185 : vector<8x128xf32>
    %cst_55 = arith.constant dense<0.000000e+00> : vector<8xf32>
    %187 = vector.multi_reduction <add>, %186, %cst_55 [1] : vector<8x128xf32> to vector<8xf32>
    %188 = vector.shape_cast %187 : vector<8xf32> to vector<8x1xf32>
    %cst_56 = arith.constant 1.280000e+02 : f32
    %189 = vector.broadcast %cst_56 : f32 to vector<8x1xf32>
    %190 = arith.divf %188, %189 : vector<8x1xf32>
    %191 = vector.broadcast %183 : vector<8x1xf32> to vector<8x128xf32>
    %192 = arith.subf %179, %191 : vector<8x128xf32>
    %cst_57 = arith.constant 9.99999974E-6 : f32
    %193 = vector.broadcast %cst_57 : f32 to vector<8x1xf32>
    %194 = arith.addf %190, %193 : vector<8x1xf32>
    %195 = math.rsqrt %194 : vector<8x1xf32>
    %196 = vector.broadcast %195 : vector<8x1xf32> to vector<8x128xf32>
    %197 = arith.mulf %192, %196 : vector<8x128xf32>
    %198 = vector.broadcast %14 : vector<1x128xf32> to vector<8x128xf32>
    %199 = arith.mulf %197, %198 : vector<8x128xf32>
    %200 = vector.broadcast %15 : vector<1x128xf32> to vector<8x128xf32>
    %201 = arith.addf %199, %200 : vector<8x128xf32>
    %c1 = arith.constant 1 : index
    %c0_58 = arith.constant 0 : index
    %c0_59 = arith.constant 0 : index
    %202 = vector.load %arg7[%c1, %c0_58, %c0_59] : memref<6x16x128xf32, #tpu.memory_space<vmem>>, vector<1x16x128xf32>
    %203 = vector.shape_cast %202 : vector<1x16x128xf32> to vector<16x128xf32>
    %204 = vector.extract_strided_slice %203 {offsets = [0, 0], sizes = [1, 128], strides = [1, 1]} : vector<16x128xf32> to vector<1x128xf32>
    %205 = vector.extract_strided_slice %203 {offsets = [1, 0], sizes = [1, 128], strides = [1, 1]} : vector<16x128xf32> to vector<1x128xf32>
    %206 = vector.extract_strided_slice %203 {offsets = [2, 0], sizes = [1, 128], strides = [1, 1]} : vector<16x128xf32> to vector<1x128xf32>
    %207 = vector.extract_strided_slice %203 {offsets = [3, 0], sizes = [1, 128], strides = [1, 1]} : vector<16x128xf32> to vector<1x128xf32>
    %208 = vector.extract_strided_slice %203 {offsets = [4, 0], sizes = [1, 128], strides = [1, 1]} : vector<16x128xf32> to vector<1x128xf32>
    %209 = vector.extract_strided_slice %203 {offsets = [5, 0], sizes = [1, 128], strides = [1, 1]} : vector<16x128xf32> to vector<1x128xf32>
    %210 = vector.extract_strided_slice %203 {offsets = [6, 0], sizes = [1, 128], strides = [1, 1]} : vector<16x128xf32> to vector<1x128xf32>
    %211 = vector.extract_strided_slice %203 {offsets = [7, 0], sizes = [1, 128], strides = [1, 1]} : vector<16x128xf32> to vector<1x128xf32>
    %212 = vector.extract_strided_slice %203 {offsets = [8, 0], sizes = [1, 128], strides = [1, 1]} : vector<16x128xf32> to vector<1x128xf32>
    %213 = vector.extract_strided_slice %203 {offsets = [9, 0], sizes = [1, 128], strides = [1, 1]} : vector<16x128xf32> to vector<1x128xf32>
    %214 = arith.truncf %201 : vector<8x128xf32> to vector<8x128xbf16>
    %c1_60 = arith.constant 1 : index
    %c0_61 = arith.constant 0 : index
    %c0_62 = arith.constant 0 : index
    %215 = vector.load %arg3[%c1_60, %c0_61, %c0_62] : memref<6x128x384xbf16, #tpu.memory_space<vmem>>, vector<1x128x384xbf16>
    %216 = vector.shape_cast %215 : vector<1x128x384xbf16> to vector<128x384xbf16>
    %cst_63 = arith.constant dense<0.000000e+00> : vector<8x384xf32>
    %217 = tpu.matmul %214, %216, %cst_63 {dimension_numbers = #tpu.dot_dimension_numbers<[1], [0], [0], [1], [0, 0, 1, 1], [], []>} : vector<8x128xbf16>, vector<128x384xbf16>, vector<8x384xf32> -> vector<8x384xf32>
    %218 = vector.extract_strided_slice %217 {offsets = [0, 0], sizes = [8, 128], strides = [1, 1]} : vector<8x384xf32> to vector<8x128xf32>
    %219 = vector.broadcast %204 : vector<1x128xf32> to vector<8x128xf32>
    %220 = arith.addf %218, %219 : vector<8x128xf32>
    %221 = vector.extract_strided_slice %217 {offsets = [0, 128], sizes = [8, 128], strides = [1, 1]} : vector<8x384xf32> to vector<8x128xf32>
    %222 = vector.broadcast %205 : vector<1x128xf32> to vector<8x128xf32>
    %223 = arith.addf %221, %222 : vector<8x128xf32>
    %224 = vector.extract_strided_slice %217 {offsets = [0, 256], sizes = [8, 128], strides = [1, 1]} : vector<8x384xf32> to vector<8x128xf32>
    %225 = vector.broadcast %206 : vector<1x128xf32> to vector<8x128xf32>
    %226 = arith.addf %224, %225 : vector<8x128xf32>
    %c1_64 = arith.constant 1 : index
    %c0_65 = arith.constant 0 : index
    %c0_66 = arith.constant 0 : index
    %227 = vector.load %arg4[%c1_64, %c0_65, %c0_66] : memref<6x128x128xbf16, #tpu.memory_space<vmem>>, vector<1x128x128xbf16>
    %228 = vector.shape_cast %227 : vector<1x128x128xbf16> to vector<128x128xbf16>
    %cst_67 = arith.constant 0.000000e+00 : f32
    %229 = vector.broadcast %cst_67 : f32 to vector<8x128xf32>
    %230 = vector.extract_strided_slice %220 {offsets = [0, 0], sizes = [8, 32], strides = [1, 1]} : vector<8x128xf32> to vector<8x32xf32>
    %231 = arith.truncf %230 : vector<8x32xf32> to vector<8x32xbf16>
    %232 = vector.extract_strided_slice %223 {offsets = [0, 0], sizes = [8, 32], strides = [1, 1]} : vector<8x128xf32> to vector<8x32xf32>
    %233 = arith.truncf %232 : vector<8x32xf32> to vector<8x32xbf16>
    %234 = vector.extract_strided_slice %226 {offsets = [0, 0], sizes = [8, 32], strides = [1, 1]} : vector<8x128xf32> to vector<8x32xf32>
    %235 = arith.truncf %234 : vector<8x32xf32> to vector<8x32xbf16>
    %cst_68 = arith.constant dense<0.000000e+00> : vector<8x8xf32>
    %236 = tpu.matmul %231, %233, %cst_68 {dimension_numbers = #tpu.dot_dimension_numbers<[1], [1], [0], [0], [0, 0, 1, 0], [], []>} : vector<8x32xbf16>, vector<8x32xbf16>, vector<8x8xf32> -> vector<8x8xf32>
    %cst_69 = arith.constant 0.176776692 : f32
    %237 = vector.broadcast %cst_69 : f32 to vector<8x8xf32>
    %238 = arith.mulf %236, %237 : vector<8x8xf32>
    %239 = vector.broadcast %3 : vector<1x8xf32> to vector<8x8xf32>
    %240 = arith.addf %238, %239 : vector<8x8xf32>
    %cst_70 = arith.constant dense<0xFF800000> : vector<8xf32>
    %241 = vector.multi_reduction <maximumf>, %240, %cst_70 [1] : vector<8x8xf32> to vector<8xf32>
    %242 = vector.shape_cast %241 : vector<8xf32> to vector<8x1xf32>
    %243 = vector.broadcast %242 : vector<8x1xf32> to vector<8x8xf32>
    %244 = arith.subf %240, %243 : vector<8x8xf32>
    %245 = math.exp %244 : vector<8x8xf32>
    %cst_71 = arith.constant dense<0.000000e+00> : vector<8xf32>
    %246 = vector.multi_reduction <add>, %245, %cst_71 [1] : vector<8x8xf32> to vector<8xf32>
    %247 = vector.shape_cast %246 : vector<8xf32> to vector<8x1xf32>
    %248 = tpu.reciprocal %247 {approx = true} : vector<8x1xf32> -> vector<8x1xf32>
    %249 = vector.broadcast %248 : vector<8x1xf32> to vector<8x8xf32>
    %250 = arith.mulf %245, %249 : vector<8x8xf32>
    %251 = arith.truncf %250 : vector<8x8xf32> to vector<8x8xbf16>
    %cst_72 = arith.constant dense<0.000000e+00> : vector<8x32xf32>
    %252 = tpu.matmul %251, %235, %cst_72 {dimension_numbers = #tpu.dot_dimension_numbers<[1], [0], [0], [1], [0, 0, 1, 1], [], []>} : vector<8x8xbf16>, vector<8x32xbf16>, vector<8x32xf32> -> vector<8x32xf32>
    %253 = arith.truncf %252 : vector<8x32xf32> to vector<8x32xbf16>
    %254 = vector.extract_strided_slice %228 {offsets = [0, 0], sizes = [32, 128], strides = [1, 1]} : vector<128x128xbf16> to vector<32x128xbf16>
    %cst_73 = arith.constant dense<0.000000e+00> : vector<8x128xf32>
    %255 = tpu.matmul %253, %254, %cst_73 {dimension_numbers = #tpu.dot_dimension_numbers<[1], [0], [0], [1], [0, 0, 1, 1], [], []>} : vector<8x32xbf16>, vector<32x128xbf16>, vector<8x128xf32> -> vector<8x128xf32>
    %256 = arith.addf %229, %255 : vector<8x128xf32>
    %257 = vector.extract_strided_slice %220 {offsets = [0, 32], sizes = [8, 32], strides = [1, 1]} : vector<8x128xf32> to vector<8x32xf32>
    %258 = arith.truncf %257 : vector<8x32xf32> to vector<8x32xbf16>
    %259 = vector.extract_strided_slice %223 {offsets = [0, 32], sizes = [8, 32], strides = [1, 1]} : vector<8x128xf32> to vector<8x32xf32>
    %260 = arith.truncf %259 : vector<8x32xf32> to vector<8x32xbf16>
    %261 = vector.extract_strided_slice %226 {offsets = [0, 32], sizes = [8, 32], strides = [1, 1]} : vector<8x128xf32> to vector<8x32xf32>
    %262 = arith.truncf %261 : vector<8x32xf32> to vector<8x32xbf16>
    %cst_74 = arith.constant dense<0.000000e+00> : vector<8x8xf32>
    %263 = tpu.matmul %258, %260, %cst_74 {dimension_numbers = #tpu.dot_dimension_numbers<[1], [1], [0], [0], [0, 0, 1, 0], [], []>} : vector<8x32xbf16>, vector<8x32xbf16>, vector<8x8xf32> -> vector<8x8xf32>
    %cst_75 = arith.constant 0.176776692 : f32
    %264 = vector.broadcast %cst_75 : f32 to vector<8x8xf32>
    %265 = arith.mulf %263, %264 : vector<8x8xf32>
    %266 = vector.broadcast %3 : vector<1x8xf32> to vector<8x8xf32>
    %267 = arith.addf %265, %266 : vector<8x8xf32>
    %cst_76 = arith.constant dense<0xFF800000> : vector<8xf32>
    %268 = vector.multi_reduction <maximumf>, %267, %cst_76 [1] : vector<8x8xf32> to vector<8xf32>
    %269 = vector.shape_cast %268 : vector<8xf32> to vector<8x1xf32>
    %270 = vector.broadcast %269 : vector<8x1xf32> to vector<8x8xf32>
    %271 = arith.subf %267, %270 : vector<8x8xf32>
    %272 = math.exp %271 : vector<8x8xf32>
    %cst_77 = arith.constant dense<0.000000e+00> : vector<8xf32>
    %273 = vector.multi_reduction <add>, %272, %cst_77 [1] : vector<8x8xf32> to vector<8xf32>
    %274 = vector.shape_cast %273 : vector<8xf32> to vector<8x1xf32>
    %275 = tpu.reciprocal %274 {approx = true} : vector<8x1xf32> -> vector<8x1xf32>
    %276 = vector.broadcast %275 : vector<8x1xf32> to vector<8x8xf32>
    %277 = arith.mulf %272, %276 : vector<8x8xf32>
    %278 = arith.truncf %277 : vector<8x8xf32> to vector<8x8xbf16>
    %cst_78 = arith.constant dense<0.000000e+00> : vector<8x32xf32>
    %279 = tpu.matmul %278, %262, %cst_78 {dimension_numbers = #tpu.dot_dimension_numbers<[1], [0], [0], [1], [0, 0, 1, 1], [], []>} : vector<8x8xbf16>, vector<8x32xbf16>, vector<8x32xf32> -> vector<8x32xf32>
    %280 = arith.truncf %279 : vector<8x32xf32> to vector<8x32xbf16>
    %281 = vector.extract_strided_slice %228 {offsets = [32, 0], sizes = [32, 128], strides = [1, 1]} : vector<128x128xbf16> to vector<32x128xbf16>
    %cst_79 = arith.constant dense<0.000000e+00> : vector<8x128xf32>
    %282 = tpu.matmul %280, %281, %cst_79 {dimension_numbers = #tpu.dot_dimension_numbers<[1], [0], [0], [1], [0, 0, 1, 1], [], []>} : vector<8x32xbf16>, vector<32x128xbf16>, vector<8x128xf32> -> vector<8x128xf32>
    %283 = arith.addf %256, %282 : vector<8x128xf32>
    %284 = vector.extract_strided_slice %220 {offsets = [0, 64], sizes = [8, 32], strides = [1, 1]} : vector<8x128xf32> to vector<8x32xf32>
    %285 = arith.truncf %284 : vector<8x32xf32> to vector<8x32xbf16>
    %286 = vector.extract_strided_slice %223 {offsets = [0, 64], sizes = [8, 32], strides = [1, 1]} : vector<8x128xf32> to vector<8x32xf32>
    %287 = arith.truncf %286 : vector<8x32xf32> to vector<8x32xbf16>
    %288 = vector.extract_strided_slice %226 {offsets = [0, 64], sizes = [8, 32], strides = [1, 1]} : vector<8x128xf32> to vector<8x32xf32>
    %289 = arith.truncf %288 : vector<8x32xf32> to vector<8x32xbf16>
    %cst_80 = arith.constant dense<0.000000e+00> : vector<8x8xf32>
    %290 = tpu.matmul %285, %287, %cst_80 {dimension_numbers = #tpu.dot_dimension_numbers<[1], [1], [0], [0], [0, 0, 1, 0], [], []>} : vector<8x32xbf16>, vector<8x32xbf16>, vector<8x8xf32> -> vector<8x8xf32>
    %cst_81 = arith.constant 0.176776692 : f32
    %291 = vector.broadcast %cst_81 : f32 to vector<8x8xf32>
    %292 = arith.mulf %290, %291 : vector<8x8xf32>
    %293 = vector.broadcast %3 : vector<1x8xf32> to vector<8x8xf32>
    %294 = arith.addf %292, %293 : vector<8x8xf32>
    %cst_82 = arith.constant dense<0xFF800000> : vector<8xf32>
    %295 = vector.multi_reduction <maximumf>, %294, %cst_82 [1] : vector<8x8xf32> to vector<8xf32>
    %296 = vector.shape_cast %295 : vector<8xf32> to vector<8x1xf32>
    %297 = vector.broadcast %296 : vector<8x1xf32> to vector<8x8xf32>
    %298 = arith.subf %294, %297 : vector<8x8xf32>
    %299 = math.exp %298 : vector<8x8xf32>
    %cst_83 = arith.constant dense<0.000000e+00> : vector<8xf32>
    %300 = vector.multi_reduction <add>, %299, %cst_83 [1] : vector<8x8xf32> to vector<8xf32>
    %301 = vector.shape_cast %300 : vector<8xf32> to vector<8x1xf32>
    %302 = tpu.reciprocal %301 {approx = true} : vector<8x1xf32> -> vector<8x1xf32>
    %303 = vector.broadcast %302 : vector<8x1xf32> to vector<8x8xf32>
    %304 = arith.mulf %299, %303 : vector<8x8xf32>
    %305 = arith.truncf %304 : vector<8x8xf32> to vector<8x8xbf16>
    %cst_84 = arith.constant dense<0.000000e+00> : vector<8x32xf32>
    %306 = tpu.matmul %305, %289, %cst_84 {dimension_numbers = #tpu.dot_dimension_numbers<[1], [0], [0], [1], [0, 0, 1, 1], [], []>} : vector<8x8xbf16>, vector<8x32xbf16>, vector<8x32xf32> -> vector<8x32xf32>
    %307 = arith.truncf %306 : vector<8x32xf32> to vector<8x32xbf16>
    %308 = vector.extract_strided_slice %228 {offsets = [64, 0], sizes = [32, 128], strides = [1, 1]} : vector<128x128xbf16> to vector<32x128xbf16>
    %cst_85 = arith.constant dense<0.000000e+00> : vector<8x128xf32>
    %309 = tpu.matmul %307, %308, %cst_85 {dimension_numbers = #tpu.dot_dimension_numbers<[1], [0], [0], [1], [0, 0, 1, 1], [], []>} : vector<8x32xbf16>, vector<32x128xbf16>, vector<8x128xf32> -> vector<8x128xf32>
    %310 = arith.addf %283, %309 : vector<8x128xf32>
    %311 = vector.extract_strided_slice %220 {offsets = [0, 96], sizes = [8, 32], strides = [1, 1]} : vector<8x128xf32> to vector<8x32xf32>
    %312 = arith.truncf %311 : vector<8x32xf32> to vector<8x32xbf16>
    %313 = vector.extract_strided_slice %223 {offsets = [0, 96], sizes = [8, 32], strides = [1, 1]} : vector<8x128xf32> to vector<8x32xf32>
    %314 = arith.truncf %313 : vector<8x32xf32> to vector<8x32xbf16>
    %315 = vector.extract_strided_slice %226 {offsets = [0, 96], sizes = [8, 32], strides = [1, 1]} : vector<8x128xf32> to vector<8x32xf32>
    %316 = arith.truncf %315 : vector<8x32xf32> to vector<8x32xbf16>
    %cst_86 = arith.constant dense<0.000000e+00> : vector<8x8xf32>
    %317 = tpu.matmul %312, %314, %cst_86 {dimension_numbers = #tpu.dot_dimension_numbers<[1], [1], [0], [0], [0, 0, 1, 0], [], []>} : vector<8x32xbf16>, vector<8x32xbf16>, vector<8x8xf32> -> vector<8x8xf32>
    %cst_87 = arith.constant 0.176776692 : f32
    %318 = vector.broadcast %cst_87 : f32 to vector<8x8xf32>
    %319 = arith.mulf %317, %318 : vector<8x8xf32>
    %320 = vector.broadcast %3 : vector<1x8xf32> to vector<8x8xf32>
    %321 = arith.addf %319, %320 : vector<8x8xf32>
    %cst_88 = arith.constant dense<0xFF800000> : vector<8xf32>
    %322 = vector.multi_reduction <maximumf>, %321, %cst_88 [1] : vector<8x8xf32> to vector<8xf32>
    %323 = vector.shape_cast %322 : vector<8xf32> to vector<8x1xf32>
    %324 = vector.broadcast %323 : vector<8x1xf32> to vector<8x8xf32>
    %325 = arith.subf %321, %324 : vector<8x8xf32>
    %326 = math.exp %325 : vector<8x8xf32>
    %cst_89 = arith.constant dense<0.000000e+00> : vector<8xf32>
    %327 = vector.multi_reduction <add>, %326, %cst_89 [1] : vector<8x8xf32> to vector<8xf32>
    %328 = vector.shape_cast %327 : vector<8xf32> to vector<8x1xf32>
    %329 = tpu.reciprocal %328 {approx = true} : vector<8x1xf32> -> vector<8x1xf32>
    %330 = vector.broadcast %329 : vector<8x1xf32> to vector<8x8xf32>
    %331 = arith.mulf %326, %330 : vector<8x8xf32>
    %332 = arith.truncf %331 : vector<8x8xf32> to vector<8x8xbf16>
    %cst_90 = arith.constant dense<0.000000e+00> : vector<8x32xf32>
    %333 = tpu.matmul %332, %316, %cst_90 {dimension_numbers = #tpu.dot_dimension_numbers<[1], [0], [0], [1], [0, 0, 1, 1], [], []>} : vector<8x8xbf16>, vector<8x32xbf16>, vector<8x32xf32> -> vector<8x32xf32>
    %334 = arith.truncf %333 : vector<8x32xf32> to vector<8x32xbf16>
    %335 = vector.extract_strided_slice %228 {offsets = [96, 0], sizes = [32, 128], strides = [1, 1]} : vector<128x128xbf16> to vector<32x128xbf16>
    %cst_91 = arith.constant dense<0.000000e+00> : vector<8x128xf32>
    %336 = tpu.matmul %334, %335, %cst_91 {dimension_numbers = #tpu.dot_dimension_numbers<[1], [0], [0], [1], [0, 0, 1, 1], [], []>} : vector<8x32xbf16>, vector<32x128xbf16>, vector<8x128xf32> -> vector<8x128xf32>
    %337 = arith.addf %310, %336 : vector<8x128xf32>
    %338 = vector.broadcast %207 : vector<1x128xf32> to vector<8x128xf32>
    %339 = arith.addf %337, %338 : vector<8x128xf32>
    %340 = arith.addf %201, %339 : vector<8x128xf32>
    %cst_92 = arith.constant dense<0.000000e+00> : vector<8xf32>
    %341 = vector.multi_reduction <add>, %340, %cst_92 [1] : vector<8x128xf32> to vector<8xf32>
    %342 = vector.shape_cast %341 : vector<8xf32> to vector<8x1xf32>
    %cst_93 = arith.constant 1.280000e+02 : f32
    %343 = vector.broadcast %cst_93 : f32 to vector<8x1xf32>
    %344 = arith.divf %342, %343 : vector<8x1xf32>
    %345 = vector.broadcast %344 : vector<8x1xf32> to vector<8x128xf32>
    %346 = arith.subf %340, %345 : vector<8x128xf32>
    %347 = arith.mulf %346, %346 : vector<8x128xf32>
    %cst_94 = arith.constant dense<0.000000e+00> : vector<8xf32>
    %348 = vector.multi_reduction <add>, %347, %cst_94 [1] : vector<8x128xf32> to vector<8xf32>
    %349 = vector.shape_cast %348 : vector<8xf32> to vector<8x1xf32>
    %cst_95 = arith.constant 1.280000e+02 : f32
    %350 = vector.broadcast %cst_95 : f32 to vector<8x1xf32>
    %351 = arith.divf %349, %350 : vector<8x1xf32>
    %352 = vector.broadcast %344 : vector<8x1xf32> to vector<8x128xf32>
    %353 = arith.subf %340, %352 : vector<8x128xf32>
    %cst_96 = arith.constant 9.99999974E-6 : f32
    %354 = vector.broadcast %cst_96 : f32 to vector<8x1xf32>
    %355 = arith.addf %351, %354 : vector<8x1xf32>
    %356 = math.rsqrt %355 : vector<8x1xf32>
    %357 = vector.broadcast %356 : vector<8x1xf32> to vector<8x128xf32>
    %358 = arith.mulf %353, %357 : vector<8x128xf32>
    %359 = vector.broadcast %210 : vector<1x128xf32> to vector<8x128xf32>
    %360 = arith.mulf %358, %359 : vector<8x128xf32>
    %361 = vector.broadcast %211 : vector<1x128xf32> to vector<8x128xf32>
    %362 = arith.addf %360, %361 : vector<8x128xf32>
    %363 = arith.truncf %362 : vector<8x128xf32> to vector<8x128xbf16>
    %c1_97 = arith.constant 1 : index
    %c0_98 = arith.constant 0 : index
    %c0_99 = arith.constant 0 : index
    %364 = vector.load %arg5[%c1_97, %c0_98, %c0_99] : memref<6x128x128xbf16, #tpu.memory_space<vmem>>, vector<1x128x128xbf16>
    %365 = vector.shape_cast %364 : vector<1x128x128xbf16> to vector<128x128xbf16>
    %cst_100 = arith.constant dense<0.000000e+00> : vector<8x128xf32>
    %366 = tpu.matmul %363, %365, %cst_100 {dimension_numbers = #tpu.dot_dimension_numbers<[1], [0], [0], [1], [0, 0, 1, 1], [], []>} : vector<8x128xbf16>, vector<128x128xbf16>, vector<8x128xf32> -> vector<8x128xf32>
    %367 = vector.broadcast %208 : vector<1x128xf32> to vector<8x128xf32>
    %368 = arith.addf %366, %367 : vector<8x128xf32>
    %cst_101 = arith.constant 0.000000e+00 : f32
    %369 = vector.broadcast %cst_101 : f32 to vector<8x128xf32>
    %370 = arith.maximumf %368, %369 : vector<8x128xf32>
    %371 = arith.truncf %370 : vector<8x128xf32> to vector<8x128xbf16>
    %c1_102 = arith.constant 1 : index
    %c0_103 = arith.constant 0 : index
    %c0_104 = arith.constant 0 : index
    %372 = vector.load %arg6[%c1_102, %c0_103, %c0_104] : memref<6x128x128xbf16, #tpu.memory_space<vmem>>, vector<1x128x128xbf16>
    %373 = vector.shape_cast %372 : vector<1x128x128xbf16> to vector<128x128xbf16>
    %cst_105 = arith.constant dense<0.000000e+00> : vector<8x128xf32>
    %374 = tpu.matmul %371, %373, %cst_105 {dimension_numbers = #tpu.dot_dimension_numbers<[1], [0], [0], [1], [0, 0, 1, 1], [], []>} : vector<8x128xbf16>, vector<128x128xbf16>, vector<8x128xf32> -> vector<8x128xf32>
    %375 = vector.broadcast %209 : vector<1x128xf32> to vector<8x128xf32>
    %376 = arith.addf %374, %375 : vector<8x128xf32>
    %377 = arith.addf %362, %376 : vector<8x128xf32>
    %cst_106 = arith.constant dense<0.000000e+00> : vector<8xf32>
    %378 = vector.multi_reduction <add>, %377, %cst_106 [1] : vector<8x128xf32> to vector<8xf32>
    %379 = vector.shape_cast %378 : vector<8xf32> to vector<8x1xf32>
    %cst_107 = arith.constant 1.280000e+02 : f32
    %380 = vector.broadcast %cst_107 : f32 to vector<8x1xf32>
    %381 = arith.divf %379, %380 : vector<8x1xf32>
    %382 = vector.broadcast %381 : vector<8x1xf32> to vector<8x128xf32>
    %383 = arith.subf %377, %382 : vector<8x128xf32>
    %384 = arith.mulf %383, %383 : vector<8x128xf32>
    %cst_108 = arith.constant dense<0.000000e+00> : vector<8xf32>
    %385 = vector.multi_reduction <add>, %384, %cst_108 [1] : vector<8x128xf32> to vector<8xf32>
    %386 = vector.shape_cast %385 : vector<8xf32> to vector<8x1xf32>
    %cst_109 = arith.constant 1.280000e+02 : f32
    %387 = vector.broadcast %cst_109 : f32 to vector<8x1xf32>
    %388 = arith.divf %386, %387 : vector<8x1xf32>
    %389 = vector.broadcast %381 : vector<8x1xf32> to vector<8x128xf32>
    %390 = arith.subf %377, %389 : vector<8x128xf32>
    %cst_110 = arith.constant 9.99999974E-6 : f32
    %391 = vector.broadcast %cst_110 : f32 to vector<8x1xf32>
    %392 = arith.addf %388, %391 : vector<8x1xf32>
    %393 = math.rsqrt %392 : vector<8x1xf32>
    %394 = vector.broadcast %393 : vector<8x1xf32> to vector<8x128xf32>
    %395 = arith.mulf %390, %394 : vector<8x128xf32>
    %396 = vector.broadcast %212 : vector<1x128xf32> to vector<8x128xf32>
    %397 = arith.mulf %395, %396 : vector<8x128xf32>
    %398 = vector.broadcast %213 : vector<1x128xf32> to vector<8x128xf32>
    %399 = arith.addf %397, %398 : vector<8x128xf32>
    %c2 = arith.constant 2 : index
    %c0_111 = arith.constant 0 : index
    %c0_112 = arith.constant 0 : index
    %400 = vector.load %arg7[%c2, %c0_111, %c0_112] : memref<6x16x128xf32, #tpu.memory_space<vmem>>, vector<1x16x128xf32>
    %401 = vector.shape_cast %400 : vector<1x16x128xf32> to vector<16x128xf32>
    %402 = vector.extract_strided_slice %401 {offsets = [0, 0], sizes = [1, 128], strides = [1, 1]} : vector<16x128xf32> to vector<1x128xf32>
    %403 = vector.extract_strided_slice %401 {offsets = [1, 0], sizes = [1, 128], strides = [1, 1]} : vector<16x128xf32> to vector<1x128xf32>
    %404 = vector.extract_strided_slice %401 {offsets = [2, 0], sizes = [1, 128], strides = [1, 1]} : vector<16x128xf32> to vector<1x128xf32>
    %405 = vector.extract_strided_slice %401 {offsets = [3, 0], sizes = [1, 128], strides = [1, 1]} : vector<16x128xf32> to vector<1x128xf32>
    %406 = vector.extract_strided_slice %401 {offsets = [4, 0], sizes = [1, 128], strides = [1, 1]} : vector<16x128xf32> to vector<1x128xf32>
    %407 = vector.extract_strided_slice %401 {offsets = [5, 0], sizes = [1, 128], strides = [1, 1]} : vector<16x128xf32> to vector<1x128xf32>
    %408 = vector.extract_strided_slice %401 {offsets = [6, 0], sizes = [1, 128], strides = [1, 1]} : vector<16x128xf32> to vector<1x128xf32>
    %409 = vector.extract_strided_slice %401 {offsets = [7, 0], sizes = [1, 128], strides = [1, 1]} : vector<16x128xf32> to vector<1x128xf32>
    %410 = vector.extract_strided_slice %401 {offsets = [8, 0], sizes = [1, 128], strides = [1, 1]} : vector<16x128xf32> to vector<1x128xf32>
    %411 = vector.extract_strided_slice %401 {offsets = [9, 0], sizes = [1, 128], strides = [1, 1]} : vector<16x128xf32> to vector<1x128xf32>
    %412 = arith.truncf %399 : vector<8x128xf32> to vector<8x128xbf16>
    %c2_113 = arith.constant 2 : index
    %c0_114 = arith.constant 0 : index
    %c0_115 = arith.constant 0 : index
    %413 = vector.load %arg3[%c2_113, %c0_114, %c0_115] : memref<6x128x384xbf16, #tpu.memory_space<vmem>>, vector<1x128x384xbf16>
    %414 = vector.shape_cast %413 : vector<1x128x384xbf16> to vector<128x384xbf16>
    %cst_116 = arith.constant dense<0.000000e+00> : vector<8x384xf32>
    %415 = tpu.matmul %412, %414, %cst_116 {dimension_numbers = #tpu.dot_dimension_numbers<[1], [0], [0], [1], [0, 0, 1, 1], [], []>} : vector<8x128xbf16>, vector<128x384xbf16>, vector<8x384xf32> -> vector<8x384xf32>
    %416 = vector.extract_strided_slice %415 {offsets = [0, 0], sizes = [8, 128], strides = [1, 1]} : vector<8x384xf32> to vector<8x128xf32>
    %417 = vector.broadcast %402 : vector<1x128xf32> to vector<8x128xf32>
    %418 = arith.addf %416, %417 : vector<8x128xf32>
    %419 = vector.extract_strided_slice %415 {offsets = [0, 128], sizes = [8, 128], strides = [1, 1]} : vector<8x384xf32> to vector<8x128xf32>
    %420 = vector.broadcast %403 : vector<1x128xf32> to vector<8x128xf32>
    %421 = arith.addf %419, %420 : vector<8x128xf32>
    %422 = vector.extract_strided_slice %415 {offsets = [0, 256], sizes = [8, 128], strides = [1, 1]} : vector<8x384xf32> to vector<8x128xf32>
    %423 = vector.broadcast %404 : vector<1x128xf32> to vector<8x128xf32>
    %424 = arith.addf %422, %423 : vector<8x128xf32>
    %c2_117 = arith.constant 2 : index
    %c0_118 = arith.constant 0 : index
    %c0_119 = arith.constant 0 : index
    %425 = vector.load %arg4[%c2_117, %c0_118, %c0_119] : memref<6x128x128xbf16, #tpu.memory_space<vmem>>, vector<1x128x128xbf16>
    %426 = vector.shape_cast %425 : vector<1x128x128xbf16> to vector<128x128xbf16>
    %cst_120 = arith.constant 0.000000e+00 : f32
    %427 = vector.broadcast %cst_120 : f32 to vector<8x128xf32>
    %428 = vector.extract_strided_slice %418 {offsets = [0, 0], sizes = [8, 32], strides = [1, 1]} : vector<8x128xf32> to vector<8x32xf32>
    %429 = arith.truncf %428 : vector<8x32xf32> to vector<8x32xbf16>
    %430 = vector.extract_strided_slice %421 {offsets = [0, 0], sizes = [8, 32], strides = [1, 1]} : vector<8x128xf32> to vector<8x32xf32>
    %431 = arith.truncf %430 : vector<8x32xf32> to vector<8x32xbf16>
    %432 = vector.extract_strided_slice %424 {offsets = [0, 0], sizes = [8, 32], strides = [1, 1]} : vector<8x128xf32> to vector<8x32xf32>
    %433 = arith.truncf %432 : vector<8x32xf32> to vector<8x32xbf16>
    %cst_121 = arith.constant dense<0.000000e+00> : vector<8x8xf32>
    %434 = tpu.matmul %429, %431, %cst_121 {dimension_numbers = #tpu.dot_dimension_numbers<[1], [1], [0], [0], [0, 0, 1, 0], [], []>} : vector<8x32xbf16>, vector<8x32xbf16>, vector<8x8xf32> -> vector<8x8xf32>
    %cst_122 = arith.constant 0.176776692 : f32
    %435 = vector.broadcast %cst_122 : f32 to vector<8x8xf32>
    %436 = arith.mulf %434, %435 : vector<8x8xf32>
    %437 = vector.broadcast %3 : vector<1x8xf32> to vector<8x8xf32>
    %438 = arith.addf %436, %437 : vector<8x8xf32>
    %cst_123 = arith.constant dense<0xFF800000> : vector<8xf32>
    %439 = vector.multi_reduction <maximumf>, %438, %cst_123 [1] : vector<8x8xf32> to vector<8xf32>
    %440 = vector.shape_cast %439 : vector<8xf32> to vector<8x1xf32>
    %441 = vector.broadcast %440 : vector<8x1xf32> to vector<8x8xf32>
    %442 = arith.subf %438, %441 : vector<8x8xf32>
    %443 = math.exp %442 : vector<8x8xf32>
    %cst_124 = arith.constant dense<0.000000e+00> : vector<8xf32>
    %444 = vector.multi_reduction <add>, %443, %cst_124 [1] : vector<8x8xf32> to vector<8xf32>
    %445 = vector.shape_cast %444 : vector<8xf32> to vector<8x1xf32>
    %446 = tpu.reciprocal %445 {approx = true} : vector<8x1xf32> -> vector<8x1xf32>
    %447 = vector.broadcast %446 : vector<8x1xf32> to vector<8x8xf32>
    %448 = arith.mulf %443, %447 : vector<8x8xf32>
    %449 = arith.truncf %448 : vector<8x8xf32> to vector<8x8xbf16>
    %cst_125 = arith.constant dense<0.000000e+00> : vector<8x32xf32>
    %450 = tpu.matmul %449, %433, %cst_125 {dimension_numbers = #tpu.dot_dimension_numbers<[1], [0], [0], [1], [0, 0, 1, 1], [], []>} : vector<8x8xbf16>, vector<8x32xbf16>, vector<8x32xf32> -> vector<8x32xf32>
    %451 = arith.truncf %450 : vector<8x32xf32> to vector<8x32xbf16>
    %452 = vector.extract_strided_slice %426 {offsets = [0, 0], sizes = [32, 128], strides = [1, 1]} : vector<128x128xbf16> to vector<32x128xbf16>
    %cst_126 = arith.constant dense<0.000000e+00> : vector<8x128xf32>
    %453 = tpu.matmul %451, %452, %cst_126 {dimension_numbers = #tpu.dot_dimension_numbers<[1], [0], [0], [1], [0, 0, 1, 1], [], []>} : vector<8x32xbf16>, vector<32x128xbf16>, vector<8x128xf32> -> vector<8x128xf32>
    %454 = arith.addf %427, %453 : vector<8x128xf32>
    %455 = vector.extract_strided_slice %418 {offsets = [0, 32], sizes = [8, 32], strides = [1, 1]} : vector<8x128xf32> to vector<8x32xf32>
    %456 = arith.truncf %455 : vector<8x32xf32> to vector<8x32xbf16>
    %457 = vector.extract_strided_slice %421 {offsets = [0, 32], sizes = [8, 32], strides = [1, 1]} : vector<8x128xf32> to vector<8x32xf32>
    %458 = arith.truncf %457 : vector<8x32xf32> to vector<8x32xbf16>
    %459 = vector.extract_strided_slice %424 {offsets = [0, 32], sizes = [8, 32], strides = [1, 1]} : vector<8x128xf32> to vector<8x32xf32>
    %460 = arith.truncf %459 : vector<8x32xf32> to vector<8x32xbf16>
    %cst_127 = arith.constant dense<0.000000e+00> : vector<8x8xf32>
    %461 = tpu.matmul %456, %458, %cst_127 {dimension_numbers = #tpu.dot_dimension_numbers<[1], [1], [0], [0], [0, 0, 1, 0], [], []>} : vector<8x32xbf16>, vector<8x32xbf16>, vector<8x8xf32> -> vector<8x8xf32>
    %cst_128 = arith.constant 0.176776692 : f32
    %462 = vector.broadcast %cst_128 : f32 to vector<8x8xf32>
    %463 = arith.mulf %461, %462 : vector<8x8xf32>
    %464 = vector.broadcast %3 : vector<1x8xf32> to vector<8x8xf32>
    %465 = arith.addf %463, %464 : vector<8x8xf32>
    %cst_129 = arith.constant dense<0xFF800000> : vector<8xf32>
    %466 = vector.multi_reduction <maximumf>, %465, %cst_129 [1] : vector<8x8xf32> to vector<8xf32>
    %467 = vector.shape_cast %466 : vector<8xf32> to vector<8x1xf32>
    %468 = vector.broadcast %467 : vector<8x1xf32> to vector<8x8xf32>
    %469 = arith.subf %465, %468 : vector<8x8xf32>
    %470 = math.exp %469 : vector<8x8xf32>
    %cst_130 = arith.constant dense<0.000000e+00> : vector<8xf32>
    %471 = vector.multi_reduction <add>, %470, %cst_130 [1] : vector<8x8xf32> to vector<8xf32>
    %472 = vector.shape_cast %471 : vector<8xf32> to vector<8x1xf32>
    %473 = tpu.reciprocal %472 {approx = true} : vector<8x1xf32> -> vector<8x1xf32>
    %474 = vector.broadcast %473 : vector<8x1xf32> to vector<8x8xf32>
    %475 = arith.mulf %470, %474 : vector<8x8xf32>
    %476 = arith.truncf %475 : vector<8x8xf32> to vector<8x8xbf16>
    %cst_131 = arith.constant dense<0.000000e+00> : vector<8x32xf32>
    %477 = tpu.matmul %476, %460, %cst_131 {dimension_numbers = #tpu.dot_dimension_numbers<[1], [0], [0], [1], [0, 0, 1, 1], [], []>} : vector<8x8xbf16>, vector<8x32xbf16>, vector<8x32xf32> -> vector<8x32xf32>
    %478 = arith.truncf %477 : vector<8x32xf32> to vector<8x32xbf16>
    %479 = vector.extract_strided_slice %426 {offsets = [32, 0], sizes = [32, 128], strides = [1, 1]} : vector<128x128xbf16> to vector<32x128xbf16>
    %cst_132 = arith.constant dense<0.000000e+00> : vector<8x128xf32>
    %480 = tpu.matmul %478, %479, %cst_132 {dimension_numbers = #tpu.dot_dimension_numbers<[1], [0], [0], [1], [0, 0, 1, 1], [], []>} : vector<8x32xbf16>, vector<32x128xbf16>, vector<8x128xf32> -> vector<8x128xf32>
    %481 = arith.addf %454, %480 : vector<8x128xf32>
    %482 = vector.extract_strided_slice %418 {offsets = [0, 64], sizes = [8, 32], strides = [1, 1]} : vector<8x128xf32> to vector<8x32xf32>
    %483 = arith.truncf %482 : vector<8x32xf32> to vector<8x32xbf16>
    %484 = vector.extract_strided_slice %421 {offsets = [0, 64], sizes = [8, 32], strides = [1, 1]} : vector<8x128xf32> to vector<8x32xf32>
    %485 = arith.truncf %484 : vector<8x32xf32> to vector<8x32xbf16>
    %486 = vector.extract_strided_slice %424 {offsets = [0, 64], sizes = [8, 32], strides = [1, 1]} : vector<8x128xf32> to vector<8x32xf32>
    %487 = arith.truncf %486 : vector<8x32xf32> to vector<8x32xbf16>
    %cst_133 = arith.constant dense<0.000000e+00> : vector<8x8xf32>
    %488 = tpu.matmul %483, %485, %cst_133 {dimension_numbers = #tpu.dot_dimension_numbers<[1], [1], [0], [0], [0, 0, 1, 0], [], []>} : vector<8x32xbf16>, vector<8x32xbf16>, vector<8x8xf32> -> vector<8x8xf32>
    %cst_134 = arith.constant 0.176776692 : f32
    %489 = vector.broadcast %cst_134 : f32 to vector<8x8xf32>
    %490 = arith.mulf %488, %489 : vector<8x8xf32>
    %491 = vector.broadcast %3 : vector<1x8xf32> to vector<8x8xf32>
    %492 = arith.addf %490, %491 : vector<8x8xf32>
    %cst_135 = arith.constant dense<0xFF800000> : vector<8xf32>
    %493 = vector.multi_reduction <maximumf>, %492, %cst_135 [1] : vector<8x8xf32> to vector<8xf32>
    %494 = vector.shape_cast %493 : vector<8xf32> to vector<8x1xf32>
    %495 = vector.broadcast %494 : vector<8x1xf32> to vector<8x8xf32>
    %496 = arith.subf %492, %495 : vector<8x8xf32>
    %497 = math.exp %496 : vector<8x8xf32>
    %cst_136 = arith.constant dense<0.000000e+00> : vector<8xf32>
    %498 = vector.multi_reduction <add>, %497, %cst_136 [1] : vector<8x8xf32> to vector<8xf32>
    %499 = vector.shape_cast %498 : vector<8xf32> to vector<8x1xf32>
    %500 = tpu.reciprocal %499 {approx = true} : vector<8x1xf32> -> vector<8x1xf32>
    %501 = vector.broadcast %500 : vector<8x1xf32> to vector<8x8xf32>
    %502 = arith.mulf %497, %501 : vector<8x8xf32>
    %503 = arith.truncf %502 : vector<8x8xf32> to vector<8x8xbf16>
    %cst_137 = arith.constant dense<0.000000e+00> : vector<8x32xf32>
    %504 = tpu.matmul %503, %487, %cst_137 {dimension_numbers = #tpu.dot_dimension_numbers<[1], [0], [0], [1], [0, 0, 1, 1], [], []>} : vector<8x8xbf16>, vector<8x32xbf16>, vector<8x32xf32> -> vector<8x32xf32>
    %505 = arith.truncf %504 : vector<8x32xf32> to vector<8x32xbf16>
    %506 = vector.extract_strided_slice %426 {offsets = [64, 0], sizes = [32, 128], strides = [1, 1]} : vector<128x128xbf16> to vector<32x128xbf16>
    %cst_138 = arith.constant dense<0.000000e+00> : vector<8x128xf32>
    %507 = tpu.matmul %505, %506, %cst_138 {dimension_numbers = #tpu.dot_dimension_numbers<[1], [0], [0], [1], [0, 0, 1, 1], [], []>} : vector<8x32xbf16>, vector<32x128xbf16>, vector<8x128xf32> -> vector<8x128xf32>
    %508 = arith.addf %481, %507 : vector<8x128xf32>
    %509 = vector.extract_strided_slice %418 {offsets = [0, 96], sizes = [8, 32], strides = [1, 1]} : vector<8x128xf32> to vector<8x32xf32>
    %510 = arith.truncf %509 : vector<8x32xf32> to vector<8x32xbf16>
    %511 = vector.extract_strided_slice %421 {offsets = [0, 96], sizes = [8, 32], strides = [1, 1]} : vector<8x128xf32> to vector<8x32xf32>
    %512 = arith.truncf %511 : vector<8x32xf32> to vector<8x32xbf16>
    %513 = vector.extract_strided_slice %424 {offsets = [0, 96], sizes = [8, 32], strides = [1, 1]} : vector<8x128xf32> to vector<8x32xf32>
    %514 = arith.truncf %513 : vector<8x32xf32> to vector<8x32xbf16>
    %cst_139 = arith.constant dense<0.000000e+00> : vector<8x8xf32>
    %515 = tpu.matmul %510, %512, %cst_139 {dimension_numbers = #tpu.dot_dimension_numbers<[1], [1], [0], [0], [0, 0, 1, 0], [], []>} : vector<8x32xbf16>, vector<8x32xbf16>, vector<8x8xf32> -> vector<8x8xf32>
    %cst_140 = arith.constant 0.176776692 : f32
    %516 = vector.broadcast %cst_140 : f32 to vector<8x8xf32>
    %517 = arith.mulf %515, %516 : vector<8x8xf32>
    %518 = vector.broadcast %3 : vector<1x8xf32> to vector<8x8xf32>
    %519 = arith.addf %517, %518 : vector<8x8xf32>
    %cst_141 = arith.constant dense<0xFF800000> : vector<8xf32>
    %520 = vector.multi_reduction <maximumf>, %519, %cst_141 [1] : vector<8x8xf32> to vector<8xf32>
    %521 = vector.shape_cast %520 : vector<8xf32> to vector<8x1xf32>
    %522 = vector.broadcast %521 : vector<8x1xf32> to vector<8x8xf32>
    %523 = arith.subf %519, %522 : vector<8x8xf32>
    %524 = math.exp %523 : vector<8x8xf32>
    %cst_142 = arith.constant dense<0.000000e+00> : vector<8xf32>
    %525 = vector.multi_reduction <add>, %524, %cst_142 [1] : vector<8x8xf32> to vector<8xf32>
    %526 = vector.shape_cast %525 : vector<8xf32> to vector<8x1xf32>
    %527 = tpu.reciprocal %526 {approx = true} : vector<8x1xf32> -> vector<8x1xf32>
    %528 = vector.broadcast %527 : vector<8x1xf32> to vector<8x8xf32>
    %529 = arith.mulf %524, %528 : vector<8x8xf32>
    %530 = arith.truncf %529 : vector<8x8xf32> to vector<8x8xbf16>
    %cst_143 = arith.constant dense<0.000000e+00> : vector<8x32xf32>
    %531 = tpu.matmul %530, %514, %cst_143 {dimension_numbers = #tpu.dot_dimension_numbers<[1], [0], [0], [1], [0, 0, 1, 1], [], []>} : vector<8x8xbf16>, vector<8x32xbf16>, vector<8x32xf32> -> vector<8x32xf32>
    %532 = arith.truncf %531 : vector<8x32xf32> to vector<8x32xbf16>
    %533 = vector.extract_strided_slice %426 {offsets = [96, 0], sizes = [32, 128], strides = [1, 1]} : vector<128x128xbf16> to vector<32x128xbf16>
    %cst_144 = arith.constant dense<0.000000e+00> : vector<8x128xf32>
    %534 = tpu.matmul %532, %533, %cst_144 {dimension_numbers = #tpu.dot_dimension_numbers<[1], [0], [0], [1], [0, 0, 1, 1], [], []>} : vector<8x32xbf16>, vector<32x128xbf16>, vector<8x128xf32> -> vector<8x128xf32>
    %535 = arith.addf %508, %534 : vector<8x128xf32>
    %536 = vector.broadcast %405 : vector<1x128xf32> to vector<8x128xf32>
    %537 = arith.addf %535, %536 : vector<8x128xf32>
    %538 = arith.addf %399, %537 : vector<8x128xf32>
    %cst_145 = arith.constant dense<0.000000e+00> : vector<8xf32>
    %539 = vector.multi_reduction <add>, %538, %cst_145 [1] : vector<8x128xf32> to vector<8xf32>
    %540 = vector.shape_cast %539 : vector<8xf32> to vector<8x1xf32>
    %cst_146 = arith.constant 1.280000e+02 : f32
    %541 = vector.broadcast %cst_146 : f32 to vector<8x1xf32>
    %542 = arith.divf %540, %541 : vector<8x1xf32>
    %543 = vector.broadcast %542 : vector<8x1xf32> to vector<8x128xf32>
    %544 = arith.subf %538, %543 : vector<8x128xf32>
    %545 = arith.mulf %544, %544 : vector<8x128xf32>
    %cst_147 = arith.constant dense<0.000000e+00> : vector<8xf32>
    %546 = vector.multi_reduction <add>, %545, %cst_147 [1] : vector<8x128xf32> to vector<8xf32>
    %547 = vector.shape_cast %546 : vector<8xf32> to vector<8x1xf32>
    %cst_148 = arith.constant 1.280000e+02 : f32
    %548 = vector.broadcast %cst_148 : f32 to vector<8x1xf32>
    %549 = arith.divf %547, %548 : vector<8x1xf32>
    %550 = vector.broadcast %542 : vector<8x1xf32> to vector<8x128xf32>
    %551 = arith.subf %538, %550 : vector<8x128xf32>
    %cst_149 = arith.constant 9.99999974E-6 : f32
    %552 = vector.broadcast %cst_149 : f32 to vector<8x1xf32>
    %553 = arith.addf %549, %552 : vector<8x1xf32>
    %554 = math.rsqrt %553 : vector<8x1xf32>
    %555 = vector.broadcast %554 : vector<8x1xf32> to vector<8x128xf32>
    %556 = arith.mulf %551, %555 : vector<8x128xf32>
    %557 = vector.broadcast %408 : vector<1x128xf32> to vector<8x128xf32>
    %558 = arith.mulf %556, %557 : vector<8x128xf32>
    %559 = vector.broadcast %409 : vector<1x128xf32> to vector<8x128xf32>
    %560 = arith.addf %558, %559 : vector<8x128xf32>
    %561 = arith.truncf %560 : vector<8x128xf32> to vector<8x128xbf16>
    %c2_150 = arith.constant 2 : index
    %c0_151 = arith.constant 0 : index
    %c0_152 = arith.constant 0 : index
    %562 = vector.load %arg5[%c2_150, %c0_151, %c0_152] : memref<6x128x128xbf16, #tpu.memory_space<vmem>>, vector<1x128x128xbf16>
    %563 = vector.shape_cast %562 : vector<1x128x128xbf16> to vector<128x128xbf16>
    %cst_153 = arith.constant dense<0.000000e+00> : vector<8x128xf32>
    %564 = tpu.matmul %561, %563, %cst_153 {dimension_numbers = #tpu.dot_dimension_numbers<[1], [0], [0], [1], [0, 0, 1, 1], [], []>} : vector<8x128xbf16>, vector<128x128xbf16>, vector<8x128xf32> -> vector<8x128xf32>
    %565 = vector.broadcast %406 : vector<1x128xf32> to vector<8x128xf32>
    %566 = arith.addf %564, %565 : vector<8x128xf32>
    %cst_154 = arith.constant 0.000000e+00 : f32
    %567 = vector.broadcast %cst_154 : f32 to vector<8x128xf32>
    %568 = arith.maximumf %566, %567 : vector<8x128xf32>
    %569 = arith.truncf %568 : vector<8x128xf32> to vector<8x128xbf16>
    %c2_155 = arith.constant 2 : index
    %c0_156 = arith.constant 0 : index
    %c0_157 = arith.constant 0 : index
    %570 = vector.load %arg6[%c2_155, %c0_156, %c0_157] : memref<6x128x128xbf16, #tpu.memory_space<vmem>>, vector<1x128x128xbf16>
    %571 = vector.shape_cast %570 : vector<1x128x128xbf16> to vector<128x128xbf16>
    %cst_158 = arith.constant dense<0.000000e+00> : vector<8x128xf32>
    %572 = tpu.matmul %569, %571, %cst_158 {dimension_numbers = #tpu.dot_dimension_numbers<[1], [0], [0], [1], [0, 0, 1, 1], [], []>} : vector<8x128xbf16>, vector<128x128xbf16>, vector<8x128xf32> -> vector<8x128xf32>
    %573 = vector.broadcast %407 : vector<1x128xf32> to vector<8x128xf32>
    %574 = arith.addf %572, %573 : vector<8x128xf32>
    %575 = arith.addf %560, %574 : vector<8x128xf32>
    %cst_159 = arith.constant dense<0.000000e+00> : vector<8xf32>
    %576 = vector.multi_reduction <add>, %575, %cst_159 [1] : vector<8x128xf32> to vector<8xf32>
    %577 = vector.shape_cast %576 : vector<8xf32> to vector<8x1xf32>
    %cst_160 = arith.constant 1.280000e+02 : f32
    %578 = vector.broadcast %cst_160 : f32 to vector<8x1xf32>
    %579 = arith.divf %577, %578 : vector<8x1xf32>
    %580 = vector.broadcast %579 : vector<8x1xf32> to vector<8x128xf32>
    %581 = arith.subf %575, %580 : vector<8x128xf32>
    %582 = arith.mulf %581, %581 : vector<8x128xf32>
    %cst_161 = arith.constant dense<0.000000e+00> : vector<8xf32>
    %583 = vector.multi_reduction <add>, %582, %cst_161 [1] : vector<8x128xf32> to vector<8xf32>
    %584 = vector.shape_cast %583 : vector<8xf32> to vector<8x1xf32>
    %cst_162 = arith.constant 1.280000e+02 : f32
    %585 = vector.broadcast %cst_162 : f32 to vector<8x1xf32>
    %586 = arith.divf %584, %585 : vector<8x1xf32>
    %587 = vector.broadcast %579 : vector<8x1xf32> to vector<8x128xf32>
    %588 = arith.subf %575, %587 : vector<8x128xf32>
    %cst_163 = arith.constant 9.99999974E-6 : f32
    %589 = vector.broadcast %cst_163 : f32 to vector<8x1xf32>
    %590 = arith.addf %586, %589 : vector<8x1xf32>
    %591 = math.rsqrt %590 : vector<8x1xf32>
    %592 = vector.broadcast %591 : vector<8x1xf32> to vector<8x128xf32>
    %593 = arith.mulf %588, %592 : vector<8x128xf32>
    %594 = vector.broadcast %410 : vector<1x128xf32> to vector<8x128xf32>
    %595 = arith.mulf %593, %594 : vector<8x128xf32>
    %596 = vector.broadcast %411 : vector<1x128xf32> to vector<8x128xf32>
    %597 = arith.addf %595, %596 : vector<8x128xf32>
    %c3 = arith.constant 3 : index
    %c0_164 = arith.constant 0 : index
    %c0_165 = arith.constant 0 : index
    %598 = vector.load %arg7[%c3, %c0_164, %c0_165] : memref<6x16x128xf32, #tpu.memory_space<vmem>>, vector<1x16x128xf32>
    %599 = vector.shape_cast %598 : vector<1x16x128xf32> to vector<16x128xf32>
    %600 = vector.extract_strided_slice %599 {offsets = [0, 0], sizes = [1, 128], strides = [1, 1]} : vector<16x128xf32> to vector<1x128xf32>
    %601 = vector.extract_strided_slice %599 {offsets = [1, 0], sizes = [1, 128], strides = [1, 1]} : vector<16x128xf32> to vector<1x128xf32>
    %602 = vector.extract_strided_slice %599 {offsets = [2, 0], sizes = [1, 128], strides = [1, 1]} : vector<16x128xf32> to vector<1x128xf32>
    %603 = vector.extract_strided_slice %599 {offsets = [3, 0], sizes = [1, 128], strides = [1, 1]} : vector<16x128xf32> to vector<1x128xf32>
    %604 = vector.extract_strided_slice %599 {offsets = [4, 0], sizes = [1, 128], strides = [1, 1]} : vector<16x128xf32> to vector<1x128xf32>
    %605 = vector.extract_strided_slice %599 {offsets = [5, 0], sizes = [1, 128], strides = [1, 1]} : vector<16x128xf32> to vector<1x128xf32>
    %606 = vector.extract_strided_slice %599 {offsets = [6, 0], sizes = [1, 128], strides = [1, 1]} : vector<16x128xf32> to vector<1x128xf32>
    %607 = vector.extract_strided_slice %599 {offsets = [7, 0], sizes = [1, 128], strides = [1, 1]} : vector<16x128xf32> to vector<1x128xf32>
    %608 = vector.extract_strided_slice %599 {offsets = [8, 0], sizes = [1, 128], strides = [1, 1]} : vector<16x128xf32> to vector<1x128xf32>
    %609 = vector.extract_strided_slice %599 {offsets = [9, 0], sizes = [1, 128], strides = [1, 1]} : vector<16x128xf32> to vector<1x128xf32>
    %610 = arith.truncf %597 : vector<8x128xf32> to vector<8x128xbf16>
    %c3_166 = arith.constant 3 : index
    %c0_167 = arith.constant 0 : index
    %c0_168 = arith.constant 0 : index
    %611 = vector.load %arg3[%c3_166, %c0_167, %c0_168] : memref<6x128x384xbf16, #tpu.memory_space<vmem>>, vector<1x128x384xbf16>
    %612 = vector.shape_cast %611 : vector<1x128x384xbf16> to vector<128x384xbf16>
    %cst_169 = arith.constant dense<0.000000e+00> : vector<8x384xf32>
    %613 = tpu.matmul %610, %612, %cst_169 {dimension_numbers = #tpu.dot_dimension_numbers<[1], [0], [0], [1], [0, 0, 1, 1], [], []>} : vector<8x128xbf16>, vector<128x384xbf16>, vector<8x384xf32> -> vector<8x384xf32>
    %614 = vector.extract_strided_slice %613 {offsets = [0, 0], sizes = [8, 128], strides = [1, 1]} : vector<8x384xf32> to vector<8x128xf32>
    %615 = vector.broadcast %600 : vector<1x128xf32> to vector<8x128xf32>
    %616 = arith.addf %614, %615 : vector<8x128xf32>
    %617 = vector.extract_strided_slice %613 {offsets = [0, 128], sizes = [8, 128], strides = [1, 1]} : vector<8x384xf32> to vector<8x128xf32>
    %618 = vector.broadcast %601 : vector<1x128xf32> to vector<8x128xf32>
    %619 = arith.addf %617, %618 : vector<8x128xf32>
    %620 = vector.extract_strided_slice %613 {offsets = [0, 256], sizes = [8, 128], strides = [1, 1]} : vector<8x384xf32> to vector<8x128xf32>
    %621 = vector.broadcast %602 : vector<1x128xf32> to vector<8x128xf32>
    %622 = arith.addf %620, %621 : vector<8x128xf32>
    %c3_170 = arith.constant 3 : index
    %c0_171 = arith.constant 0 : index
    %c0_172 = arith.constant 0 : index
    %623 = vector.load %arg4[%c3_170, %c0_171, %c0_172] : memref<6x128x128xbf16, #tpu.memory_space<vmem>>, vector<1x128x128xbf16>
    %624 = vector.shape_cast %623 : vector<1x128x128xbf16> to vector<128x128xbf16>
    %cst_173 = arith.constant 0.000000e+00 : f32
    %625 = vector.broadcast %cst_173 : f32 to vector<8x128xf32>
    %626 = vector.extract_strided_slice %616 {offsets = [0, 0], sizes = [8, 32], strides = [1, 1]} : vector<8x128xf32> to vector<8x32xf32>
    %627 = arith.truncf %626 : vector<8x32xf32> to vector<8x32xbf16>
    %628 = vector.extract_strided_slice %619 {offsets = [0, 0], sizes = [8, 32], strides = [1, 1]} : vector<8x128xf32> to vector<8x32xf32>
    %629 = arith.truncf %628 : vector<8x32xf32> to vector<8x32xbf16>
    %630 = vector.extract_strided_slice %622 {offsets = [0, 0], sizes = [8, 32], strides = [1, 1]} : vector<8x128xf32> to vector<8x32xf32>
    %631 = arith.truncf %630 : vector<8x32xf32> to vector<8x32xbf16>
    %cst_174 = arith.constant dense<0.000000e+00> : vector<8x8xf32>
    %632 = tpu.matmul %627, %629, %cst_174 {dimension_numbers = #tpu.dot_dimension_numbers<[1], [1], [0], [0], [0, 0, 1, 0], [], []>} : vector<8x32xbf16>, vector<8x32xbf16>, vector<8x8xf32> -> vector<8x8xf32>
    %cst_175 = arith.constant 0.176776692 : f32
    %633 = vector.broadcast %cst_175 : f32 to vector<8x8xf32>
    %634 = arith.mulf %632, %633 : vector<8x8xf32>
    %635 = vector.broadcast %3 : vector<1x8xf32> to vector<8x8xf32>
    %636 = arith.addf %634, %635 : vector<8x8xf32>
    %cst_176 = arith.constant dense<0xFF800000> : vector<8xf32>
    %637 = vector.multi_reduction <maximumf>, %636, %cst_176 [1] : vector<8x8xf32> to vector<8xf32>
    %638 = vector.shape_cast %637 : vector<8xf32> to vector<8x1xf32>
    %639 = vector.broadcast %638 : vector<8x1xf32> to vector<8x8xf32>
    %640 = arith.subf %636, %639 : vector<8x8xf32>
    %641 = math.exp %640 : vector<8x8xf32>
    %cst_177 = arith.constant dense<0.000000e+00> : vector<8xf32>
    %642 = vector.multi_reduction <add>, %641, %cst_177 [1] : vector<8x8xf32> to vector<8xf32>
    %643 = vector.shape_cast %642 : vector<8xf32> to vector<8x1xf32>
    %644 = tpu.reciprocal %643 {approx = true} : vector<8x1xf32> -> vector<8x1xf32>
    %645 = vector.broadcast %644 : vector<8x1xf32> to vector<8x8xf32>
    %646 = arith.mulf %641, %645 : vector<8x8xf32>
    %647 = arith.truncf %646 : vector<8x8xf32> to vector<8x8xbf16>
    %cst_178 = arith.constant dense<0.000000e+00> : vector<8x32xf32>
    %648 = tpu.matmul %647, %631, %cst_178 {dimension_numbers = #tpu.dot_dimension_numbers<[1], [0], [0], [1], [0, 0, 1, 1], [], []>} : vector<8x8xbf16>, vector<8x32xbf16>, vector<8x32xf32> -> vector<8x32xf32>
    %649 = arith.truncf %648 : vector<8x32xf32> to vector<8x32xbf16>
    %650 = vector.extract_strided_slice %624 {offsets = [0, 0], sizes = [32, 128], strides = [1, 1]} : vector<128x128xbf16> to vector<32x128xbf16>
    %cst_179 = arith.constant dense<0.000000e+00> : vector<8x128xf32>
    %651 = tpu.matmul %649, %650, %cst_179 {dimension_numbers = #tpu.dot_dimension_numbers<[1], [0], [0], [1], [0, 0, 1, 1], [], []>} : vector<8x32xbf16>, vector<32x128xbf16>, vector<8x128xf32> -> vector<8x128xf32>
    %652 = arith.addf %625, %651 : vector<8x128xf32>
    %653 = vector.extract_strided_slice %616 {offsets = [0, 32], sizes = [8, 32], strides = [1, 1]} : vector<8x128xf32> to vector<8x32xf32>
    %654 = arith.truncf %653 : vector<8x32xf32> to vector<8x32xbf16>
    %655 = vector.extract_strided_slice %619 {offsets = [0, 32], sizes = [8, 32], strides = [1, 1]} : vector<8x128xf32> to vector<8x32xf32>
    %656 = arith.truncf %655 : vector<8x32xf32> to vector<8x32xbf16>
    %657 = vector.extract_strided_slice %622 {offsets = [0, 32], sizes = [8, 32], strides = [1, 1]} : vector<8x128xf32> to vector<8x32xf32>
    %658 = arith.truncf %657 : vector<8x32xf32> to vector<8x32xbf16>
    %cst_180 = arith.constant dense<0.000000e+00> : vector<8x8xf32>
    %659 = tpu.matmul %654, %656, %cst_180 {dimension_numbers = #tpu.dot_dimension_numbers<[1], [1], [0], [0], [0, 0, 1, 0], [], []>} : vector<8x32xbf16>, vector<8x32xbf16>, vector<8x8xf32> -> vector<8x8xf32>
    %cst_181 = arith.constant 0.176776692 : f32
    %660 = vector.broadcast %cst_181 : f32 to vector<8x8xf32>
    %661 = arith.mulf %659, %660 : vector<8x8xf32>
    %662 = vector.broadcast %3 : vector<1x8xf32> to vector<8x8xf32>
    %663 = arith.addf %661, %662 : vector<8x8xf32>
    %cst_182 = arith.constant dense<0xFF800000> : vector<8xf32>
    %664 = vector.multi_reduction <maximumf>, %663, %cst_182 [1] : vector<8x8xf32> to vector<8xf32>
    %665 = vector.shape_cast %664 : vector<8xf32> to vector<8x1xf32>
    %666 = vector.broadcast %665 : vector<8x1xf32> to vector<8x8xf32>
    %667 = arith.subf %663, %666 : vector<8x8xf32>
    %668 = math.exp %667 : vector<8x8xf32>
    %cst_183 = arith.constant dense<0.000000e+00> : vector<8xf32>
    %669 = vector.multi_reduction <add>, %668, %cst_183 [1] : vector<8x8xf32> to vector<8xf32>
    %670 = vector.shape_cast %669 : vector<8xf32> to vector<8x1xf32>
    %671 = tpu.reciprocal %670 {approx = true} : vector<8x1xf32> -> vector<8x1xf32>
    %672 = vector.broadcast %671 : vector<8x1xf32> to vector<8x8xf32>
    %673 = arith.mulf %668, %672 : vector<8x8xf32>
    %674 = arith.truncf %673 : vector<8x8xf32> to vector<8x8xbf16>
    %cst_184 = arith.constant dense<0.000000e+00> : vector<8x32xf32>
    %675 = tpu.matmul %674, %658, %cst_184 {dimension_numbers = #tpu.dot_dimension_numbers<[1], [0], [0], [1], [0, 0, 1, 1], [], []>} : vector<8x8xbf16>, vector<8x32xbf16>, vector<8x32xf32> -> vector<8x32xf32>
    %676 = arith.truncf %675 : vector<8x32xf32> to vector<8x32xbf16>
    %677 = vector.extract_strided_slice %624 {offsets = [32, 0], sizes = [32, 128], strides = [1, 1]} : vector<128x128xbf16> to vector<32x128xbf16>
    %cst_185 = arith.constant dense<0.000000e+00> : vector<8x128xf32>
    %678 = tpu.matmul %676, %677, %cst_185 {dimension_numbers = #tpu.dot_dimension_numbers<[1], [0], [0], [1], [0, 0, 1, 1], [], []>} : vector<8x32xbf16>, vector<32x128xbf16>, vector<8x128xf32> -> vector<8x128xf32>
    %679 = arith.addf %652, %678 : vector<8x128xf32>
    %680 = vector.extract_strided_slice %616 {offsets = [0, 64], sizes = [8, 32], strides = [1, 1]} : vector<8x128xf32> to vector<8x32xf32>
    %681 = arith.truncf %680 : vector<8x32xf32> to vector<8x32xbf16>
    %682 = vector.extract_strided_slice %619 {offsets = [0, 64], sizes = [8, 32], strides = [1, 1]} : vector<8x128xf32> to vector<8x32xf32>
    %683 = arith.truncf %682 : vector<8x32xf32> to vector<8x32xbf16>
    %684 = vector.extract_strided_slice %622 {offsets = [0, 64], sizes = [8, 32], strides = [1, 1]} : vector<8x128xf32> to vector<8x32xf32>
    %685 = arith.truncf %684 : vector<8x32xf32> to vector<8x32xbf16>
    %cst_186 = arith.constant dense<0.000000e+00> : vector<8x8xf32>
    %686 = tpu.matmul %681, %683, %cst_186 {dimension_numbers = #tpu.dot_dimension_numbers<[1], [1], [0], [0], [0, 0, 1, 0], [], []>} : vector<8x32xbf16>, vector<8x32xbf16>, vector<8x8xf32> -> vector<8x8xf32>
    %cst_187 = arith.constant 0.176776692 : f32
    %687 = vector.broadcast %cst_187 : f32 to vector<8x8xf32>
    %688 = arith.mulf %686, %687 : vector<8x8xf32>
    %689 = vector.broadcast %3 : vector<1x8xf32> to vector<8x8xf32>
    %690 = arith.addf %688, %689 : vector<8x8xf32>
    %cst_188 = arith.constant dense<0xFF800000> : vector<8xf32>
    %691 = vector.multi_reduction <maximumf>, %690, %cst_188 [1] : vector<8x8xf32> to vector<8xf32>
    %692 = vector.shape_cast %691 : vector<8xf32> to vector<8x1xf32>
    %693 = vector.broadcast %692 : vector<8x1xf32> to vector<8x8xf32>
    %694 = arith.subf %690, %693 : vector<8x8xf32>
    %695 = math.exp %694 : vector<8x8xf32>
    %cst_189 = arith.constant dense<0.000000e+00> : vector<8xf32>
    %696 = vector.multi_reduction <add>, %695, %cst_189 [1] : vector<8x8xf32> to vector<8xf32>
    %697 = vector.shape_cast %696 : vector<8xf32> to vector<8x1xf32>
    %698 = tpu.reciprocal %697 {approx = true} : vector<8x1xf32> -> vector<8x1xf32>
    %699 = vector.broadcast %698 : vector<8x1xf32> to vector<8x8xf32>
    %700 = arith.mulf %695, %699 : vector<8x8xf32>
    %701 = arith.truncf %700 : vector<8x8xf32> to vector<8x8xbf16>
    %cst_190 = arith.constant dense<0.000000e+00> : vector<8x32xf32>
    %702 = tpu.matmul %701, %685, %cst_190 {dimension_numbers = #tpu.dot_dimension_numbers<[1], [0], [0], [1], [0, 0, 1, 1], [], []>} : vector<8x8xbf16>, vector<8x32xbf16>, vector<8x32xf32> -> vector<8x32xf32>
    %703 = arith.truncf %702 : vector<8x32xf32> to vector<8x32xbf16>
    %704 = vector.extract_strided_slice %624 {offsets = [64, 0], sizes = [32, 128], strides = [1, 1]} : vector<128x128xbf16> to vector<32x128xbf16>
    %cst_191 = arith.constant dense<0.000000e+00> : vector<8x128xf32>
    %705 = tpu.matmul %703, %704, %cst_191 {dimension_numbers = #tpu.dot_dimension_numbers<[1], [0], [0], [1], [0, 0, 1, 1], [], []>} : vector<8x32xbf16>, vector<32x128xbf16>, vector<8x128xf32> -> vector<8x128xf32>
    %706 = arith.addf %679, %705 : vector<8x128xf32>
    %707 = vector.extract_strided_slice %616 {offsets = [0, 96], sizes = [8, 32], strides = [1, 1]} : vector<8x128xf32> to vector<8x32xf32>
    %708 = arith.truncf %707 : vector<8x32xf32> to vector<8x32xbf16>
    %709 = vector.extract_strided_slice %619 {offsets = [0, 96], sizes = [8, 32], strides = [1, 1]} : vector<8x128xf32> to vector<8x32xf32>
    %710 = arith.truncf %709 : vector<8x32xf32> to vector<8x32xbf16>
    %711 = vector.extract_strided_slice %622 {offsets = [0, 96], sizes = [8, 32], strides = [1, 1]} : vector<8x128xf32> to vector<8x32xf32>
    %712 = arith.truncf %711 : vector<8x32xf32> to vector<8x32xbf16>
    %cst_192 = arith.constant dense<0.000000e+00> : vector<8x8xf32>
    %713 = tpu.matmul %708, %710, %cst_192 {dimension_numbers = #tpu.dot_dimension_numbers<[1], [1], [0], [0], [0, 0, 1, 0], [], []>} : vector<8x32xbf16>, vector<8x32xbf16>, vector<8x8xf32> -> vector<8x8xf32>
    %cst_193 = arith.constant 0.176776692 : f32
    %714 = vector.broadcast %cst_193 : f32 to vector<8x8xf32>
    %715 = arith.mulf %713, %714 : vector<8x8xf32>
    %716 = vector.broadcast %3 : vector<1x8xf32> to vector<8x8xf32>
    %717 = arith.addf %715, %716 : vector<8x8xf32>
    %cst_194 = arith.constant dense<0xFF800000> : vector<8xf32>
    %718 = vector.multi_reduction <maximumf>, %717, %cst_194 [1] : vector<8x8xf32> to vector<8xf32>
    %719 = vector.shape_cast %718 : vector<8xf32> to vector<8x1xf32>
    %720 = vector.broadcast %719 : vector<8x1xf32> to vector<8x8xf32>
    %721 = arith.subf %717, %720 : vector<8x8xf32>
    %722 = math.exp %721 : vector<8x8xf32>
    %cst_195 = arith.constant dense<0.000000e+00> : vector<8xf32>
    %723 = vector.multi_reduction <add>, %722, %cst_195 [1] : vector<8x8xf32> to vector<8xf32>
    %724 = vector.shape_cast %723 : vector<8xf32> to vector<8x1xf32>
    %725 = tpu.reciprocal %724 {approx = true} : vector<8x1xf32> -> vector<8x1xf32>
    %726 = vector.broadcast %725 : vector<8x1xf32> to vector<8x8xf32>
    %727 = arith.mulf %722, %726 : vector<8x8xf32>
    %728 = arith.truncf %727 : vector<8x8xf32> to vector<8x8xbf16>
    %cst_196 = arith.constant dense<0.000000e+00> : vector<8x32xf32>
    %729 = tpu.matmul %728, %712, %cst_196 {dimension_numbers = #tpu.dot_dimension_numbers<[1], [0], [0], [1], [0, 0, 1, 1], [], []>} : vector<8x8xbf16>, vector<8x32xbf16>, vector<8x32xf32> -> vector<8x32xf32>
    %730 = arith.truncf %729 : vector<8x32xf32> to vector<8x32xbf16>
    %731 = vector.extract_strided_slice %624 {offsets = [96, 0], sizes = [32, 128], strides = [1, 1]} : vector<128x128xbf16> to vector<32x128xbf16>
    %cst_197 = arith.constant dense<0.000000e+00> : vector<8x128xf32>
    %732 = tpu.matmul %730, %731, %cst_197 {dimension_numbers = #tpu.dot_dimension_numbers<[1], [0], [0], [1], [0, 0, 1, 1], [], []>} : vector<8x32xbf16>, vector<32x128xbf16>, vector<8x128xf32> -> vector<8x128xf32>
    %733 = arith.addf %706, %732 : vector<8x128xf32>
    %734 = vector.broadcast %603 : vector<1x128xf32> to vector<8x128xf32>
    %735 = arith.addf %733, %734 : vector<8x128xf32>
    %736 = arith.addf %597, %735 : vector<8x128xf32>
    %cst_198 = arith.constant dense<0.000000e+00> : vector<8xf32>
    %737 = vector.multi_reduction <add>, %736, %cst_198 [1] : vector<8x128xf32> to vector<8xf32>
    %738 = vector.shape_cast %737 : vector<8xf32> to vector<8x1xf32>
    %cst_199 = arith.constant 1.280000e+02 : f32
    %739 = vector.broadcast %cst_199 : f32 to vector<8x1xf32>
    %740 = arith.divf %738, %739 : vector<8x1xf32>
    %741 = vector.broadcast %740 : vector<8x1xf32> to vector<8x128xf32>
    %742 = arith.subf %736, %741 : vector<8x128xf32>
    %743 = arith.mulf %742, %742 : vector<8x128xf32>
    %cst_200 = arith.constant dense<0.000000e+00> : vector<8xf32>
    %744 = vector.multi_reduction <add>, %743, %cst_200 [1] : vector<8x128xf32> to vector<8xf32>
    %745 = vector.shape_cast %744 : vector<8xf32> to vector<8x1xf32>
    %cst_201 = arith.constant 1.280000e+02 : f32
    %746 = vector.broadcast %cst_201 : f32 to vector<8x1xf32>
    %747 = arith.divf %745, %746 : vector<8x1xf32>
    %748 = vector.broadcast %740 : vector<8x1xf32> to vector<8x128xf32>
    %749 = arith.subf %736, %748 : vector<8x128xf32>
    %cst_202 = arith.constant 9.99999974E-6 : f32
    %750 = vector.broadcast %cst_202 : f32 to vector<8x1xf32>
    %751 = arith.addf %747, %750 : vector<8x1xf32>
    %752 = math.rsqrt %751 : vector<8x1xf32>
    %753 = vector.broadcast %752 : vector<8x1xf32> to vector<8x128xf32>
    %754 = arith.mulf %749, %753 : vector<8x128xf32>
    %755 = vector.broadcast %606 : vector<1x128xf32> to vector<8x128xf32>
    %756 = arith.mulf %754, %755 : vector<8x128xf32>
    %757 = vector.broadcast %607 : vector<1x128xf32> to vector<8x128xf32>
    %758 = arith.addf %756, %757 : vector<8x128xf32>
    %759 = arith.truncf %758 : vector<8x128xf32> to vector<8x128xbf16>
    %c3_203 = arith.constant 3 : index
    %c0_204 = arith.constant 0 : index
    %c0_205 = arith.constant 0 : index
    %760 = vector.load %arg5[%c3_203, %c0_204, %c0_205] : memref<6x128x128xbf16, #tpu.memory_space<vmem>>, vector<1x128x128xbf16>
    %761 = vector.shape_cast %760 : vector<1x128x128xbf16> to vector<128x128xbf16>
    %cst_206 = arith.constant dense<0.000000e+00> : vector<8x128xf32>
    %762 = tpu.matmul %759, %761, %cst_206 {dimension_numbers = #tpu.dot_dimension_numbers<[1], [0], [0], [1], [0, 0, 1, 1], [], []>} : vector<8x128xbf16>, vector<128x128xbf16>, vector<8x128xf32> -> vector<8x128xf32>
    %763 = vector.broadcast %604 : vector<1x128xf32> to vector<8x128xf32>
    %764 = arith.addf %762, %763 : vector<8x128xf32>
    %cst_207 = arith.constant 0.000000e+00 : f32
    %765 = vector.broadcast %cst_207 : f32 to vector<8x128xf32>
    %766 = arith.maximumf %764, %765 : vector<8x128xf32>
    %767 = arith.truncf %766 : vector<8x128xf32> to vector<8x128xbf16>
    %c3_208 = arith.constant 3 : index
    %c0_209 = arith.constant 0 : index
    %c0_210 = arith.constant 0 : index
    %768 = vector.load %arg6[%c3_208, %c0_209, %c0_210] : memref<6x128x128xbf16, #tpu.memory_space<vmem>>, vector<1x128x128xbf16>
    %769 = vector.shape_cast %768 : vector<1x128x128xbf16> to vector<128x128xbf16>
    %cst_211 = arith.constant dense<0.000000e+00> : vector<8x128xf32>
    %770 = tpu.matmul %767, %769, %cst_211 {dimension_numbers = #tpu.dot_dimension_numbers<[1], [0], [0], [1], [0, 0, 1, 1], [], []>} : vector<8x128xbf16>, vector<128x128xbf16>, vector<8x128xf32> -> vector<8x128xf32>
    %771 = vector.broadcast %605 : vector<1x128xf32> to vector<8x128xf32>
    %772 = arith.addf %770, %771 : vector<8x128xf32>
    %773 = arith.addf %758, %772 : vector<8x128xf32>
    %cst_212 = arith.constant dense<0.000000e+00> : vector<8xf32>
    %774 = vector.multi_reduction <add>, %773, %cst_212 [1] : vector<8x128xf32> to vector<8xf32>
    %775 = vector.shape_cast %774 : vector<8xf32> to vector<8x1xf32>
    %cst_213 = arith.constant 1.280000e+02 : f32
    %776 = vector.broadcast %cst_213 : f32 to vector<8x1xf32>
    %777 = arith.divf %775, %776 : vector<8x1xf32>
    %778 = vector.broadcast %777 : vector<8x1xf32> to vector<8x128xf32>
    %779 = arith.subf %773, %778 : vector<8x128xf32>
    %780 = arith.mulf %779, %779 : vector<8x128xf32>
    %cst_214 = arith.constant dense<0.000000e+00> : vector<8xf32>
    %781 = vector.multi_reduction <add>, %780, %cst_214 [1] : vector<8x128xf32> to vector<8xf32>
    %782 = vector.shape_cast %781 : vector<8xf32> to vector<8x1xf32>
    %cst_215 = arith.constant 1.280000e+02 : f32
    %783 = vector.broadcast %cst_215 : f32 to vector<8x1xf32>
    %784 = arith.divf %782, %783 : vector<8x1xf32>
    %785 = vector.broadcast %777 : vector<8x1xf32> to vector<8x128xf32>
    %786 = arith.subf %773, %785 : vector<8x128xf32>
    %cst_216 = arith.constant 9.99999974E-6 : f32
    %787 = vector.broadcast %cst_216 : f32 to vector<8x1xf32>
    %788 = arith.addf %784, %787 : vector<8x1xf32>
    %789 = math.rsqrt %788 : vector<8x1xf32>
    %790 = vector.broadcast %789 : vector<8x1xf32> to vector<8x128xf32>
    %791 = arith.mulf %786, %790 : vector<8x128xf32>
    %792 = vector.broadcast %608 : vector<1x128xf32> to vector<8x128xf32>
    %793 = arith.mulf %791, %792 : vector<8x128xf32>
    %794 = vector.broadcast %609 : vector<1x128xf32> to vector<8x128xf32>
    %795 = arith.addf %793, %794 : vector<8x128xf32>
    %c4 = arith.constant 4 : index
    %c0_217 = arith.constant 0 : index
    %c0_218 = arith.constant 0 : index
    %796 = vector.load %arg7[%c4, %c0_217, %c0_218] : memref<6x16x128xf32, #tpu.memory_space<vmem>>, vector<1x16x128xf32>
    %797 = vector.shape_cast %796 : vector<1x16x128xf32> to vector<16x128xf32>
    %798 = vector.extract_strided_slice %797 {offsets = [0, 0], sizes = [1, 128], strides = [1, 1]} : vector<16x128xf32> to vector<1x128xf32>
    %799 = vector.extract_strided_slice %797 {offsets = [1, 0], sizes = [1, 128], strides = [1, 1]} : vector<16x128xf32> to vector<1x128xf32>
    %800 = vector.extract_strided_slice %797 {offsets = [2, 0], sizes = [1, 128], strides = [1, 1]} : vector<16x128xf32> to vector<1x128xf32>
    %801 = vector.extract_strided_slice %797 {offsets = [3, 0], sizes = [1, 128], strides = [1, 1]} : vector<16x128xf32> to vector<1x128xf32>
    %802 = vector.extract_strided_slice %797 {offsets = [4, 0], sizes = [1, 128], strides = [1, 1]} : vector<16x128xf32> to vector<1x128xf32>
    %803 = vector.extract_strided_slice %797 {offsets = [5, 0], sizes = [1, 128], strides = [1, 1]} : vector<16x128xf32> to vector<1x128xf32>
    %804 = vector.extract_strided_slice %797 {offsets = [6, 0], sizes = [1, 128], strides = [1, 1]} : vector<16x128xf32> to vector<1x128xf32>
    %805 = vector.extract_strided_slice %797 {offsets = [7, 0], sizes = [1, 128], strides = [1, 1]} : vector<16x128xf32> to vector<1x128xf32>
    %806 = vector.extract_strided_slice %797 {offsets = [8, 0], sizes = [1, 128], strides = [1, 1]} : vector<16x128xf32> to vector<1x128xf32>
    %807 = vector.extract_strided_slice %797 {offsets = [9, 0], sizes = [1, 128], strides = [1, 1]} : vector<16x128xf32> to vector<1x128xf32>
    %808 = arith.truncf %795 : vector<8x128xf32> to vector<8x128xbf16>
    %c4_219 = arith.constant 4 : index
    %c0_220 = arith.constant 0 : index
    %c0_221 = arith.constant 0 : index
    %809 = vector.load %arg3[%c4_219, %c0_220, %c0_221] : memref<6x128x384xbf16, #tpu.memory_space<vmem>>, vector<1x128x384xbf16>
    %810 = vector.shape_cast %809 : vector<1x128x384xbf16> to vector<128x384xbf16>
    %cst_222 = arith.constant dense<0.000000e+00> : vector<8x384xf32>
    %811 = tpu.matmul %808, %810, %cst_222 {dimension_numbers = #tpu.dot_dimension_numbers<[1], [0], [0], [1], [0, 0, 1, 1], [], []>} : vector<8x128xbf16>, vector<128x384xbf16>, vector<8x384xf32> -> vector<8x384xf32>
    %812 = vector.extract_strided_slice %811 {offsets = [0, 0], sizes = [8, 128], strides = [1, 1]} : vector<8x384xf32> to vector<8x128xf32>
    %813 = vector.broadcast %798 : vector<1x128xf32> to vector<8x128xf32>
    %814 = arith.addf %812, %813 : vector<8x128xf32>
    %815 = vector.extract_strided_slice %811 {offsets = [0, 128], sizes = [8, 128], strides = [1, 1]} : vector<8x384xf32> to vector<8x128xf32>
    %816 = vector.broadcast %799 : vector<1x128xf32> to vector<8x128xf32>
    %817 = arith.addf %815, %816 : vector<8x128xf32>
    %818 = vector.extract_strided_slice %811 {offsets = [0, 256], sizes = [8, 128], strides = [1, 1]} : vector<8x384xf32> to vector<8x128xf32>
    %819 = vector.broadcast %800 : vector<1x128xf32> to vector<8x128xf32>
    %820 = arith.addf %818, %819 : vector<8x128xf32>
    %c4_223 = arith.constant 4 : index
    %c0_224 = arith.constant 0 : index
    %c0_225 = arith.constant 0 : index
    %821 = vector.load %arg4[%c4_223, %c0_224, %c0_225] : memref<6x128x128xbf16, #tpu.memory_space<vmem>>, vector<1x128x128xbf16>
    %822 = vector.shape_cast %821 : vector<1x128x128xbf16> to vector<128x128xbf16>
    %cst_226 = arith.constant 0.000000e+00 : f32
    %823 = vector.broadcast %cst_226 : f32 to vector<8x128xf32>
    %824 = vector.extract_strided_slice %814 {offsets = [0, 0], sizes = [8, 32], strides = [1, 1]} : vector<8x128xf32> to vector<8x32xf32>
    %825 = arith.truncf %824 : vector<8x32xf32> to vector<8x32xbf16>
    %826 = vector.extract_strided_slice %817 {offsets = [0, 0], sizes = [8, 32], strides = [1, 1]} : vector<8x128xf32> to vector<8x32xf32>
    %827 = arith.truncf %826 : vector<8x32xf32> to vector<8x32xbf16>
    %828 = vector.extract_strided_slice %820 {offsets = [0, 0], sizes = [8, 32], strides = [1, 1]} : vector<8x128xf32> to vector<8x32xf32>
    %829 = arith.truncf %828 : vector<8x32xf32> to vector<8x32xbf16>
    %cst_227 = arith.constant dense<0.000000e+00> : vector<8x8xf32>
    %830 = tpu.matmul %825, %827, %cst_227 {dimension_numbers = #tpu.dot_dimension_numbers<[1], [1], [0], [0], [0, 0, 1, 0], [], []>} : vector<8x32xbf16>, vector<8x32xbf16>, vector<8x8xf32> -> vector<8x8xf32>
    %cst_228 = arith.constant 0.176776692 : f32
    %831 = vector.broadcast %cst_228 : f32 to vector<8x8xf32>
    %832 = arith.mulf %830, %831 : vector<8x8xf32>
    %833 = vector.broadcast %3 : vector<1x8xf32> to vector<8x8xf32>
    %834 = arith.addf %832, %833 : vector<8x8xf32>
    %cst_229 = arith.constant dense<0xFF800000> : vector<8xf32>
    %835 = vector.multi_reduction <maximumf>, %834, %cst_229 [1] : vector<8x8xf32> to vector<8xf32>
    %836 = vector.shape_cast %835 : vector<8xf32> to vector<8x1xf32>
    %837 = vector.broadcast %836 : vector<8x1xf32> to vector<8x8xf32>
    %838 = arith.subf %834, %837 : vector<8x8xf32>
    %839 = math.exp %838 : vector<8x8xf32>
    %cst_230 = arith.constant dense<0.000000e+00> : vector<8xf32>
    %840 = vector.multi_reduction <add>, %839, %cst_230 [1] : vector<8x8xf32> to vector<8xf32>
    %841 = vector.shape_cast %840 : vector<8xf32> to vector<8x1xf32>
    %842 = tpu.reciprocal %841 {approx = true} : vector<8x1xf32> -> vector<8x1xf32>
    %843 = vector.broadcast %842 : vector<8x1xf32> to vector<8x8xf32>
    %844 = arith.mulf %839, %843 : vector<8x8xf32>
    %845 = arith.truncf %844 : vector<8x8xf32> to vector<8x8xbf16>
    %cst_231 = arith.constant dense<0.000000e+00> : vector<8x32xf32>
    %846 = tpu.matmul %845, %829, %cst_231 {dimension_numbers = #tpu.dot_dimension_numbers<[1], [0], [0], [1], [0, 0, 1, 1], [], []>} : vector<8x8xbf16>, vector<8x32xbf16>, vector<8x32xf32> -> vector<8x32xf32>
    %847 = arith.truncf %846 : vector<8x32xf32> to vector<8x32xbf16>
    %848 = vector.extract_strided_slice %822 {offsets = [0, 0], sizes = [32, 128], strides = [1, 1]} : vector<128x128xbf16> to vector<32x128xbf16>
    %cst_232 = arith.constant dense<0.000000e+00> : vector<8x128xf32>
    %849 = tpu.matmul %847, %848, %cst_232 {dimension_numbers = #tpu.dot_dimension_numbers<[1], [0], [0], [1], [0, 0, 1, 1], [], []>} : vector<8x32xbf16>, vector<32x128xbf16>, vector<8x128xf32> -> vector<8x128xf32>
    %850 = arith.addf %823, %849 : vector<8x128xf32>
    %851 = vector.extract_strided_slice %814 {offsets = [0, 32], sizes = [8, 32], strides = [1, 1]} : vector<8x128xf32> to vector<8x32xf32>
    %852 = arith.truncf %851 : vector<8x32xf32> to vector<8x32xbf16>
    %853 = vector.extract_strided_slice %817 {offsets = [0, 32], sizes = [8, 32], strides = [1, 1]} : vector<8x128xf32> to vector<8x32xf32>
    %854 = arith.truncf %853 : vector<8x32xf32> to vector<8x32xbf16>
    %855 = vector.extract_strided_slice %820 {offsets = [0, 32], sizes = [8, 32], strides = [1, 1]} : vector<8x128xf32> to vector<8x32xf32>
    %856 = arith.truncf %855 : vector<8x32xf32> to vector<8x32xbf16>
    %cst_233 = arith.constant dense<0.000000e+00> : vector<8x8xf32>
    %857 = tpu.matmul %852, %854, %cst_233 {dimension_numbers = #tpu.dot_dimension_numbers<[1], [1], [0], [0], [0, 0, 1, 0], [], []>} : vector<8x32xbf16>, vector<8x32xbf16>, vector<8x8xf32> -> vector<8x8xf32>
    %cst_234 = arith.constant 0.176776692 : f32
    %858 = vector.broadcast %cst_234 : f32 to vector<8x8xf32>
    %859 = arith.mulf %857, %858 : vector<8x8xf32>
    %860 = vector.broadcast %3 : vector<1x8xf32> to vector<8x8xf32>
    %861 = arith.addf %859, %860 : vector<8x8xf32>
    %cst_235 = arith.constant dense<0xFF800000> : vector<8xf32>
    %862 = vector.multi_reduction <maximumf>, %861, %cst_235 [1] : vector<8x8xf32> to vector<8xf32>
    %863 = vector.shape_cast %862 : vector<8xf32> to vector<8x1xf32>
    %864 = vector.broadcast %863 : vector<8x1xf32> to vector<8x8xf32>
    %865 = arith.subf %861, %864 : vector<8x8xf32>
    %866 = math.exp %865 : vector<8x8xf32>
    %cst_236 = arith.constant dense<0.000000e+00> : vector<8xf32>
    %867 = vector.multi_reduction <add>, %866, %cst_236 [1] : vector<8x8xf32> to vector<8xf32>
    %868 = vector.shape_cast %867 : vector<8xf32> to vector<8x1xf32>
    %869 = tpu.reciprocal %868 {approx = true} : vector<8x1xf32> -> vector<8x1xf32>
    %870 = vector.broadcast %869 : vector<8x1xf32> to vector<8x8xf32>
    %871 = arith.mulf %866, %870 : vector<8x8xf32>
    %872 = arith.truncf %871 : vector<8x8xf32> to vector<8x8xbf16>
    %cst_237 = arith.constant dense<0.000000e+00> : vector<8x32xf32>
    %873 = tpu.matmul %872, %856, %cst_237 {dimension_numbers = #tpu.dot_dimension_numbers<[1], [0], [0], [1], [0, 0, 1, 1], [], []>} : vector<8x8xbf16>, vector<8x32xbf16>, vector<8x32xf32> -> vector<8x32xf32>
    %874 = arith.truncf %873 : vector<8x32xf32> to vector<8x32xbf16>
    %875 = vector.extract_strided_slice %822 {offsets = [32, 0], sizes = [32, 128], strides = [1, 1]} : vector<128x128xbf16> to vector<32x128xbf16>
    %cst_238 = arith.constant dense<0.000000e+00> : vector<8x128xf32>
    %876 = tpu.matmul %874, %875, %cst_238 {dimension_numbers = #tpu.dot_dimension_numbers<[1], [0], [0], [1], [0, 0, 1, 1], [], []>} : vector<8x32xbf16>, vector<32x128xbf16>, vector<8x128xf32> -> vector<8x128xf32>
    %877 = arith.addf %850, %876 : vector<8x128xf32>
    %878 = vector.extract_strided_slice %814 {offsets = [0, 64], sizes = [8, 32], strides = [1, 1]} : vector<8x128xf32> to vector<8x32xf32>
    %879 = arith.truncf %878 : vector<8x32xf32> to vector<8x32xbf16>
    %880 = vector.extract_strided_slice %817 {offsets = [0, 64], sizes = [8, 32], strides = [1, 1]} : vector<8x128xf32> to vector<8x32xf32>
    %881 = arith.truncf %880 : vector<8x32xf32> to vector<8x32xbf16>
    %882 = vector.extract_strided_slice %820 {offsets = [0, 64], sizes = [8, 32], strides = [1, 1]} : vector<8x128xf32> to vector<8x32xf32>
    %883 = arith.truncf %882 : vector<8x32xf32> to vector<8x32xbf16>
    %cst_239 = arith.constant dense<0.000000e+00> : vector<8x8xf32>
    %884 = tpu.matmul %879, %881, %cst_239 {dimension_numbers = #tpu.dot_dimension_numbers<[1], [1], [0], [0], [0, 0, 1, 0], [], []>} : vector<8x32xbf16>, vector<8x32xbf16>, vector<8x8xf32> -> vector<8x8xf32>
    %cst_240 = arith.constant 0.176776692 : f32
    %885 = vector.broadcast %cst_240 : f32 to vector<8x8xf32>
    %886 = arith.mulf %884, %885 : vector<8x8xf32>
    %887 = vector.broadcast %3 : vector<1x8xf32> to vector<8x8xf32>
    %888 = arith.addf %886, %887 : vector<8x8xf32>
    %cst_241 = arith.constant dense<0xFF800000> : vector<8xf32>
    %889 = vector.multi_reduction <maximumf>, %888, %cst_241 [1] : vector<8x8xf32> to vector<8xf32>
    %890 = vector.shape_cast %889 : vector<8xf32> to vector<8x1xf32>
    %891 = vector.broadcast %890 : vector<8x1xf32> to vector<8x8xf32>
    %892 = arith.subf %888, %891 : vector<8x8xf32>
    %893 = math.exp %892 : vector<8x8xf32>
    %cst_242 = arith.constant dense<0.000000e+00> : vector<8xf32>
    %894 = vector.multi_reduction <add>, %893, %cst_242 [1] : vector<8x8xf32> to vector<8xf32>
    %895 = vector.shape_cast %894 : vector<8xf32> to vector<8x1xf32>
    %896 = tpu.reciprocal %895 {approx = true} : vector<8x1xf32> -> vector<8x1xf32>
    %897 = vector.broadcast %896 : vector<8x1xf32> to vector<8x8xf32>
    %898 = arith.mulf %893, %897 : vector<8x8xf32>
    %899 = arith.truncf %898 : vector<8x8xf32> to vector<8x8xbf16>
    %cst_243 = arith.constant dense<0.000000e+00> : vector<8x32xf32>
    %900 = tpu.matmul %899, %883, %cst_243 {dimension_numbers = #tpu.dot_dimension_numbers<[1], [0], [0], [1], [0, 0, 1, 1], [], []>} : vector<8x8xbf16>, vector<8x32xbf16>, vector<8x32xf32> -> vector<8x32xf32>
    %901 = arith.truncf %900 : vector<8x32xf32> to vector<8x32xbf16>
    %902 = vector.extract_strided_slice %822 {offsets = [64, 0], sizes = [32, 128], strides = [1, 1]} : vector<128x128xbf16> to vector<32x128xbf16>
    %cst_244 = arith.constant dense<0.000000e+00> : vector<8x128xf32>
    %903 = tpu.matmul %901, %902, %cst_244 {dimension_numbers = #tpu.dot_dimension_numbers<[1], [0], [0], [1], [0, 0, 1, 1], [], []>} : vector<8x32xbf16>, vector<32x128xbf16>, vector<8x128xf32> -> vector<8x128xf32>
    %904 = arith.addf %877, %903 : vector<8x128xf32>
    %905 = vector.extract_strided_slice %814 {offsets = [0, 96], sizes = [8, 32], strides = [1, 1]} : vector<8x128xf32> to vector<8x32xf32>
    %906 = arith.truncf %905 : vector<8x32xf32> to vector<8x32xbf16>
    %907 = vector.extract_strided_slice %817 {offsets = [0, 96], sizes = [8, 32], strides = [1, 1]} : vector<8x128xf32> to vector<8x32xf32>
    %908 = arith.truncf %907 : vector<8x32xf32> to vector<8x32xbf16>
    %909 = vector.extract_strided_slice %820 {offsets = [0, 96], sizes = [8, 32], strides = [1, 1]} : vector<8x128xf32> to vector<8x32xf32>
    %910 = arith.truncf %909 : vector<8x32xf32> to vector<8x32xbf16>
    %cst_245 = arith.constant dense<0.000000e+00> : vector<8x8xf32>
    %911 = tpu.matmul %906, %908, %cst_245 {dimension_numbers = #tpu.dot_dimension_numbers<[1], [1], [0], [0], [0, 0, 1, 0], [], []>} : vector<8x32xbf16>, vector<8x32xbf16>, vector<8x8xf32> -> vector<8x8xf32>
    %cst_246 = arith.constant 0.176776692 : f32
    %912 = vector.broadcast %cst_246 : f32 to vector<8x8xf32>
    %913 = arith.mulf %911, %912 : vector<8x8xf32>
    %914 = vector.broadcast %3 : vector<1x8xf32> to vector<8x8xf32>
    %915 = arith.addf %913, %914 : vector<8x8xf32>
    %cst_247 = arith.constant dense<0xFF800000> : vector<8xf32>
    %916 = vector.multi_reduction <maximumf>, %915, %cst_247 [1] : vector<8x8xf32> to vector<8xf32>
    %917 = vector.shape_cast %916 : vector<8xf32> to vector<8x1xf32>
    %918 = vector.broadcast %917 : vector<8x1xf32> to vector<8x8xf32>
    %919 = arith.subf %915, %918 : vector<8x8xf32>
    %920 = math.exp %919 : vector<8x8xf32>
    %cst_248 = arith.constant dense<0.000000e+00> : vector<8xf32>
    %921 = vector.multi_reduction <add>, %920, %cst_248 [1] : vector<8x8xf32> to vector<8xf32>
    %922 = vector.shape_cast %921 : vector<8xf32> to vector<8x1xf32>
    %923 = tpu.reciprocal %922 {approx = true} : vector<8x1xf32> -> vector<8x1xf32>
    %924 = vector.broadcast %923 : vector<8x1xf32> to vector<8x8xf32>
    %925 = arith.mulf %920, %924 : vector<8x8xf32>
    %926 = arith.truncf %925 : vector<8x8xf32> to vector<8x8xbf16>
    %cst_249 = arith.constant dense<0.000000e+00> : vector<8x32xf32>
    %927 = tpu.matmul %926, %910, %cst_249 {dimension_numbers = #tpu.dot_dimension_numbers<[1], [0], [0], [1], [0, 0, 1, 1], [], []>} : vector<8x8xbf16>, vector<8x32xbf16>, vector<8x32xf32> -> vector<8x32xf32>
    %928 = arith.truncf %927 : vector<8x32xf32> to vector<8x32xbf16>
    %929 = vector.extract_strided_slice %822 {offsets = [96, 0], sizes = [32, 128], strides = [1, 1]} : vector<128x128xbf16> to vector<32x128xbf16>
    %cst_250 = arith.constant dense<0.000000e+00> : vector<8x128xf32>
    %930 = tpu.matmul %928, %929, %cst_250 {dimension_numbers = #tpu.dot_dimension_numbers<[1], [0], [0], [1], [0, 0, 1, 1], [], []>} : vector<8x32xbf16>, vector<32x128xbf16>, vector<8x128xf32> -> vector<8x128xf32>
    %931 = arith.addf %904, %930 : vector<8x128xf32>
    %932 = vector.broadcast %801 : vector<1x128xf32> to vector<8x128xf32>
    %933 = arith.addf %931, %932 : vector<8x128xf32>
    %934 = arith.addf %795, %933 : vector<8x128xf32>
    %cst_251 = arith.constant dense<0.000000e+00> : vector<8xf32>
    %935 = vector.multi_reduction <add>, %934, %cst_251 [1] : vector<8x128xf32> to vector<8xf32>
    %936 = vector.shape_cast %935 : vector<8xf32> to vector<8x1xf32>
    %cst_252 = arith.constant 1.280000e+02 : f32
    %937 = vector.broadcast %cst_252 : f32 to vector<8x1xf32>
    %938 = arith.divf %936, %937 : vector<8x1xf32>
    %939 = vector.broadcast %938 : vector<8x1xf32> to vector<8x128xf32>
    %940 = arith.subf %934, %939 : vector<8x128xf32>
    %941 = arith.mulf %940, %940 : vector<8x128xf32>
    %cst_253 = arith.constant dense<0.000000e+00> : vector<8xf32>
    %942 = vector.multi_reduction <add>, %941, %cst_253 [1] : vector<8x128xf32> to vector<8xf32>
    %943 = vector.shape_cast %942 : vector<8xf32> to vector<8x1xf32>
    %cst_254 = arith.constant 1.280000e+02 : f32
    %944 = vector.broadcast %cst_254 : f32 to vector<8x1xf32>
    %945 = arith.divf %943, %944 : vector<8x1xf32>
    %946 = vector.broadcast %938 : vector<8x1xf32> to vector<8x128xf32>
    %947 = arith.subf %934, %946 : vector<8x128xf32>
    %cst_255 = arith.constant 9.99999974E-6 : f32
    %948 = vector.broadcast %cst_255 : f32 to vector<8x1xf32>
    %949 = arith.addf %945, %948 : vector<8x1xf32>
    %950 = math.rsqrt %949 : vector<8x1xf32>
    %951 = vector.broadcast %950 : vector<8x1xf32> to vector<8x128xf32>
    %952 = arith.mulf %947, %951 : vector<8x128xf32>
    %953 = vector.broadcast %804 : vector<1x128xf32> to vector<8x128xf32>
    %954 = arith.mulf %952, %953 : vector<8x128xf32>
    %955 = vector.broadcast %805 : vector<1x128xf32> to vector<8x128xf32>
    %956 = arith.addf %954, %955 : vector<8x128xf32>
    %957 = arith.truncf %956 : vector<8x128xf32> to vector<8x128xbf16>
    %c4_256 = arith.constant 4 : index
    %c0_257 = arith.constant 0 : index
    %c0_258 = arith.constant 0 : index
    %958 = vector.load %arg5[%c4_256, %c0_257, %c0_258] : memref<6x128x128xbf16, #tpu.memory_space<vmem>>, vector<1x128x128xbf16>
    %959 = vector.shape_cast %958 : vector<1x128x128xbf16> to vector<128x128xbf16>
    %cst_259 = arith.constant dense<0.000000e+00> : vector<8x128xf32>
    %960 = tpu.matmul %957, %959, %cst_259 {dimension_numbers = #tpu.dot_dimension_numbers<[1], [0], [0], [1], [0, 0, 1, 1], [], []>} : vector<8x128xbf16>, vector<128x128xbf16>, vector<8x128xf32> -> vector<8x128xf32>
    %961 = vector.broadcast %802 : vector<1x128xf32> to vector<8x128xf32>
    %962 = arith.addf %960, %961 : vector<8x128xf32>
    %cst_260 = arith.constant 0.000000e+00 : f32
    %963 = vector.broadcast %cst_260 : f32 to vector<8x128xf32>
    %964 = arith.maximumf %962, %963 : vector<8x128xf32>
    %965 = arith.truncf %964 : vector<8x128xf32> to vector<8x128xbf16>
    %c4_261 = arith.constant 4 : index
    %c0_262 = arith.constant 0 : index
    %c0_263 = arith.constant 0 : index
    %966 = vector.load %arg6[%c4_261, %c0_262, %c0_263] : memref<6x128x128xbf16, #tpu.memory_space<vmem>>, vector<1x128x128xbf16>
    %967 = vector.shape_cast %966 : vector<1x128x128xbf16> to vector<128x128xbf16>
    %cst_264 = arith.constant dense<0.000000e+00> : vector<8x128xf32>
    %968 = tpu.matmul %965, %967, %cst_264 {dimension_numbers = #tpu.dot_dimension_numbers<[1], [0], [0], [1], [0, 0, 1, 1], [], []>} : vector<8x128xbf16>, vector<128x128xbf16>, vector<8x128xf32> -> vector<8x128xf32>
    %969 = vector.broadcast %803 : vector<1x128xf32> to vector<8x128xf32>
    %970 = arith.addf %968, %969 : vector<8x128xf32>
    %971 = arith.addf %956, %970 : vector<8x128xf32>
    %cst_265 = arith.constant dense<0.000000e+00> : vector<8xf32>
    %972 = vector.multi_reduction <add>, %971, %cst_265 [1] : vector<8x128xf32> to vector<8xf32>
    %973 = vector.shape_cast %972 : vector<8xf32> to vector<8x1xf32>
    %cst_266 = arith.constant 1.280000e+02 : f32
    %974 = vector.broadcast %cst_266 : f32 to vector<8x1xf32>
    %975 = arith.divf %973, %974 : vector<8x1xf32>
    %976 = vector.broadcast %975 : vector<8x1xf32> to vector<8x128xf32>
    %977 = arith.subf %971, %976 : vector<8x128xf32>
    %978 = arith.mulf %977, %977 : vector<8x128xf32>
    %cst_267 = arith.constant dense<0.000000e+00> : vector<8xf32>
    %979 = vector.multi_reduction <add>, %978, %cst_267 [1] : vector<8x128xf32> to vector<8xf32>
    %980 = vector.shape_cast %979 : vector<8xf32> to vector<8x1xf32>
    %cst_268 = arith.constant 1.280000e+02 : f32
    %981 = vector.broadcast %cst_268 : f32 to vector<8x1xf32>
    %982 = arith.divf %980, %981 : vector<8x1xf32>
    %983 = vector.broadcast %975 : vector<8x1xf32> to vector<8x128xf32>
    %984 = arith.subf %971, %983 : vector<8x128xf32>
    %cst_269 = arith.constant 9.99999974E-6 : f32
    %985 = vector.broadcast %cst_269 : f32 to vector<8x1xf32>
    %986 = arith.addf %982, %985 : vector<8x1xf32>
    %987 = math.rsqrt %986 : vector<8x1xf32>
    %988 = vector.broadcast %987 : vector<8x1xf32> to vector<8x128xf32>
    %989 = arith.mulf %984, %988 : vector<8x128xf32>
    %990 = vector.broadcast %806 : vector<1x128xf32> to vector<8x128xf32>
    %991 = arith.mulf %989, %990 : vector<8x128xf32>
    %992 = vector.broadcast %807 : vector<1x128xf32> to vector<8x128xf32>
    %993 = arith.addf %991, %992 : vector<8x128xf32>
    %c5 = arith.constant 5 : index
    %c0_270 = arith.constant 0 : index
    %c0_271 = arith.constant 0 : index
    %994 = vector.load %arg7[%c5, %c0_270, %c0_271] : memref<6x16x128xf32, #tpu.memory_space<vmem>>, vector<1x16x128xf32>
    %995 = vector.shape_cast %994 : vector<1x16x128xf32> to vector<16x128xf32>
    %996 = vector.extract_strided_slice %995 {offsets = [0, 0], sizes = [1, 128], strides = [1, 1]} : vector<16x128xf32> to vector<1x128xf32>
    %997 = vector.extract_strided_slice %995 {offsets = [1, 0], sizes = [1, 128], strides = [1, 1]} : vector<16x128xf32> to vector<1x128xf32>
    %998 = vector.extract_strided_slice %995 {offsets = [2, 0], sizes = [1, 128], strides = [1, 1]} : vector<16x128xf32> to vector<1x128xf32>
    %999 = vector.extract_strided_slice %995 {offsets = [3, 0], sizes = [1, 128], strides = [1, 1]} : vector<16x128xf32> to vector<1x128xf32>
    %1000 = vector.extract_strided_slice %995 {offsets = [4, 0], sizes = [1, 128], strides = [1, 1]} : vector<16x128xf32> to vector<1x128xf32>
    %1001 = vector.extract_strided_slice %995 {offsets = [5, 0], sizes = [1, 128], strides = [1, 1]} : vector<16x128xf32> to vector<1x128xf32>
    %1002 = vector.extract_strided_slice %995 {offsets = [6, 0], sizes = [1, 128], strides = [1, 1]} : vector<16x128xf32> to vector<1x128xf32>
    %1003 = vector.extract_strided_slice %995 {offsets = [7, 0], sizes = [1, 128], strides = [1, 1]} : vector<16x128xf32> to vector<1x128xf32>
    %1004 = vector.extract_strided_slice %995 {offsets = [8, 0], sizes = [1, 128], strides = [1, 1]} : vector<16x128xf32> to vector<1x128xf32>
    %1005 = vector.extract_strided_slice %995 {offsets = [9, 0], sizes = [1, 128], strides = [1, 1]} : vector<16x128xf32> to vector<1x128xf32>
    %1006 = arith.truncf %993 : vector<8x128xf32> to vector<8x128xbf16>
    %c5_272 = arith.constant 5 : index
    %c0_273 = arith.constant 0 : index
    %c0_274 = arith.constant 0 : index
    %1007 = vector.load %arg3[%c5_272, %c0_273, %c0_274] : memref<6x128x384xbf16, #tpu.memory_space<vmem>>, vector<1x128x384xbf16>
    %1008 = vector.shape_cast %1007 : vector<1x128x384xbf16> to vector<128x384xbf16>
    %cst_275 = arith.constant dense<0.000000e+00> : vector<8x384xf32>
    %1009 = tpu.matmul %1006, %1008, %cst_275 {dimension_numbers = #tpu.dot_dimension_numbers<[1], [0], [0], [1], [0, 0, 1, 1], [], []>} : vector<8x128xbf16>, vector<128x384xbf16>, vector<8x384xf32> -> vector<8x384xf32>
    %1010 = vector.extract_strided_slice %1009 {offsets = [0, 0], sizes = [8, 128], strides = [1, 1]} : vector<8x384xf32> to vector<8x128xf32>
    %1011 = vector.broadcast %996 : vector<1x128xf32> to vector<8x128xf32>
    %1012 = arith.addf %1010, %1011 : vector<8x128xf32>
    %1013 = vector.extract_strided_slice %1009 {offsets = [0, 128], sizes = [8, 128], strides = [1, 1]} : vector<8x384xf32> to vector<8x128xf32>
    %1014 = vector.broadcast %997 : vector<1x128xf32> to vector<8x128xf32>
    %1015 = arith.addf %1013, %1014 : vector<8x128xf32>
    %1016 = vector.extract_strided_slice %1009 {offsets = [0, 256], sizes = [8, 128], strides = [1, 1]} : vector<8x384xf32> to vector<8x128xf32>
    %1017 = vector.broadcast %998 : vector<1x128xf32> to vector<8x128xf32>
    %1018 = arith.addf %1016, %1017 : vector<8x128xf32>
    %c5_276 = arith.constant 5 : index
    %c0_277 = arith.constant 0 : index
    %c0_278 = arith.constant 0 : index
    %1019 = vector.load %arg4[%c5_276, %c0_277, %c0_278] : memref<6x128x128xbf16, #tpu.memory_space<vmem>>, vector<1x128x128xbf16>
    %1020 = vector.shape_cast %1019 : vector<1x128x128xbf16> to vector<128x128xbf16>
    %cst_279 = arith.constant 0.000000e+00 : f32
    %1021 = vector.broadcast %cst_279 : f32 to vector<8x128xf32>
    %1022 = vector.extract_strided_slice %1012 {offsets = [0, 0], sizes = [8, 32], strides = [1, 1]} : vector<8x128xf32> to vector<8x32xf32>
    %1023 = arith.truncf %1022 : vector<8x32xf32> to vector<8x32xbf16>
    %1024 = vector.extract_strided_slice %1015 {offsets = [0, 0], sizes = [8, 32], strides = [1, 1]} : vector<8x128xf32> to vector<8x32xf32>
    %1025 = arith.truncf %1024 : vector<8x32xf32> to vector<8x32xbf16>
    %1026 = vector.extract_strided_slice %1018 {offsets = [0, 0], sizes = [8, 32], strides = [1, 1]} : vector<8x128xf32> to vector<8x32xf32>
    %1027 = arith.truncf %1026 : vector<8x32xf32> to vector<8x32xbf16>
    %cst_280 = arith.constant dense<0.000000e+00> : vector<8x8xf32>
    %1028 = tpu.matmul %1023, %1025, %cst_280 {dimension_numbers = #tpu.dot_dimension_numbers<[1], [1], [0], [0], [0, 0, 1, 0], [], []>} : vector<8x32xbf16>, vector<8x32xbf16>, vector<8x8xf32> -> vector<8x8xf32>
    %cst_281 = arith.constant 0.176776692 : f32
    %1029 = vector.broadcast %cst_281 : f32 to vector<8x8xf32>
    %1030 = arith.mulf %1028, %1029 : vector<8x8xf32>
    %1031 = vector.broadcast %3 : vector<1x8xf32> to vector<8x8xf32>
    %1032 = arith.addf %1030, %1031 : vector<8x8xf32>
    %cst_282 = arith.constant dense<0xFF800000> : vector<8xf32>
    %1033 = vector.multi_reduction <maximumf>, %1032, %cst_282 [1] : vector<8x8xf32> to vector<8xf32>
    %1034 = vector.shape_cast %1033 : vector<8xf32> to vector<8x1xf32>
    %1035 = vector.broadcast %1034 : vector<8x1xf32> to vector<8x8xf32>
    %1036 = arith.subf %1032, %1035 : vector<8x8xf32>
    %1037 = math.exp %1036 : vector<8x8xf32>
    %cst_283 = arith.constant dense<0.000000e+00> : vector<8xf32>
    %1038 = vector.multi_reduction <add>, %1037, %cst_283 [1] : vector<8x8xf32> to vector<8xf32>
    %1039 = vector.shape_cast %1038 : vector<8xf32> to vector<8x1xf32>
    %1040 = tpu.reciprocal %1039 {approx = true} : vector<8x1xf32> -> vector<8x1xf32>
    %1041 = vector.broadcast %1040 : vector<8x1xf32> to vector<8x8xf32>
    %1042 = arith.mulf %1037, %1041 : vector<8x8xf32>
    %1043 = arith.truncf %1042 : vector<8x8xf32> to vector<8x8xbf16>
    %cst_284 = arith.constant dense<0.000000e+00> : vector<8x32xf32>
    %1044 = tpu.matmul %1043, %1027, %cst_284 {dimension_numbers = #tpu.dot_dimension_numbers<[1], [0], [0], [1], [0, 0, 1, 1], [], []>} : vector<8x8xbf16>, vector<8x32xbf16>, vector<8x32xf32> -> vector<8x32xf32>
    %1045 = arith.truncf %1044 : vector<8x32xf32> to vector<8x32xbf16>
    %1046 = vector.extract_strided_slice %1020 {offsets = [0, 0], sizes = [32, 128], strides = [1, 1]} : vector<128x128xbf16> to vector<32x128xbf16>
    %cst_285 = arith.constant dense<0.000000e+00> : vector<8x128xf32>
    %1047 = tpu.matmul %1045, %1046, %cst_285 {dimension_numbers = #tpu.dot_dimension_numbers<[1], [0], [0], [1], [0, 0, 1, 1], [], []>} : vector<8x32xbf16>, vector<32x128xbf16>, vector<8x128xf32> -> vector<8x128xf32>
    %1048 = arith.addf %1021, %1047 : vector<8x128xf32>
    %1049 = vector.extract_strided_slice %1012 {offsets = [0, 32], sizes = [8, 32], strides = [1, 1]} : vector<8x128xf32> to vector<8x32xf32>
    %1050 = arith.truncf %1049 : vector<8x32xf32> to vector<8x32xbf16>
    %1051 = vector.extract_strided_slice %1015 {offsets = [0, 32], sizes = [8, 32], strides = [1, 1]} : vector<8x128xf32> to vector<8x32xf32>
    %1052 = arith.truncf %1051 : vector<8x32xf32> to vector<8x32xbf16>
    %1053 = vector.extract_strided_slice %1018 {offsets = [0, 32], sizes = [8, 32], strides = [1, 1]} : vector<8x128xf32> to vector<8x32xf32>
    %1054 = arith.truncf %1053 : vector<8x32xf32> to vector<8x32xbf16>
    %cst_286 = arith.constant dense<0.000000e+00> : vector<8x8xf32>
    %1055 = tpu.matmul %1050, %1052, %cst_286 {dimension_numbers = #tpu.dot_dimension_numbers<[1], [1], [0], [0], [0, 0, 1, 0], [], []>} : vector<8x32xbf16>, vector<8x32xbf16>, vector<8x8xf32> -> vector<8x8xf32>
    %cst_287 = arith.constant 0.176776692 : f32
    %1056 = vector.broadcast %cst_287 : f32 to vector<8x8xf32>
    %1057 = arith.mulf %1055, %1056 : vector<8x8xf32>
    %1058 = vector.broadcast %3 : vector<1x8xf32> to vector<8x8xf32>
    %1059 = arith.addf %1057, %1058 : vector<8x8xf32>
    %cst_288 = arith.constant dense<0xFF800000> : vector<8xf32>
    %1060 = vector.multi_reduction <maximumf>, %1059, %cst_288 [1] : vector<8x8xf32> to vector<8xf32>
    %1061 = vector.shape_cast %1060 : vector<8xf32> to vector<8x1xf32>
    %1062 = vector.broadcast %1061 : vector<8x1xf32> to vector<8x8xf32>
    %1063 = arith.subf %1059, %1062 : vector<8x8xf32>
    %1064 = math.exp %1063 : vector<8x8xf32>
    %cst_289 = arith.constant dense<0.000000e+00> : vector<8xf32>
    %1065 = vector.multi_reduction <add>, %1064, %cst_289 [1] : vector<8x8xf32> to vector<8xf32>
    %1066 = vector.shape_cast %1065 : vector<8xf32> to vector<8x1xf32>
    %1067 = tpu.reciprocal %1066 {approx = true} : vector<8x1xf32> -> vector<8x1xf32>
    %1068 = vector.broadcast %1067 : vector<8x1xf32> to vector<8x8xf32>
    %1069 = arith.mulf %1064, %1068 : vector<8x8xf32>
    %1070 = arith.truncf %1069 : vector<8x8xf32> to vector<8x8xbf16>
    %cst_290 = arith.constant dense<0.000000e+00> : vector<8x32xf32>
    %1071 = tpu.matmul %1070, %1054, %cst_290 {dimension_numbers = #tpu.dot_dimension_numbers<[1], [0], [0], [1], [0, 0, 1, 1], [], []>} : vector<8x8xbf16>, vector<8x32xbf16>, vector<8x32xf32> -> vector<8x32xf32>
    %1072 = arith.truncf %1071 : vector<8x32xf32> to vector<8x32xbf16>
    %1073 = vector.extract_strided_slice %1020 {offsets = [32, 0], sizes = [32, 128], strides = [1, 1]} : vector<128x128xbf16> to vector<32x128xbf16>
    %cst_291 = arith.constant dense<0.000000e+00> : vector<8x128xf32>
    %1074 = tpu.matmul %1072, %1073, %cst_291 {dimension_numbers = #tpu.dot_dimension_numbers<[1], [0], [0], [1], [0, 0, 1, 1], [], []>} : vector<8x32xbf16>, vector<32x128xbf16>, vector<8x128xf32> -> vector<8x128xf32>
    %1075 = arith.addf %1048, %1074 : vector<8x128xf32>
    %1076 = vector.extract_strided_slice %1012 {offsets = [0, 64], sizes = [8, 32], strides = [1, 1]} : vector<8x128xf32> to vector<8x32xf32>
    %1077 = arith.truncf %1076 : vector<8x32xf32> to vector<8x32xbf16>
    %1078 = vector.extract_strided_slice %1015 {offsets = [0, 64], sizes = [8, 32], strides = [1, 1]} : vector<8x128xf32> to vector<8x32xf32>
    %1079 = arith.truncf %1078 : vector<8x32xf32> to vector<8x32xbf16>
    %1080 = vector.extract_strided_slice %1018 {offsets = [0, 64], sizes = [8, 32], strides = [1, 1]} : vector<8x128xf32> to vector<8x32xf32>
    %1081 = arith.truncf %1080 : vector<8x32xf32> to vector<8x32xbf16>
    %cst_292 = arith.constant dense<0.000000e+00> : vector<8x8xf32>
    %1082 = tpu.matmul %1077, %1079, %cst_292 {dimension_numbers = #tpu.dot_dimension_numbers<[1], [1], [0], [0], [0, 0, 1, 0], [], []>} : vector<8x32xbf16>, vector<8x32xbf16>, vector<8x8xf32> -> vector<8x8xf32>
    %cst_293 = arith.constant 0.176776692 : f32
    %1083 = vector.broadcast %cst_293 : f32 to vector<8x8xf32>
    %1084 = arith.mulf %1082, %1083 : vector<8x8xf32>
    %1085 = vector.broadcast %3 : vector<1x8xf32> to vector<8x8xf32>
    %1086 = arith.addf %1084, %1085 : vector<8x8xf32>
    %cst_294 = arith.constant dense<0xFF800000> : vector<8xf32>
    %1087 = vector.multi_reduction <maximumf>, %1086, %cst_294 [1] : vector<8x8xf32> to vector<8xf32>
    %1088 = vector.shape_cast %1087 : vector<8xf32> to vector<8x1xf32>
    %1089 = vector.broadcast %1088 : vector<8x1xf32> to vector<8x8xf32>
    %1090 = arith.subf %1086, %1089 : vector<8x8xf32>
    %1091 = math.exp %1090 : vector<8x8xf32>
    %cst_295 = arith.constant dense<0.000000e+00> : vector<8xf32>
    %1092 = vector.multi_reduction <add>, %1091, %cst_295 [1] : vector<8x8xf32> to vector<8xf32>
    %1093 = vector.shape_cast %1092 : vector<8xf32> to vector<8x1xf32>
    %1094 = tpu.reciprocal %1093 {approx = true} : vector<8x1xf32> -> vector<8x1xf32>
    %1095 = vector.broadcast %1094 : vector<8x1xf32> to vector<8x8xf32>
    %1096 = arith.mulf %1091, %1095 : vector<8x8xf32>
    %1097 = arith.truncf %1096 : vector<8x8xf32> to vector<8x8xbf16>
    %cst_296 = arith.constant dense<0.000000e+00> : vector<8x32xf32>
    %1098 = tpu.matmul %1097, %1081, %cst_296 {dimension_numbers = #tpu.dot_dimension_numbers<[1], [0], [0], [1], [0, 0, 1, 1], [], []>} : vector<8x8xbf16>, vector<8x32xbf16>, vector<8x32xf32> -> vector<8x32xf32>
    %1099 = arith.truncf %1098 : vector<8x32xf32> to vector<8x32xbf16>
    %1100 = vector.extract_strided_slice %1020 {offsets = [64, 0], sizes = [32, 128], strides = [1, 1]} : vector<128x128xbf16> to vector<32x128xbf16>
    %cst_297 = arith.constant dense<0.000000e+00> : vector<8x128xf32>
    %1101 = tpu.matmul %1099, %1100, %cst_297 {dimension_numbers = #tpu.dot_dimension_numbers<[1], [0], [0], [1], [0, 0, 1, 1], [], []>} : vector<8x32xbf16>, vector<32x128xbf16>, vector<8x128xf32> -> vector<8x128xf32>
    %1102 = arith.addf %1075, %1101 : vector<8x128xf32>
    %1103 = vector.extract_strided_slice %1012 {offsets = [0, 96], sizes = [8, 32], strides = [1, 1]} : vector<8x128xf32> to vector<8x32xf32>
    %1104 = arith.truncf %1103 : vector<8x32xf32> to vector<8x32xbf16>
    %1105 = vector.extract_strided_slice %1015 {offsets = [0, 96], sizes = [8, 32], strides = [1, 1]} : vector<8x128xf32> to vector<8x32xf32>
    %1106 = arith.truncf %1105 : vector<8x32xf32> to vector<8x32xbf16>
    %1107 = vector.extract_strided_slice %1018 {offsets = [0, 96], sizes = [8, 32], strides = [1, 1]} : vector<8x128xf32> to vector<8x32xf32>
    %1108 = arith.truncf %1107 : vector<8x32xf32> to vector<8x32xbf16>
    %cst_298 = arith.constant dense<0.000000e+00> : vector<8x8xf32>
    %1109 = tpu.matmul %1104, %1106, %cst_298 {dimension_numbers = #tpu.dot_dimension_numbers<[1], [1], [0], [0], [0, 0, 1, 0], [], []>} : vector<8x32xbf16>, vector<8x32xbf16>, vector<8x8xf32> -> vector<8x8xf32>
    %cst_299 = arith.constant 0.176776692 : f32
    %1110 = vector.broadcast %cst_299 : f32 to vector<8x8xf32>
    %1111 = arith.mulf %1109, %1110 : vector<8x8xf32>
    %1112 = vector.broadcast %3 : vector<1x8xf32> to vector<8x8xf32>
    %1113 = arith.addf %1111, %1112 : vector<8x8xf32>
    %cst_300 = arith.constant dense<0xFF800000> : vector<8xf32>
    %1114 = vector.multi_reduction <maximumf>, %1113, %cst_300 [1] : vector<8x8xf32> to vector<8xf32>
    %1115 = vector.shape_cast %1114 : vector<8xf32> to vector<8x1xf32>
    %1116 = vector.broadcast %1115 : vector<8x1xf32> to vector<8x8xf32>
    %1117 = arith.subf %1113, %1116 : vector<8x8xf32>
    %1118 = math.exp %1117 : vector<8x8xf32>
    %cst_301 = arith.constant dense<0.000000e+00> : vector<8xf32>
    %1119 = vector.multi_reduction <add>, %1118, %cst_301 [1] : vector<8x8xf32> to vector<8xf32>
    %1120 = vector.shape_cast %1119 : vector<8xf32> to vector<8x1xf32>
    %1121 = tpu.reciprocal %1120 {approx = true} : vector<8x1xf32> -> vector<8x1xf32>
    %1122 = vector.broadcast %1121 : vector<8x1xf32> to vector<8x8xf32>
    %1123 = arith.mulf %1118, %1122 : vector<8x8xf32>
    %1124 = arith.truncf %1123 : vector<8x8xf32> to vector<8x8xbf16>
    %cst_302 = arith.constant dense<0.000000e+00> : vector<8x32xf32>
    %1125 = tpu.matmul %1124, %1108, %cst_302 {dimension_numbers = #tpu.dot_dimension_numbers<[1], [0], [0], [1], [0, 0, 1, 1], [], []>} : vector<8x8xbf16>, vector<8x32xbf16>, vector<8x32xf32> -> vector<8x32xf32>
    %1126 = arith.truncf %1125 : vector<8x32xf32> to vector<8x32xbf16>
    %1127 = vector.extract_strided_slice %1020 {offsets = [96, 0], sizes = [32, 128], strides = [1, 1]} : vector<128x128xbf16> to vector<32x128xbf16>
    %cst_303 = arith.constant dense<0.000000e+00> : vector<8x128xf32>
    %1128 = tpu.matmul %1126, %1127, %cst_303 {dimension_numbers = #tpu.dot_dimension_numbers<[1], [0], [0], [1], [0, 0, 1, 1], [], []>} : vector<8x32xbf16>, vector<32x128xbf16>, vector<8x128xf32> -> vector<8x128xf32>
    %1129 = arith.addf %1102, %1128 : vector<8x128xf32>
    %1130 = vector.broadcast %999 : vector<1x128xf32> to vector<8x128xf32>
    %1131 = arith.addf %1129, %1130 : vector<8x128xf32>
    %1132 = arith.addf %993, %1131 : vector<8x128xf32>
    %cst_304 = arith.constant dense<0.000000e+00> : vector<8xf32>
    %1133 = vector.multi_reduction <add>, %1132, %cst_304 [1] : vector<8x128xf32> to vector<8xf32>
    %1134 = vector.shape_cast %1133 : vector<8xf32> to vector<8x1xf32>
    %cst_305 = arith.constant 1.280000e+02 : f32
    %1135 = vector.broadcast %cst_305 : f32 to vector<8x1xf32>
    %1136 = arith.divf %1134, %1135 : vector<8x1xf32>
    %1137 = vector.broadcast %1136 : vector<8x1xf32> to vector<8x128xf32>
    %1138 = arith.subf %1132, %1137 : vector<8x128xf32>
    %1139 = arith.mulf %1138, %1138 : vector<8x128xf32>
    %cst_306 = arith.constant dense<0.000000e+00> : vector<8xf32>
    %1140 = vector.multi_reduction <add>, %1139, %cst_306 [1] : vector<8x128xf32> to vector<8xf32>
    %1141 = vector.shape_cast %1140 : vector<8xf32> to vector<8x1xf32>
    %cst_307 = arith.constant 1.280000e+02 : f32
    %1142 = vector.broadcast %cst_307 : f32 to vector<8x1xf32>
    %1143 = arith.divf %1141, %1142 : vector<8x1xf32>
    %1144 = vector.broadcast %1136 : vector<8x1xf32> to vector<8x128xf32>
    %1145 = arith.subf %1132, %1144 : vector<8x128xf32>
    %cst_308 = arith.constant 9.99999974E-6 : f32
    %1146 = vector.broadcast %cst_308 : f32 to vector<8x1xf32>
    %1147 = arith.addf %1143, %1146 : vector<8x1xf32>
    %1148 = math.rsqrt %1147 : vector<8x1xf32>
    %1149 = vector.broadcast %1148 : vector<8x1xf32> to vector<8x128xf32>
    %1150 = arith.mulf %1145, %1149 : vector<8x128xf32>
    %1151 = vector.broadcast %1002 : vector<1x128xf32> to vector<8x128xf32>
    %1152 = arith.mulf %1150, %1151 : vector<8x128xf32>
    %1153 = vector.broadcast %1003 : vector<1x128xf32> to vector<8x128xf32>
    %1154 = arith.addf %1152, %1153 : vector<8x128xf32>
    %1155 = arith.truncf %1154 : vector<8x128xf32> to vector<8x128xbf16>
    %c5_309 = arith.constant 5 : index
    %c0_310 = arith.constant 0 : index
    %c0_311 = arith.constant 0 : index
    %1156 = vector.load %arg5[%c5_309, %c0_310, %c0_311] : memref<6x128x128xbf16, #tpu.memory_space<vmem>>, vector<1x128x128xbf16>
    %1157 = vector.shape_cast %1156 : vector<1x128x128xbf16> to vector<128x128xbf16>
    %cst_312 = arith.constant dense<0.000000e+00> : vector<8x128xf32>
    %1158 = tpu.matmul %1155, %1157, %cst_312 {dimension_numbers = #tpu.dot_dimension_numbers<[1], [0], [0], [1], [0, 0, 1, 1], [], []>} : vector<8x128xbf16>, vector<128x128xbf16>, vector<8x128xf32> -> vector<8x128xf32>
    %1159 = vector.broadcast %1000 : vector<1x128xf32> to vector<8x128xf32>
    %1160 = arith.addf %1158, %1159 : vector<8x128xf32>
    %cst_313 = arith.constant 0.000000e+00 : f32
    %1161 = vector.broadcast %cst_313 : f32 to vector<8x128xf32>
    %1162 = arith.maximumf %1160, %1161 : vector<8x128xf32>
    %1163 = arith.truncf %1162 : vector<8x128xf32> to vector<8x128xbf16>
    %c5_314 = arith.constant 5 : index
    %c0_315 = arith.constant 0 : index
    %c0_316 = arith.constant 0 : index
    %1164 = vector.load %arg6[%c5_314, %c0_315, %c0_316] : memref<6x128x128xbf16, #tpu.memory_space<vmem>>, vector<1x128x128xbf16>
    %1165 = vector.shape_cast %1164 : vector<1x128x128xbf16> to vector<128x128xbf16>
    %cst_317 = arith.constant dense<0.000000e+00> : vector<8x128xf32>
    %1166 = tpu.matmul %1163, %1165, %cst_317 {dimension_numbers = #tpu.dot_dimension_numbers<[1], [0], [0], [1], [0, 0, 1, 1], [], []>} : vector<8x128xbf16>, vector<128x128xbf16>, vector<8x128xf32> -> vector<8x128xf32>
    %1167 = vector.broadcast %1001 : vector<1x128xf32> to vector<8x128xf32>
    %1168 = arith.addf %1166, %1167 : vector<8x128xf32>
    %1169 = arith.addf %1154, %1168 : vector<8x128xf32>
    %cst_318 = arith.constant dense<0.000000e+00> : vector<8xf32>
    %1170 = vector.multi_reduction <add>, %1169, %cst_318 [1] : vector<8x128xf32> to vector<8xf32>
    %1171 = vector.shape_cast %1170 : vector<8xf32> to vector<8x1xf32>
    %cst_319 = arith.constant 1.280000e+02 : f32
    %1172 = vector.broadcast %cst_319 : f32 to vector<8x1xf32>
    %1173 = arith.divf %1171, %1172 : vector<8x1xf32>
    %1174 = vector.broadcast %1173 : vector<8x1xf32> to vector<8x128xf32>
    %1175 = arith.subf %1169, %1174 : vector<8x128xf32>
    %1176 = arith.mulf %1175, %1175 : vector<8x128xf32>
    %cst_320 = arith.constant dense<0.000000e+00> : vector<8xf32>
    %1177 = vector.multi_reduction <add>, %1176, %cst_320 [1] : vector<8x128xf32> to vector<8xf32>
    %1178 = vector.shape_cast %1177 : vector<8xf32> to vector<8x1xf32>
    %cst_321 = arith.constant 1.280000e+02 : f32
    %1179 = vector.broadcast %cst_321 : f32 to vector<8x1xf32>
    %1180 = arith.divf %1178, %1179 : vector<8x1xf32>
    %1181 = vector.broadcast %1173 : vector<8x1xf32> to vector<8x128xf32>
    %1182 = arith.subf %1169, %1181 : vector<8x128xf32>
    %cst_322 = arith.constant 9.99999974E-6 : f32
    %1183 = vector.broadcast %cst_322 : f32 to vector<8x1xf32>
    %1184 = arith.addf %1180, %1183 : vector<8x1xf32>
    %1185 = math.rsqrt %1184 : vector<8x1xf32>
    %1186 = vector.broadcast %1185 : vector<8x1xf32> to vector<8x128xf32>
    %1187 = arith.mulf %1182, %1186 : vector<8x128xf32>
    %1188 = vector.broadcast %1004 : vector<1x128xf32> to vector<8x128xf32>
    %1189 = arith.mulf %1187, %1188 : vector<8x128xf32>
    %1190 = vector.broadcast %1005 : vector<1x128xf32> to vector<8x128xf32>
    %1191 = arith.addf %1189, %1190 : vector<8x128xf32>
    %1192 = arith.truncf %1191 : vector<8x128xf32> to vector<8x128xbf16>
    %c0_323 = arith.constant 0 : index
    %c0_324 = arith.constant 0 : index
    %1193 = vector.load %arg8[%c0_323, %c0_324] : memref<128x1024xbf16, #tpu.memory_space<vmem>>, vector<128x1024xbf16>
    %cst_325 = arith.constant dense<0.000000e+00> : vector<8x1024xf32>
    %1194 = tpu.matmul %1192, %1193, %cst_325 {dimension_numbers = #tpu.dot_dimension_numbers<[1], [0], [0], [1], [0, 0, 1, 1], [], []>} : vector<8x128xbf16>, vector<128x1024xbf16>, vector<8x1024xf32> -> vector<8x1024xf32>
    %c0_326 = arith.constant 0 : index
    %c0_327 = arith.constant 0 : index
    %1195 = vector.load %arg9[%c0_326, %c0_327] : memref<1x1024xf32, #tpu.memory_space<vmem>>, vector<1x1024xf32>
    %1196 = vector.broadcast %1195 : vector<1x1024xf32> to vector<8x1024xf32>
    %1197 = arith.addf %1194, %1196 : vector<8x1024xf32>
    %cst_328 = arith.constant 0.000000e+00 : f32
    %1198 = vector.broadcast %cst_328 : f32 to vector<8x1024xf32>
    %1199 = arith.maximumf %1197, %1198 : vector<8x1024xf32>
    %c0_329 = arith.constant 0 : index
    %c0_330 = arith.constant 0 : index
    %c0_331 = arith.constant 0 : index
    %1200 = vector.load %arg10[%c0_329, %c0_330, %c0_331] : memref<1x8x1024xf32, #tpu.memory_space<vmem>>, vector<1x8x1024xf32>
    %1201 = vector.shape_cast %1200 : vector<1x8x1024xf32> to vector<8x1024xf32>
    %1202 = vector.shape_cast %1199 : vector<8x1024xf32> to vector<1x8x1024xf32>
    tpu.vector_store %arg10[%c0_329, %c0_330, %c0_331], %1202 {strides = array<i32>} : memref<1x8x1024xf32, #tpu.memory_space<vmem>>, vector<1x8x1024xf32>,
    return
  }
  func.func @transform_0(%arg0: i32) -> (i32, i32, i32) {
    %c0_i32 = arith.constant 0 : i32
    %c0_i32_0 = arith.constant 0 : i32
    %c0_i32_1 = arith.constant 0 : i32
    return %arg0, %c0_i32, %c0_i32_0 : i32, i32, i32
  }
  func.func @transform_1(%arg0: i32) -> (i32, i32, i32) {
    %c0_i32 = arith.constant 0 : i32
    %c0_i32_0 = arith.constant 0 : i32
    %c0_i32_1 = arith.constant 0 : i32
    return %arg0, %c0_i32, %c0_i32_0 : i32, i32, i32
  }
  func.func @transform_2(%arg0: i32) -> (i32, i32, i32) {
    %c0_i32 = arith.constant 0 : i32
    %c0_i32_0 = arith.constant 0 : i32
    %c0_i32_1 = arith.constant 0 : i32
    %c0_i32_2 = arith.constant 0 : i32
    return %c0_i32, %c0_i32_0, %c0_i32_1 : i32, i32, i32
  }
  func.func @transform_3(%arg0: i32) -> (i32, i32, i32) {
    %c0_i32 = arith.constant 0 : i32
    %c0_i32_0 = arith.constant 0 : i32
    %c0_i32_1 = arith.constant 0 : i32
    %c0_i32_2 = arith.constant 0 : i32
    return %c0_i32, %c0_i32_0, %c0_i32_1 : i32, i32, i32
  }
  func.func @transform_4(%arg0: i32) -> (i32, i32, i32) {
    %c0_i32 = arith.constant 0 : i32
    %c0_i32_0 = arith.constant 0 : i32
    %c0_i32_1 = arith.constant 0 : i32
    %c0_i32_2 = arith.constant 0 : i32
    return %c0_i32, %c0_i32_0, %c0_i32_1 : i32, i32, i32
  }
  func.func @transform_5(%arg0: i32) -> (i32, i32, i32) {
    %c0_i32 = arith.constant 0 : i32
    %c0_i32_0 = arith.constant 0 : i32
    %c0_i32_1 = arith.constant 0 : i32
    %c0_i32_2 = arith.constant 0 : i32
    return %c0_i32, %c0_i32_0, %c0_i32_1 : i32, i32, i32
  }
  func.func @transform_6(%arg0: i32) -> (i32, i32, i32) {
    %c0_i32 = arith.constant 0 : i32
    %c0_i32_0 = arith.constant 0 : i32
    %c0_i32_1 = arith.constant 0 : i32
    %c0_i32_2 = arith.constant 0 : i32
    return %c0_i32, %c0_i32_0, %c0_i32_1 : i32, i32, i32
  }
  func.func @transform_7(%arg0: i32) -> (i32, i32) {
    %c0_i32 = arith.constant 0 : i32
    %c0_i32_0 = arith.constant 0 : i32
    %c0_i32_1 = arith.constant 0 : i32
    return %c0_i32, %c0_i32_0 : i32, i32
  }
  func.func @transform_8(%arg0: i32) -> (i32, i32) {
    %c0_i32 = arith.constant 0 : i32
    %c0_i32_0 = arith.constant 0 : i32
    %c0_i32_1 = arith.constant 0 : i32
    return %c0_i32, %c0_i32_0 : i32, i32
  }
  func.func @transform_9(%arg0: i32) -> (i32, i32, i32) {
    %c0_i32 = arith.constant 0 : i32
    %c0_i32_0 = arith.constant 0 : i32
    %c0_i32_1 = arith.constant 0 : i32
    return %arg0, %c0_i32, %c0_i32_0 : i32, i32, i32
  }
}

</mosaic_0001>

<llo_original>
// kernel: tpu_custom_call.1
$region0: #{tpu_custom_call.1}
  #allocation0 [shape = 'u32[]', space=smem, size = 0x4, offset = 0x4, fixed_abs, tag = 'smem constant byte address 0x4 - core index']
  #allocation1 [shape = 'u32[144,128]{1,0:T(1,128)}', space=vmem, size = 0x12000, scoped, tag = 'internal scratch']
  %s0 = inlined_call_operand.hbm [shape: f32[2,8,128], index: 0, kind: input, shape index: {}]
  %s1 = inlined_call_operand.vmem [shape: f32[2,1,8], index: 1, kind: input, shape index: {}]
  %s2 = inlined_call_operand.hbm [shape: bf16[6,128,384], index: 2, kind: input, shape index: {}]
  %s3 = inlined_call_operand.hbm [shape: bf16[6,128,128], index: 3, kind: input, shape index: {}]
  %s4 = inlined_call_operand.hbm [shape: bf16[6,128,128], index: 4, kind: input, shape index: {}]
  %s5 = inlined_call_operand.hbm [shape: bf16[6,128,128], index: 5, kind: input, shape index: {}]
  %s6 = inlined_call_operand.hbm [shape: f32[6,16,128], index: 6, kind: input, shape index: {}]
  %s7 = inlined_call_operand.hbm [shape: bf16[128,1024], index: 7, kind: input, shape index: {}]
  %s8 = inlined_call_operand.vmem [shape: f32[1,1024], index: 8, kind: input, shape index: {}]
  %s9 = inlined_call_operand.hbm [shape: f32[2,8,1024], index: 9, kind: output, shape index: {}]
  %s10 = sld [smem:[#allocation0]]
  $region97: #{tpu_custom_call.1} parent=0
    _
  %s12 = ssub.s32 1, %s10
  %s13 = scalar_select 0, %s12, %s10
  $region1: #{tpu_custom_call.1} parent=0
    #allocation2 [shape = 'u8[8192]{0}', space=vmem, size = 0x2000, scoped, tag = 'input window, operand 0']
    #allocation3 [shape = 's32[2]{0}', space=sflag, size = 0x8, scoped, tag = 'scoped memory for tpu_custom_call.1']
    #allocation4 [shape = 's32[2]{0}', space=sflag, size = 0x8, scoped, tag = 'scoped memory for tpu_custom_call.1']
    #allocation5 [shape = 'u8[589824]{0}', space=vmem, size = 0x90000, scoped, tag = 'input window, operand 2, single buffered']
    #allocation6 [shape = 's32[1]{0}', space=sflag, size = 0x4, scoped, tag = 'scoped memory for tpu_custom_call.1']
    #allocation7 [shape = 'u8[196608]{0}', space=vmem, size = 0x30000, scoped, tag = 'input window, operand 3, single buffered']
    #allocation8 [shape = 'u8[196608]{0}', space=vmem, size = 0x30000, scoped, tag = 'input window, operand 4, single buffered']
    #allocation9 [shape = 's32[1]{0}', space=sflag, size = 0x4, scoped, tag = 'scoped memory for tpu_custom_call.1']
    #allocation10 [shape = 'u8[196608]{0}', space=vmem, size = 0x30000, scoped, tag = 'input window, operand 5, single buffered']
    #allocation11 [shape = 'u8[49152]{0}', space=vmem, size = 0xc000, scoped, tag = 'input window, operand 6, single buffered']
    #allocation12 [shape = 's32[1]{0}', space=sflag, size = 0x4, scoped, tag = 'scoped memory for tpu_custom_call.1']
    #allocation13 [shape = 'u8[262144]{0}', space=vmem, size = 0x40000, scoped, tag = 'input window, operand 7, single buffered']
    #allocation14 [shape = 'u8[65536]{0}', space=vmem, size = 0x10000, scoped, tag = 'output window, operand 0']
    %14 = vsyncpa [#allocation3], 0
    %s15 = scalar_lea.sflag [#allocation3], 1
    %16 = vsyncpa %s15, 0
    %17 = vsyncpa [#allocation6], 0
    %18 = vsyncpa [#allocation9], 0
    %19 = vsyncpa [#allocation12], 0
    %20 = vsyncpa [#allocation4], 0
    %s21 = scalar_lea.sflag [#allocation4], 1
    %22 = vsyncpa %s21, 0
    loop: start=0, step=1, limit=4
    $region2: #{tpu_custom_call.1} parent=1 // loop_pre_header
      _
    $region3: #{tpu_custom_call.1} parent=1 // loop_header
      %s24 = sphi 0, %s28
      %p25 = scmp.ge.s32.totalorder %s24, 4
      %s34 = sphi 0, %s36
      %s37 = sphi 0, %s34
      %s38 = sphi 0, %s37
      %s54 = sphi 0, %s38
      %s60 = sphi 0, %s62
      %s63 = sphi 0, %s60
      %s64 = sphi 0, %s63
      %s80 = sphi 0, %s64
      %s84 = sphi 0, %s84
      %s86 = sphi 0, %s84
      %s87 = sphi 0, %s86
      %s101 = sphi 0, %s87
      %s105 = sphi 0, %s105
      %s107 = sphi 0, %s105
      %s108 = sphi 0, %s107
      %s122 = sphi 0, %s108
      %s126 = sphi 0, %s126
      %s128 = sphi 0, %s126
      %s129 = sphi 0, %s128
      %s143 = sphi 0, %s129
      %s147 = sphi 0, %s147
      %s149 = sphi 0, %s147
      %s150 = sphi 0, %s149
      %s164 = sphi 0, %s150
      %s168 = sphi 0, %s168
      %s170 = sphi 0, %s168
      %s171 = sphi 0, %s170
      %s185 = sphi 0, %s171
      %s189 = sphi 0, %s189
      %s191 = sphi 0, %s189
      %s192 = sphi 0, %s191
      %s206 = sphi 0, %s192
      %s210 = sphi 0, %s210
      %s212 = sphi 0, %s210
      %s213 = sphi 0, %s212
      %s227 = sphi 0, %s213
      %s233 = sphi 0, %s235
      %s236 = sphi 0, %s233
      %s237 = sphi 0, %s236
      %s253 = sphi 0, %s237
    $region4: #{tpu_custom_call.1} parent=1 // loop_header_branch
      %27 = sbr.rel (%p25) target = $region8
    $region5: #{tpu_custom_call.1} parent=1 // loop_body
      %s29 = ssub.s32 %s24, 1
      %s30 = ssub.s32 %s24, 2
      %s31 = sadd.s32 %s24, 1
      %s32 = ssub.s32 %s24, %s31
      %p33 = scmp.eq.s32.totalorder %s32, 0
      %s35 = sadd.s32 %s34, 1
      %s36 = scalar_select %p33, %s34, %s35
      %p39 = pneg %p33
      %p40 = scmp.eq.s32.totalorder %s24, 1
      %p41 = por %p39, %p40
      %p42 = scmp.ne.s32.totalorder %s34, %s37
      %p43 = scmp.eq.s32.totalorder %s24, 0
      %p44 = por %p42, %p43
      %p45 = scmp.ne.s32.totalorder %s34, %s37
      %p46 = scmp.eq.s32.totalorder %s29, 1
      %p47 = por %p45, %p46
      %p48 = scmp.ne.s32.totalorder %s37, %s38
      %p49 = scmp.eq.s32.totalorder %s29, 0
      %p50 = por %p48, %p49
      %p51 = scmp.ne.s32.totalorder %s37, %s38
      %p52 = scmp.eq.s32.totalorder %s30, 1
      %p53 = por %p51, %p52
      %p55 = scmp.ne.s32.totalorder %s38, %s54
      %p56 = scmp.eq.s32.totalorder %s30, 0
      %p57 = por %p55, %p56
      %s58 = ssub.s32 %s24, %s31
      %p59 = scmp.eq.s32.totalorder %s58, 0
      %s61 = sadd.s32 %s60, 1
      %s62 = scalar_select %p59, %s60, %s61
      %p65 = pneg %p59
      %p66 = scmp.eq.s32.totalorder %s24, 1
      %p67 = por %p65, %p66
      %p68 = scmp.ne.s32.totalorder %s60, %s63
      %p69 = scmp.eq.s32.totalorder %s24, 0
      %p70 = por %p68, %p69
      %p71 = scmp.ne.s32.totalorder %s60, %s63
      %p72 = scmp.eq.s32.totalorder %s29, 1
      %p73 = por %p71, %p72
      %p74 = scmp.ne.s32.totalorder %s63, %s64
      %p75 = scmp.eq.s32.totalorder %s29, 0
      %p76 = por %p74, %p75
      %p77 = scmp.ne.s32.totalorder %s63, %s64
      %p78 = scmp.eq.s32.totalorder %s30, 1
      %p79 = por %p77, %p78
      %p81 = scmp.ne.s32.totalorder %s64, %s80
      %p82 = scmp.eq.s32.totalorder %s30, 0
      %p83 = por %p81, %p82
      %s85 = sadd.s32 %s84, 1
      %p88 = scmp.eq.s32.totalorder %s24, 1
      %p89 = scmp.ne.s32.totalorder %s84, %s86
      %p90 = scmp.eq.s32.totalorder %s24, 0
      %p91 = por %p89, %p90
      %p92 = scmp.ne.s32.totalorder %s84, %s86
      %p93 = scmp.eq.s32.totalorder %s29, 1
      %p94 = por %p92, %p93
      %p95 = scmp.ne.s32.totalorder %s86, %s87
      %p96 = scmp.eq.s32.totalorder %s29, 0
      %p97 = por %p95, %p96
      %p98 = scmp.ne.s32.totalorder %s86, %s87
      %p99 = scmp.eq.s32.totalorder %s30, 1
      %p100 = por %p98, %p99
      %p102 = scmp.ne.s32.totalorder %s87, %s101
      %p103 = scmp.eq.s32.totalorder %s30, 0
      %p104 = por %p102, %p103
      %s106 = sadd.s32 %s105, 1
      %p109 = scmp.eq.s32.totalorder %s24, 1
      %p110 = scmp.ne.s32.totalorder %s105, %s107
      %p111 = scmp.eq.s32.totalorder %s24, 0
      %p112 = por %p110, %p111
      %p113 = scmp.ne.s32.totalorder %s105, %s107
      %p114 = scmp.eq.s32.totalorder %s29, 1
      %p115 = por %p113, %p114
      %p116 = scmp.ne.s32.totalorder %s107, %s108
      %p117 = scmp.eq.s32.totalorder %s29, 0
      %p118 = por %p116, %p117
      %p119 = scmp.ne.s32.totalorder %s107, %s108
      %p120 = scmp.eq.s32.totalorder %s30, 1
      %p121 = por %p119, %p120
      %p123 = scmp.ne.s32.totalorder %s108, %s122
      %p124 = scmp.eq.s32.totalorder %s30, 0
      %p125 = por %p123, %p124
      %s127 = sadd.s32 %s126, 1
      %p130 = scmp.eq.s32.totalorder %s24, 1
      %p131 = scmp.ne.s32.totalorder %s126, %s128
      %p132 = scmp.eq.s32.totalorder %s24, 0
      %p133 = por %p131, %p132
      %p134 = scmp.ne.s32.totalorder %s126, %s128
      %p135 = scmp.eq.s32.totalorder %s29, 1
      %p136 = por %p134, %p135
      %p137 = scmp.ne.s32.totalorder %s128, %s129
      %p138 = scmp.eq.s32.totalorder %s29, 0
      %p139 = por %p137, %p138
      %p140 = scmp.ne.s32.totalorder %s128, %s129
      %p141 = scmp.eq.s32.totalorder %s30, 1
      %p142 = por %p140, %p141
      %p144 = scmp.ne.s32.totalorder %s129, %s143
      %p145 = scmp.eq.s32.totalorder %s30, 0
      %p146 = por %p144, %p145
      %s148 = sadd.s32 %s147, 1
      %p151 = scmp.eq.s32.totalorder %s24, 1
      %p152 = scmp.ne.s32.totalorder %s147, %s149
      %p153 = scmp.eq.s32.totalorder %s24, 0
      %p154 = por %p152, %p153
      %p155 = scmp.ne.s32.totalorder %s147, %s149
      %p156 = scmp.eq.s32.totalorder %s29, 1
      %p157 = por %p155, %p156
      %p158 = scmp.ne.s32.totalorder %s149, %s150
      %p159 = scmp.eq.s32.totalorder %s29, 0
      %p160 = por %p158, %p159
      %p161 = scmp.ne.s32.totalorder %s149, %s150
      %p162 = scmp.eq.s32.totalorder %s30, 1
      %p163 = por %p161, %p162
      %p165 = scmp.ne.s32.totalorder %s150, %s164
      %p166 = scmp.eq.s32.totalorder %s30, 0
      %p167 = por %p165, %p166
      %s169 = sadd.s32 %s168, 1
      %p172 = scmp.eq.s32.totalorder %s24, 1
      %p173 = scmp.ne.s32.totalorder %s168, %s170
      %p174 = scmp.eq.s32.totalorder %s24, 0
      %p175 = por %p173, %p174
      %p176 = scmp.ne.s32.totalorder %s168, %s170
      %p177 = scmp.eq.s32.totalorder %s29, 1
      %p178 = por %p176, %p177
      %p179 = scmp.ne.s32.totalorder %s170, %s171
      %p180 = scmp.eq.s32.totalorder %s29, 0
      %p181 = por %p179, %p180
      %p182 = scmp.ne.s32.totalorder %s170, %s171
      %p183 = scmp.eq.s32.totalorder %s30, 1
      %p184 = por %p182, %p183
      %p186 = scmp.ne.s32.totalorder %s171, %s185
      %p187 = scmp.eq.s32.totalorder %s30, 0
      %p188 = por %p186, %p187
      %s190 = sadd.s32 %s189, 1
      %p193 = scmp.eq.s32.totalorder %s24, 1
      %p194 = scmp.ne.s32.totalorder %s189, %s191
      %p195 = scmp.eq.s32.totalorder %s24, 0
      %p196 = por %p194, %p195
      %p197 = scmp.ne.s32.totalorder %s189, %s191
      %p198 = scmp.eq.s32.totalorder %s29, 1
      %p199 = por %p197, %p198
      %p200 = scmp.ne.s32.totalorder %s191, %s192
      %p201 = scmp.eq.s32.totalorder %s29, 0
      %p202 = por %p200, %p201
      %p203 = scmp.ne.s32.totalorder %s191, %s192
      %p204 = scmp.eq.s32.totalorder %s30, 1
      %p205 = por %p203, %p204
      %p207 = scmp.ne.s32.totalorder %s192, %s206
      %p208 = scmp.eq.s32.totalorder %s30, 0
      %p209 = por %p207, %p208
      %s211 = sadd.s32 %s210, 1
      %p214 = scmp.eq.s32.totalorder %s24, 1
      %p215 = scmp.ne.s32.totalorder %s210, %s212
      %p216 = scmp.eq.s32.totalorder %s24, 0
      %p217 = por %p215, %p216
      %p218 = scmp.ne.s32.totalorder %s210, %s212
      %p219 = scmp.eq.s32.totalorder %s29, 1
      %p220 = por %p218, %p219
      %p221 = scmp.ne.s32.totalorder %s212, %s213
      %p222 = scmp.eq.s32.totalorder %s29, 0
      %p223 = por %p221, %p222
      %p224 = scmp.ne.s32.totalorder %s212, %s213
      %p225 = scmp.eq.s32.totalorder %s30, 1
      %p226 = por %p224, %p225
      %p228 = scmp.ne.s32.totalorder %s213, %s227
      %p229 = scmp.eq.s32.totalorder %s30, 0
      %p230 = por %p228, %p229
      %s231 = ssub.s32 %s24, %s31
      %p232 = scmp.eq.s32.totalorder %s231, 0
      %s234 = sadd.s32 %s233, 1
      %s235 = scalar_select %p232, %s233, %s234
      %p238 = pneg %p232
      %p239 = scmp.eq.s32.totalorder %s24, 1
      %p240 = por %p238, %p239
      %p241 = scmp.ne.s32.totalorder %s233, %s236
      %p242 = scmp.eq.s32.totalorder %s24, 0
      %p243 = por %p241, %p242
      %p244 = scmp.ne.s32.totalorder %s233, %s236
      %p245 = scmp.eq.s32.totalorder %s29, 1
      %p246 = por %p244, %p245
      %p247 = scmp.ne.s32.totalorder %s236, %s237
      %p248 = scmp.eq.s32.totalorder %s29, 0
      %p249 = por %p247, %p248
      %p250 = scmp.ne.s32.totalorder %s236, %s237
      %p251 = scmp.eq.s32.totalorder %s30, 1
      %p252 = por %p250, %p251
      %p254 = scmp.ne.s32.totalorder %s237, %s253
      %p255 = scmp.eq.s32.totalorder %s30, 0
      %p256 = por %p254, %p255
      %p257 = scmp.le.s32.totalorder 1, %s24
      %p258 = scmp.lt.s32.totalorder %s24, 3
      %p259 = pnand %p257, %p258
      %p260 = pneg %p259
      // Predicated region
      $region9: #{tpu_custom_call.1} parent=5 // pred_check
        _
      $region10: #{tpu_custom_call.1} parent=5 // pred_check_branch
        %262 = sbr.rel (%p259) target = $region12
      $region11: #{tpu_custom_call.1} parent=5 // pred_region
        %s263 = ssub.s32 %s24, 1
        // Predicated region
        $region13: #{tpu_custom_call.1} parent=11 // pred_check
          %p264 = pneg %p97
        $region14: #{tpu_custom_call.1} parent=11 // pred_check_branch
          %266 = sbr.rel (%p264) target = $region16
        $region15: #{tpu_custom_call.1} parent=11 // pred_region
          %s268 = ssub.s32 18432, 18432
          %269 = vsyncadd [#allocation6], %s268
          %s270 = sshll.u32 [#allocation5], 4
          %s271 = int_to_ptr.vmem [resolvable:$true] %s270
          %276 = dma.hbm_to_vmem [thread:$0]  %s2, 18432, %s271, [#allocation6], 192, 192, 12
        $region16: #{tpu_custom_call.1} parent=11 // pred_fallthru
          _
        // Predicated region
        $region17: #{tpu_custom_call.1} parent=11 // pred_check
          %p277 = pneg %p118
        $region18: #{tpu_custom_call.1} parent=11 // pred_check_branch
          %279 = sbr.rel (%p277) target = $region20
        $region19: #{tpu_custom_call.1} parent=11 // pred_region
          %s281 = ssub.s32 6144, 6144
          %282 = vsyncadd [#allocation6], %s281
          %s283 = sshll.u32 [#allocation7], 4
          %s284 = int_to_ptr.vmem [resolvable:$true] %s283
          %289 = dma.hbm_to_vmem [thread:$0]  %s3, 6144, %s284, [#allocation6], 64, 64, 4
        $region20: #{tpu_custom_call.1} parent=11 // pred_fallthru
          _
        // Predicated region
        $region21: #{tpu_custom_call.1} parent=11 // pred_check
          %p290 = pneg %p139
        $region22: #{tpu_custom_call.1} parent=11 // pred_check_branch
          %292 = sbr.rel (%p290) target = $region24
        $region23: #{tpu_custom_call.1} parent=11 // pred_region
          %s294 = ssub.s32 6144, 6144
          %295 = vsyncadd [#allocation9], %s294
          %s296 = sshll.u32 [#allocation8], 4
          %s297 = int_to_ptr.vmem [resolvable:$true] %s296
          %302 = dma.hbm_to_vmem [thread:$0]  %s4, 6144, %s297, [#allocation9], 64, 64, 4
        $region24: #{tpu_custom_call.1} parent=11 // pred_fallthru
          _
        // Predicated region
        $region25: #{tpu_custom_call.1} parent=11 // pred_check
          %p303 = pneg %p160
        $region26: #{tpu_custom_call.1} parent=11 // pred_check_branch
          %305 = sbr.rel (%p303) target = $region28
        $region27: #{tpu_custom_call.1} parent=11 // pred_region
          %s307 = ssub.s32 6144, 6144
          %308 = vsyncadd [#allocation9], %s307
          %s309 = sshll.u32 [#allocation10], 4
          %s310 = int_to_ptr.vmem [resolvable:$true] %s309
          %315 = dma.hbm_to_vmem [thread:$0]  %s5, 6144, %s310, [#allocation9], 64, 64, 4
        $region28: #{tpu_custom_call.1} parent=11 // pred_fallthru
          _
        // Predicated region
        $region29: #{tpu_custom_call.1} parent=11 // pred_check
          %p316 = pneg %p181
        $region30: #{tpu_custom_call.1} parent=11 // pred_check_branch
          %318 = sbr.rel (%p316) target = $region32
        $region31: #{tpu_custom_call.1} parent=11 // pred_region
          %s320 = ssub.s32 1536, 1536
          %321 = vsyncadd [#allocation12], %s320
          %s322 = sshll.u32 [#allocation11], 4
          %s323 = int_to_ptr.vmem [resolvable:$true] %s322
          %328 = dma.hbm_to_vmem [thread:$0]  %s6, 1536, %s323, [#allocation12], 128, 128, 8
        $region32: #{tpu_custom_call.1} parent=11 // pred_fallthru
          _
        // Predicated region
        $region33: #{tpu_custom_call.1} parent=11 // pred_check
          %p329 = pneg %p202
        $region34: #{tpu_custom_call.1} parent=11 // pred_check_branch
          %331 = sbr.rel (%p329) target = $region36
        $region35: #{tpu_custom_call.1} parent=11 // pred_region
          %s333 = ssub.s32 8192, 8192
          %334 = vsyncadd [#allocation12], %s333
          %s335 = sshll.u32 [#allocation13], 4
          %s336 = int_to_ptr.vmem [resolvable:$true] %s335
          %341 = dma.hbm_to_vmem [thread:$0]  %s7, 8192, %s336, [#allocation12], 512, 512, 32
        $region36: #{tpu_custom_call.1} parent=11 // pred_fallthru
          _
        // Predicated region
        $region37: #{tpu_custom_call.1} parent=11 // pred_check
          %p342 = pneg %p223
        $region38: #{tpu_custom_call.1} parent=11 // pred_check_branch
          %344 = sbr.rel (%p342) target = $region40
        $region39: #{tpu_custom_call.1} parent=11 // pred_region
          _
        $region40: #{tpu_custom_call.1} parent=11 // pred_fallthru
          _
      $region12: #{tpu_custom_call.1} parent=5 // pred_fallthru
        _
      %p345 = scmp.lt.s32.totalorder %s24, 2
      // Predicated region
      $region41: #{tpu_custom_call.1} parent=5 // pred_check
        %p346 = pneg %p345
      $region42: #{tpu_custom_call.1} parent=5 // pred_check_branch
        %348 = sbr.rel (%p346) target = $region44
      $region43: #{tpu_custom_call.1} parent=5 // pred_region
        // Predicated region
        $region45: #{tpu_custom_call.1} parent=43 // pred_check
          %p349 = pneg %p44
        $region46: #{tpu_custom_call.1} parent=43 // pred_check_branch
          %351 = sbr.rel (%p349) target = $region48
        $region47: #{tpu_custom_call.1} parent=43 // pred_region
          %s352 = sand.u32 %s34, 1
          %s353 = scalar_lea.sflag [#allocation3], %s352
          %s354 = sand.u32 %s34, 1
          %s355 = smul.addr %s354, 8
          %s356 = scalar_lea.vmem [#allocation2], %s355
          %s358 = ssub.s32 128, 128
          %359 = vsyncadd %s353, %s358
          %s360 = smul.addr %s24, 128
          %s361 = scalar_lea.hbm %s0, %s360
          %s363 = sshll.u32 %s356, 4
          %s364 = int_to_ptr.vmem [resolvable:$true] %s363
          %366 = dma.hbm_to_vmem [thread:$0]  %s361, 128, %s364, %s353
        $region48: #{tpu_custom_call.1} parent=43 // pred_fallthru
          _
        // Predicated region
        $region49: #{tpu_custom_call.1} parent=43 // pred_check
          %p367 = pneg %p70
        $region50: #{tpu_custom_call.1} parent=43 // pred_check_branch
          %369 = sbr.rel (%p367) target = $region52
        $region51: #{tpu_custom_call.1} parent=43 // pred_region
          %p370 = scmp.lt.s32.totalorder %s24, 1
          %s371 = scalar_select %p370, %s24, 1
          %s372 = scalar_lea.vmem %s1, %s371
        $region52: #{tpu_custom_call.1} parent=43 // pred_fallthru
          _
      $region44: #{tpu_custom_call.1} parent=5 // pred_fallthru
        _
      %p373 = scmp.le.s32.totalorder 1, %s24
      %p374 = scmp.lt.s32.totalorder %s24, 3
      %p375 = pnand %p373, %p374
      %p376 = pneg %p375
      // Predicated region
      $region53: #{tpu_custom_call.1} parent=5 // pred_check
        _
      $region54: #{tpu_custom_call.1} parent=5 // pred_check_branch
        %378 = sbr.rel (%p375) target = $region56
      $region55: #{tpu_custom_call.1} parent=5 // pred_region
        %s379 = ssub.s32 %s24, 1
        %s380 = sand.u32 %s37, 1
        %s381 = scalar_lea.sflag [#allocation3], %s380
        %s382 = sand.u32 %s37, 1
        %s383 = smul.addr %s382, 8
        %s384 = scalar_lea.vmem [#allocation2], %s383
        // Predicated region
        $region57: #{tpu_custom_call.1} parent=55 // pred_check
          %p385 = pneg %p50
        $region58: #{tpu_custom_call.1} parent=55 // pred_check_branch
          %387 = sbr.rel (%p385) target = $region60
        $region59: #{tpu_custom_call.1} parent=55 // pred_region
          %388 = dma.done %s381, 128
        $region60: #{tpu_custom_call.1} parent=55 // pred_fallthru
          _
        // Predicated region
        $region61: #{tpu_custom_call.1} parent=55 // pred_check
          %p389 = pneg %p97
        $region62: #{tpu_custom_call.1} parent=55 // pred_check_branch
          %391 = sbr.rel (%p389) target = $region64
        $region63: #{tpu_custom_call.1} parent=55 // pred_region
          %392 = dma.done [#allocation6], 18432
        $region64: #{tpu_custom_call.1} parent=55 // pred_fallthru
          _
        // Predicated region
        $region65: #{tpu_custom_call.1} parent=55 // pred_check
          %p393 = pneg %p118
        $region66: #{tpu_custom_call.1} parent=55 // pred_check_branch
          %395 = sbr.rel (%p393) target = $region68
        $region67: #{tpu_custom_call.1} parent=55 // pred_region
          %396 = dma.done [#allocation6], 6144
        $region68: #{tpu_custom_call.1} parent=55 // pred_fallthru
          _
        // Predicated region
        $region69: #{tpu_custom_call.1} parent=55 // pred_check
          %p397 = pneg %p139
        $region70: #{tpu_custom_call.1} parent=55 // pred_check_branch
          %399 = sbr.rel (%p397) target = $region72
        $region71: #{tpu_custom_call.1} parent=55 // pred_region
          %400 = dma.done [#allocation9], 6144
        $region72: #{tpu_custom_call.1} parent=55 // pred_fallthru
          _
        // Predicated region
        $region73: #{tpu_custom_call.1} parent=55 // pred_check
          %p401 = pneg %p160
        $region74: #{tpu_custom_call.1} parent=55 // pred_check_branch
          %403 = sbr.rel (%p401) target = $region76
        $region75: #{tpu_custom_call.1} parent=55 // pred_region
          %404 = dma.done [#allocation9], 6144
        $region76: #{tpu_custom_call.1} parent=55 // pred_fallthru
          _
        // Predicated region
        $region77: #{tpu_custom_call.1} parent=55 // pred_check
          %p405 = pneg %p181
        $region78: #{tpu_custom_call.1} parent=55 // pred_check_branch
          %407 = sbr.rel (%p405) target = $region80
        $region79: #{tpu_custom_call.1} parent=55 // pred_region
          %408 = dma.done [#allocation12], 1536
        $region80: #{tpu_custom_call.1} parent=55 // pred_fallthru
          _
        // Predicated region
        $region81: #{tpu_custom_call.1} parent=55 // pred_check
          %p409 = pneg %p202
        $region82: #{tpu_custom_call.1} parent=55 // pred_check_branch
          %411 = sbr.rel (%p409) target = $region84
        $region83: #{tpu_custom_call.1} parent=55 // pred_region
          %412 = dma.done [#allocation12], 8192
        $region84: #{tpu_custom_call.1} parent=55 // pred_fallthru
          _
        %s413 = sand.u32 %s37, 1
        %s414 = scalar_lea.sflag [#allocation3], %s413
        %s415 = sand.u32 %s37, 1
        %s416 = smul.addr %s415, 8
        %s417 = scalar_lea.vmem [#allocation2], %s416
        %p418 = pneg %p50
        %p419 = pneg %p47
        %p420 = scmp.lt.s32.totalorder %s29, 1
        %s421 = scalar_select %p420, %s29, 1
        %s422 = scalar_lea.vmem %s1, %s421
        %p423 = pneg %p76
        %p424 = pneg %p73
        %p425 = pneg %p97
        %p426 = pneg %p94
        %p427 = pneg %p118
        %p428 = pneg %p115
        %p429 = pneg %p139
        %p430 = pneg %p136
        %p431 = pneg %p160
        %p432 = pneg %p157
        %p433 = pneg %p181
        %p434 = pneg %p178
        %p435 = pneg %p202
        %p436 = pneg %p199
        %p437 = pneg %p223
        %p438 = pneg %p220
        %p439 = pneg %p249
        %p440 = pneg %p246
        %s441 = sand.u32 %s236, 1
        %s442 = scalar_lea.sflag [#allocation4], %s441
        %s443 = sand.u32 %s236, 1
        %s444 = smul.addr %s443, 64
        %s445 = scalar_lea.vmem [#allocation14], %s444
        %p446 = scmp.lt.s32.totalorder %s29, 1
        %s447 = scalar_select %p446, %s29, 1
        %s448 = scalar_lea.vmem %s1, %s447
        %v450 = vld [vmem:[%s384] sm:$0xff]
        %v451 = vld [vmem:[%s448] sm:$0x1]
        %v452 = vld [vmem:[#allocation11] sm:$0xff]
        %v453 = vld [vmem:[#allocation11 + $0x8] sm:$0xff]
        %v454 = vpack.c.bf16 %v450, %v450
        %v455 = vld [vmem:[#allocation5] sm:$0xff]
        %v456 = vld [vmem:[#allocation5 + $0x8] sm:$0xf]
        %v457 = vld [vmem:[#allocation5 + $0xc] sm:$0xff]
        %v458 = vld [vmem:[#allocation5 + $0x14] sm:$0xf]
        %v459 = vld [vmem:[#allocation5 + $0x18] sm:$0xff]
        %v460 = vld [vmem:[#allocation5 + $0x20] sm:$0xf]
        %v461 = vld [vmem:[#allocation5 + $0x24] sm:$0xff]
        %v462 = vld [vmem:[#allocation5 + $0x2c] sm:$0xf]
        %v463 = vld [vmem:[#allocation5 + $0x30] sm:$0xff]
        %v464 = vld [vmem:[#allocation5 + $0x38] sm:$0xf]
        %v465 = vld [vmem:[#allocation5 + $0x3c] sm:$0xff]
        %v466 = vld [vmem:[#allocation5 + $0x44] sm:$0xf]
        %v467 = vld [vmem:[#allocation5 + $0x48] sm:$0xff]
        %v468 = vld [vmem:[#allocation5 + $0x50] sm:$0xf]
        %v469 = vld [vmem:[#allocation5 + $0x54] sm:$0xff]
        %v470 = vld [vmem:[#allocation5 + $0x5c] sm:$0xf]
        %v471 = vld [vmem:[#allocation5 + $0x60] sm:$0xff]
        %v472 = vld [vmem:[#allocation5 + $0x68] sm:$0xf]
        %v473 = vld [vmem:[#allocation5 + $0x6c] sm:$0xff]
        %v474 = vld [vmem:[#allocation5 + $0x74] sm:$0xf]
        %v475 = vld [vmem:[#allocation5 + $0x78] sm:$0xff]
        %v476 = vld [vmem:[#allocation5 + $0x80] sm:$0xf]
        %v477 = vld [vmem:[#allocation5 + $0x84] sm:$0xff]
        %v478 = vld [vmem:[#allocation5 + $0x8c] sm:$0xf]
        %v479 = vld [vmem:[#allocation5 + $0x90] sm:$0xff]
        %v480 = vld [vmem:[#allocation5 + $0x98] sm:$0xf]
        %v481 = vld [vmem:[#allocation5 + $0x9c] sm:$0xff]
        %v482 = vld [vmem:[#allocation5 + $0xa4] sm:$0xf]
        %v483 = vld [vmem:[#allocation5 + $0xa8] sm:$0xff]
        %v484 = vld [vmem:[#allocation5 + $0xb0] sm:$0xf]
        %v485 = vld [vmem:[#allocation5 + $0xb4] sm:$0xff]
        %v486 = vld [vmem:[#allocation5 + $0xbc] sm:$0xf]
        %v519 = vunpack.c.l.b16 %v455
        %v520 = vunpack.c.h.b16 %v455
        %v521 = vunpack.c.l.b16 %v456
        %v522 = vunpack.c.l.b16 %v457
        %v523 = vunpack.c.h.b16 %v457
        %v524 = vunpack.c.l.b16 %v458
        %v525 = vunpack.c.l.b16 %v459
        %v526 = vunpack.c.h.b16 %v459
        %v527 = vunpack.c.l.b16 %v460
        %v528 = vunpack.c.l.b16 %v461
        %v529 = vunpack.c.h.b16 %v461
        %v530 = vunpack.c.l.b16 %v462
        %v531 = vunpack.c.l.b16 %v463
        %v532 = vunpack.c.h.b16 %v463
        %v533 = vunpack.c.l.b16 %v464
        %v534 = vunpack.c.l.b16 %v465
        %v535 = vunpack.c.h.b16 %v465
        %v536 = vunpack.c.l.b16 %v466
        %v537 = vunpack.c.l.b16 %v467
        %v538 = vunpack.c.h.b16 %v467
        %v539 = vunpack.c.l.b16 %v468
        %v540 = vunpack.c.l.b16 %v469
        %v541 = vunpack.c.h.b16 %v469
        %v542 = vunpack.c.l.b16 %v470
        %v543 = vunpack.c.l.b16 %v471
        %v544 = vunpack.c.h.b16 %v471
        %v545 = vunpack.c.l.b16 %v472
        %v546 = vunpack.c.l.b16 %v473
        %v547 = vunpack.c.h.b16 %v473
        %v548 = vunpack.c.l.b16 %v474
        %v549 = vunpack.c.l.b16 %v475
        %v550 = vunpack.c.h.b16 %v475
        %v551 = vunpack.c.l.b16 %v476
        %v552 = vunpack.c.l.b16 %v477
        %v553 = vunpack.c.h.b16 %v477
        %v554 = vunpack.c.l.b16 %v478
        %v555 = vunpack.c.l.b16 %v479
        %v556 = vunpack.c.h.b16 %v479
        %v557 = vunpack.c.l.b16 %v480
        %v558 = vunpack.c.l.b16 %v481
        %v559 = vunpack.c.h.b16 %v481
        %v560 = vunpack.c.l.b16 %v482
        %v561 = vunpack.c.l.b16 %v483
        %v562 = vunpack.c.h.b16 %v483
        %v563 = vunpack.c.l.b16 %v484
        %v564 = vunpack.c.l.b16 %v485
        %v565 = vunpack.c.h.b16 %v485
        %v566 = vunpack.c.l.b16 %v486
        %v567 = vpack.c.b16 %v522, %v519
        %v568 = vpack.c.b16 %v523, %v520
        %v569 = vpack.c.b16 %v524, %v521
        %v570 = vpack.c.b16 %v528, %v525
        %v571 = vpack.c.b16 %v529, %v526
        %v572 = vpack.c.b16 %v530, %v527
        %v573 = vpack.c.b16 %v534, %v531
        %v574 = vpack.c.b16 %v535, %v532
        %v575 = vpack.c.b16 %v536, %v533
        %v576 = vpack.c.b16 %v540, %v537
        %v577 = vpack.c.b16 %v541, %v538
        %v578 = vpack.c.b16 %v542, %v539
        %v579 = vpack.c.b16 %v546, %v543
        %v580 = vpack.c.b16 %v547, %v544
        %v581 = vpack.c.b16 %v548, %v545
        %v582 = vpack.c.b16 %v552, %v549
        %v583 = vpack.c.b16 %v553, %v550
        %v584 = vpack.c.b16 %v554, %v551
        %v585 = vpack.c.b16 %v558, %v555
        %v586 = vpack.c.b16 %v559, %v556
        %v587 = vpack.c.b16 %v560, %v557
        %v588 = vpack.c.b16 %v564, %v561
        %v589 = vpack.c.b16 %v565, %v562
        %v590 = vpack.c.b16 %v566, %v563
        %615 = vmatprep.subr.bf16.mxu0 %v568
        %616 = vmatpush1.bf16.msra.mxu0 %v567
        %617 = vmatprep.subr.bf16.mxu0 %v571
        %618 = vmatpush1.bf16.msra.mxu0 %v570
        %619 = vmatprep.subr.bf16.mxu0 %v574
        %620 = vmatpush1.bf16.msra.mxu0 %v573
        %621 = vmatprep.subr.bf16.mxu0 %v577
        %622 = vmatpush1.bf16.msra.mxu0 %v576
        %623 = vmatprep.subr.bf16.mxu0 %v580
        %624 = vmatpush1.bf16.msra.mxu0 %v579
        %625 = vmatprep.subr.bf16.mxu0 %v583
        %626 = vmatpush1.bf16.msra.mxu0 %v582
        %627 = vmatprep.subr.bf16.mxu0 %v586
        %628 = vmatpush1.bf16.msra.mxu0 %v585
        %629 = vmatprep.subr.bf16.mxu0 %v589
        %630 = vmatpush1.bf16.msra.mxu0 %v588
        %631 = vmatprep.subr.bf16.mxu0 0
        %632 = vmatpush1.bf16.msra.mxu0 0
        %633 = vmatprep.subr.bf16.mxu0 0
        %634 = vmatpush1.bf16.msra.mxu0 0
        %635 = vmatprep.subr.bf16.mxu0 0
        %636 = vmatpush1.bf16.msra.mxu0 0
        %637 = vmatprep.subr.bf16.mxu0 0
        %638 = vmatpush1.bf16.msra.mxu0 0
        %639 = vmatprep.subr.bf16.mxu0 0
        %640 = vmatpush1.bf16.msra.mxu0 0
        %641 = vmatprep.subr.bf16.mxu0 0
        %642 = vmatpush1.bf16.msra.mxu0 0
        %643 = vmatprep.subr.bf16.mxu0 0
        %644 = vmatpush1.bf16.msra.mxu0 0
        %645 = vmatprep.subr.bf16.mxu0 0
        %646 = vmatpush1.bf16.msra.mxu0 0
        %647 = vmatprep.mubr.bf16.mxu0 0
        %648 = vmatmul.mubr.bf16.gmra.mrb[0].mxu0 %v454
        %v649 = vpop.f32.mrb[0].mxu0
        %v650 = vadd.f32 0.0, %v649
        %v651 = vpop.f32.mrb[0].mxu0
        %v652 = vadd.f32 0.0, %v651
        %v653 = vpop.f32.mrb[0].mxu0
        %v654 = vpop.f32.mrb[0].mxu0
        %655 = vdwg.mxu0
        %656 = vmatprep.subr.bf16.mxu0 0
        %657 = vmatpush1.bf16.msra.mxu0 %v569
        %658 = vmatprep.subr.bf16.mxu0 0
        %659 = vmatpush1.bf16.msra.mxu0 %v572
        %660 = vmatprep.subr.bf16.mxu0 0
        %661 = vmatpush1.bf16.msra.mxu0 %v575
        %662 = vmatprep.subr.bf16.mxu0 0
        %663 = vmatpush1.bf16.msra.mxu0 %v578
        %664 = vmatprep.subr.bf16.mxu0 0
        %665 = vmatpush1.bf16.msra.mxu0 %v581
        %666 = vmatprep.subr.bf16.mxu0 0
        %667 = vmatpush1.bf16.msra.mxu0 %v584
        %668 = vmatprep.subr.bf16.mxu0 0
        %669 = vmatpush1.bf16.msra.mxu0 %v587
        %670 = vmatprep.subr.bf16.mxu0 0
        %671 = vmatpush1.bf16.msra.mxu0 %v590
        %672 = vmatprep.subr.bf16.mxu0 0
        %673 = vmatpush1.bf16.msra.mxu0 0
        %674 = vmatprep.subr.bf16.mxu0 0
        %675 = vmatpush1.bf16.msra.mxu0 0
        %676 = vmatprep.subr.bf16.mxu0 0
        %677 = vmatpush1.bf16.msra.mxu0 0
        %678 = vmatprep.subr.bf16.mxu0 0
        %679 = vmatpush1.bf16.msra.mxu0 0
        %680 = vmatprep.subr.bf16.mxu0 0
        %681 = vmatpush1.bf16.msra.mxu0 0
        %682 = vmatprep.subr.bf16.mxu0 0
        %683 = vmatpush1.bf16.msra.mxu0 0
        %684 = vmatprep.subr.bf16.mxu0 0
        %685 = vmatpush1.bf16.msra.mxu0 0
        %686 = vmatprep.subr.bf16.mxu0 0
        %687 = vmatpush1.bf16.msra.mxu0 0
        %688 = vmatprep.mubr.bf16.mxu0 0
        %689 = vmatmul.mubr.bf16.gmra.mrb[0].mxu0 %v454
        %v690 = vpop.f32.mrb[0].mxu0
        %v691 = vadd.f32 0.0, %v690
        %v692 = vpop.f32.mrb[0].mxu0
        %v693 = vpop.f32.mrb[0].mxu0
        %v694 = vpop.f32.mrb[0].mxu0
        %695 = vdwg.mxu0
        %v696 = vlaneseq
        %v697 = vshrl.u32 %v696, 7
        %v698 = vsub.s32 0, %v697
        %v699 = vrot.slane %v452, %v698
        %v700 = vadd.f32 %v650, %v699
        %v701 = vlaneseq
        %v702 = vshrl.u32 %v701, 7
        %v703 = vsub.s32 1, %v702
        %v704 = vrot.slane %v452, %v703
        %v705 = vadd.f32 %v652, %v704
        %v706 = vlaneseq
        %v707 = vshrl.u32 %v706, 7
        %v708 = vsub.s32 2, %v707
        %v709 = vrot.slane %v452, %v708
        %v710 = vadd.f32 %v691, %v709
        %v711 = vld [vmem:[#allocation7] sm:$0xf]
        %v712 = vld [vmem:[#allocation7 + $0x4] sm:$0xf]
        %v713 = vld [vmem:[#allocation7 + $0x8] sm:$0xf]
        %v714 = vld [vmem:[#allocation7 + $0xc] sm:$0xf]
        %v715 = vld [vmem:[#allocation7 + $0x10] sm:$0xf]
        %v716 = vld [vmem:[#allocation7 + $0x14] sm:$0xf]
        %v717 = vld [vmem:[#allocation7 + $0x18] sm:$0xf]
        %v718 = vld [vmem:[#allocation7 + $0x1c] sm:$0xf]
        %v719 = vld [vmem:[#allocation7 + $0x20] sm:$0xf]
        %v720 = vld [vmem:[#allocation7 + $0x24] sm:$0xf]
        %v721 = vld [vmem:[#allocation7 + $0x28] sm:$0xf]
        %v722 = vld [vmem:[#allocation7 + $0x2c] sm:$0xf]
        %v723 = vld [vmem:[#allocation7 + $0x30] sm:$0xf]
        %v724 = vld [vmem:[#allocation7 + $0x34] sm:$0xf]
        %v725 = vld [vmem:[#allocation7 + $0x38] sm:$0xf]
        %v726 = vld [vmem:[#allocation7 + $0x3c] sm:$0xf]
        %v727 = vpack.c.bf16 %v700, %v700
        %v728 = vpack.c.bf16 %v705, %v705
        %v729 = vpack.c.bf16 %v710, %v710
        %vm730 = vcmask 261120
        %v732 = vsel %vm730, %v727, 0
        %v735 = vsel %vm730, %v728, 0
        %737 = vmatprep.subr.bf16.mxu0 0
        %738 = vmatpush1.bf16.xpose.msra.mxu0 %v735
        %739 = vmatprep.subr.bf16.mxu0 0
        %740 = vmatpush1.bf16.xpose.msra.mxu0 0
        %741 = vmatprep.subr.bf16.mxu0 0
        %742 = vmatpush1.bf16.xpose.msra.mxu0 0
        %743 = vmatprep.subr.bf16.mxu0 0
        %744 = vmatpush1.bf16.xpose.msra.mxu0 0
        %745 = vmatprep.subr.bf16.mxu0 0
        %746 = vmatpush1.bf16.xpose.msra.mxu0 0
        %747 = vmatprep.subr.bf16.mxu0 0
        %748 = vmatpush1.bf16.xpose.msra.mxu0 0
        %749 = vmatprep.subr.bf16.mxu0 0
        %750 = vmatpush1.bf16.xpose.msra.mxu0 0
        %751 = vmatprep.subr.bf16.mxu0 0
        %752 = vmatpush1.bf16.xpose.msra.mxu0 0
        %753 = vmatprep.subr.bf16.mxu0 0
        %754 = vmatpush1.bf16.xpose.msra.mxu0 0
        %755 = vmatprep.subr.bf16.mxu0 0
        %756 = vmatpush1.bf16.xpose.msra.mxu0 0
        %757 = vmatprep.subr.bf16.mxu0 0
        %758 = vmatpush1.bf16.xpose.msra.mxu0 0
        %759 = vmatprep.subr.bf16.mxu0 0
        %760 = vmatpush1.bf16.xpose.msra.mxu0 0
        %761 = vmatprep.subr.bf16.mxu0 0
        %762 = vmatpush1.bf16.xpose.msra.mxu0 0
        %763 = vmatprep.subr.bf16.mxu0 0
        %764 = vmatpush1.bf16.xpose.msra.mxu0 0
        %765 = vmatprep.subr.bf16.mxu0 0
        %766 = vmatpush1.bf16.xpose.msra.mxu0 0
        %767 = vmatprep.subr.bf16.mxu0 0
        %768 = vmatpush1.bf16.xpose.msra.mxu0 0
        %769 = vmatprep.mubr.bf16.mxu0 0
        %770 = vmatmul.mubr.bf16.gmra.mrb[0].mxu0 %v732
        %v771 = vpop.f32.mrb[0].mxu0
        %v772 = vadd.f32 0.0, %v771
        %v773 = vpop.f32.mrb[0].mxu0
        %v774 = vpop.f32.mrb[0].mxu0
        %v775 = vpop.f32.mrb[0].mxu0
        %776 = vdwg.mxu0
        %v777 = vmul.f32 %v772, 0.17677669
        %v779 = vlaneseq
        %v780 = vshrl.u32 %v779, 7
        %v781 = vsub.s32 0, %v780
        %v782 = vrot.slane %v451, %v781
        %v784 = vadd.f32 %v777, %v782
        %vm785 = vcmask 64512
        %v786 = vsel %vm785, %v784, -inf
        %787 = vmax.xlane.f32.xlu0 %v786
        %v788 = vpop.xlane.xlu0 %787
        %v789 = vsub.f32 %v784, %v788
        %v790 = vmul.f32 %v789, 1.442695
        %v791 = vpow.pop %v790
        %v792 = vsel %vm785, %v791, 0.0
        %793 = vadd.xlane.f32.xlu0 %v792
        %v794 = vpop.xlane.xlu0 %793
        %v795 = vrcp.pop %v794
        %v796 = vmul.f32 %v791, %v795
        %v797 = vpack.c.bf16 %v796, %v796
        %v799 = vsel %vm785, %v797, 0
        %vm801 = vcmask 1043456
        %v803 = vsel %vm801, %v729, 0
        %805 = vmatprep.subr.bf16.mxu0 0
        %806 = vmatpush1.bf16.msra.mxu0 %v803
        %807 = vmatprep.subr.bf16.mxu0 0
        %808 = vmatpush1.bf16.msra.mxu0 0
        %809 = vmatprep.subr.bf16.mxu0 0
        %810 = vmatpush1.bf16.msra.mxu0 0
        %811 = vmatprep.subr.bf16.mxu0 0
        %812 = vmatpush1.bf16.msra.mxu0 0
        %813 = vmatprep.subr.bf16.mxu0 0
        %814 = vmatpush1.bf16.msra.mxu0 0
        %815 = vmatprep.subr.bf16.mxu0 0
        %816 = vmatpush1.bf16.msra.mxu0 0
        %817 = vmatprep.subr.bf16.mxu0 0
        %818 = vmatpush1.bf16.msra.mxu0 0
        %819 = vmatprep.subr.bf16.mxu0 0
        %820 = vmatpush1.bf16.msra.mxu0 0
        %821 = vmatprep.subr.bf16.mxu0 0
        %822 = vmatpush1.bf16.msra.mxu0 0
        %823 = vmatprep.subr.bf16.mxu0 0
        %824 = vmatpush1.bf16.msra.mxu0 0
        %825 = vmatprep.subr.bf16.mxu0 0
        %826 = vmatpush1.bf16.msra.mxu0 0
        %827 = vmatprep.subr.bf16.mxu0 0
        %828 = vmatpush1.bf16.msra.mxu0 0
        %829 = vmatprep.subr.bf16.mxu0 0
        %830 = vmatpush1.bf16.msra.mxu0 0
        %831 = vmatprep.subr.bf16.mxu0 0
        %832 = vmatpush1.bf16.msra.mxu0 0
        %833 = vmatprep.subr.bf16.mxu0 0
        %834 = vmatpush1.bf16.msra.mxu0 0
        %835 = vmatprep.subr.bf16.mxu0 0
        %836 = vmatpush1.bf16.msra.mxu0 0
        %837 = vmatprep.mubr.bf16.mxu0 0
        %838 = vmatmul.mubr.bf16.gmra.mrb[0].mxu0 %v799
        %v839 = vpop.f32.mrb[0].mxu0
        %v840 = vadd.f32 0.0, %v839
        %v841 = vpop.f32.mrb[0].mxu0
        %v842 = vpop.f32.mrb[0].mxu0
        %v843 = vpop.f32.mrb[0].mxu0
        %844 = vdwg.mxu0
        %v845 = vpack.c.bf16 %v840, %v840
        %847 = vrot.lane.b32.xlu0 %v727, 96
        %v848 = vpop.permute.xlu0 %847
        %850 = vrot.lane.b32.xlu0 %v728, 96
        %v851 = vpop.permute.xlu0 %850
        %v853 = vsel %vm730, %v848, 0
        %v856 = vsel %vm730, %v851, 0
        %858 = vmatprep.subr.bf16.mxu0 0
        %859 = vmatpush1.bf16.xpose.msra.mxu0 %v856
        %860 = vmatprep.subr.bf16.mxu0 0
        %861 = vmatpush1.bf16.xpose.msra.mxu0 0
        %862 = vmatprep.subr.bf16.mxu0 0
        %863 = vmatpush1.bf16.xpose.msra.mxu0 0
        %864 = vmatprep.subr.bf16.mxu0 0
        %865 = vmatpush1.bf16.xpose.msra.mxu0 0
        %866 = vmatprep.subr.bf16.mxu0 0
        %867 = vmatpush1.bf16.xpose.msra.mxu0 0
        %868 = vmatprep.subr.bf16.mxu0 0
        %869 = vmatpush1.bf16.xpose.msra.mxu0 0
        %870 = vmatprep.subr.bf16.mxu0 0
        %871 = vmatpush1.bf16.xpose.msra.mxu0 0
        %872 = vmatprep.subr.bf16.mxu0 0
        %873 = vmatpush1.bf16.xpose.msra.mxu0 0
        %874 = vmatprep.subr.bf16.mxu0 0
        %875 = vmatpush1.bf16.xpose.msra.mxu0 0
        %876 = vmatprep.subr.bf16.mxu0 0
        %877 = vmatpush1.bf16.xpose.msra.mxu0 0
        %878 = vmatprep.subr.bf16.mxu0 0
        %879 = vmatpush1.bf16.xpose.msra.mxu0 0
        %880 = vmatprep.subr.bf16.mxu0 0
        %881 = vmatpush1.bf16.xpose.msra.mxu0 0
        %882 = vmatprep.subr.bf16.mxu0 0
        %883 = vmatpush1.bf16.xpose.msra.mxu0 0
        %884 = vmatprep.subr.bf16.mxu0 0
        %885 = vmatpush1.bf16.xpose.msra.mxu0 0
        %886 = vmatprep.subr.bf16.mxu0 0
        %887 = vmatpush1.bf16.xpose.msra.mxu0 0
        %888 = vmatprep.subr.bf16.mxu0 0
        %889 = vmatpush1.bf16.xpose.msra.mxu0 0
        %890 = vmatprep.mubr.bf16.mxu0 0
        %891 = vmatmul.mubr.bf16.gmra.mrb[0].mxu0 %v853
        %v892 = vpop.f32.mrb[0].mxu0
        %v893 = vadd.f32 0.0, %v892
        %v894 = vpop.f32.mrb[0].mxu0
        %v895 = vpop.f32.mrb[0].mxu0
        %v896 = vpop.f32.mrb[0].mxu0
        %897 = vdwg.mxu0
        %v898 = vmul.f32 %v893, 0.17677669
        %v899 = vadd.f32 %v898, %v782
        %v900 = vsel %vm785, %v899, -inf
        %901 = vmax.xlane.f32.xlu0 %v900
        %v902 = vpop.xlane.xlu0 %901
        %v903 = vsub.f32 %v899, %v902
        %v904 = vmul.f32 %v903, 1.442695
        %v905 = vpow.pop %v904
        %v906 = vsel %vm785, %v905, 0.0
        %907 = vadd.xlane.f32.xlu0 %v906
        %v908 = vpop.xlane.xlu0 %907
        %v909 = vrcp.pop %v908
        %v910 = vmul.f32 %v905, %v909
        %v911 = vpack.c.bf16 %v910, %v910
        %913 = vrot.lane.b32.xlu0 %v729, 96
        %v914 = vpop.permute.xlu0 %913
        %v916 = vsel %vm785, %v911, 0
        %v919 = vsel %vm801, %v914, 0
        %921 = vmatprep.subr.bf16.mxu0 0
        %922 = vmatpush1.bf16.msra.mxu0 %v919
        %923 = vmatprep.subr.bf16.mxu0 0
        %924 = vmatpush1.bf16.msra.mxu0 0
        %925 = vmatprep.subr.bf16.mxu0 0
        %926 = vmatpush1.bf16.msra.mxu0 0
        %927 = vmatprep.subr.bf16.mxu0 0
        %928 = vmatpush1.bf16.msra.mxu0 0
        %929 = vmatprep.subr.bf16.mxu0 0
        %930 = vmatpush1.bf16.msra.mxu0 0
        %931 = vmatprep.subr.bf16.mxu0 0
        %932 = vmatpush1.bf16.msra.mxu0 0
        %933 = vmatprep.subr.bf16.mxu0 0
        %934 = vmatpush1.bf16.msra.mxu0 0
        %935 = vmatprep.subr.bf16.mxu0 0
        %936 = vmatpush1.bf16.msra.mxu0 0
        %937 = vmatprep.subr.bf16.mxu0 0
        %938 = vmatpush1.bf16.msra.mxu0 0
        %939 = vmatprep.subr.bf16.mxu0 0
        %940 = vmatpush1.bf16.msra.mxu0 0
        %941 = vmatprep.subr.bf16.mxu0 0
        %942 = vmatpush1.bf16.msra.mxu0 0
        %943 = vmatprep.subr.bf16.mxu0 0
        %944 = vmatpush1.bf16.msra.mxu0 0
        %945 = vmatprep.subr.bf16.mxu0 0
        %946 = vmatpush1.bf16.msra.mxu0 0
        %947 = vmatprep.subr.bf16.mxu0 0
        %948 = vmatpush1.bf16.msra.mxu0 0
        %949 = vmatprep.subr.bf16.mxu0 0
        %950 = vmatpush1.bf16.msra.mxu0 0
        %951 = vmatprep.subr.bf16.mxu0 0
        %952 = vmatpush1.bf16.msra.mxu0 0
        %953 = vmatprep.mubr.bf16.mxu0 0
        %954 = vmatmul.mubr.bf16.gmra.mrb[0].mxu0 %v916
        %v955 = vpop.f32.mrb[0].mxu0
        %v956 = vadd.f32 0.0, %v955
        %v957 = vpop.f32.mrb[0].mxu0
        %v958 = vpop.f32.mrb[0].mxu0
        %v959 = vpop.f32.mrb[0].mxu0
        %960 = vdwg.mxu0
        %v961 = vpack.c.bf16 %v956, %v956
        %v966 = vunpack.c.l.b16 %v715
        %v967 = vunpack.c.l.b16 %v716
        %v968 = vunpack.c.l.b16 %v717
        %v969 = vunpack.c.l.b16 %v718
        %v970 = vpack.c.b16 %v967, %v966
        %v971 = vpack.c.b16 %v969, %v968
        %v975 = vsel %vm730, %v961, 0
        %977 = vmatprep.subr.bf16.mxu0 0
        %978 = vmatpush1.bf16.msra.mxu0 %v970
        %979 = vmatprep.subr.bf16.mxu0 0
        %980 = vmatpush1.bf16.msra.mxu0 %v971
        %981 = vmatprep.subr.bf16.mxu0 0
        %982 = vmatpush1.bf16.msra.mxu0 0
        %983 = vmatprep.subr.bf16.mxu0 0
        %984 = vmatpush1.bf16.msra.mxu0 0
        %985 = vmatprep.subr.bf16.mxu0 0
        %986 = vmatpush1.bf16.msra.mxu0 0
        %987 = vmatprep.subr.bf16.mxu0 0
        %988 = vmatpush1.bf16.msra.mxu0 0
        %989 = vmatprep.subr.bf16.mxu0 0
        %990 = vmatpush1.bf16.msra.mxu0 0
        %991 = vmatprep.subr.bf16.mxu0 0
        %992 = vmatpush1.bf16.msra.mxu0 0
        %993 = vmatprep.subr.bf16.mxu0 0
        %994 = vmatpush1.bf16.msra.mxu0 0
        %995 = vmatprep.subr.bf16.mxu0 0
        %996 = vmatpush1.bf16.msra.mxu0 0
        %997 = vmatprep.subr.bf16.mxu0 0
        %998 = vmatpush1.bf16.msra.mxu0 0
        %999 = vmatprep.subr.bf16.mxu0 0
        %1000 = vmatpush1.bf16.msra.mxu0 0
        %1001 = vmatprep.subr.bf16.mxu0 0
        %1002 = vmatpush1.bf16.msra.mxu0 0
        %1003 = vmatprep.subr.bf16.mxu0 0
        %1004 = vmatpush1.bf16.msra.mxu0 0
        %1005 = vmatprep.subr.bf16.mxu0 0
        %1006 = vmatpush1.bf16.msra.mxu0 0
        %1007 = vmatprep.subr.bf16.mxu0 0
        %1008 = vmatpush1.bf16.msra.mxu0 0
        %1009 = vmatprep.mubr.bf16.mxu0 0
        %1010 = vmatmul.mubr.bf16.gmra.mrb[0].mxu0 %v975
        %v1011 = vpop.f32.mrb[0].mxu0
        %v1012 = vadd.f32 0.0, %v1011
        %v1013 = vpop.f32.mrb[0].mxu0
        %v1014 = vpop.f32.mrb[0].mxu0
        %v1015 = vpop.f32.mrb[0].mxu0
        %1016 = vdwg.mxu0
        %v1021 = vunpack.c.l.b16 %v711
        %v1022 = vunpack.c.l.b16 %v712
        %v1023 = vunpack.c.l.b16 %v713
        %v1024 = vunpack.c.l.b16 %v714
        %v1025 = vpack.c.b16 %v1022, %v1021
        %v1026 = vpack.c.b16 %v1024, %v1023
        %v1030 = vsel %vm730, %v845, 0
        %1032 = vmatprep.subr.bf16.mxu0 0
        %1033 = vmatpush1.bf16.msra.mxu0 %v1025
        %1034 = vmatprep.subr.bf16.mxu0 0
        %1035 = vmatpush1.bf16.msra.mxu0 %v1026
        %1036 = vmatprep.subr.bf16.mxu0 0
        %1037 = vmatpush1.bf16.msra.mxu0 0
        %1038 = vmatprep.subr.bf16.mxu0 0
        %1039 = vmatpush1.bf16.msra.mxu0 0
        %1040 = vmatprep.subr.bf16.mxu0 0
        %1041 = vmatpush1.bf16.msra.mxu0 0
        %1042 = vmatprep.subr.bf16.mxu0 0
        %1043 = vmatpush1.bf16.msra.mxu0 0
        %1044 = vmatprep.subr.bf16.mxu0 0
        %1045 = vmatpush1.bf16.msra.mxu0 0
        %1046 = vmatprep.subr.bf16.mxu0 0
        %1047 = vmatpush1.bf16.msra.mxu0 0
        %1048 = vmatprep.subr.bf16.mxu0 0
        %1049 = vmatpush1.bf16.msra.mxu0 0
        %1050 = vmatprep.subr.bf16.mxu0 0
        %1051 = vmatpush1.bf16.msra.mxu0 0
        %1052 = vmatprep.subr.bf16.mxu0 0
        %1053 = vmatpush1.bf16.msra.mxu0 0
        %1054 = vmatprep.subr.bf16.mxu0 0
        %1055 = vmatpush1.bf16.msra.mxu0 0
        %1056 = vmatprep.subr.bf16.mxu0 0
        %1057 = vmatpush1.bf16.msra.mxu0 0
        %1058 = vmatprep.subr.bf16.mxu0 0
        %1059 = vmatpush1.bf16.msra.mxu0 0
        %1060 = vmatprep.subr.bf16.mxu0 0
        %1061 = vmatpush1.bf16.msra.mxu0 0
        %1062 = vmatprep.subr.bf16.mxu0 0
        %1063 = vmatpush1.bf16.msra.mxu0 0
        %1064 = vmatprep.mubr.bf16.mxu0 0
        %1065 = vmatmul.mubr.bf16.gmra.mrb[0].mxu0 %v1030
        %v1066 = vpop.f32.mrb[0].mxu0
        %v1067 = vadd.f32 %v1012, %v1066
        %v1068 = vpop.f32.mrb[0].mxu0
        %v1069 = vpop.f32.mrb[0].mxu0
        %v1070 = vpop.f32.mrb[0].mxu0
        %1071 = vdwg.mxu0
        %1072 = vrot.lane.b32.xlu0 %v727, 64
        %v1073 = vpop.permute.xlu0 %1072
        %1074 = vrot.lane.b32.xlu0 %v728, 64
        %v1075 = vpop.permute.xlu0 %1074
        %v1077 = vsel %vm730, %v1073, 0
        %v1080 = vsel %vm730, %v1075, 0
        %1082 = vmatprep.subr.bf16.mxu0 0
        %1083 = vmatpush1.bf16.xpose.msra.mxu0 %v1080
        %1084 = vmatprep.subr.bf16.mxu0 0
        %1085 = vmatpush1.bf16.xpose.msra.mxu0 0
        %1086 = vmatprep.subr.bf16.mxu0 0
        %1087 = vmatpush1.bf16.xpose.msra.mxu0 0
        %1088 = vmatprep.subr.bf16.mxu0 0
        %1089 = vmatpush1.bf16.xpose.msra.mxu0 0
        %1090 = vmatprep.subr.bf16.mxu0 0
        %1091 = vmatpush1.bf16.xpose.msra.mxu0 0
        %1092 = vmatprep.subr.bf16.mxu0 0
        %1093 = vmatpush1.bf16.xpose.msra.mxu0 0
        %1094 = vmatprep.subr.bf16.mxu0 0
        %1095 = vmatpush1.bf16.xpose.msra.mxu0 0
        %1096 = vmatprep.subr.bf16.mxu0 0
        %1097 = vmatpush1.bf16.xpose.msra.mxu0 0
        %1098 = vmatprep.subr.bf16.mxu0 0
        %1099 = vmatpush1.bf16.xpose.msra.mxu0 0
        %1100 = vmatprep.subr.bf16.mxu0 0
        %1101 = vmatpush1.bf16.xpose.msra.mxu0 0
        %1102 = vmatprep.subr.bf16.mxu0 0
        %1103 = vmatpush1.bf16.xpose.msra.mxu0 0
        %1104 = vmatprep.subr.bf16.mxu0 0
        %1105 = vmatpush1.bf16.xpose.msra.mxu0 0
        %1106 = vmatprep.subr.bf16.mxu0 0
        %1107 = vmatpush1.bf16.xpose.msra.mxu0 0
        %1108 = vmatprep.subr.bf16.mxu0 0
        %1109 = vmatpush1.bf16.xpose.msra.mxu0 0
        %1110 = vmatprep.subr.bf16.mxu0 0
        %1111 = vmatpush1.bf16.xpose.msra.mxu0 0
        %1112 = vmatprep.subr.bf16.mxu0 0
        %1113 = vmatpush1.bf16.xpose.msra.mxu0 0
        %1114 = vmatprep.mubr.bf16.mxu0 0
        %1115 = vmatmul.mubr.bf16.gmra.mrb[0].mxu0 %v1077
        %v1116 = vpop.f32.mrb[0].mxu0
        %v1117 = vadd.f32 0.0, %v1116
        %v1118 = vpop.f32.mrb[0].mxu0
        %v1119 = vpop.f32.mrb[0].mxu0
        %v1120 = vpop.f32.mrb[0].mxu0
        %1121 = vdwg.mxu0
        %v1122 = vmul.f32 %v1117, 0.17677669
        %v1123 = vadd.f32 %v1122, %v782
        %v1124 = vsel %vm785, %v1123, -inf
        %1125 = vmax.xlane.f32.xlu0 %v1124
        %v1126 = vpop.xlane.xlu0 %1125
        %v1127 = vsub.f32 %v1123, %v1126
        %v1128 = vmul.f32 %v1127, 1.442695
        %v1129 = vpow.pop %v1128
        %v1130 = vsel %vm785, %v1129, 0.0
        %1131 = vadd.xlane.f32.xlu0 %v1130
        %v1132 = vpop.xlane.xlu0 %1131
        %v1133 = vrcp.pop %v1132
        %v1134 = vmul.f32 %v1129, %v1133
        %v1135 = vpack.c.bf16 %v1134, %v1134
        %1136 = vrot.lane.b32.xlu0 %v729, 64
        %v1137 = vpop.permute.xlu0 %1136
        %v1139 = vsel %vm785, %v1135, 0
        %v1142 = vsel %vm801, %v1137, 0
        %1144 = vmatprep.subr.bf16.mxu0 0
        %1145 = vmatpush1.bf16.msra.mxu0 %v1142
        %1146 = vmatprep.subr.bf16.mxu0 0
        %1147 = vmatpush1.bf16.msra.mxu0 0
        %1148 = vmatprep.subr.bf16.mxu0 0
        %1149 = vmatpush1.bf16.msra.mxu0 0
        %1150 = vmatprep.subr.bf16.mxu0 0
        %1151 = vmatpush1.bf16.msra.mxu0 0
        %1152 = vmatprep.subr.bf16.mxu0 0
        %1153 = vmatpush1.bf16.msra.mxu0 0
        %1154 = vmatprep.subr.bf16.mxu0 0
        %1155 = vmatpush1.bf16.msra.mxu0 0
        %1156 = vmatprep.subr.bf16.mxu0 0
        %1157 = vmatpush1.bf16.msra.mxu0 0
        %1158 = vmatprep.subr.bf16.mxu0 0
        %1159 = vmatpush1.bf16.msra.mxu0 0
        %1160 = vmatprep.subr.bf16.mxu0 0
        %1161 = vmatpush1.bf16.msra.mxu0 0
        %1162 = vmatprep.subr.bf16.mxu0 0
        %1163 = vmatpush1.bf16.msra.mxu0 0
        %1164 = vmatprep.subr.bf16.mxu0 0
        %1165 = vmatpush1.bf16.msra.mxu0 0
        %1166 = vmatprep.subr.bf16.mxu0 0
        %1167 = vmatpush1.bf16.msra.mxu0 0
        %1168 = vmatprep.subr.bf16.mxu0 0
        %1169 = vmatpush1.bf16.msra.mxu0 0
        %1170 = vmatprep.subr.bf16.mxu0 0
        %1171 = vmatpush1.bf16.msra.mxu0 0
        %1172 = vmatprep.subr.bf16.mxu0 0
        %1173 = vmatpush1.bf16.msra.mxu0 0
        %1174 = vmatprep.subr.bf16.mxu0 0
        %1175 = vmatpush1.bf16.msra.mxu0 0
        %1176 = vmatprep.mubr.bf16.mxu0 0
        %1177 = vmatmul.mubr.bf16.gmra.mrb[0].mxu0 %v1139
        %v1178 = vpop.f32.mrb[0].mxu0
        %v1179 = vadd.f32 0.0, %v1178
        %v1180 = vpop.f32.mrb[0].mxu0
        %v1181 = vpop.f32.mrb[0].mxu0
        %v1182 = vpop.f32.mrb[0].mxu0
        %1183 = vdwg.mxu0
        %v1184 = vpack.c.bf16 %v1179, %v1179
        %v1189 = vunpack.c.l.b16 %v719
        %v1190 = vunpack.c.l.b16 %v720
        %v1191 = vunpack.c.l.b16 %v721
        %v1192 = vunpack.c.l.b16 %v722
        %v1193 = vpack.c.b16 %v1190, %v1189
        %v1194 = vpack.c.b16 %v1192, %v1191
        %v1198 = vsel %vm730, %v1184, 0
        %1200 = vmatprep.subr.bf16.mxu0 0
        %1201 = vmatpush1.bf16.msra.mxu0 %v1193
        %1202 = vmatprep.subr.bf16.mxu0 0
        %1203 = vmatpush1.bf16.msra.mxu0 %v1194
        %1204 = vmatprep.subr.bf16.mxu0 0
        %1205 = vmatpush1.bf16.msra.mxu0 0
        %1206 = vmatprep.subr.bf16.mxu0 0
        %1207 = vmatpush1.bf16.msra.mxu0 0
        %1208 = vmatprep.subr.bf16.mxu0 0
        %1209 = vmatpush1.bf16.msra.mxu0 0
        %1210 = vmatprep.subr.bf16.mxu0 0
        %1211 = vmatpush1.bf16.msra.mxu0 0
        %1212 = vmatprep.subr.bf16.mxu0 0
        %1213 = vmatpush1.bf16.msra.mxu0 0
        %1214 = vmatprep.subr.bf16.mxu0 0
        %1215 = vmatpush1.bf16.msra.mxu0 0
        %1216 = vmatprep.subr.bf16.mxu0 0
        %1217 = vmatpush1.bf16.msra.mxu0 0
        %1218 = vmatprep.subr.bf16.mxu0 0
        %1219 = vmatpush1.bf16.msra.mxu0 0
        %1220 = vmatprep.subr.bf16.mxu0 0
        %1221 = vmatpush1.bf16.msra.mxu0 0
        %1222 = vmatprep.subr.bf16.mxu0 0
        %1223 = vmatpush1.bf16.msra.mxu0 0
        %1224 = vmatprep.subr.bf16.mxu0 0
        %1225 = vmatpush1.bf16.msra.mxu0 0
        %1226 = vmatprep.subr.bf16.mxu0 0
        %1227 = vmatpush1.bf16.msra.mxu0 0
        %1228 = vmatprep.subr.bf16.mxu0 0
        %1229 = vmatpush1.bf16.msra.mxu0 0
        %1230 = vmatprep.subr.bf16.mxu0 0
        %1231 = vmatpush1.bf16.msra.mxu0 0
        %1232 = vmatprep.mubr.bf16.mxu0 0
        %1233 = vmatmul.mubr.bf16.gmra.mrb[0].mxu0 %v1198
        %v1234 = vpop.f32.mrb[0].mxu0
        %v1235 = vadd.f32 0.0, %v1234
        %v1236 = vpop.f32.mrb[0].mxu0
        %v1237 = vpop.f32.mrb[0].mxu0
        %v1238 = vpop.f32.mrb[0].mxu0
        %1239 = vdwg.mxu0
        %v1240 = vadd.f32 %v1067, %v1235
        %1241 = vrot.lane.b32.xlu0 %v727, 32
        %v1242 = vpop.permute.xlu0 %1241
        %1243 = vrot.lane.b32.xlu0 %v728, 32
        %v1244 = vpop.permute.xlu0 %1243
        %v1246 = vsel %vm730, %v1242, 0
        %v1249 = vsel %vm730, %v1244, 0
        %1251 = vmatprep.subr.bf16.mxu0 0
        %1252 = vmatpush1.bf16.xpose.msra.mxu0 %v1249
        %1253 = vmatprep.subr.bf16.mxu0 0
        %1254 = vmatpush1.bf16.xpose.msra.mxu0 0
        %1255 = vmatprep.subr.bf16.mxu0 0
        %1256 = vmatpush1.bf16.xpose.msra.mxu0 0
        %1257 = vmatprep.subr.bf16.mxu0 0
        %1258 = vmatpush1.bf16.xpose.msra.mxu0 0
        %1259 = vmatprep.subr.bf16.mxu0 0
        %1260 = vmatpush1.bf16.xpose.msra.mxu0 0
        %1261 = vmatprep.subr.bf16.mxu0 0
        %1262 = vmatpush1.bf16.xpose.msra.mxu0 0
        %1263 = vmatprep.subr.bf16.mxu0 0
        %1264 = vmatpush1.bf16.xpose.msra.mxu0 0
        %1265 = vmatprep.subr.bf16.mxu0 0
        %1266 = vmatpush1.bf16.xpose.msra.mxu0 0
        %1267 = vmatprep.subr.bf16.mxu0 0
        %1268 = vmatpush1.bf16.xpose.msra.mxu0 0
        %1269 = vmatprep.subr.bf16.mxu0 0
        %1270 = vmatpush1.bf16.xpose.msra.mxu0 0
        %1271 = vmatprep.subr.bf16.mxu0 0
        %1272 = vmatpush1.bf16.xpose.msra.mxu0 0
        %1273 = vmatprep.subr.bf16.mxu0 0
        %1274 = vmatpush1.bf16.xpose.msra.mxu0 0
        %1275 = vmatprep.subr.bf16.mxu0 0
        %1276 = vmatpush1.bf16.xpose.msra.mxu0 0
        %1277 = vmatprep.subr.bf16.mxu0 0
        %1278 = vmatpush1.bf16.xpose.msra.mxu0 0
        %1279 = vmatprep.subr.bf16.mxu0 0
        %1280 = vmatpush1.bf16.xpose.msra.mxu0 0
        %1281 = vmatprep.subr.bf16.mxu0 0
        %1282 = vmatpush1.bf16.xpose.msra.mxu0 0
        %1283 = vmatprep.mubr.bf16.mxu0 0
        %1284 = vmatmul.mubr.bf16.gmra.mrb[0].mxu0 %v1246
        %v1285 = vpop.f32.mrb[0].mxu0
        %v1286 = vadd.f32 0.0, %v1285
        %v1287 = vpop.f32.mrb[0].mxu0
        %v1288 = vpop.f32.mrb[0].mxu0
        %v1289 = vpop.f32.mrb[0].mxu0
        %1290 = vdwg.mxu0
        %v1291 = vmul.f32 %v1286, 0.17677669
        %v1292 = vadd.f32 %v1291, %v782
        %v1293 = vsel %vm785, %v1292, -inf
        %1294 = vmax.xlane.f32.xlu0 %v1293
        %v1295 = vpop.xlane.xlu0 %1294
        %v1296 = vsub.f32 %v1292, %v1295
        %v1297 = vmul.f32 %v1296, 1.442695
        %v1298 = vpow.pop %v1297
        %v1299 = vsel %vm785, %v1298, 0.0
        %1300 = vadd.xlane.f32.xlu0 %v1299
        %v1301 = vpop.xlane.xlu0 %1300
        %v1302 = vrcp.pop %v1301
        %v1303 = vmul.f32 %v1298, %v1302
        %v1304 = vpack.c.bf16 %v1303, %v1303
        %1305 = vrot.lane.b32.xlu0 %v729, 32
        %v1306 = vpop.permute.xlu0 %1305
        %v1308 = vsel %vm785, %v1304, 0
        %v1311 = vsel %vm801, %v1306, 0
        %1313 = vmatprep.subr.bf16.mxu0 0
        %1314 = vmatpush1.bf16.msra.mxu0 %v1311
        %1315 = vmatprep.subr.bf16.mxu0 0
        %1316 = vmatpush1.bf16.msra.mxu0 0
        %1317 = vmatprep.subr.bf16.mxu0 0
        %1318 = vmatpush1.bf16.msra.mxu0 0
        %1319 = vmatprep.subr.bf16.mxu0 0
        %1320 = vmatpush1.bf16.msra.mxu0 0
        %1321 = vmatprep.subr.bf16.mxu0 0
        %1322 = vmatpush1.bf16.msra.mxu0 0
        %1323 = vmatprep.subr.bf16.mxu0 0
        %1324 = vmatpush1.bf16.msra.mxu0 0
        %1325 = vmatprep.subr.bf16.mxu0 0
        %1326 = vmatpush1.bf16.msra.mxu0 0
        %1327 = vmatprep.subr.bf16.mxu0 0
        %1328 = vmatpush1.bf16.msra.mxu0 0
        %1329 = vmatprep.subr.bf16.mxu0 0
        %1330 = vmatpush1.bf16.msra.mxu0 0
        %1331 = vmatprep.subr.bf16.mxu0 0
        %1332 = vmatpush1.bf16.msra.mxu0 0
        %1333 = vmatprep.subr.bf16.mxu0 0
        %1334 = vmatpush1.bf16.msra.mxu0 0
        %1335 = vmatprep.subr.bf16.mxu0 0
        %1336 = vmatpush1.bf16.msra.mxu0 0
        %1337 = vmatprep.subr.bf16.mxu0 0
        %1338 = vmatpush1.bf16.msra.mxu0 0
        %1339 = vmatprep.subr.bf16.mxu0 0
        %1340 = vmatpush1.bf16.msra.mxu0 0
        %1341 = vmatprep.subr.bf16.mxu0 0
        %1342 = vmatpush1.bf16.msra.mxu0 0
        %1343 = vmatprep.subr.bf16.mxu0 0
        %1344 = vmatpush1.bf16.msra.mxu0 0
        %1345 = vmatprep.mubr.bf16.mxu0 0
        %1346 = vmatmul.mubr.bf16.gmra.mrb[0].mxu0 %v1308
        %v1347 = vpop.f32.mrb[0].mxu0
        %v1348 = vadd.f32 0.0, %v1347
        %v1349 = vpop.f32.mrb[0].mxu0
        %v1350 = vpop.f32.mrb[0].mxu0
        %v1351 = vpop.f32.mrb[0].mxu0
        %1352 = vdwg.mxu0
        %v1353 = vpack.c.bf16 %v1348, %v1348
        %v1358 = vunpack.c.l.b16 %v723
        %v1359 = vunpack.c.l.b16 %v724
        %v1360 = vunpack.c.l.b16 %v725
        %v1361 = vunpack.c.l.b16 %v726
        %v1362 = vpack.c.b16 %v1359, %v1358
        %v1363 = vpack.c.b16 %v1361, %v1360
        %v1367 = vsel %vm730, %v1353, 0
        %1369 = vmatprep.subr.bf16.mxu0 0
        %1370 = vmatpush1.bf16.msra.mxu0 %v1362
        %1371 = vmatprep.subr.bf16.mxu0 0
        %1372 = vmatpush1.bf16.msra.mxu0 %v1363
        %1373 = vmatprep.subr.bf16.mxu0 0
        %1374 = vmatpush1.bf16.msra.mxu0 0
        %1375 = vmatprep.subr.bf16.mxu0 0
        %1376 = vmatpush1.bf16.msra.mxu0 0
        %1377 = vmatprep.subr.bf16.mxu0 0
        %1378 = vmatpush1.bf16.msra.mxu0 0
        %1379 = vmatprep.subr.bf16.mxu0 0
        %1380 = vmatpush1.bf16.msra.mxu0 0
        %1381 = vmatprep.subr.bf16.mxu0 0
        %1382 = vmatpush1.bf16.msra.mxu0 0
        %1383 = vmatprep.subr.bf16.mxu0 0
        %1384 = vmatpush1.bf16.msra.mxu0 0
        %1385 = vmatprep.subr.bf16.mxu0 0
        %1386 = vmatpush1.bf16.msra.mxu0 0
        %1387 = vmatprep.subr.bf16.mxu0 0
        %1388 = vmatpush1.bf16.msra.mxu0 0
        %1389 = vmatprep.subr.bf16.mxu0 0
        %1390 = vmatpush1.bf16.msra.mxu0 0
        %1391 = vmatprep.subr.bf16.mxu0 0
        %1392 = vmatpush1.bf16.msra.mxu0 0
        %1393 = vmatprep.subr.bf16.mxu0 0
        %1394 = vmatpush1.bf16.msra.mxu0 0
        %1395 = vmatprep.subr.bf16.mxu0 0
        %1396 = vmatpush1.bf16.msra.mxu0 0
        %1397 = vmatprep.subr.bf16.mxu0 0
        %1398 = vmatpush1.bf16.msra.mxu0 0
        %1399 = vmatprep.subr.bf16.mxu0 0
        %1400 = vmatpush1.bf16.msra.mxu0 0
        %1401 = vmatprep.mubr.bf16.mxu0 0
        %1402 = vmatmul.mubr.bf16.gmra.mrb[0].mxu0 %v1367
        %v1403 = vpop.f32.mrb[0].mxu0
        %v1404 = vadd.f32 0.0, %v1403
        %v1405 = vpop.f32.mrb[0].mxu0
        %v1406 = vpop.f32.mrb[0].mxu0
        %v1407 = vpop.f32.mrb[0].mxu0
        %1408 = vdwg.mxu0
        %v1409 = vadd.f32 %v1240, %v1404
        %v1410 = vlaneseq
        %v1411 = vshrl.u32 %v1410, 7
        %v1412 = vsub.s32 3, %v1411
        %v1413 = vrot.slane %v452, %v1412
        %v1414 = vadd.f32 %v1409, %v1413
        %v1415 = vadd.f32 %v450, %v1414
        %1416 = vadd.xlane.f32.xlu0 %v1415
        %v1417 = vpop.xlane.xlu0 %1416
        %v1418 = vrcp.pop 128.0
        %v1419 = vmul.f32 %v1417, %v1418
        %v1420 = vsub.f32 %v1415, %v1419
        %v1421 = vmul.f32 %v1420, %v1420
        %1422 = vadd.xlane.f32.xlu0 %v1421
        %v1423 = vpop.xlane.xlu0 %1422
        %v1424 = vmul.f32 %v1423, %v1418
        %v1425 = vadd.f32 %v1424, 1e-05
        %v1426 = vrsqrt.pop %v1425
        %v1427 = vmul.f32 %v1420, %v1426
        %v1428 = vlaneseq
        %v1429 = vshrl.u32 %v1428, 7
        %v1430 = vsub.s32 6, %v1429
        %v1431 = vrot.slane %v452, %v1430
        %v1432 = vmul.f32 %v1427, %v1431
        %v1433 = vlaneseq
        %v1434 = vshrl.u32 %v1433, 7
        %v1435 = vsub.s32 7, %v1434
        %v1436 = vrot.slane %v452, %v1435
        %v1437 = vadd.f32 %v1432, %v1436
        %v1438 = vpack.c.bf16 %v1437, %v1437
        %v1439 = vld [vmem:[#allocation8] sm:$0xf]
        %v1440 = vld [vmem:[#allocation8 + $0x4] sm:$0xf]
        %v1441 = vld [vmem:[#allocation8 + $0x8] sm:$0xf]
        %v1442 = vld [vmem:[#allocation8 + $0xc] sm:$0xf]
        %v1443 = vld [vmem:[#allocation8 + $0x10] sm:$0xf]
        %v1444 = vld [vmem:[#allocation8 + $0x14] sm:$0xf]
        %v1445 = vld [vmem:[#allocation8 + $0x18] sm:$0xf]
        %v1446 = vld [vmem:[#allocation8 + $0x1c] sm:$0xf]
        %v1447 = vld [vmem:[#allocation8 + $0x20] sm:$0xf]
        %v1448 = vld [vmem:[#allocation8 + $0x24] sm:$0xf]
        %v1449 = vld [vmem:[#allocation8 + $0x28] sm:$0xf]
        %v1450 = vld [vmem:[#allocation8 + $0x2c] sm:$0xf]
        %v1451 = vld [vmem:[#allocation8 + $0x30] sm:$0xf]
        %v1452 = vld [vmem:[#allocation8 + $0x34] sm:$0xf]
        %v1453 = vld [vmem:[#allocation8 + $0x38] sm:$0xf]
        %v1454 = vld [vmem:[#allocation8 + $0x3c] sm:$0xf]
        %v1455 = vlaneseq
        %v1456 = vshrl.u32 %v1455, 7
        %v1457 = vsub.s32 4, %v1456
        %v1458 = vrot.slane %v452, %v1457
        %v1475 = vunpack.c.l.b16 %v1439
        %v1476 = vunpack.c.l.b16 %v1440
        %v1477 = vunpack.c.l.b16 %v1441
        %v1478 = vunpack.c.l.b16 %v1442
        %v1479 = vunpack.c.l.b16 %v1443
        %v1480 = vunpack.c.l.b16 %v1444
        %v1481 = vunpack.c.l.b16 %v1445
        %v1482 = vunpack.c.l.b16 %v1446
        %v1483 = vunpack.c.l.b16 %v1447
        %v1484 = vunpack.c.l.b16 %v1448
        %v1485 = vunpack.c.l.b16 %v1449
        %v1486 = vunpack.c.l.b16 %v1450
        %v1487 = vunpack.c.l.b16 %v1451
        %v1488 = vunpack.c.l.b16 %v1452
        %v1489 = vunpack.c.l.b16 %v1453
        %v1490 = vunpack.c.l.b16 %v1454
        %v1491 = vpack.c.b16 %v1476, %v1475
        %v1492 = vpack.c.b16 %v1478, %v1477
        %v1493 = vpack.c.b16 %v1480, %v1479
        %v1494 = vpack.c.b16 %v1482, %v1481
        %v1495 = vpack.c.b16 %v1484, %v1483
        %v1496 = vpack.c.b16 %v1486, %v1485
        %v1497 = vpack.c.b16 %v1488, %v1487
        %v1498 = vpack.c.b16 %v1490, %v1489
        %1507 = vmatprep.subr.bf16.mxu0 0
        %1508 = vmatpush1.bf16.msra.mxu0 %v1491
        %1509 = vmatprep.subr.bf16.mxu0 0
        %1510 = vmatpush1.bf16.msra.mxu0 %v1492
        %1511 = vmatprep.subr.bf16.mxu0 0
        %1512 = vmatpush1.bf16.msra.mxu0 %v1493
        %1513 = vmatprep.subr.bf16.mxu0 0
        %1514 = vmatpush1.bf16.msra.mxu0 %v1494
        %1515 = vmatprep.subr.bf16.mxu0 0
        %1516 = vmatpush1.bf16.msra.mxu0 %v1495
        %1517 = vmatprep.subr.bf16.mxu0 0
        %1518 = vmatpush1.bf16.msra.mxu0 %v1496
        %1519 = vmatprep.subr.bf16.mxu0 0
        %1520 = vmatpush1.bf16.msra.mxu0 %v1497
        %1521 = vmatprep.subr.bf16.mxu0 0
        %1522 = vmatpush1.bf16.msra.mxu0 %v1498
        %1523 = vmatprep.subr.bf16.mxu0 0
        %1524 = vmatpush1.bf16.msra.mxu0 0
        %1525 = vmatprep.subr.bf16.mxu0 0
        %1526 = vmatpush1.bf16.msra.mxu0 0
        %1527 = vmatprep.subr.bf16.mxu0 0
        %1528 = vmatpush1.bf16.msra.mxu0 0
        %1529 = vmatprep.subr.bf16.mxu0 0
        %1530 = vmatpush1.bf16.msra.mxu0 0
        %1531 = vmatprep.subr.bf16.mxu0 0
        %1532 = vmatpush1.bf16.msra.mxu0 0
        %1533 = vmatprep.subr.bf16.mxu0 0
        %1534 = vmatpush1.bf16.msra.mxu0 0
        %1535 = vmatprep.subr.bf16.mxu0 0
        %1536 = vmatpush1.bf16.msra.mxu0 0
        %1537 = vmatprep.subr.bf16.mxu0 0
        %1538 = vmatpush1.bf16.msra.mxu0 0
        %1539 = vmatprep.mubr.bf16.mxu0 0
        %1540 = vmatmul.mubr.bf16.gmra.mrb[0].mxu0 %v1438
        %v1541 = vpop.f32.mrb[0].mxu0
        %v1542 = vadd.f32 %v1458, %v1541
        %v1543 = vpop.f32.mrb[0].mxu0
        %v1544 = vpop.f32.mrb[0].mxu0
        %v1545 = vpop.f32.mrb[0].mxu0
        %1546 = vdwg.mxu0
        %v1547 = vmax.f32 %v1542, 0.0
        %v1548 = vpack.c.bf16 %v1547, %v1547
        %v1549 = vld [vmem:[#allocation10] sm:$0xf]
        %v1550 = vld [vmem:[#allocation10 + $0x4] sm:$0xf]
        %v1551 = vld [vmem:[#allocation10 + $0x8] sm:$0xf]
        %v1552 = vld [vmem:[#allocation10 + $0xc] sm:$0xf]
        %v1553 = vld [vmem:[#allocation10 + $0x10] sm:$0xf]
        %v1554 = vld [vmem:[#allocation10 + $0x14] sm:$0xf]
        %v1555 = vld [vmem:[#allocation10 + $0x18] sm:$0xf]
        %v1556 = vld [vmem:[#allocation10 + $0x1c] sm:$0xf]
        %v1557 = vld [vmem:[#allocation10 + $0x20] sm:$0xf]
        %v1558 = vld [vmem:[#allocation10 + $0x24] sm:$0xf]
        %v1559 = vld [vmem:[#allocation10 + $0x28] sm:$0xf]
        %v1560 = vld [vmem:[#allocation10 + $0x2c] sm:$0xf]
        %v1561 = vld [vmem:[#allocation10 + $0x30] sm:$0xf]
        %v1562 = vld [vmem:[#allocation10 + $0x34] sm:$0xf]
        %v1563 = vld [vmem:[#allocation10 + $0x38] sm:$0xf]
        %v1564 = vld [vmem:[#allocation10 + $0x3c] sm:$0xf]
        %v1565 = vlaneseq
        %v1566 = vshrl.u32 %v1565, 7
        %v1567 = vsub.s32 5, %v1566
        %v1568 = vrot.slane %v452, %v1567
        %v1585 = vunpack.c.l.b16 %v1549
        %v1586 = vunpack.c.l.b16 %v1550
        %v1587 = vunpack.c.l.b16 %v1551
        %v1588 = vunpack.c.l.b16 %v1552
        %v1589 = vunpack.c.l.b16 %v1553
        %v1590 = vunpack.c.l.b16 %v1554
        %v1591 = vunpack.c.l.b16 %v1555
        %v1592 = vunpack.c.l.b16 %v1556
        %v1593 = vunpack.c.l.b16 %v1557
        %v1594 = vunpack.c.l.b16 %v1558
        %v1595 = vunpack.c.l.b16 %v1559
        %v1596 = vunpack.c.l.b16 %v1560
        %v1597 = vunpack.c.l.b16 %v1561
        %v1598 = vunpack.c.l.b16 %v1562
        %v1599 = vunpack.c.l.b16 %v1563
        %v1600 = vunpack.c.l.b16 %v1564
        %v1601 = vpack.c.b16 %v1586, %v1585
        %v1602 = vpack.c.b16 %v1588, %v1587
        %v1603 = vpack.c.b16 %v1590, %v1589
        %v1604 = vpack.c.b16 %v1592, %v1591
        %v1605 = vpack.c.b16 %v1594, %v1593
        %v1606 = vpack.c.b16 %v1596, %v1595
        %v1607 = vpack.c.b16 %v1598, %v1597
        %v1608 = vpack.c.b16 %v1600, %v1599
        %1617 = vmatprep.subr.bf16.mxu0 0
        %1618 = vmatpush1.bf16.msra.mxu0 %v1601
        %1619 = vmatprep.subr.bf16.mxu0 0
        %1620 = vmatpush1.bf16.msra.mxu0 %v1602
        %1621 = vmatprep.subr.bf16.mxu0 0
        %1622 = vmatpush1.bf16.msra.mxu0 %v1603
        %1623 = vmatprep.subr.bf16.mxu0 0
        %1624 = vmatpush1.bf16.msra.mxu0 %v1604
        %1625 = vmatprep.subr.bf16.mxu0 0
        %1626 = vmatpush1.bf16.msra.mxu0 %v1605
        %1627 = vmatprep.subr.bf16.mxu0 0
        %1628 = vmatpush1.bf16.msra.mxu0 %v1606
        %1629 = vmatprep.subr.bf16.mxu0 0
        %1630 = vmatpush1.bf16.msra.mxu0 %v1607
        %1631 = vmatprep.subr.bf16.mxu0 0
        %1632 = vmatpush1.bf16.msra.mxu0 %v1608
        %1633 = vmatprep.subr.bf16.mxu0 0
        %1634 = vmatpush1.bf16.msra.mxu0 0
        %1635 = vmatprep.subr.bf16.mxu0 0
        %1636 = vmatpush1.bf16.msra.mxu0 0
        %1637 = vmatprep.subr.bf16.mxu0 0
        %1638 = vmatpush1.bf16.msra.mxu0 0
        %1639 = vmatprep.subr.bf16.mxu0 0
        %1640 = vmatpush1.bf16.msra.mxu0 0
        %1641 = vmatprep.subr.bf16.mxu0 0
        %1642 = vmatpush1.bf16.msra.mxu0 0
        %1643 = vmatprep.subr.bf16.mxu0 0
        %1644 = vmatpush1.bf16.msra.mxu0 0
        %1645 = vmatprep.subr.bf16.mxu0 0
        %1646 = vmatpush1.bf16.msra.mxu0 0
        %1647 = vmatprep.subr.bf16.mxu0 0
        %1648 = vmatpush1.bf16.msra.mxu0 0
        %1649 = vmatprep.mubr.bf16.mxu0 0
        %1650 = vmatmul.mubr.bf16.gmra.mrb[0].mxu0 %v1548
        %v1651 = vpop.f32.mrb[0].mxu0
        %v1652 = vadd.f32 %v1568, %v1651
        %v1653 = vpop.f32.mrb[0].mxu0
        %v1654 = vpop.f32.mrb[0].mxu0
        %v1655 = vpop.f32.mrb[0].mxu0
        %1656 = vdwg.mxu0
        %v1657 = vadd.f32 %v1437, %v1652
        %1658 = vadd.xlane.f32.xlu0 %v1657
        %v1659 = vpop.xlane.xlu0 %1658
        %v1660 = vmul.f32 %v1659, %v1418
        %v1661 = vsub.f32 %v1657, %v1660
        %v1662 = vmul.f32 %v1661, %v1661
        %1663 = vadd.xlane.f32.xlu0 %v1662
        %v1664 = vpop.xlane.xlu0 %1663
        %v1665 = vmul.f32 %v1664, %v1418
        %v1666 = vadd.f32 %v1665, 1e-05
        %v1667 = vrsqrt.pop %v1666
        %v1668 = vmul.f32 %v1661, %v1667
        %v1669 = vlaneseq
        %v1670 = vshrl.u32 %v1669, 7
        %v1671 = vsub.s32 0, %v1670
        %v1672 = vrot.slane %v453, %v1671
        %v1673 = vmul.f32 %v1668, %v1672
        %v1674 = vlaneseq
        %v1675 = vshrl.u32 %v1674, 7
        %v1676 = vsub.s32 1, %v1675
        %v1677 = vrot.slane %v453, %v1676
        %v1678 = vadd.f32 %v1673, %v1677
        %s1679 = scalar_lea.vmem [#allocation11], 16
        %v1680 = vld [vmem:[%s1679] sm:$0xff]
        %v1681 = vld [vmem:[%s1679 + $0x8] sm:$0xff]
        %v1682 = vpack.c.bf16 %v1678, %v1678
        %s1683 = scalar_lea.vmem [#allocation5], 192
        %v1684 = vld [vmem:[%s1683] sm:$0xff]
        %v1685 = vld [vmem:[%s1683 + $0x8] sm:$0xf]
        %v1686 = vld [vmem:[%s1683 + $0xc] sm:$0xff]
        %v1687 = vld [vmem:[%s1683 + $0x14] sm:$0xf]
        %v1688 = vld [vmem:[%s1683 + $0x18] sm:$0xff]
        %v1689 = vld [vmem:[%s1683 + $0x20] sm:$0xf]
        %v1690 = vld [vmem:[%s1683 + $0x24] sm:$0xff]
        %v1691 = vld [vmem:[%s1683 + $0x2c] sm:$0xf]
        %v1692 = vld [vmem:[%s1683 + $0x30] sm:$0xff]
        %v1693 = vld [vmem:[%s1683 + $0x38] sm:$0xf]
        %v1694 = vld [vmem:[%s1683 + $0x3c] sm:$0xff]
        %v1695 = vld [vmem:[%s1683 + $0x44] sm:$0xf]
        %v1696 = vld [vmem:[%s1683 + $0x48] sm:$0xff]
        %v1697 = vld [vmem:[%s1683 + $0x50] sm:$0xf]
        %v1698 = vld [vmem:[%s1683 + $0x54] sm:$0xff]
        %v1699 = vld [vmem:[%s1683 + $0x5c] sm:$0xf]
        %v1700 = vld [vmem:[%s1683 + $0x60] sm:$0xff]
        %v1701 = vld [vmem:[%s1683 + $0x68] sm:$0xf]
        %v1702 = vld [vmem:[%s1683 + $0x6c] sm:$0xff]
        %v1703 = vld [vmem:[%s1683 + $0x74] sm:$0xf]
        %v1704 = vld [vmem:[%s1683 + $0x78] sm:$0xff]
        %v1705 = vld [vmem:[%s1683 + $0x80] sm:$0xf]
        %v1706 = vld [vmem:[%s1683 + $0x84] sm:$0xff]
        %v1707 = vld [vmem:[%s1683 + $0x8c] sm:$0xf]
        %v1708 = vld [vmem:[%s1683 + $0x90] sm:$0xff]
        %v1709 = vld [vmem:[%s1683 + $0x98] sm:$0xf]
        %v1710 = vld [vmem:[%s1683 + $0x9c] sm:$0xff]
        %v1711 = vld [vmem:[%s1683 + $0xa4] sm:$0xf]
        %v1712 = vld [vmem:[%s1683 + $0xa8] sm:$0xff]
        %v1713 = vld [vmem:[%s1683 + $0xb0] sm:$0xf]
        %v1714 = vld [vmem:[%s1683 + $0xb4] sm:$0xff]
        %v1715 = vld [vmem:[%s1683 + $0xbc] sm:$0xf]
        %v1748 = vunpack.c.l.b16 %v1684
        %v1749 = vunpack.c.h.b16 %v1684
        %v1750 = vunpack.c.l.b16 %v1685
        %v1751 = vunpack.c.l.b16 %v1686
        %v1752 = vunpack.c.h.b16 %v1686
        %v1753 = vunpack.c.l.b16 %v1687
        %v1754 = vunpack.c.l.b16 %v1688
        %v1755 = vunpack.c.h.b16 %v1688
        %v1756 = vunpack.c.l.b16 %v1689
        %v1757 = vunpack.c.l.b16 %v1690
        %v1758 = vunpack.c.h.b16 %v1690
        %v1759 = vunpack.c.l.b16 %v1691
        %v1760 = vunpack.c.l.b16 %v1692
        %v1761 = vunpack.c.h.b16 %v1692
        %v1762 = vunpack.c.l.b16 %v1693
        %v1763 = vunpack.c.l.b16 %v1694
        %v1764 = vunpack.c.h.b16 %v1694
        %v1765 = vunpack.c.l.b16 %v1695
        %v1766 = vunpack.c.l.b16 %v1696
        %v1767 = vunpack.c.h.b16 %v1696
        %v1768 = vunpack.c.l.b16 %v1697
        %v1769 = vunpack.c.l.b16 %v1698
        %v1770 = vunpack.c.h.b16 %v1698
        %v1771 = vunpack.c.l.b16 %v1699
        %v1772 = vunpack.c.l.b16 %v1700
        %v1773 = vunpack.c.h.b16 %v1700
        %v1774 = vunpack.c.l.b16 %v1701
        %v1775 = vunpack.c.l.b16 %v1702
        %v1776 = vunpack.c.h.b16 %v1702
        %v1777 = vunpack.c.l.b16 %v1703
        %v1778 = vunpack.c.l.b16 %v1704
        %v1779 = vunpack.c.h.b16 %v1704
        %v1780 = vunpack.c.l.b16 %v1705
        %v1781 = vunpack.c.l.b16 %v1706
        %v1782 = vunpack.c.h.b16 %v1706
        %v1783 = vunpack.c.l.b16 %v1707
        %v1784 = vunpack.c.l.b16 %v1708
        %v1785 = vunpack.c.h.b16 %v1708
        %v1786 = vunpack.c.l.b16 %v1709
        %v1787 = vunpack.c.l.b16 %v1710
        %v1788 = vunpack.c.h.b16 %v1710
        %v1789 = vunpack.c.l.b16 %v1711
        %v1790 = vunpack.c.l.b16 %v1712
        %v1791 = vunpack.c.h.b16 %v1712
        %v1792 = vunpack.c.l.b16 %v1713
        %v1793 = vunpack.c.l.b16 %v1714
        %v1794 = vunpack.c.h.b16 %v1714
        %v1795 = vunpack.c.l.b16 %v1715
        %v1796 = vpack.c.b16 %v1751, %v1748
        %v1797 = vpack.c.b16 %v1752, %v1749
        %v1798 = vpack.c.b16 %v1753, %v1750
        %v1799 = vpack.c.b16 %v1757, %v1754
        %v1800 = vpack.c.b16 %v1758, %v1755
        %v1801 = vpack.c.b16 %v1759, %v1756
        %v1802 = vpack.c.b16 %v1763, %v1760
        %v1803 = vpack.c.b16 %v1764, %v1761
        %v1804 = vpack.c.b16 %v1765, %v1762
        %v1805 = vpack.c.b16 %v1769, %v1766
        %v1806 = vpack.c.b16 %v1770, %v1767
        %v1807 = vpack.c.b16 %v1771, %v1768
        %v1808 = vpack.c.b16 %v1775, %v1772
        %v1809 = vpack.c.b16 %v1776, %v1773
        %v1810 = vpack.c.b16 %v1777, %v1774
        %v1811 = vpack.c.b16 %v1781, %v1778
        %v1812 = vpack.c.b16 %v1782, %v1779
        %v1813 = vpack.c.b16 %v1783, %v1780
        %v1814 = vpack.c.b16 %v1787, %v1784
        %v1815 = vpack.c.b16 %v1788, %v1785
        %v1816 = vpack.c.b16 %v1789, %v1786
        %v1817 = vpack.c.b16 %v1793, %v1790
        %v1818 = vpack.c.b16 %v1794, %v1791
        %v1819 = vpack.c.b16 %v1795, %v1792
        %1844 = vmatprep.subr.bf16.mxu0 %v1797
        %1845 = vmatpush1.bf16.msra.mxu0 %v1796
        %1846 = vmatprep.subr.bf16.mxu0 %v1800
        %1847 = vmatpush1.bf16.msra.mxu0 %v1799
        %1848 = vmatprep.subr.bf16.mxu0 %v1803
        %1849 = vmatpush1.bf16.msra.mxu0 %v1802
        %1850 = vmatprep.subr.bf16.mxu0 %v1806
        %1851 = vmatpush1.bf16.msra.mxu0 %v1805
        %1852 = vmatprep.subr.bf16.mxu0 %v1809
        %1853 = vmatpush1.bf16.msra.mxu0 %v1808
        %1854 = vmatprep.subr.bf16.mxu0 %v1812
        %1855 = vmatpush1.bf16.msra.mxu0 %v1811
        %1856 = vmatprep.subr.bf16.mxu0 %v1815
        %1857 = vmatpush1.bf16.msra.mxu0 %v1814
        %1858 = vmatprep.subr.bf16.mxu0 %v1818
        %1859 = vmatpush1.bf16.msra.mxu0 %v1817
        %1860 = vmatprep.subr.bf16.mxu0 0
        %1861 = vmatpush1.bf16.msra.mxu0 0
        %1862 = vmatprep.subr.bf16.mxu0 0
        %1863 = vmatpush1.bf16.msra.mxu0 0
        %1864 = vmatprep.subr.bf16.mxu0 0
        %1865 = vmatpush1.bf16.msra.mxu0 0
        %1866 = vmatprep.subr.bf16.mxu0 0
        %1867 = vmatpush1.bf16.msra.mxu0 0
        %1868 = vmatprep.subr.bf16.mxu0 0
        %1869 = vmatpush1.bf16.msra.mxu0 0
        %1870 = vmatprep.subr.bf16.mxu0 0
        %1871 = vmatpush1.bf16.msra.mxu0 0
        %1872 = vmatprep.subr.bf16.mxu0 0
        %1873 = vmatpush1.bf16.msra.mxu0 0
        %1874 = vmatprep.subr.bf16.mxu0 0
        %1875 = vmatpush1.bf16.msra.mxu0 0
        %1876 = vmatprep.mubr.bf16.mxu0 0
        %1877 = vmatmul.mubr.bf16.gmra.mrb[0].mxu0 %v1682
        %v1878 = vpop.f32.mrb[0].mxu0
        %v1879 = vadd.f32 0.0, %v1878
        %v1880 = vpop.f32.mrb[0].mxu0
        %v1881 = vadd.f32 0.0, %v1880
        %v1882 = vpop.f32.mrb[0].mxu0
        %v1883 = vpop.f32.mrb[0].mxu0
        %1884 = vdwg.mxu0
        %1885 = vmatprep.subr.bf16.mxu0 0
        %1886 = vmatpush1.bf16.msra.mxu0 %v1798
        %1887 = vmatprep.subr.bf16.mxu0 0
        %1888 = vmatpush1.bf16.msra.mxu0 %v1801
        %1889 = vmatprep.subr.bf16.mxu0 0
        %1890 = vmatpush1.bf16.msra.mxu0 %v1804
        %1891 = vmatprep.subr.bf16.mxu0 0
        %1892 = vmatpush1.bf16.msra.mxu0 %v1807
        %1893 = vmatprep.subr.bf16.mxu0 0
        %1894 = vmatpush1.bf16.msra.mxu0 %v1810
        %1895 = vmatprep.subr.bf16.mxu0 0
        %1896 = vmatpush1.bf16.msra.mxu0 %v1813
        %1897 = vmatprep.subr.bf16.mxu0 0
        %1898 = vmatpush1.bf16.msra.mxu0 %v1816
        %1899 = vmatprep.subr.bf16.mxu0 0
        %1900 = vmatpush1.bf16.msra.mxu0 %v1819
        %1901 = vmatprep.subr.bf16.mxu0 0
        %1902 = vmatpush1.bf16.msra.mxu0 0
        %1903 = vmatprep.subr.bf16.mxu0 0
        %1904 = vmatpush1.bf16.msra.mxu0 0
        %1905 = vmatprep.subr.bf16.mxu0 0
        %1906 = vmatpush1.bf16.msra.mxu0 0
        %1907 = vmatprep.subr.bf16.mxu0 0
        %1908 = vmatpush1.bf16.msra.mxu0 0
        %1909 = vmatprep.subr.bf16.mxu0 0
        %1910 = vmatpush1.bf16.msra.mxu0 0
        %1911 = vmatprep.subr.bf16.mxu0 0
        %1912 = vmatpush1.bf16.msra.mxu0 0
        %1913 = vmatprep.subr.bf16.mxu0 0
        %1914 = vmatpush1.bf16.msra.mxu0 0
        %1915 = vmatprep.subr.bf16.mxu0 0
        %1916 = vmatpush1.bf16.msra.mxu0 0
        %1917 = vmatprep.mubr.bf16.mxu0 0
        %1918 = vmatmul.mubr.bf16.gmra.mrb[0].mxu0 %v1682
        %v1919 = vpop.f32.mrb[0].mxu0
        %v1920 = vadd.f32 0.0, %v1919
        %v1921 = vpop.f32.mrb[0].mxu0
        %v1922 = vpop.f32.mrb[0].mxu0
        %v1923 = vpop.f32.mrb[0].mxu0
        %1924 = vdwg.mxu0
        %v1925 = vlaneseq
        %v1926 = vshrl.u32 %v1925, 7
        %v1927 = vsub.s32 0, %v1926
        %v1928 = vrot.slane %v1680, %v1927
        %v1929 = vadd.f32 %v1879, %v1928
        %v1930 = vlaneseq
        %v1931 = vshrl.u32 %v1930, 7
        %v1932 = vsub.s32 1, %v1931
        %v1933 = vrot.slane %v1680, %v1932
        %v1934 = vadd.f32 %v1881, %v1933
        %v1935 = vlaneseq
        %v1936 = vshrl.u32 %v1935, 7
        %v1937 = vsub.s32 2, %v1936
        %v1938 = vrot.slane %v1680, %v1937
        %v1939 = vadd.f32 %v1920, %v1938
        %s1940 = scalar_lea.vmem [#allocation7], 64
        %v1941 = vld [vmem:[%s1940] sm:$0xf]
        %v1942 = vld [vmem:[%s1940 + $0x4] sm:$0xf]
        %v1943 = vld [vmem:[%s1940 + $0x8] sm:$0xf]
        %v1944 = vld [vmem:[%s1940 + $0xc] sm:$0xf]
        %v1945 = vld [vmem:[%s1940 + $0x10] sm:$0xf]
        %v1946 = vld [vmem:[%s1940 + $0x14] sm:$0xf]
        %v1947 = vld [vmem:[%s1940 + $0x18] sm:$0xf]
        %v1948 = vld [vmem:[%s1940 + $0x1c] sm:$0xf]
        %v1949 = vld [vmem:[%s1940 + $0x20] sm:$0xf]
        %v1950 = vld [vmem:[%s1940 + $0x24] sm:$0xf]
        %v1951 = vld [vmem:[%s1940 + $0x28] sm:$0xf]
        %v1952 = vld [vmem:[%s1940 + $0x2c] sm:$0xf]
        %v1953 = vld [vmem:[%s1940 + $0x30] sm:$0xf]
        %v1954 = vld [vmem:[%s1940 + $0x34] sm:$0xf]
        %v1955 = vld [vmem:[%s1940 + $0x38] sm:$0xf]
        %v1956 = vld [vmem:[%s1940 + $0x3c] sm:$0xf]
        %v1957 = vpack.c.bf16 %v1929, %v1929
        %v1958 = vpack.c.bf16 %v1934, %v1934
        %v1959 = vpack.c.bf16 %v1939, %v1939
        %v1961 = vsel %vm730, %v1957, 0
        %v1964 = vsel %vm730, %v1958, 0
        %1966 = vmatprep.subr.bf16.mxu0 0
        %1967 = vmatpush1.bf16.xpose.msra.mxu0 %v1964
        %1968 = vmatprep.subr.bf16.mxu0 0
        %1969 = vmatpush1.bf16.xpose.msra.mxu0 0
        %1970 = vmatprep.subr.bf16.mxu0 0
        %1971 = vmatpush1.bf16.xpose.msra.mxu0 0
        %1972 = vmatprep.subr.bf16.mxu0 0
        %1973 = vmatpush1.bf16.xpose.msra.mxu0 0
        %1974 = vmatprep.subr.bf16.mxu0 0
        %1975 = vmatpush1.bf16.xpose.msra.mxu0 0
        %1976 = vmatprep.subr.bf16.mxu0 0
        %1977 = vmatpush1.bf16.xpose.msra.mxu0 0
        %1978 = vmatprep.subr.bf16.mxu0 0
        %1979 = vmatpush1.bf16.xpose.msra.mxu0 0
        %1980 = vmatprep.subr.bf16.mxu0 0
        %1981 = vmatpush1.bf16.xpose.msra.mxu0 0
        %1982 = vmatprep.subr.bf16.mxu0 0
        %1983 = vmatpush1.bf16.xpose.msra.mxu0 0
        %1984 = vmatprep.subr.bf16.mxu0 0
        %1985 = vmatpush1.bf16.xpose.msra.mxu0 0
        %1986 = vmatprep.subr.bf16.mxu0 0
        %1987 = vmatpush1.bf16.xpose.msra.mxu0 0
        %1988 = vmatprep.subr.bf16.mxu0 0
        %1989 = vmatpush1.bf16.xpose.msra.mxu0 0
        %1990 = vmatprep.subr.bf16.mxu0 0
        %1991 = vmatpush1.bf16.xpose.msra.mxu0 0
        %1992 = vmatprep.subr.bf16.mxu0 0
        %1993 = vmatpush1.bf16.xpose.msra.mxu0 0
        %1994 = vmatprep.subr.bf16.mxu0 0
        %1995 = vmatpush1.bf16.xpose.msra.mxu0 0
        %1996 = vmatprep.subr.bf16.mxu0 0
        %1997 = vmatpush1.bf16.xpose.msra.mxu0 0
        %1998 = vmatprep.mubr.bf16.mxu0 0
        %1999 = vmatmul.mubr.bf16.gmra.mrb[0].mxu0 %v1961
        %v2000 = vpop.f32.mrb[0].mxu0
        %v2001 = vadd.f32 0.0, %v2000
        %v2002 = vpop.f32.mrb[0].mxu0
        %v2003 = vpop.f32.mrb[0].mxu0
        %v2004 = vpop.f32.mrb[0].mxu0
        %2005 = vdwg.mxu0
        %v2006 = vmul.f32 %v2001, 0.17677669
        %v2007 = vadd.f32 %v2006, %v782
        %v2008 = vsel %vm785, %v2007, -inf
        %2009 = vmax.xlane.f32.xlu0 %v2008
        %v2010 = vpop.xlane.xlu0 %2009
        %v2011 = vsub.f32 %v2007, %v2010
        %v2012 = vmul.f32 %v2011, 1.442695
        %v2013 = vpow.pop %v2012
        %v2014 = vsel %vm785, %v2013, 0.0
        %2015 = vadd.xlane.f32.xlu0 %v2014
        %v2016 = vpop.xlane.xlu0 %2015
        %v2017 = vrcp.pop %v2016
        %v2018 = vmul.f32 %v2013, %v2017
        %v2019 = vpack.c.bf16 %v2018, %v2018
        %v2021 = vsel %vm785, %v2019, 0
        %v2024 = vsel %vm801, %v1959, 0
        %2026 = vmatprep.subr.bf16.mxu0 0
        %2027 = vmatpush1.bf16.msra.mxu0 %v2024
        %2028 = vmatprep.subr.bf16.mxu0 0
        %2029 = vmatpush1.bf16.msra.mxu0 0
        %2030 = vmatprep.subr.bf16.mxu0 0
        %2031 = vmatpush1.bf16.msra.mxu0 0
        %2032 = vmatprep.subr.bf16.mxu0 0
        %2033 = vmatpush1.bf16.msra.mxu0 0
        %2034 = vmatprep.subr.bf16.mxu0 0
        %2035 = vmatpush1.bf16.msra.mxu0 0
        %2036 = vmatprep.subr.bf16.mxu0 0
        %2037 = vmatpush1.bf16.msra.mxu0 0
        %2038 = vmatprep.subr.bf16.mxu0 0
        %2039 = vmatpush1.bf16.msra.mxu0 0
        %2040 = vmatprep.subr.bf16.mxu0 0
        %2041 = vmatpush1.bf16.msra.mxu0 0
        %2042 = vmatprep.subr.bf16.mxu0 0
        %2043 = vmatpush1.bf16.msra.mxu0 0
        %2044 = vmatprep.subr.bf16.mxu0 0
        %2045 = vmatpush1.bf16.msra.mxu0 0
        %2046 = vmatprep.subr.bf16.mxu0 0
        %2047 = vmatpush1.bf16.msra.mxu0 0
        %2048 = vmatprep.subr.bf16.mxu0 0
        %2049 = vmatpush1.bf16.msra.mxu0 0
        %2050 = vmatprep.subr.bf16.mxu0 0
        %2051 = vmatpush1.bf16.msra.mxu0 0
        %2052 = vmatprep.subr.bf16.mxu0 0
        %2053 = vmatpush1.bf16.msra.mxu0 0
        %2054 = vmatprep.subr.bf16.mxu0 0
        %2055 = vmatpush1.bf16.msra.mxu0 0
        %2056 = vmatprep.subr.bf16.mxu0 0
        %2057 = vmatpush1.bf16.msra.mxu0 0
        %2058 = vmatprep.mubr.bf16.mxu0 0
        %2059 = vmatmul.mubr.bf16.gmra.mrb[0].mxu0 %v2021
        %v2060 = vpop.f32.mrb[0].mxu0
        %v2061 = vadd.f32 0.0, %v2060
        %v2062 = vpop.f32.mrb[0].mxu0
        %v2063 = vpop.f32.mrb[0].mxu0
        %v2064 = vpop.f32.mrb[0].mxu0
        %2065 = vdwg.mxu0
        %v2066 = vpack.c.bf16 %v2061, %v2061
        %2068 = vrot.lane.b32.xlu0 %v1957, 96
        %v2069 = vpop.permute.xlu0 %2068
        %2071 = vrot.lane.b32.xlu0 %v1958, 96
        %v2072 = vpop.permute.xlu0 %2071
        %v2074 = vsel %vm730, %v2069, 0
        %v2077 = vsel %vm730, %v2072, 0
        %2079 = vmatprep.subr.bf16.mxu0 0
        %2080 = vmatpush1.bf16.xpose.msra.mxu0 %v2077
        %2081 = vmatprep.subr.bf16.mxu0 0
        %2082 = vmatpush1.bf16.xpose.msra.mxu0 0
        %2083 = vmatprep.subr.bf16.mxu0 0
        %2084 = vmatpush1.bf16.xpose.msra.mxu0 0
        %2085 = vmatprep.subr.bf16.mxu0 0
        %2086 = vmatpush1.bf16.xpose.msra.mxu0 0
        %2087 = vmatprep.subr.bf16.mxu0 0
        %2088 = vmatpush1.bf16.xpose.msra.mxu0 0
        %2089 = vmatprep.subr.bf16.mxu0 0
        %2090 = vmatpush1.bf16.xpose.msra.mxu0 0
        %2091 = vmatprep.subr.bf16.mxu0 0
        %2092 = vmatpush1.bf16.xpose.msra.mxu0 0
        %2093 = vmatprep.subr.bf16.mxu0 0
        %2094 = vmatpush1.bf16.xpose.msra.mxu0 0
        %2095 = vmatprep.subr.bf16.mxu0 0
        %2096 = vmatpush1.bf16.xpose.msra.mxu0 0
        %2097 = vmatprep.subr.bf16.mxu0 0
        %2098 = vmatpush1.bf16.xpose.msra.mxu0 0
        %2099 = vmatprep.subr.bf16.mxu0 0
        %2100 = vmatpush1.bf16.xpose.msra.mxu0 0
        %2101 = vmatprep.subr.bf16.mxu0 0
        %2102 = vmatpush1.bf16.xpose.msra.mxu0 0
        %2103 = vmatprep.subr.bf16.mxu0 0
        %2104 = vmatpush1.bf16.xpose.msra.mxu0 0
        %2105 = vmatprep.subr.bf16.mxu0 0
        %2106 = vmatpush1.bf16.xpose.msra.mxu0 0
        %2107 = vmatprep.subr.bf16.mxu0 0
        %2108 = vmatpush1.bf16.xpose.msra.mxu0 0
        %2109 = vmatprep.subr.bf16.mxu0 0
        %2110 = vmatpush1.bf16.xpose.msra.mxu0 0
        %2111 = vmatprep.mubr.bf16.mxu0 0
        %2112 = vmatmul.mubr.bf16.gmra.mrb[0].mxu0 %v2074
        %v2113 = vpop.f32.mrb[0].mxu0
        %v2114 = vadd.f32 0.0, %v2113
        %v2115 = vpop.f32.mrb[0].mxu0
        %v2116 = vpop.f32.mrb[0].mxu0
        %v2117 = vpop.f32.mrb[0].mxu0
        %2118 = vdwg.mxu0
        %v2119 = vmul.f32 %v2114, 0.17677669
        %v2120 = vadd.f32 %v2119, %v782
        %v2121 = vsel %vm785, %v2120, -inf
        %2122 = vmax.xlane.f32.xlu0 %v2121
        %v2123 = vpop.xlane.xlu0 %2122
        %v2124 = vsub.f32 %v2120, %v2123
        %v2125 = vmul.f32 %v2124, 1.442695
        %v2126 = vpow.pop %v2125
        %v2127 = vsel %vm785, %v2126, 0.0
        %2128 = vadd.xlane.f32.xlu0 %v2127
        %v2129 = vpop.xlane.xlu0 %2128
        %v2130 = vrcp.pop %v2129
        %v2131 = vmul.f32 %v2126, %v2130
        %v2132 = vpack.c.bf16 %v2131, %v2131
        %2134 = vrot.lane.b32.xlu0 %v1959, 96
        %v2135 = vpop.permute.xlu0 %2134
        %v2137 = vsel %vm785, %v2132, 0
        %v2140 = vsel %vm801, %v2135, 0
        %2142 = vmatprep.subr.bf16.mxu0 0
        %2143 = vmatpush1.bf16.msra.mxu0 %v2140
        %2144 = vmatprep.subr.bf16.mxu0 0
        %2145 = vmatpush1.bf16.msra.mxu0 0
        %2146 = vmatprep.subr.bf16.mxu0 0
        %2147 = vmatpush1.bf16.msra.mxu0 0
        %2148 = vmatprep.subr.bf16.mxu0 0
        %2149 = vmatpush1.bf16.msra.mxu0 0
        %2150 = vmatprep.subr.bf16.mxu0 0
        %2151 = vmatpush1.bf16.msra.mxu0 0
        %2152 = vmatprep.subr.bf16.mxu0 0
        %2153 = vmatpush1.bf16.msra.mxu0 0
        %2154 = vmatprep.subr.bf16.mxu0 0
        %2155 = vmatpush1.bf16.msra.mxu0 0
        %2156 = vmatprep.subr.bf16.mxu0 0
        %2157 = vmatpush1.bf16.msra.mxu0 0
        %2158 = vmatprep.subr.bf16.mxu0 0
        %2159 = vmatpush1.bf16.msra.mxu0 0
        %2160 = vmatprep.subr.bf16.mxu0 0
        %2161 = vmatpush1.bf16.msra.mxu0 0
        %2162 = vmatprep.subr.bf16.mxu0 0
        %2163 = vmatpush1.bf16.msra.mxu0 0
        %2164 = vmatprep.subr.bf16.mxu0 0
        %2165 = vmatpush1.bf16.msra.mxu0 0
        %2166 = vmatprep.subr.bf16.mxu0 0
        %2167 = vmatpush1.bf16.msra.mxu0 0
        %2168 = vmatprep.subr.bf16.mxu0 0
        %2169 = vmatpush1.bf16.msra.mxu0 0
        %2170 = vmatprep.subr.bf16.mxu0 0
        %2171 = vmatpush1.bf16.msra.mxu0 0
        %2172 = vmatprep.subr.bf16.mxu0 0
        %2173 = vmatpush1.bf16.msra.mxu0 0
        %2174 = vmatprep.mubr.bf16.mxu0 0
        %2175 = vmatmul.mubr.bf16.gmra.mrb[0].mxu0 %v2137
        %v2176 = vpop.f32.mrb[0].mxu0
        %v2177 = vadd.f32 0.0, %v2176
        %v2178 = vpop.f32.mrb[0].mxu0
        %v2179 = vpop.f32.mrb[0].mxu0
        %v2180 = vpop.f32.mrb[0].mxu0
        %2181 = vdwg.mxu0
        %v2182 = vpack.c.bf16 %v2177, %v2177
        %v2187 = vunpack.c.l.b16 %v1945
        %v2188 = vunpack.c.l.b16 %v1946
        %v2189 = vunpack.c.l.b16 %v1947
        %v2190 = vunpack.c.l.b16 %v1948
        %v2191 = vpack.c.b16 %v2188, %v2187
        %v2192 = vpack.c.b16 %v2190, %v2189
        %v2196 = vsel %vm730, %v2182, 0
        %2198 = vmatprep.subr.bf16.mxu0 0
        %2199 = vmatpush1.bf16.msra.mxu0 %v2191
        %2200 = vmatprep.subr.bf16.mxu0 0
        %2201 = vmatpush1.bf16.msra.mxu0 %v2192
        %2202 = vmatprep.subr.bf16.mxu0 0
        %2203 = vmatpush1.bf16.msra.mxu0 0
        %2204 = vmatprep.subr.bf16.mxu0 0
        %2205 = vmatpush1.bf16.msra.mxu0 0
        %2206 = vmatprep.subr.bf16.mxu0 0
        %2207 = vmatpush1.bf16.msra.mxu0 0
        %2208 = vmatprep.subr.bf16.mxu0 0
        %2209 = vmatpush1.bf16.msra.mxu0 0
        %2210 = vmatprep.subr.bf16.mxu0 0
        %2211 = vmatpush1.bf16.msra.mxu0 0
        %2212 = vmatprep.subr.bf16.mxu0 0
        %2213 = vmatpush1.bf16.msra.mxu0 0
        %2214 = vmatprep.subr.bf16.mxu0 0
        %2215 = vmatpush1.bf16.msra.mxu0 0
        %2216 = vmatprep.subr.bf16.mxu0 0
        %2217 = vmatpush1.bf16.msra.mxu0 0
        %2218 = vmatprep.subr.bf16.mxu0 0
        %2219 = vmatpush1.bf16.msra.mxu0 0
        %2220 = vmatprep.subr.bf16.mxu0 0
        %2221 = vmatpush1.bf16.msra.mxu0 0
        %2222 = vmatprep.subr.bf16.mxu0 0
        %2223 = vmatpush1.bf16.msra.mxu0 0
        %2224 = vmatprep.subr.bf16.mxu0 0
        %2225 = vmatpush1.bf16.msra.mxu0 0
        %2226 = vmatprep.subr.bf16.mxu0 0
        %2227 = vmatpush1.bf16.msra.mxu0 0
        %2228 = vmatprep.subr.bf16.mxu0 0
        %2229 = vmatpush1.bf16.msra.mxu0 0
        %2230 = vmatprep.mubr.bf16.mxu0 0
        %2231 = vmatmul.mubr.bf16.gmra.mrb[0].mxu0 %v2196
        %v2232 = vpop.f32.mrb[0].mxu0
        %v2233 = vadd.f32 0.0, %v2232
        %v2234 = vpop.f32.mrb[0].mxu0
        %v2235 = vpop.f32.mrb[0].mxu0
        %v2236 = vpop.f32.mrb[0].mxu0
        %2237 = vdwg.mxu0
        %v2242 = vunpack.c.l.b16 %v1941
        %v2243 = vunpack.c.l.b16 %v1942
        %v2244 = vunpack.c.l.b16 %v1943
        %v2245 = vunpack.c.l.b16 %v1944
        %v2246 = vpack.c.b16 %v2243, %v2242
        %v2247 = vpack.c.b16 %v2245, %v2244
        %v2251 = vsel %vm730, %v2066, 0
        %2253 = vmatprep.subr.bf16.mxu0 0
        %2254 = vmatpush1.bf16.msra.mxu0 %v2246
        %2255 = vmatprep.subr.bf16.mxu0 0
        %2256 = vmatpush1.bf16.msra.mxu0 %v2247
        %2257 = vmatprep.subr.bf16.mxu0 0
        %2258 = vmatpush1.bf16.msra.mxu0 0
        %2259 = vmatprep.subr.bf16.mxu0 0
        %2260 = vmatpush1.bf16.msra.mxu0 0
        %2261 = vmatprep.subr.bf16.mxu0 0
        %2262 = vmatpush1.bf16.msra.mxu0 0
        %2263 = vmatprep.subr.bf16.mxu0 0
        %2264 = vmatpush1.bf16.msra.mxu0 0
        %2265 = vmatprep.subr.bf16.mxu0 0
        %2266 = vmatpush1.bf16.msra.mxu0 0
        %2267 = vmatprep.subr.bf16.mxu0 0
        %2268 = vmatpush1.bf16.msra.mxu0 0
        %2269 = vmatprep.subr.bf16.mxu0 0
        %2270 = vmatpush1.bf16.msra.mxu0 0
        %2271 = vmatprep.subr.bf16.mxu0 0
        %2272 = vmatpush1.bf16.msra.mxu0 0
        %2273 = vmatprep.subr.bf16.mxu0 0
        %2274 = vmatpush1.bf16.msra.mxu0 0
        %2275 = vmatprep.subr.bf16.mxu0 0
        %2276 = vmatpush1.bf16.msra.mxu0 0
        %2277 = vmatprep.subr.bf16.mxu0 0
        %2278 = vmatpush1.bf16.msra.mxu0 0
        %2279 = vmatprep.subr.bf16.mxu0 0
        %2280 = vmatpush1.bf16.msra.mxu0 0
        %2281 = vmatprep.subr.bf16.mxu0 0
        %2282 = vmatpush1.bf16.msra.mxu0 0
        %2283 = vmatprep.subr.bf16.mxu0 0
        %2284 = vmatpush1.bf16.msra.mxu0 0
        %2285 = vmatprep.mubr.bf16.mxu0 0
        %2286 = vmatmul.mubr.bf16.gmra.mrb[0].mxu0 %v2251
        %v2287 = vpop.f32.mrb[0].mxu0
        %v2288 = vadd.f32 %v2233, %v2287
        %v2289 = vpop.f32.mrb[0].mxu0
        %v2290 = vpop.f32.mrb[0].mxu0
        %v2291 = vpop.f32.mrb[0].mxu0
        %2292 = vdwg.mxu0
        %2293 = vrot.lane.b32.xlu0 %v1957, 64
        %v2294 = vpop.permute.xlu0 %2293
        %2295 = vrot.lane.b32.xlu0 %v1958, 64
        %v2296 = vpop.permute.xlu0 %2295
        %v2298 = vsel %vm730, %v2294, 0
        %v2301 = vsel %vm730, %v2296, 0
        %2303 = vmatprep.subr.bf16.mxu0 0
        %2304 = vmatpush1.bf16.xpose.msra.mxu0 %v2301
        %2305 = vmatprep.subr.bf16.mxu0 0
        %2306 = vmatpush1.bf16.xpose.msra.mxu0 0
        %2307 = vmatprep.subr.bf16.mxu0 0
        %2308 = vmatpush1.bf16.xpose.msra.mxu0 0
        %2309 = vmatprep.subr.bf16.mxu0 0
        %2310 = vmatpush1.bf16.xpose.msra.mxu0 0
        %2311 = vmatprep.subr.bf16.mxu0 0
        %2312 = vmatpush1.bf16.xpose.msra.mxu0 0
        %2313 = vmatprep.subr.bf16.mxu0 0
        %2314 = vmatpush1.bf16.xpose.msra.mxu0 0
        %2315 = vmatprep.subr.bf16.mxu0 0
        %2316 = vmatpush1.bf16.xpose.msra.mxu0 0
        %2317 = vmatprep.subr.bf16.mxu0 0
        %2318 = vmatpush1.bf16.xpose.msra.mxu0 0
        %2319 = vmatprep.subr.bf16.mxu0 0
        %2320 = vmatpush1.bf16.xpose.msra.mxu0 0
        %2321 = vmatprep.subr.bf16.mxu0 0
        %2322 = vmatpush1.bf16.xpose.msra.mxu0 0
        %2323 = vmatprep.subr.bf16.mxu0 0
        %2324 = vmatpush1.bf16.xpose.msra.mxu0 0
        %2325 = vmatprep.subr.bf16.mxu0 0
        %2326 = vmatpush1.bf16.xpose.msra.mxu0 0
        %2327 = vmatprep.subr.bf16.mxu0 0
        %2328 = vmatpush1.bf16.xpose.msra.mxu0 0
        %2329 = vmatprep.subr.bf16.mxu0 0
        %2330 = vmatpush1.bf16.xpose.msra.mxu0 0
        %2331 = vmatprep.subr.bf16.mxu0 0
        %2332 = vmatpush1.bf16.xpose.msra.mxu0 0
        %2333 = vmatprep.subr.bf16.mxu0 0
        %2334 = vmatpush1.bf16.xpose.msra.mxu0 0
        %2335 = vmatprep.mubr.bf16.mxu0 0
        %2336 = vmatmul.mubr.bf16.gmra.mrb[0].mxu0 %v2298
        %v2337 = vpop.f32.mrb[0].mxu0
        %v2338 = vadd.f32 0.0, %v2337
        %v2339 = vpop.f32.mrb[0].mxu0
        %v2340 = vpop.f32.mrb[0].mxu0
        %v2341 = vpop.f32.mrb[0].mxu0
        %2342 = vdwg.mxu0
        %v2343 = vmul.f32 %v2338, 0.17677669
        %v2344 = vadd.f32 %v2343, %v782
        %v2345 = vsel %vm785, %v2344, -inf
        %2346 = vmax.xlane.f32.xlu0 %v2345
        %v2347 = vpop.xlane.xlu0 %2346
        %v2348 = vsub.f32 %v2344, %v2347
        %v2349 = vmul.f32 %v2348, 1.442695
        %v2350 = vpow.pop %v2349
        %v2351 = vsel %vm785, %v2350, 0.0
        %2352 = vadd.xlane.f32.xlu0 %v2351
        %v2353 = vpop.xlane.xlu0 %2352
        %v2354 = vrcp.pop %v2353
        %v2355 = vmul.f32 %v2350, %v2354
        %v2356 = vpack.c.bf16 %v2355, %v2355
        %2357 = vrot.lane.b32.xlu0 %v1959, 64
        %v2358 = vpop.permute.xlu0 %2357
        %v2360 = vsel %vm785, %v2356, 0
        %v2363 = vsel %vm801, %v2358, 0
        %2365 = vmatprep.subr.bf16.mxu0 0
        %2366 = vmatpush1.bf16.msra.mxu0 %v2363
        %2367 = vmatprep.subr.bf16.mxu0 0
        %2368 = vmatpush1.bf16.msra.mxu0 0
        %2369 = vmatprep.subr.bf16.mxu0 0
        %2370 = vmatpush1.bf16.msra.mxu0 0
        %2371 = vmatprep.subr.bf16.mxu0 0
        %2372 = vmatpush1.bf16.msra.mxu0 0
        %2373 = vmatprep.subr.bf16.mxu0 0
        %2374 = vmatpush1.bf16.msra.mxu0 0
        %2375 = vmatprep.subr.bf16.mxu0 0
        %2376 = vmatpush1.bf16.msra.mxu0 0
        %2377 = vmatprep.subr.bf16.mxu0 0
        %2378 = vmatpush1.bf16.msra.mxu0 0
        %2379 = vmatprep.subr.bf16.mxu0 0
        %2380 = vmatpush1.bf16.msra.mxu0 0
        %2381 = vmatprep.subr.bf16.mxu0 0
        %2382 = vmatpush1.bf16.msra.mxu0 0
        %2383 = vmatprep.subr.bf16.mxu0 0
        %2384 = vmatpush1.bf16.msra.mxu0 0
        %2385 = vmatprep.subr.bf16.mxu0 0
        %2386 = vmatpush1.bf16.msra.mxu0 0
        %2387 = vmatprep.subr.bf16.mxu0 0
        %2388 = vmatpush1.bf16.msra.mxu0 0
        %2389 = vmatprep.subr.bf16.mxu0 0
        %2390 = vmatpush1.bf16.msra.mxu0 0
        %2391 = vmatprep.subr.bf16.mxu0 0
        %2392 = vmatpush1.bf16.msra.mxu0 0
        %2393 = vmatprep.subr.bf16.mxu0 0
        %2394 = vmatpush1.bf16.msra.mxu0 0
        %2395 = vmatprep.subr.bf16.mxu0 0
        %2396 = vmatpush1.bf16.msra.mxu0 0
        %2397 = vmatprep.mubr.bf16.mxu0 0
        %2398 = vmatmul.mubr.bf16.gmra.mrb[0].mxu0 %v2360
        %v2399 = vpop.f32.mrb[0].mxu0
        %v2400 = vadd.f32 0.0, %v2399
        %v2401 = vpop.f32.mrb[0].mxu0
        %v2402 = vpop.f32.mrb[0].mxu0
        %v2403 = vpop.f32.mrb[0].mxu0
        %2404 = vdwg.mxu0
        %v2405 = vpack.c.bf16 %v2400, %v2400
        %v2410 = vunpack.c.l.b16 %v1949
        %v2411 = vunpack.c.l.b16 %v1950
        %v2412 = vunpack.c.l.b16 %v1951
        %v2413 = vunpack.c.l.b16 %v1952
        %v2414 = vpack.c.b16 %v2411, %v2410
        %v2415 = vpack.c.b16 %v2413, %v2412
        %v2419 = vsel %vm730, %v2405, 0
        %2421 = vmatprep.subr.bf16.mxu0 0
        %2422 = vmatpush1.bf16.msra.mxu0 %v2414
        %2423 = vmatprep.subr.bf16.mxu0 0
        %2424 = vmatpush1.bf16.msra.mxu0 %v2415
        %2425 = vmatprep.subr.bf16.mxu0 0
        %2426 = vmatpush1.bf16.msra.mxu0 0
        %2427 = vmatprep.subr.bf16.mxu0 0
        %2428 = vmatpush1.bf16.msra.mxu0 0
        %2429 = vmatprep.subr.bf16.mxu0 0
        %2430 = vmatpush1.bf16.msra.mxu0 0
        %2431 = vmatprep.subr.bf16.mxu0 0
        %2432 = vmatpush1.bf16.msra.mxu0 0
        %2433 = vmatprep.subr.bf16.mxu0 0
        %2434 = vmatpush1.bf16.msra.mxu0 0
        %2435 = vmatprep.subr.bf16.mxu0 0
        %2436 = vmatpush1.bf16.msra.mxu0 0
        %2437 = vmatprep.subr.bf16.mxu0 0
        %2438 = vmatpush1.bf16.msra.mxu0 0
        %2439 = vmatprep.subr.bf16.mxu0 0
        %2440 = vmatpush1.bf16.msra.mxu0 0
        %2441 = vmatprep.subr.bf16.mxu0 0
        %2442 = vmatpush1.bf16.msra.mxu0 0
        %2443 = vmatprep.subr.bf16.mxu0 0
        %2444 = vmatpush1.bf16.msra.mxu0 0
        %2445 = vmatprep.subr.bf16.mxu0 0
        %2446 = vmatpush1.bf16.msra.mxu0 0
        %2447 = vmatprep.subr.bf16.mxu0 0
        %2448 = vmatpush1.bf16.msra.mxu0 0
        %2449 = vmatprep.subr.bf16.mxu0 0
        %2450 = vmatpush1.bf16.msra.mxu0 0
        %2451 = vmatprep.subr.bf16.mxu0 0
        %2452 = vmatpush1.bf16.msra.mxu0 0
        %2453 = vmatprep.mubr.bf16.mxu0 0
        %2454 = vmatmul.mubr.bf16.gmra.mrb[0].mxu0 %v2419
        %v2455 = vpop.f32.mrb[0].mxu0
        %v2456 = vadd.f32 0.0, %v2455
        %v2457 = vpop.f32.mrb[0].mxu0
        %v2458 = vpop.f32.mrb[0].mxu0
        %v2459 = vpop.f32.mrb[0].mxu0
        %2460 = vdwg.mxu0
        %v2461 = vadd.f32 %v2288, %v2456
        %2462 = vrot.lane.b32.xlu0 %v1957, 32
        %v2463 = vpop.permute.xlu0 %2462
        %2464 = vrot.lane.b32.xlu0 %v1958, 32
        %v2465 = vpop.permute.xlu0 %2464
        %v2467 = vsel %vm730, %v2463, 0
        %v2470 = vsel %vm730, %v2465, 0
        %2472 = vmatprep.subr.bf16.mxu0 0
        %2473 = vmatpush1.bf16.xpose.msra.mxu0 %v2470
        %2474 = vmatprep.subr.bf16.mxu0 0
        %2475 = vmatpush1.bf16.xpose.msra.mxu0 0
        %2476 = vmatprep.subr.bf16.mxu0 0
        %2477 = vmatpush1.bf16.xpose.msra.mxu0 0
        %2478 = vmatprep.subr.bf16.mxu0 0
        %2479 = vmatpush1.bf16.xpose.msra.mxu0 0
        %2480 = vmatprep.subr.bf16.mxu0 0
        %2481 = vmatpush1.bf16.xpose.msra.mxu0 0
        %2482 = vmatprep.subr.bf16.mxu0 0
        %2483 = vmatpush1.bf16.xpose.msra.mxu0 0
        %2484 = vmatprep.subr.bf16.mxu0 0
        %2485 = vmatpush1.bf16.xpose.msra.mxu0 0
        %2486 = vmatprep.subr.bf16.mxu0 0
        %2487 = vmatpush1.bf16.xpose.msra.mxu0 0
        %2488 = vmatprep.subr.bf16.mxu0 0
        %2489 = vmatpush1.bf16.xpose.msra.mxu0 0
        %2490 = vmatprep.subr.bf16.mxu0 0
        %2491 = vmatpush1.bf16.xpose.msra.mxu0 0
        %2492 = vmatprep.subr.bf16.mxu0 0
        %2493 = vmatpush1.bf16.xpose.msra.mxu0 0
        %2494 = vmatprep.subr.bf16.mxu0 0
        %2495 = vmatpush1.bf16.xpose.msra.mxu0 0
        %2496 = vmatprep.subr.bf16.mxu0 0
        %2497 = vmatpush1.bf16.xpose.msra.mxu0 0
        %2498 = vmatprep.subr.bf16.mxu0 0
        %2499 = vmatpush1.bf16.xpose.msra.mxu0 0
        %2500 = vmatprep.subr.bf16.mxu0 0
        %2501 = vmatpush1.bf16.xpose.msra.mxu0 0
        %2502 = vmatprep.subr.bf16.mxu0 0
        %2503 = vmatpush1.bf16.xpose.msra.mxu0 0
        %2504 = vmatprep.mubr.bf16.mxu0 0
        %2505 = vmatmul.mubr.bf16.gmra.mrb[0].mxu0 %v2467
        %v2506 = vpop.f32.mrb[0].mxu0
        %v2507 = vadd.f32 0.0, %v2506
        %v2508 = vpop.f32.mrb[0].mxu0
        %v2509 = vpop.f32.mrb[0].mxu0
        %v2510 = vpop.f32.mrb[0].mxu0
        %2511 = vdwg.mxu0
        %v2512 = vmul.f32 %v2507, 0.17677669
        %v2513 = vadd.f32 %v2512, %v782
        %v2514 = vsel %vm785, %v2513, -inf
        %2515 = vmax.xlane.f32.xlu0 %v2514
        %v2516 = vpop.xlane.xlu0 %2515
        %v2517 = vsub.f32 %v2513, %v2516
        %v2518 = vmul.f32 %v2517, 1.442695
        %v2519 = vpow.pop %v2518
        %v2520 = vsel %vm785, %v2519, 0.0
        %2521 = vadd.xlane.f32.xlu0 %v2520
        %v2522 = vpop.xlane.xlu0 %2521
        %v2523 = vrcp.pop %v2522
        %v2524 = vmul.f32 %v2519, %v2523
        %v2525 = vpack.c.bf16 %v2524, %v2524
        %2526 = vrot.lane.b32.xlu0 %v1959, 32
        %v2527 = vpop.permute.xlu0 %2526
        %v2529 = vsel %vm785, %v2525, 0
        %v2532 = vsel %vm801, %v2527, 0
        %2534 = vmatprep.subr.bf16.mxu0 0
        %2535 = vmatpush1.bf16.msra.mxu0 %v2532
        %2536 = vmatprep.subr.bf16.mxu0 0
        %2537 = vmatpush1.bf16.msra.mxu0 0
        %2538 = vmatprep.subr.bf16.mxu0 0
        %2539 = vmatpush1.bf16.msra.mxu0 0
        %2540 = vmatprep.subr.bf16.mxu0 0
        %2541 = vmatpush1.bf16.msra.mxu0 0
        %2542 = vmatprep.subr.bf16.mxu0 0
        %2543 = vmatpush1.bf16.msra.mxu0 0
        %2544 = vmatprep.subr.bf16.mxu0 0
        %2545 = vmatpush1.bf16.msra.mxu0 0
        %2546 = vmatprep.subr.bf16.mxu0 0
        %2547 = vmatpush1.bf16.msra.mxu0 0
        %2548 = vmatprep.subr.bf16.mxu0 0
        %2549 = vmatpush1.bf16.msra.mxu0 0
        %2550 = vmatprep.subr.bf16.mxu0 0
        %2551 = vmatpush1.bf16.msra.mxu0 0
        %2552 = vmatprep.subr.bf16.mxu0 0
        %2553 = vmatpush1.bf16.msra.mxu0 0
        %2554 = vmatprep.subr.bf16.mxu0 0
        %2555 = vmatpush1.bf16.msra.mxu0 0
        %2556 = vmatprep.subr.bf16.mxu0 0
        %2557 = vmatpush1.bf16.msra.mxu0 0
        %2558 = vmatprep.subr.bf16.mxu0 0
        %2559 = vmatpush1.bf16.msra.mxu0 0
        %2560 = vmatprep.subr.bf16.mxu0 0
        %2561 = vmatpush1.bf16.msra.mxu0 0
        %2562 = vmatprep.subr.bf16.mxu0 0
        %2563 = vmatpush1.bf16.msra.mxu0 0
        %2564 = vmatprep.subr.bf16.mxu0 0
        %2565 = vmatpush1.bf16.msra.mxu0 0
        %2566 = vmatprep.mubr.bf16.mxu0 0
        %2567 = vmatmul.mubr.bf16.gmra.mrb[0].mxu0 %v2529
        %v2568 = vpop.f32.mrb[0].mxu0
        %v2569 = vadd.f32 0.0, %v2568
        %v2570 = vpop.f32.mrb[0].mxu0
        %v2571 = vpop.f32.mrb[0].mxu0
        %v2572 = vpop.f32.mrb[0].mxu0
        %2573 = vdwg.mxu0
        %v2574 = vpack.c.bf16 %v2569, %v2569
        %v2579 = vunpack.c.l.b16 %v1953
        %v2580 = vunpack.c.l.b16 %v1954
        %v2581 = vunpack.c.l.b16 %v1955
        %v2582 = vunpack.c.l.b16 %v1956
        %v2583 = vpack.c.b16 %v2580, %v2579
        %v2584 = vpack.c.b16 %v2582, %v2581
        %v2588 = vsel %vm730, %v2574, 0
        %2590 = vmatprep.subr.bf16.mxu0 0
        %2591 = vmatpush1.bf16.msra.mxu0 %v2583
        %2592 = vmatprep.subr.bf16.mxu0 0
        %2593 = vmatpush1.bf16.msra.mxu0 %v2584
        %2594 = vmatprep.subr.bf16.mxu0 0
        %2595 = vmatpush1.bf16.msra.mxu0 0
        %2596 = vmatprep.subr.bf16.mxu0 0
        %2597 = vmatpush1.bf16.msra.mxu0 0
        %2598 = vmatprep.subr.bf16.mxu0 0
        %2599 = vmatpush1.bf16.msra.mxu0 0
        %2600 = vmatprep.subr.bf16.mxu0 0
        %2601 = vmatpush1.bf16.msra.mxu0 0
        %2602 = vmatprep.subr.bf16.mxu0 0
        %2603 = vmatpush1.bf16.msra.mxu0 0
        %2604 = vmatprep.subr.bf16.mxu0 0
        %2605 = vmatpush1.bf16.msra.mxu0 0
        %2606 = vmatprep.subr.bf16.mxu0 0
        %2607 = vmatpush1.bf16.msra.mxu0 0
        %2608 = vmatprep.subr.bf16.mxu0 0
        %2609 = vmatpush1.bf16.msra.mxu0 0
        %2610 = vmatprep.subr.bf16.mxu0 0
        %2611 = vmatpush1.bf16.msra.mxu0 0
        %2612 = vmatprep.subr.bf16.mxu0 0
        %2613 = vmatpush1.bf16.msra.mxu0 0
        %2614 = vmatprep.subr.bf16.mxu0 0
        %2615 = vmatpush1.bf16.msra.mxu0 0
        %2616 = vmatprep.subr.bf16.mxu0 0
        %2617 = vmatpush1.bf16.msra.mxu0 0
        %2618 = vmatprep.subr.bf16.mxu0 0
        %2619 = vmatpush1.bf16.msra.mxu0 0
        %2620 = vmatprep.subr.bf16.mxu0 0
        %2621 = vmatpush1.bf16.msra.mxu0 0
        %2622 = vmatprep.mubr.bf16.mxu0 0
        %2623 = vmatmul.mubr.bf16.gmra.mrb[0].mxu0 %v2588
        %v2624 = vpop.f32.mrb[0].mxu0
        %v2625 = vadd.f32 0.0, %v2624
        %v2626 = vpop.f32.mrb[0].mxu0
        %v2627 = vpop.f32.mrb[0].mxu0
        %v2628 = vpop.f32.mrb[0].mxu0
        %2629 = vdwg.mxu0
        %v2630 = vadd.f32 %v2461, %v2625
        %v2631 = vlaneseq
        %v2632 = vshrl.u32 %v2631, 7
        %v2633 = vsub.s32 3, %v2632
        %v2634 = vrot.slane %v1680, %v2633
        %v2635 = vadd.f32 %v2630, %v2634
        %v2636 = vadd.f32 %v1678, %v2635
        %2637 = vadd.xlane.f32.xlu0 %v2636
        %v2638 = vpop.xlane.xlu0 %2637
        %v2639 = vmul.f32 %v2638, %v1418
        %v2640 = vsub.f32 %v2636, %v2639
        %v2641 = vmul.f32 %v2640, %v2640
        %2642 = vadd.xlane.f32.xlu0 %v2641
        %v2643 = vpop.xlane.xlu0 %2642
        %v2644 = vmul.f32 %v2643, %v1418
        %v2645 = vadd.f32 %v2644, 1e-05
        %v2646 = vrsqrt.pop %v2645
        %v2647 = vmul.f32 %v2640, %v2646
        %v2648 = vlaneseq
        %v2649 = vshrl.u32 %v2648, 7
        %v2650 = vsub.s32 6, %v2649
        %v2651 = vrot.slane %v1680, %v2650
        %v2652 = vmul.f32 %v2647, %v2651
        %v2653 = vlaneseq
        %v2654 = vshrl.u32 %v2653, 7
        %v2655 = vsub.s32 7, %v2654
        %v2656 = vrot.slane %v1680, %v2655
        %v2657 = vadd.f32 %v2652, %v2656
        %v2658 = vpack.c.bf16 %v2657, %v2657
        %s2659 = scalar_lea.vmem [#allocation8], 64
        %v2660 = vld [vmem:[%s2659] sm:$0xf]
        %v2661 = vld [vmem:[%s2659 + $0x4] sm:$0xf]
        %v2662 = vld [vmem:[%s2659 + $0x8] sm:$0xf]
        %v2663 = vld [vmem:[%s2659 + $0xc] sm:$0xf]
        %v2664 = vld [vmem:[%s2659 + $0x10] sm:$0xf]
        %v2665 = vld [vmem:[%s2659 + $0x14] sm:$0xf]
        %v2666 = vld [vmem:[%s2659 + $0x18] sm:$0xf]
        %v2667 = vld [vmem:[%s2659 + $0x1c] sm:$0xf]
        %v2668 = vld [vmem:[%s2659 + $0x20] sm:$0xf]
        %v2669 = vld [vmem:[%s2659 + $0x24] sm:$0xf]
        %v2670 = vld [vmem:[%s2659 + $0x28] sm:$0xf]
        %v2671 = vld [vmem:[%s2659 + $0x2c] sm:$0xf]
        %v2672 = vld [vmem:[%s2659 + $0x30] sm:$0xf]
        %v2673 = vld [vmem:[%s2659 + $0x34] sm:$0xf]
        %v2674 = vld [vmem:[%s2659 + $0x38] sm:$0xf]
        %v2675 = vld [vmem:[%s2659 + $0x3c] sm:$0xf]
        %v2676 = vlaneseq
        %v2677 = vshrl.u32 %v2676, 7
        %v2678 = vsub.s32 4, %v2677
        %v2679 = vrot.slane %v1680, %v2678
        %v2696 = vunpack.c.l.b16 %v2660
        %v2697 = vunpack.c.l.b16 %v2661
        %v2698 = vunpack.c.l.b16 %v2662
        %v2699 = vunpack.c.l.b16 %v2663
        %v2700 = vunpack.c.l.b16 %v2664
        %v2701 = vunpack.c.l.b16 %v2665
        %v2702 = vunpack.c.l.b16 %v2666
        %v2703 = vunpack.c.l.b16 %v2667
        %v2704 = vunpack.c.l.b16 %v2668
        %v2705 = vunpack.c.l.b16 %v2669
        %v2706 = vunpack.c.l.b16 %v2670
        %v2707 = vunpack.c.l.b16 %v2671
        %v2708 = vunpack.c.l.b16 %v2672
        %v2709 = vunpack.c.l.b16 %v2673
        %v2710 = vunpack.c.l.b16 %v2674
        %v2711 = vunpack.c.l.b16 %v2675
        %v2712 = vpack.c.b16 %v2697, %v2696
        %v2713 = vpack.c.b16 %v2699, %v2698
        %v2714 = vpack.c.b16 %v2701, %v2700
        %v2715 = vpack.c.b16 %v2703, %v2702
        %v2716 = vpack.c.b16 %v2705, %v2704
        %v2717 = vpack.c.b16 %v2707, %v2706
        %v2718 = vpack.c.b16 %v2709, %v2708
        %v2719 = vpack.c.b16 %v2711, %v2710
        %2728 = vmatprep.subr.bf16.mxu0 0
        %2729 = vmatpush1.bf16.msra.mxu0 %v2712
        %2730 = vmatprep.subr.bf16.mxu0 0
        %2731 = vmatpush1.bf16.msra.mxu0 %v2713
        %2732 = vmatprep.subr.bf16.mxu0 0
        %2733 = vmatpush1.bf16.msra.mxu0 %v2714
        %2734 = vmatprep.subr.bf16.mxu0 0
        %2735 = vmatpush1.bf16.msra.mxu0 %v2715
        %2736 = vmatprep.subr.bf16.mxu0 0
        %2737 = vmatpush1.bf16.msra.mxu0 %v2716
        %2738 = vmatprep.subr.bf16.mxu0 0
        %2739 = vmatpush1.bf16.msra.mxu0 %v2717
        %2740 = vmatprep.subr.bf16.mxu0 0
        %2741 = vmatpush1.bf16.msra.mxu0 %v2718
        %2742 = vmatprep.subr.bf16.mxu0 0
        %2743 = vmatpush1.bf16.msra.mxu0 %v2719
        %2744 = vmatprep.subr.bf16.mxu0 0
        %2745 = vmatpush1.bf16.msra.mxu0 0
        %2746 = vmatprep.subr.bf16.mxu0 0
        %2747 = vmatpush1.bf16.msra.mxu0 0
        %2748 = vmatprep.subr.bf16.mxu0 0
        %2749 = vmatpush1.bf16.msra.mxu0 0
        %2750 = vmatprep.subr.bf16.mxu0 0
        %2751 = vmatpush1.bf16.msra.mxu0 0
        %2752 = vmatprep.subr.bf16.mxu0 0
        %2753 = vmatpush1.bf16.msra.mxu0 0
        %2754 = vmatprep.subr.bf16.mxu0 0
        %2755 = vmatpush1.bf16.msra.mxu0 0
        %2756 = vmatprep.subr.bf16.mxu0 0
        %2757 = vmatpush1.bf16.msra.mxu0 0
        %2758 = vmatprep.subr.bf16.mxu0 0
        %2759 = vmatpush1.bf16.msra.mxu0 0
        %2760 = vmatprep.mubr.bf16.mxu0 0
        %2761 = vmatmul.mubr.bf16.gmra.mrb[0].mxu0 %v2658
        %v2762 = vpop.f32.mrb[0].mxu0
        %v2763 = vadd.f32 %v2679, %v2762
        %v2764 = vpop.f32.mrb[0].mxu0
        %v2765 = vpop.f32.mrb[0].mxu0
        %v2766 = vpop.f32.mrb[0].mxu0
        %2767 = vdwg.mxu0
        %v2768 = vmax.f32 %v2763, 0.0
        %v2769 = vpack.c.bf16 %v2768, %v2768
        %s2770 = scalar_lea.vmem [#allocation10], 64
        %v2771 = vld [vmem:[%s2770] sm:$0xf]
        %v2772 = vld [vmem:[%s2770 + $0x4] sm:$0xf]
        %v2773 = vld [vmem:[%s2770 + $0x8] sm:$0xf]
        %v2774 = vld [vmem:[%s2770 + $0xc] sm:$0xf]
        %v2775 = vld [vmem:[%s2770 + $0x10] sm:$0xf]
        %v2776 = vld [vmem:[%s2770 + $0x14] sm:$0xf]
        %v2777 = vld [vmem:[%s2770 + $0x18] sm:$0xf]
        %v2778 = vld [vmem:[%s2770 + $0x1c] sm:$0xf]
        %v2779 = vld [vmem:[%s2770 + $0x20] sm:$0xf]
        %v2780 = vld [vmem:[%s2770 + $0x24] sm:$0xf]
        %v2781 = vld [vmem:[%s2770 + $0x28] sm:$0xf]
        %v2782 = vld [vmem:[%s2770 + $0x2c] sm:$0xf]
        %v2783 = vld [vmem:[%s2770 + $0x30] sm:$0xf]
        %v2784 = vld [vmem:[%s2770 + $0x34] sm:$0xf]
        %v2785 = vld [vmem:[%s2770 + $0x38] sm:$0xf]
        %v2786 = vld [vmem:[%s2770 + $0x3c] sm:$0xf]
        %v2787 = vlaneseq
        %v2788 = vshrl.u32 %v2787, 7
        %v2789 = vsub.s32 5, %v2788
        %v2790 = vrot.slane %v1680, %v2789
        %v2807 = vunpack.c.l.b16 %v2771
        %v2808 = vunpack.c.l.b16 %v2772
        %v2809 = vunpack.c.l.b16 %v2773
        %v2810 = vunpack.c.l.b16 %v2774
        %v2811 = vunpack.c.l.b16 %v2775
        %v2812 = vunpack.c.l.b16 %v2776
        %v2813 = vunpack.c.l.b16 %v2777
        %v2814 = vunpack.c.l.b16 %v2778
        %v2815 = vunpack.c.l.b16 %v2779
        %v2816 = vunpack.c.l.b16 %v2780
        %v2817 = vunpack.c.l.b16 %v2781
        %v2818 = vunpack.c.l.b16 %v2782
        %v2819 = vunpack.c.l.b16 %v2783
        %v2820 = vunpack.c.l.b16 %v2784
        %v2821 = vunpack.c.l.b16 %v2785
        %v2822 = vunpack.c.l.b16 %v2786
        %v2823 = vpack.c.b16 %v2808, %v2807
        %v2824 = vpack.c.b16 %v2810, %v2809
        %v2825 = vpack.c.b16 %v2812, %v2811
        %v2826 = vpack.c.b16 %v2814, %v2813
        %v2827 = vpack.c.b16 %v2816, %v2815
        %v2828 = vpack.c.b16 %v2818, %v2817
        %v2829 = vpack.c.b16 %v2820, %v2819
        %v2830 = vpack.c.b16 %v2822, %v2821
        %2839 = vmatprep.subr.bf16.mxu0 0
        %2840 = vmatpush1.bf16.msra.mxu0 %v2823
        %2841 = vmatprep.subr.bf16.mxu0 0
        %2842 = vmatpush1.bf16.msra.mxu0 %v2824
        %2843 = vmatprep.subr.bf16.mxu0 0
        %2844 = vmatpush1.bf16.msra.mxu0 %v2825
        %2845 = vmatprep.subr.bf16.mxu0 0
        %2846 = vmatpush1.bf16.msra.mxu0 %v2826
        %2847 = vmatprep.subr.bf16.mxu0 0
        %2848 = vmatpush1.bf16.msra.mxu0 %v2827
        %2849 = vmatprep.subr.bf16.mxu0 0
        %2850 = vmatpush1.bf16.msra.mxu0 %v2828
        %2851 = vmatprep.subr.bf16.mxu0 0
        %2852 = vmatpush1.bf16.msra.mxu0 %v2829
        %2853 = vmatprep.subr.bf16.mxu0 0
        %2854 = vmatpush1.bf16.msra.mxu0 %v2830
        %2855 = vmatprep.subr.bf16.mxu0 0
        %2856 = vmatpush1.bf16.msra.mxu0 0
        %2857 = vmatprep.subr.bf16.mxu0 0
        %2858 = vmatpush1.bf16.msra.mxu0 0
        %2859 = vmatprep.subr.bf16.mxu0 0
        %2860 = vmatpush1.bf16.msra.mxu0 0
        %2861 = vmatprep.subr.bf16.mxu0 0
        %2862 = vmatpush1.bf16.msra.mxu0 0
        %2863 = vmatprep.subr.bf16.mxu0 0
        %2864 = vmatpush1.bf16.msra.mxu0 0
        %2865 = vmatprep.subr.bf16.mxu0 0
        %2866 = vmatpush1.bf16.msra.mxu0 0
        %2867 = vmatprep.subr.bf16.mxu0 0
        %2868 = vmatpush1.bf16.msra.mxu0 0
        %2869 = vmatprep.subr.bf16.mxu0 0
        %2870 = vmatpush1.bf16.msra.mxu0 0
        %2871 = vmatprep.mubr.bf16.mxu0 0
        %2872 = vmatmul.mubr.bf16.gmra.mrb[0].mxu0 %v2769
        %v2873 = vpop.f32.mrb[0].mxu0
        %v2874 = vadd.f32 %v2790, %v2873
        %v2875 = vpop.f32.mrb[0].mxu0
        %v2876 = vpop.f32.mrb[0].mxu0
        %v2877 = vpop.f32.mrb[0].mxu0
        %2878 = vdwg.mxu0
        %v2879 = vadd.f32 %v2657, %v2874
        %2880 = vadd.xlane.f32.xlu0 %v2879
        %v2881 = vpop.xlane.xlu0 %2880
        %v2882 = vmul.f32 %v2881, %v1418
        %v2883 = vsub.f32 %v2879, %v2882
        %v2884 = vmul.f32 %v2883, %v2883
        %2885 = vadd.xlane.f32.xlu0 %v2884
        %v2886 = vpop.xlane.xlu0 %2885
        %v2887 = vmul.f32 %v2886, %v1418
        %v2888 = vadd.f32 %v2887, 1e-05
        %v2889 = vrsqrt.pop %v2888
        %v2890 = vmul.f32 %v2883, %v2889
        %v2891 = vlaneseq
        %v2892 = vshrl.u32 %v2891, 7
        %v2893 = vsub.s32 0, %v2892
        %v2894 = vrot.slane %v1681, %v2893
        %v2895 = vmul.f32 %v2890, %v2894
        %v2896 = vlaneseq
        %v2897 = vshrl.u32 %v2896, 7
        %v2898 = vsub.s32 1, %v2897
        %v2899 = vrot.slane %v1681, %v2898
        %v2900 = vadd.f32 %v2895, %v2899
        %s2901 = scalar_lea.vmem [#allocation11], 32
        %v2902 = vld [vmem:[%s2901] sm:$0xff]
        %v2903 = vld [vmem:[%s2901 + $0x8] sm:$0xff]
        %v2904 = vpack.c.bf16 %v2900, %v2900
        %s2905 = scalar_lea.vmem [#allocation5], 384
        %v2906 = vld [vmem:[%s2905] sm:$0xff]
        %v2907 = vld [vmem:[%s2905 + $0x8] sm:$0xf]
        %v2908 = vld [vmem:[%s2905 + $0xc] sm:$0xff]
        %v2909 = vld [vmem:[%s2905 + $0x14] sm:$0xf]
        %v2910 = vld [vmem:[%s2905 + $0x18] sm:$0xff]
        %v2911 = vld [vmem:[%s2905 + $0x20] sm:$0xf]
        %v2912 = vld [vmem:[%s2905 + $0x24] sm:$0xff]
        %v2913 = vld [vmem:[%s2905 + $0x2c] sm:$0xf]
        %v2914 = vld [vmem:[%s2905 + $0x30] sm:$0xff]
        %v2915 = vld [vmem:[%s2905 + $0x38] sm:$0xf]
        %v2916 = vld [vmem:[%s2905 + $0x3c] sm:$0xff]
        %v2917 = vld [vmem:[%s2905 + $0x44] sm:$0xf]
        %v2918 = vld [vmem:[%s2905 + $0x48] sm:$0xff]
        %v2919 = vld [vmem:[%s2905 + $0x50] sm:$0xf]
        %v2920 = vld [vmem:[%s2905 + $0x54] sm:$0xff]
        %v2921 = vld [vmem:[%s2905 + $0x5c] sm:$0xf]
        %v2922 = vld [vmem:[%s2905 + $0x60] sm:$0xff]
        %v2923 = vld [vmem:[%s2905 + $0x68] sm:$0xf]
        %v2924 = vld [vmem:[%s2905 + $0x6c] sm:$0xff]
        %v2925 = vld [vmem:[%s2905 + $0x74] sm:$0xf]
        %v2926 = vld [vmem:[%s2905 + $0x78] sm:$0xff]
        %v2927 = vld [vmem:[%s2905 + $0x80] sm:$0xf]
        %v2928 = vld [vmem:[%s2905 + $0x84] sm:$0xff]
        %v2929 = vld [vmem:[%s2905 + $0x8c] sm:$0xf]
        %v2930 = vld [vmem:[%s2905 + $0x90] sm:$0xff]
        %v2931 = vld [vmem:[%s2905 + $0x98] sm:$0xf]
        %v2932 = vld [vmem:[%s2905 + $0x9c] sm:$0xff]
        %v2933 = vld [vmem:[%s2905 + $0xa4] sm:$0xf]
        %v2934 = vld [vmem:[%s2905 + $0xa8] sm:$0xff]
        %v2935 = vld [vmem:[%s2905 + $0xb0] sm:$0xf]
        %v2936 = vld [vmem:[%s2905 + $0xb4] sm:$0xff]
        %v2937 = vld [vmem:[%s2905 + $0xbc] sm:$0xf]
        %v2970 = vunpack.c.l.b16 %v2906
        %v2971 = vunpack.c.h.b16 %v2906
        %v2972 = vunpack.c.l.b16 %v2907
        %v2973 = vunpack.c.l.b16 %v2908
        %v2974 = vunpack.c.h.b16 %v2908
        %v2975 = vunpack.c.l.b16 %v2909
        %v2976 = vunpack.c.l.b16 %v2910
        %v2977 = vunpack.c.h.b16 %v2910
        %v2978 = vunpack.c.l.b16 %v2911
        %v2979 = vunpack.c.l.b16 %v2912
        %v2980 = vunpack.c.h.b16 %v2912
        %v2981 = vunpack.c.l.b16 %v2913
        %v2982 = vunpack.c.l.b16 %v2914
        %v2983 = vunpack.c.h.b16 %v2914
        %v2984 = vunpack.c.l.b16 %v2915
        %v2985 = vunpack.c.l.b16 %v2916
        %v2986 = vunpack.c.h.b16 %v2916
        %v2987 = vunpack.c.l.b16 %v2917
        %v2988 = vunpack.c.l.b16 %v2918
        %v2989 = vunpack.c.h.b16 %v2918
        %v2990 = vunpack.c.l.b16 %v2919
        %v2991 = vunpack.c.l.b16 %v2920
        %v2992 = vunpack.c.h.b16 %v2920
        %v2993 = vunpack.c.l.b16 %v2921
        %v2994 = vunpack.c.l.b16 %v2922
        %v2995 = vunpack.c.h.b16 %v2922
        %v2996 = vunpack.c.l.b16 %v2923
        %v2997 = vunpack.c.l.b16 %v2924
        %v2998 = vunpack.c.h.b16 %v2924
        %v2999 = vunpack.c.l.b16 %v2925
        %v3000 = vunpack.c.l.b16 %v2926
        %v3001 = vunpack.c.h.b16 %v2926
        %v3002 = vunpack.c.l.b16 %v2927
        %v3003 = vunpack.c.l.b16 %v2928
        %v3004 = vunpack.c.h.b16 %v2928
        %v3005 = vunpack.c.l.b16 %v2929
        %v3006 = vunpack.c.l.b16 %v2930
        %v3007 = vunpack.c.h.b16 %v2930
        %v3008 = vunpack.c.l.b16 %v2931
        %v3009 = vunpack.c.l.b16 %v2932
        %v3010 = vunpack.c.h.b16 %v2932
        %v3011 = vunpack.c.l.b16 %v2933
        %v3012 = vunpack.c.l.b16 %v2934
        %v3013 = vunpack.c.h.b16 %v2934
        %v3014 = vunpack.c.l.b16 %v2935
        %v3015 = vunpack.c.l.b16 %v2936
        %v3016 = vunpack.c.h.b16 %v2936
        %v3017 = vunpack.c.l.b16 %v2937
        %v3018 = vpack.c.b16 %v2973, %v2970
        %v3019 = vpack.c.b16 %v2974, %v2971
        %v3020 = vpack.c.b16 %v2975, %v2972
        %v3021 = vpack.c.b16 %v2979, %v2976
        %v3022 = vpack.c.b16 %v2980, %v2977
        %v3023 = vpack.c.b16 %v2981, %v2978
        %v3024 = vpack.c.b16 %v2985, %v2982
        %v3025 = vpack.c.b16 %v2986, %v2983
        %v3026 = vpack.c.b16 %v2987, %v2984
        %v3027 = vpack.c.b16 %v2991, %v2988
        %v3028 = vpack.c.b16 %v2992, %v2989
        %v3029 = vpack.c.b16 %v2993, %v2990
        %v3030 = vpack.c.b16 %v2997, %v2994
        %v3031 = vpack.c.b16 %v2998, %v2995
        %v3032 = vpack.c.b16 %v2999, %v2996
        %v3033 = vpack.c.b16 %v3003, %v3000
        %v3034 = vpack.c.b16 %v3004, %v3001
        %v3035 = vpack.c.b16 %v3005, %v3002
        %v3036 = vpack.c.b16 %v3009, %v3006
        %v3037 = vpack.c.b16 %v3010, %v3007
        %v3038 = vpack.c.b16 %v3011, %v3008
        %v3039 = vpack.c.b16 %v3015, %v3012
        %v3040 = vpack.c.b16 %v3016, %v3013
        %v3041 = vpack.c.b16 %v3017, %v3014
        %3066 = vmatprep.subr.bf16.mxu0 %v3019
        %3067 = vmatpush1.bf16.msra.mxu0 %v3018
        %3068 = vmatprep.subr.bf16.mxu0 %v3022
        %3069 = vmatpush1.bf16.msra.mxu0 %v3021
        %3070 = vmatprep.subr.bf16.mxu0 %v3025
        %3071 = vmatpush1.bf16.msra.mxu0 %v3024
        %3072 = vmatprep.subr.bf16.mxu0 %v3028
        %3073 = vmatpush1.bf16.msra.mxu0 %v3027
        %3074 = vmatprep.subr.bf16.mxu0 %v3031
        %3075 = vmatpush1.bf16.msra.mxu0 %v3030
        %3076 = vmatprep.subr.bf16.mxu0 %v3034
        %3077 = vmatpush1.bf16.msra.mxu0 %v3033
        %3078 = vmatprep.subr.bf16.mxu0 %v3037
        %3079 = vmatpush1.bf16.msra.mxu0 %v3036
        %3080 = vmatprep.subr.bf16.mxu0 %v3040
        %3081 = vmatpush1.bf16.msra.mxu0 %v3039
        %3082 = vmatprep.subr.bf16.mxu0 0
        %3083 = vmatpush1.bf16.msra.mxu0 0
        %3084 = vmatprep.subr.bf16.mxu0 0
        %3085 = vmatpush1.bf16.msra.mxu0 0
        %3086 = vmatprep.subr.bf16.mxu0 0
        %3087 = vmatpush1.bf16.msra.mxu0 0
        %3088 = vmatprep.subr.bf16.mxu0 0
        %3089 = vmatpush1.bf16.msra.mxu0 0
        %3090 = vmatprep.subr.bf16.mxu0 0
        %3091 = vmatpush1.bf16.msra.mxu0 0
        %3092 = vmatprep.subr.bf16.mxu0 0
        %3093 = vmatpush1.bf16.msra.mxu0 0
        %3094 = vmatprep.subr.bf16.mxu0 0
        %3095 = vmatpush1.bf16.msra.mxu0 0
        %3096 = vmatprep.subr.bf16.mxu0 0
        %3097 = vmatpush1.bf16.msra.mxu0 0
        %3098 = vmatprep.mubr.bf16.mxu0 0
        %3099 = vmatmul.mubr.bf16.gmra.mrb[0].mxu0 %v2904
        %v3100 = vpop.f32.mrb[0].mxu0
        %v3101 = vadd.f32 0.0, %v3100
        %v3102 = vpop.f32.mrb[0].mxu0
        %v3103 = vadd.f32 0.0, %v3102
        %v3104 = vpop.f32.mrb[0].mxu0
        %v3105 = vpop.f32.mrb[0].mxu0
        %3106 = vdwg.mxu0
        %3107 = vmatprep.subr.bf16.mxu0 0
        %3108 = vmatpush1.bf16.msra.mxu0 %v3020
        %3109 = vmatprep.subr.bf16.mxu0 0
        %3110 = vmatpush1.bf16.msra.mxu0 %v3023
        %3111 = vmatprep.subr.bf16.mxu0 0
        %3112 = vmatpush1.bf16.msra.mxu0 %v3026
        %3113 = vmatprep.subr.bf16.mxu0 0
        %3114 = vmatpush1.bf16.msra.mxu0 %v3029
        %3115 = vmatprep.subr.bf16.mxu0 0
        %3116 = vmatpush1.bf16.msra.mxu0 %v3032
        %3117 = vmatprep.subr.bf16.mxu0 0
        %3118 = vmatpush1.bf16.msra.mxu0 %v3035
        %3119 = vmatprep.subr.bf16.mxu0 0
        %3120 = vmatpush1.bf16.msra.mxu0 %v3038
        %3121 = vmatprep.subr.bf16.mxu0 0
        %3122 = vmatpush1.bf16.msra.mxu0 %v3041
        %3123 = vmatprep.subr.bf16.mxu0 0
        %3124 = vmatpush1.bf16.msra.mxu0 0
        %3125 = vmatprep.subr.bf16.mxu0 0
        %3126 = vmatpush1.bf16.msra.mxu0 0
        %3127 = vmatprep.subr.bf16.mxu0 0
        %3128 = vmatpush1.bf16.msra.mxu0 0
        %3129 = vmatprep.subr.bf16.mxu0 0
        %3130 = vmatpush1.bf16.msra.mxu0 0
        %3131 = vmatprep.subr.bf16.mxu0 0
        %3132 = vmatpush1.bf16.msra.mxu0 0
        %3133 = vmatprep.subr.bf16.mxu0 0
        %3134 = vmatpush1.bf16.msra.mxu0 0
        %3135 = vmatprep.subr.bf16.mxu0 0
        %3136 = vmatpush1.bf16.msra.mxu0 0
        %3137 = vmatprep.subr.bf16.mxu0 0
        %3138 = vmatpush1.bf16.msra.mxu0 0
        %3139 = vmatprep.mubr.bf16.mxu0 0
        %3140 = vmatmul.mubr.bf16.gmra.mrb[0].mxu0 %v2904
        %v3141 = vpop.f32.mrb[0].mxu0
        %v3142 = vadd.f32 0.0, %v3141
        %v3143 = vpop.f32.mrb[0].mxu0
        %v3144 = vpop.f32.mrb[0].mxu0
        %v3145 = vpop.f32.mrb[0].mxu0
        %3146 = vdwg.mxu0
        %v3147 = vlaneseq
        %v3148 = vshrl.u32 %v3147, 7
        %v3149 = vsub.s32 0, %v3148
        %v3150 = vrot.slane %v2902, %v3149
        %v3151 = vadd.f32 %v3101, %v3150
        %v3152 = vlaneseq
        %v3153 = vshrl.u32 %v3152, 7
        %v3154 = vsub.s32 1, %v3153
        %v3155 = vrot.slane %v2902, %v3154
        %v3156 = vadd.f32 %v3103, %v3155
        %v3157 = vlaneseq
        %v3158 = vshrl.u32 %v3157, 7
        %v3159 = vsub.s32 2, %v3158
        %v3160 = vrot.slane %v2902, %v3159
        %v3161 = vadd.f32 %v3142, %v3160
        %s3162 = scalar_lea.vmem [#allocation7], 128
        %v3163 = vld [vmem:[%s3162] sm:$0xf]
        %v3164 = vld [vmem:[%s3162 + $0x4] sm:$0xf]
        %v3165 = vld [vmem:[%s3162 + $0x8] sm:$0xf]
        %v3166 = vld [vmem:[%s3162 + $0xc] sm:$0xf]
        %v3167 = vld [vmem:[%s3162 + $0x10] sm:$0xf]
        %v3168 = vld [vmem:[%s3162 + $0x14] sm:$0xf]
        %v3169 = vld [vmem:[%s3162 + $0x18] sm:$0xf]
        %v3170 = vld [vmem:[%s3162 + $0x1c] sm:$0xf]
        %v3171 = vld [vmem:[%s3162 + $0x20] sm:$0xf]
        %v3172 = vld [vmem:[%s3162 + $0x24] sm:$0xf]
        %v3173 = vld [vmem:[%s3162 + $0x28] sm:$0xf]
        %v3174 = vld [vmem:[%s3162 + $0x2c] sm:$0xf]
        %v3175 = vld [vmem:[%s3162 + $0x30] sm:$0xf]
        %v3176 = vld [vmem:[%s3162 + $0x34] sm:$0xf]
        %v3177 = vld [vmem:[%s3162 + $0x38] sm:$0xf]
        %v3178 = vld [vmem:[%s3162 + $0x3c] sm:$0xf]
        %v3179 = vpack.c.bf16 %v3151, %v3151
        %v3180 = vpack.c.bf16 %v3156, %v3156
        %v3181 = vpack.c.bf16 %v3161, %v3161
        %v3183 = vsel %vm730, %v3179, 0
        %v3186 = vsel %vm730, %v3180, 0
        %3188 = vmatprep.subr.bf16.mxu0 0
        %3189 = vmatpush1.bf16.xpose.msra.mxu0 %v3186
        %3190 = vmatprep.subr.bf16.mxu0 0
        %3191 = vmatpush1.bf16.xpose.msra.mxu0 0
        %3192 = vmatprep.subr.bf16.mxu0 0
        %3193 = vmatpush1.bf16.xpose.msra.mxu0 0
        %3194 = vmatprep.subr.bf16.mxu0 0
        %3195 = vmatpush1.bf16.xpose.msra.mxu0 0
        %3196 = vmatprep.subr.bf16.mxu0 0
        %3197 = vmatpush1.bf16.xpose.msra.mxu0 0
        %3198 = vmatprep.subr.bf16.mxu0 0
        %3199 = vmatpush1.bf16.xpose.msra.mxu0 0
        %3200 = vmatprep.subr.bf16.mxu0 0
        %3201 = vmatpush1.bf16.xpose.msra.mxu0 0
        %3202 = vmatprep.subr.bf16.mxu0 0
        %3203 = vmatpush1.bf16.xpose.msra.mxu0 0
        %3204 = vmatprep.subr.bf16.mxu0 0
        %3205 = vmatpush1.bf16.xpose.msra.mxu0 0
        %3206 = vmatprep.subr.bf16.mxu0 0
        %3207 = vmatpush1.bf16.xpose.msra.mxu0 0
        %3208 = vmatprep.subr.bf16.mxu0 0
        %3209 = vmatpush1.bf16.xpose.msra.mxu0 0
        %3210 = vmatprep.subr.bf16.mxu0 0
        %3211 = vmatpush1.bf16.xpose.msra.mxu0 0
        %3212 = vmatprep.subr.bf16.mxu0 0
        %3213 = vmatpush1.bf16.xpose.msra.mxu0 0
        %3214 = vmatprep.subr.bf16.mxu0 0
        %3215 = vmatpush1.bf16.xpose.msra.mxu0 0
        %3216 = vmatprep.subr.bf16.mxu0 0
        %3217 = vmatpush1.bf16.xpose.msra.mxu0 0
        %3218 = vmatprep.subr.bf16.mxu0 0
        %3219 = vmatpush1.bf16.xpose.msra.mxu0 0
        %3220 = vmatprep.mubr.bf16.mxu0 0
        %3221 = vmatmul.mubr.bf16.gmra.mrb[0].mxu0 %v3183
        %v3222 = vpop.f32.mrb[0].mxu0
        %v3223 = vadd.f32 0.0, %v3222
        %v3224 = vpop.f32.mrb[0].mxu0
        %v3225 = vpop.f32.mrb[0].mxu0
        %v3226 = vpop.f32.mrb[0].mxu0
        %3227 = vdwg.mxu0
        %v3228 = vmul.f32 %v3223, 0.17677669
        %v3229 = vadd.f32 %v3228, %v782
        %v3230 = vsel %vm785, %v3229, -inf
        %3231 = vmax.xlane.f32.xlu0 %v3230
        %v3232 = vpop.xlane.xlu0 %3231
        %v3233 = vsub.f32 %v3229, %v3232
        %v3234 = vmul.f32 %v3233, 1.442695
        %v3235 = vpow.pop %v3234
        %v3236 = vsel %vm785, %v3235, 0.0
        %3237 = vadd.xlane.f32.xlu0 %v3236
        %v3238 = vpop.xlane.xlu0 %3237
        %v3239 = vrcp.pop %v3238
        %v3240 = vmul.f32 %v3235, %v3239
        %v3241 = vpack.c.bf16 %v3240, %v3240
        %v3243 = vsel %vm785, %v3241, 0
        %v3246 = vsel %vm801, %v3181, 0
        %3248 = vmatprep.subr.bf16.mxu0 0
        %3249 = vmatpush1.bf16.msra.mxu0 %v3246
        %3250 = vmatprep.subr.bf16.mxu0 0
        %3251 = vmatpush1.bf16.msra.mxu0 0
        %3252 = vmatprep.subr.bf16.mxu0 0
        %3253 = vmatpush1.bf16.msra.mxu0 0
        %3254 = vmatprep.subr.bf16.mxu0 0
        %3255 = vmatpush1.bf16.msra.mxu0 0
        %3256 = vmatprep.subr.bf16.mxu0 0
        %3257 = vmatpush1.bf16.msra.mxu0 0
        %3258 = vmatprep.subr.bf16.mxu0 0
        %3259 = vmatpush1.bf16.msra.mxu0 0
        %3260 = vmatprep.subr.bf16.mxu0 0
        %3261 = vmatpush1.bf16.msra.mxu0 0
        %3262 = vmatprep.subr.bf16.mxu0 0
        %3263 = vmatpush1.bf16.msra.mxu0 0
        %3264 = vmatprep.subr.bf16.mxu0 0
        %3265 = vmatpush1.bf16.msra.mxu0 0
        %3266 = vmatprep.subr.bf16.mxu0 0
        %3267 = vmatpush1.bf16.msra.mxu0 0
        %3268 = vmatprep.subr.bf16.mxu0 0
        %3269 = vmatpush1.bf16.msra.mxu0 0
        %3270 = vmatprep.subr.bf16.mxu0 0
        %3271 = vmatpush1.bf16.msra.mxu0 0
        %3272 = vmatprep.subr.bf16.mxu0 0
        %3273 = vmatpush1.bf16.msra.mxu0 0
        %3274 = vmatprep.subr.bf16.mxu0 0
        %3275 = vmatpush1.bf16.msra.mxu0 0
        %3276 = vmatprep.subr.bf16.mxu0 0
        %3277 = vmatpush1.bf16.msra.mxu0 0
        %3278 = vmatprep.subr.bf16.mxu0 0
        %3279 = vmatpush1.bf16.msra.mxu0 0
        %3280 = vmatprep.mubr.bf16.mxu0 0
        %3281 = vmatmul.mubr.bf16.gmra.mrb[0].mxu0 %v3243
        %v3282 = vpop.f32.mrb[0].mxu0
        %v3283 = vadd.f32 0.0, %v3282
        %v3284 = vpop.f32.mrb[0].mxu0
        %v3285 = vpop.f32.mrb[0].mxu0
        %v3286 = vpop.f32.mrb[0].mxu0
        %3287 = vdwg.mxu0
        %v3288 = vpack.c.bf16 %v3283, %v3283
        %3290 = vrot.lane.b32.xlu0 %v3179, 96
        %v3291 = vpop.permute.xlu0 %3290
        %3293 = vrot.lane.b32.xlu0 %v3180, 96
        %v3294 = vpop.permute.xlu0 %3293
        %v3296 = vsel %vm730, %v3291, 0
        %v3299 = vsel %vm730, %v3294, 0
        %3301 = vmatprep.subr.bf16.mxu0 0
        %3302 = vmatpush1.bf16.xpose.msra.mxu0 %v3299
        %3303 = vmatprep.subr.bf16.mxu0 0
        %3304 = vmatpush1.bf16.xpose.msra.mxu0 0
        %3305 = vmatprep.subr.bf16.mxu0 0
        %3306 = vmatpush1.bf16.xpose.msra.mxu0 0
        %3307 = vmatprep.subr.bf16.mxu0 0
        %3308 = vmatpush1.bf16.xpose.msra.mxu0 0
        %3309 = vmatprep.subr.bf16.mxu0 0
        %3310 = vmatpush1.bf16.xpose.msra.mxu0 0
        %3311 = vmatprep.subr.bf16.mxu0 0
        %3312 = vmatpush1.bf16.xpose.msra.mxu0 0
        %3313 = vmatprep.subr.bf16.mxu0 0
        %3314 = vmatpush1.bf16.xpose.msra.mxu0 0
        %3315 = vmatprep.subr.bf16.mxu0 0
        %3316 = vmatpush1.bf16.xpose.msra.mxu0 0
        %3317 = vmatprep.subr.bf16.mxu0 0
        %3318 = vmatpush1.bf16.xpose.msra.mxu0 0
        %3319 = vmatprep.subr.bf16.mxu0 0
        %3320 = vmatpush1.bf16.xpose.msra.mxu0 0
        %3321 = vmatprep.subr.bf16.mxu0 0
        %3322 = vmatpush1.bf16.xpose.msra.mxu0 0
        %3323 = vmatprep.subr.bf16.mxu0 0
        %3324 = vmatpush1.bf16.xpose.msra.mxu0 0
        %3325 = vmatprep.subr.bf16.mxu0 0
        %3326 = vmatpush1.bf16.xpose.msra.mxu0 0
        %3327 = vmatprep.subr.bf16.mxu0 0
        %3328 = vmatpush1.bf16.xpose.msra.mxu0 0
        %3329 = vmatprep.subr.bf16.mxu0 0
        %3330 = vmatpush1.bf16.xpose.msra.mxu0 0
        %3331 = vmatprep.subr.bf16.mxu0 0
        %3332 = vmatpush1.bf16.xpose.msra.mxu0 0
        %3333 = vmatprep.mubr.bf16.mxu0 0
        %3334 = vmatmul.mubr.bf16.gmra.mrb[0].mxu0 %v3296
        %v3335 = vpop.f32.mrb[0].mxu0
        %v3336 = vadd.f32 0.0, %v3335
        %v3337 = vpop.f32.mrb[0].mxu0
        %v3338 = vpop.f32.mrb[0].mxu0
        %v3339 = vpop.f32.mrb[0].mxu0
        %3340 = vdwg.mxu0
        %v3341 = vmul.f32 %v3336, 0.17677669
        %v3342 = vadd.f32 %v3341, %v782
        %v3343 = vsel %vm785, %v3342, -inf
        %3344 = vmax.xlane.f32.xlu0 %v3343
        %v3345 = vpop.xlane.xlu0 %3344
        %v3346 = vsub.f32 %v3342, %v3345
        %v3347 = vmul.f32 %v3346, 1.442695
        %v3348 = vpow.pop %v3347
        %v3349 = vsel %vm785, %v3348, 0.0
        %3350 = vadd.xlane.f32.xlu0 %v3349
        %v3351 = vpop.xlane.xlu0 %3350
        %v3352 = vrcp.pop %v3351
        %v3353 = vmul.f32 %v3348, %v3352
        %v3354 = vpack.c.bf16 %v3353, %v3353
        %3356 = vrot.lane.b32.xlu0 %v3181, 96
        %v3357 = vpop.permute.xlu0 %3356
        %v3359 = vsel %vm785, %v3354, 0
        %v3362 = vsel %vm801, %v3357, 0
        %3364 = vmatprep.subr.bf16.mxu0 0
        %3365 = vmatpush1.bf16.msra.mxu0 %v3362
        %3366 = vmatprep.subr.bf16.mxu0 0
        %3367 = vmatpush1.bf16.msra.mxu0 0
        %3368 = vmatprep.subr.bf16.mxu0 0
        %3369 = vmatpush1.bf16.msra.mxu0 0
        %3370 = vmatprep.subr.bf16.mxu0 0
        %3371 = vmatpush1.bf16.msra.mxu0 0
        %3372 = vmatprep.subr.bf16.mxu0 0
        %3373 = vmatpush1.bf16.msra.mxu0 0
        %3374 = vmatprep.subr.bf16.mxu0 0
        %3375 = vmatpush1.bf16.msra.mxu0 0
        %3376 = vmatprep.subr.bf16.mxu0 0
        %3377 = vmatpush1.bf16.msra.mxu0 0
        %3378 = vmatprep.subr.bf16.mxu0 0
        %3379 = vmatpush1.bf16.msra.mxu0 0
        %3380 = vmatprep.subr.bf16.mxu0 0
        %3381 = vmatpush1.bf16.msra.mxu0 0
        %3382 = vmatprep.subr.bf16.mxu0 0
        %3383 = vmatpush1.bf16.msra.mxu0 0
        %3384 = vmatprep.subr.bf16.mxu0 0
        %3385 = vmatpush1.bf16.msra.mxu0 0
        %3386 = vmatprep.subr.bf16.mxu0 0
        %3387 = vmatpush1.bf16.msra.mxu0 0
        %3388 = vmatprep.subr.bf16.mxu0 0
        %3389 = vmatpush1.bf16.msra.mxu0 0
        %3390 = vmatprep.subr.bf16.mxu0 0
        %3391 = vmatpush1.bf16.msra.mxu0 0
        %3392 = vmatprep.subr.bf16.mxu0 0
        %3393 = vmatpush1.bf16.msra.mxu0 0
        %3394 = vmatprep.subr.bf16.mxu0 0
        %3395 = vmatpush1.bf16.msra.mxu0 0
        %3396 = vmatprep.mubr.bf16.mxu0 0
        %3397 = vmatmul.mubr.bf16.gmra.mrb[0].mxu0 %v3359
        %v3398 = vpop.f32.mrb[0].mxu0
        %v3399 = vadd.f32 0.0, %v3398
        %v3400 = vpop.f32.mrb[0].mxu0
        %v3401 = vpop.f32.mrb[0].mxu0
        %v3402 = vpop.f32.mrb[0].mxu0
        %3403 = vdwg.mxu0
        %v3404 = vpack.c.bf16 %v3399, %v3399
        %v3409 = vunpack.c.l.b16 %v3167
        %v3410 = vunpack.c.l.b16 %v3168
        %v3411 = vunpack.c.l.b16 %v3169
        %v3412 = vunpack.c.l.b16 %v3170
        %v3413 = vpack.c.b16 %v3410, %v3409
        %v3414 = vpack.c.b16 %v3412, %v3411
        %v3418 = vsel %vm730, %v3404, 0
        %3420 = vmatprep.subr.bf16.mxu0 0
        %3421 = vmatpush1.bf16.msra.mxu0 %v3413
        %3422 = vmatprep.subr.bf16.mxu0 0
        %3423 = vmatpush1.bf16.msra.mxu0 %v3414
        %3424 = vmatprep.subr.bf16.mxu0 0
        %3425 = vmatpush1.bf16.msra.mxu0 0
        %3426 = vmatprep.subr.bf16.mxu0 0
        %3427 = vmatpush1.bf16.msra.mxu0 0
        %3428 = vmatprep.subr.bf16.mxu0 0
        %3429 = vmatpush1.bf16.msra.mxu0 0
        %3430 = vmatprep.subr.bf16.mxu0 0
        %3431 = vmatpush1.bf16.msra.mxu0 0
        %3432 = vmatprep.subr.bf16.mxu0 0
        %3433 = vmatpush1.bf16.msra.mxu0 0
        %3434 = vmatprep.subr.bf16.mxu0 0
        %3435 = vmatpush1.bf16.msra.mxu0 0
        %3436 = vmatprep.subr.bf16.mxu0 0
        %3437 = vmatpush1.bf16.msra.mxu0 0
        %3438 = vmatprep.subr.bf16.mxu0 0
        %3439 = vmatpush1.bf16.msra.mxu0 0
        %3440 = vmatprep.subr.bf16.mxu0 0
        %3441 = vmatpush1.bf16.msra.mxu0 0
        %3442 = vmatprep.subr.bf16.mxu0 0
        %3443 = vmatpush1.bf16.msra.mxu0 0
        %3444 = vmatprep.subr.bf16.mxu0 0
        %3445 = vmatpush1.bf16.msra.mxu0 0
        %3446 = vmatprep.subr.bf16.mxu0 0
        %3447 = vmatpush1.bf16.msra.mxu0 0
        %3448 = vmatprep.subr.bf16.mxu0 0
        %3449 = vmatpush1.bf16.msra.mxu0 0
        %3450 = vmatprep.subr.bf16.mxu0 0
        %3451 = vmatpush1.bf16.msra.mxu0 0
        %3452 = vmatprep.mubr.bf16.mxu0 0
        %3453 = vmatmul.mubr.bf16.gmra.mrb[0].mxu0 %v3418
        %v3454 = vpop.f32.mrb[0].mxu0
        %v3455 = vadd.f32 0.0, %v3454
        %v3456 = vpop.f32.mrb[0].mxu0
        %v3457 = vpop.f32.mrb[0].mxu0
        %v3458 = vpop.f32.mrb[0].mxu0
        %3459 = vdwg.mxu0
        %v3464 = vunpack.c.l.b16 %v3163
        %v3465 = vunpack.c.l.b16 %v3164
        %v3466 = vunpack.c.l.b16 %v3165
        %v3467 = vunpack.c.l.b16 %v3166
        %v3468 = vpack.c.b16 %v3465, %v3464
        %v3469 = vpack.c.b16 %v3467, %v3466
        %v3473 = vsel %vm730, %v3288, 0
        %3475 = vmatprep.subr.bf16.mxu0 0
        %3476 = vmatpush1.bf16.msra.mxu0 %v3468
        %3477 = vmatprep.subr.bf16.mxu0 0
        %3478 = vmatpush1.bf16.msra.mxu0 %v3469
        %3479 = vmatprep.subr.bf16.mxu0 0
        %3480 = vmatpush1.bf16.msra.mxu0 0
        %3481 = vmatprep.subr.bf16.mxu0 0
        %3482 = vmatpush1.bf16.msra.mxu0 0
        %3483 = vmatprep.subr.bf16.mxu0 0
        %3484 = vmatpush1.bf16.msra.mxu0 0
        %3485 = vmatprep.subr.bf16.mxu0 0
        %3486 = vmatpush1.bf16.msra.mxu0 0
        %3487 = vmatprep.subr.bf16.mxu0 0
        %3488 = vmatpush1.bf16.msra.mxu0 0
        %3489 = vmatprep.subr.bf16.mxu0 0
        %3490 = vmatpush1.bf16.msra.mxu0 0
        %3491 = vmatprep.subr.bf16.mxu0 0
        %3492 = vmatpush1.bf16.msra.mxu0 0
        %3493 = vmatprep.subr.bf16.mxu0 0
        %3494 = vmatpush1.bf16.msra.mxu0 0
        %3495 = vmatprep.subr.bf16.mxu0 0
        %3496 = vmatpush1.bf16.msra.mxu0 0
        %3497 = vmatprep.subr.bf16.mxu0 0
        %3498 = vmatpush1.bf16.msra.mxu0 0
        %3499 = vmatprep.subr.bf16.mxu0 0
        %3500 = vmatpush1.bf16.msra.mxu0 0
        %3501 = vmatprep.subr.bf16.mxu0 0
        %3502 = vmatpush1.bf16.msra.mxu0 0
        %3503 = vmatprep.subr.bf16.mxu0 0
        %3504 = vmatpush1.bf16.msra.mxu0 0
        %3505 = vmatprep.subr.bf16.mxu0 0
        %3506 = vmatpush1.bf16.msra.mxu0 0
        %3507 = vmatprep.mubr.bf16.mxu0 0
        %3508 = vmatmul.mubr.bf16.gmra.mrb[0].mxu0 %v3473
        %v3509 = vpop.f32.mrb[0].mxu0
        %v3510 = vadd.f32 %v3455, %v3509
        %v3511 = vpop.f32.mrb[0].mxu0
        %v3512 = vpop.f32.mrb[0].mxu0
        %v3513 = vpop.f32.mrb[0].mxu0
        %3514 = vdwg.mxu0
        %3515 = vrot.lane.b32.xlu0 %v3179, 64
        %v3516 = vpop.permute.xlu0 %3515
        %3517 = vrot.lane.b32.xlu0 %v3180, 64
        %v3518 = vpop.permute.xlu0 %3517
        %v3520 = vsel %vm730, %v3516, 0
        %v3523 = vsel %vm730, %v3518, 0
        %3525 = vmatprep.subr.bf16.mxu0 0
        %3526 = vmatpush1.bf16.xpose.msra.mxu0 %v3523
        %3527 = vmatprep.subr.bf16.mxu0 0
        %3528 = vmatpush1.bf16.xpose.msra.mxu0 0
        %3529 = vmatprep.subr.bf16.mxu0 0
        %3530 = vmatpush1.bf16.xpose.msra.mxu0 0
        %3531 = vmatprep.subr.bf16.mxu0 0
        %3532 = vmatpush1.bf16.xpose.msra.mxu0 0
        %3533 = vmatprep.subr.bf16.mxu0 0
        %3534 = vmatpush1.bf16.xpose.msra.mxu0 0
        %3535 = vmatprep.subr.bf16.mxu0 0
        %3536 = vmatpush1.bf16.xpose.msra.mxu0 0
        %3537 = vmatprep.subr.bf16.mxu0 0
        %3538 = vmatpush1.bf16.xpose.msra.mxu0 0
        %3539 = vmatprep.subr.bf16.mxu0 0
        %3540 = vmatpush1.bf16.xpose.msra.mxu0 0
        %3541 = vmatprep.subr.bf16.mxu0 0
        %3542 = vmatpush1.bf16.xpose.msra.mxu0 0
        %3543 = vmatprep.subr.bf16.mxu0 0
        %3544 = vmatpush1.bf16.xpose.msra.mxu0 0
        %3545 = vmatprep.subr.bf16.mxu0 0
        %3546 = vmatpush1.bf16.xpose.msra.mxu0 0
        %3547 = vmatprep.subr.bf16.mxu0 0
        %3548 = vmatpush1.bf16.xpose.msra.mxu0 0
        %3549 = vmatprep.subr.bf16.mxu0 0
        %3550 = vmatpush1.bf16.xpose.msra.mxu0 0
        %3551 = vmatprep.subr.bf16.mxu0 0
        %3552 = vmatpush1.bf16.xpose.msra.mxu0 0
        %3553 = vmatprep.subr.bf16.mxu0 0
        %3554 = vmatpush1.bf16.xpose.msra.mxu0 0
        %3555 = vmatprep.subr.bf16.mxu0 0
        %3556 = vmatpush1.bf16.xpose.msra.mxu0 0
        %3557 = vmatprep.mubr.bf16.mxu0 0
        %3558 = vmatmul.mubr.bf16.gmra.mrb[0].mxu0 %v3520
        %v3559 = vpop.f32.mrb[0].mxu0
        %v3560 = vadd.f32 0.0, %v3559
        %v3561 = vpop.f32.mrb[0].mxu0
        %v3562 = vpop.f32.mrb[0].mxu0
        %v3563 = vpop.f32.mrb[0].mxu0
        %3564 = vdwg.mxu0
        %v3565 = vmul.f32 %v3560, 0.17677669
        %v3566 = vadd.f32 %v3565, %v782
        %v3567 = vsel %vm785, %v3566, -inf
        %3568 = vmax.xlane.f32.xlu0 %v3567
        %v3569 = vpop.xlane.xlu0 %3568
        %v3570 = vsub.f32 %v3566, %v3569
        %v3571 = vmul.f32 %v3570, 1.442695
        %v3572 = vpow.pop %v3571
        %v3573 = vsel %vm785, %v3572, 0.0
        %3574 = vadd.xlane.f32.xlu0 %v3573
        %v3575 = vpop.xlane.xlu0 %3574
        %v3576 = vrcp.pop %v3575
        %v3577 = vmul.f32 %v3572, %v3576
        %v3578 = vpack.c.bf16 %v3577, %v3577
        %3579 = vrot.lane.b32.xlu0 %v3181, 64
        %v3580 = vpop.permute.xlu0 %3579
        %v3582 = vsel %vm785, %v3578, 0
        %v3585 = vsel %vm801, %v3580, 0
        %3587 = vmatprep.subr.bf16.mxu0 0
        %3588 = vmatpush1.bf16.msra.mxu0 %v3585
        %3589 = vmatprep.subr.bf16.mxu0 0
        %3590 = vmatpush1.bf16.msra.mxu0 0
        %3591 = vmatprep.subr.bf16.mxu0 0
        %3592 = vmatpush1.bf16.msra.mxu0 0
        %3593 = vmatprep.subr.bf16.mxu0 0
        %3594 = vmatpush1.bf16.msra.mxu0 0
        %3595 = vmatprep.subr.bf16.mxu0 0
        %3596 = vmatpush1.bf16.msra.mxu0 0
        %3597 = vmatprep.subr.bf16.mxu0 0
        %3598 = vmatpush1.bf16.msra.mxu0 0
        %3599 = vmatprep.subr.bf16.mxu0 0
        %3600 = vmatpush1.bf16.msra.mxu0 0
        %3601 = vmatprep.subr.bf16.mxu0 0
        %3602 = vmatpush1.bf16.msra.mxu0 0
        %3603 = vmatprep.subr.bf16.mxu0 0
        %3604 = vmatpush1.bf16.msra.mxu0 0
        %3605 = vmatprep.subr.bf16.mxu0 0
        %3606 = vmatpush1.bf16.msra.mxu0 0
        %3607 = vmatprep.subr.bf16.mxu0 0
        %3608 = vmatpush1.bf16.msra.mxu0 0
        %3609 = vmatprep.subr.bf16.mxu0 0
        %3610 = vmatpush1.bf16.msra.mxu0 0
        %3611 = vmatprep.subr.bf16.mxu0 0
        %3612 = vmatpush1.bf16.msra.mxu0 0
        %3613 = vmatprep.subr.bf16.mxu0 0
        %3614 = vmatpush1.bf16.msra.mxu0 0
        %3615 = vmatprep.subr.bf16.mxu0 0
        %3616 = vmatpush1.bf16.msra.mxu0 0
        %3617 = vmatprep.subr.bf16.mxu0 0
        %3618 = vmatpush1.bf16.msra.mxu0 0
        %3619 = vmatprep.mubr.bf16.mxu0 0
        %3620 = vmatmul.mubr.bf16.gmra.mrb[0].mxu0 %v3582
        %v3621 = vpop.f32.mrb[0].mxu0
        %v3622 = vadd.f32 0.0, %v3621
        %v3623 = vpop.f32.mrb[0].mxu0
        %v3624 = vpop.f32.mrb[0].mxu0
        %v3625 = vpop.f32.mrb[0].mxu0
        %3626 = vdwg.mxu0
        %v3627 = vpack.c.bf16 %v3622, %v3622
        %v3632 = vunpack.c.l.b16 %v3171
        %v3633 = vunpack.c.l.b16 %v3172
        %v3634 = vunpack.c.l.b16 %v3173
        %v3635 = vunpack.c.l.b16 %v3174
        %v3636 = vpack.c.b16 %v3633, %v3632
        %v3637 = vpack.c.b16 %v3635, %v3634
        %v3641 = vsel %vm730, %v3627, 0
        %3643 = vmatprep.subr.bf16.mxu0 0
        %3644 = vmatpush1.bf16.msra.mxu0 %v3636
        %3645 = vmatprep.subr.bf16.mxu0 0
        %3646 = vmatpush1.bf16.msra.mxu0 %v3637
        %3647 = vmatprep.subr.bf16.mxu0 0
        %3648 = vmatpush1.bf16.msra.mxu0 0
        %3649 = vmatprep.subr.bf16.mxu0 0
        %3650 = vmatpush1.bf16.msra.mxu0 0
        %3651 = vmatprep.subr.bf16.mxu0 0
        %3652 = vmatpush1.bf16.msra.mxu0 0
        %3653 = vmatprep.subr.bf16.mxu0 0
        %3654 = vmatpush1.bf16.msra.mxu0 0
        %3655 = vmatprep.subr.bf16.mxu0 0
        %3656 = vmatpush1.bf16.msra.mxu0 0
        %3657 = vmatprep.subr.bf16.mxu0 0
        %3658 = vmatpush1.bf16.msra.mxu0 0
        %3659 = vmatprep.subr.bf16.mxu0 0
        %3660 = vmatpush1.bf16.msra.mxu0 0
        %3661 = vmatprep.subr.bf16.mxu0 0
        %3662 = vmatpush1.bf16.msra.mxu0 0
        %3663 = vmatprep.subr.bf16.mxu0 0
        %3664 = vmatpush1.bf16.msra.mxu0 0
        %3665 = vmatprep.subr.bf16.mxu0 0
        %3666 = vmatpush1.bf16.msra.mxu0 0
        %3667 = vmatprep.subr.bf16.mxu0 0
        %3668 = vmatpush1.bf16.msra.mxu0 0
        %3669 = vmatprep.subr.bf16.mxu0 0
        %3670 = vmatpush1.bf16.msra.mxu0 0
        %3671 = vmatprep.subr.bf16.mxu0 0
        %3672 = vmatpush1.bf16.msra.mxu0 0
        %3673 = vmatprep.subr.bf16.mxu0 0
        %3674 = vmatpush1.bf16.msra.mxu0 0
        %3675 = vmatprep.mubr.bf16.mxu0 0
        %3676 = vmatmul.mubr.bf16.gmra.mrb[0].mxu0 %v3641
        %v3677 = vpop.f32.mrb[0].mxu0
        %v3678 = vadd.f32 0.0, %v3677
        %v3679 = vpop.f32.mrb[0].mxu0
        %v3680 = vpop.f32.mrb[0].mxu0
        %v3681 = vpop.f32.mrb[0].mxu0
        %3682 = vdwg.mxu0
        %v3683 = vadd.f32 %v3510, %v3678
        %3684 = vrot.lane.b32.xlu0 %v3179, 32
        %v3685 = vpop.permute.xlu0 %3684
        %3686 = vrot.lane.b32.xlu0 %v3180, 32
        %v3687 = vpop.permute.xlu0 %3686
        %v3689 = vsel %vm730, %v3685, 0
        %v3692 = vsel %vm730, %v3687, 0
        %3694 = vmatprep.subr.bf16.mxu0 0
        %3695 = vmatpush1.bf16.xpose.msra.mxu0 %v3692
        %3696 = vmatprep.subr.bf16.mxu0 0
        %3697 = vmatpush1.bf16.xpose.msra.mxu0 0
        %3698 = vmatprep.subr.bf16.mxu0 0
        %3699 = vmatpush1.bf16.xpose.msra.mxu0 0
        %3700 = vmatprep.subr.bf16.mxu0 0
        %3701 = vmatpush1.bf16.xpose.msra.mxu0 0
        %3702 = vmatprep.subr.bf16.mxu0 0
        %3703 = vmatpush1.bf16.xpose.msra.mxu0 0
        %3704 = vmatprep.subr.bf16.mxu0 0
        %3705 = vmatpush1.bf16.xpose.msra.mxu0 0
        %3706 = vmatprep.subr.bf16.mxu0 0
        %3707 = vmatpush1.bf16.xpose.msra.mxu0 0
        %3708 = vmatprep.subr.bf16.mxu0 0
        %3709 = vmatpush1.bf16.xpose.msra.mxu0 0
        %3710 = vmatprep.subr.bf16.mxu0 0
        %3711 = vmatpush1.bf16.xpose.msra.mxu0 0
        %3712 = vmatprep.subr.bf16.mxu0 0
        %3713 = vmatpush1.bf16.xpose.msra.mxu0 0
        %3714 = vmatprep.subr.bf16.mxu0 0
        %3715 = vmatpush1.bf16.xpose.msra.mxu0 0
        %3716 = vmatprep.subr.bf16.mxu0 0
        %3717 = vmatpush1.bf16.xpose.msra.mxu0 0
        %3718 = vmatprep.subr.bf16.mxu0 0
        %3719 = vmatpush1.bf16.xpose.msra.mxu0 0
        %3720 = vmatprep.subr.bf16.mxu0 0
        %3721 = vmatpush1.bf16.xpose.msra.mxu0 0
        %3722 = vmatprep.subr.bf16.mxu0 0
        %3723 = vmatpush1.bf16.xpose.msra.mxu0 0
        %3724 = vmatprep.subr.bf16.mxu0 0
        %3725 = vmatpush1.bf16.xpose.msra.mxu0 0
        %3726 = vmatprep.mubr.bf16.mxu0 0
        %3727 = vmatmul.mubr.bf16.gmra.mrb[0].mxu0 %v3689
        %v3728 = vpop.f32.mrb[0].mxu0
        %v3729 = vadd.f32 0.0, %v3728
        %v3730 = vpop.f32.mrb[0].mxu0
        %v3731 = vpop.f32.mrb[0].mxu0
        %v3732 = vpop.f32.mrb[0].mxu0
        %3733 = vdwg.mxu0
        %v3734 = vmul.f32 %v3729, 0.17677669
        %v3735 = vadd.f32 %v3734, %v782
        %v3736 = vsel %vm785, %v3735, -inf
        %3737 = vmax.xlane.f32.xlu0 %v3736
        %v3738 = vpop.xlane.xlu0 %3737
        %v3739 = vsub.f32 %v3735, %v3738
        %v3740 = vmul.f32 %v3739, 1.442695
        %v3741 = vpow.pop %v3740
        %v3742 = vsel %vm785, %v3741, 0.0
        %3743 = vadd.xlane.f32.xlu0 %v3742
        %v3744 = vpop.xlane.xlu0 %3743
        %v3745 = vrcp.pop %v3744
        %v3746 = vmul.f32 %v3741, %v3745
        %v3747 = vpack.c.bf16 %v3746, %v3746
        %3748 = vrot.lane.b32.xlu0 %v3181, 32
        %v3749 = vpop.permute.xlu0 %3748
        %v3751 = vsel %vm785, %v3747, 0
        %v3754 = vsel %vm801, %v3749, 0
        %3756 = vmatprep.subr.bf16.mxu0 0
        %3757 = vmatpush1.bf16.msra.mxu0 %v3754
        %3758 = vmatprep.subr.bf16.mxu0 0
        %3759 = vmatpush1.bf16.msra.mxu0 0
        %3760 = vmatprep.subr.bf16.mxu0 0
        %3761 = vmatpush1.bf16.msra.mxu0 0
        %3762 = vmatprep.subr.bf16.mxu0 0
        %3763 = vmatpush1.bf16.msra.mxu0 0
        %3764 = vmatprep.subr.bf16.mxu0 0
        %3765 = vmatpush1.bf16.msra.mxu0 0
        %3766 = vmatprep.subr.bf16.mxu0 0
        %3767 = vmatpush1.bf16.msra.mxu0 0
        %3768 = vmatprep.subr.bf16.mxu0 0
        %3769 = vmatpush1.bf16.msra.mxu0 0
        %3770 = vmatprep.subr.bf16.mxu0 0
        %3771 = vmatpush1.bf16.msra.mxu0 0
        %3772 = vmatprep.subr.bf16.mxu0 0
        %3773 = vmatpush1.bf16.msra.mxu0 0
        %3774 = vmatprep.subr.bf16.mxu0 0
        %3775 = vmatpush1.bf16.msra.mxu0 0
        %3776 = vmatprep.subr.bf16.mxu0 0
        %3777 = vmatpush1.bf16.msra.mxu0 0
        %3778 = vmatprep.subr.bf16.mxu0 0
        %3779 = vmatpush1.bf16.msra.mxu0 0
        %3780 = vmatprep.subr.bf16.mxu0 0
        %3781 = vmatpush1.bf16.msra.mxu0 0
        %3782 = vmatprep.subr.bf16.mxu0 0
        %3783 = vmatpush1.bf16.msra.mxu0 0
        %3784 = vmatprep.subr.bf16.mxu0 0
        %3785 = vmatpush1.bf16.msra.mxu0 0
        %3786 = vmatprep.subr.bf16.mxu0 0
        %3787 = vmatpush1.bf16.msra.mxu0 0
        %3788 = vmatprep.mubr.bf16.mxu0 0
        %3789 = vmatmul.mubr.bf16.gmra.mrb[0].mxu0 %v3751
        %v3790 = vpop.f32.mrb[0].mxu0
        %v3791 = vadd.f32 0.0, %v3790
        %v3792 = vpop.f32.mrb[0].mxu0
        %v3793 = vpop.f32.mrb[0].mxu0
        %v3794 = vpop.f32.mrb[0].mxu0
        %3795 = vdwg.mxu0
        %v3796 = vpack.c.bf16 %v3791, %v3791
        %v3801 = vunpack.c.l.b16 %v3175
        %v3802 = vunpack.c.l.b16 %v3176
        %v3803 = vunpack.c.l.b16 %v3177
        %v3804 = vunpack.c.l.b16 %v3178
        %v3805 = vpack.c.b16 %v3802, %v3801
        %v3806 = vpack.c.b16 %v3804, %v3803
        %v3810 = vsel %vm730, %v3796, 0
        %3812 = vmatprep.subr.bf16.mxu0 0
        %3813 = vmatpush1.bf16.msra.mxu0 %v3805
        %3814 = vmatprep.subr.bf16.mxu0 0
        %3815 = vmatpush1.bf16.msra.mxu0 %v3806
        %3816 = vmatprep.subr.bf16.mxu0 0
        %3817 = vmatpush1.bf16.msra.mxu0 0
        %3818 = vmatprep.subr.bf16.mxu0 0
        %3819 = vmatpush1.bf16.msra.mxu0 0
        %3820 = vmatprep.subr.bf16.mxu0 0
        %3821 = vmatpush1.bf16.msra.mxu0 0
        %3822 = vmatprep.subr.bf16.mxu0 0
        %3823 = vmatpush1.bf16.msra.mxu0 0
        %3824 = vmatprep.subr.bf16.mxu0 0
        %3825 = vmatpush1.bf16.msra.mxu0 0
        %3826 = vmatprep.subr.bf16.mxu0 0
        %3827 = vmatpush1.bf16.msra.mxu0 0
        %3828 = vmatprep.subr.bf16.mxu0 0
        %3829 = vmatpush1.bf16.msra.mxu0 0
        %3830 = vmatprep.subr.bf16.mxu0 0
        %3831 = vmatpush1.bf16.msra.mxu0 0
        %3832 = vmatprep.subr.bf16.mxu0 0
        %3833 = vmatpush1.bf16.msra.mxu0 0
        %3834 = vmatprep.subr.bf16.mxu0 0
        %3835 = vmatpush1.bf16.msra.mxu0 0
        %3836 = vmatprep.subr.bf16.mxu0 0
        %3837 = vmatpush1.bf16.msra.mxu0 0
        %3838 = vmatprep.subr.bf16.mxu0 0
        %3839 = vmatpush1.bf16.msra.mxu0 0
        %3840 = vmatprep.subr.bf16.mxu0 0
        %3841 = vmatpush1.bf16.msra.mxu0 0
        %3842 = vmatprep.subr.bf16.mxu0 0
        %3843 = vmatpush1.bf16.msra.mxu0 0
        %3844 = vmatprep.mubr.bf16.mxu0 0
        %3845 = vmatmul.mubr.bf16.gmra.mrb[0].mxu0 %v3810
        %v3846 = vpop.f32.mrb[0].mxu0
        %v3847 = vadd.f32 0.0, %v3846
        %v3848 = vpop.f32.mrb[0].mxu0
        %v3849 = vpop.f32.mrb[0].mxu0
        %v3850 = vpop.f32.mrb[0].mxu0
        %3851 = vdwg.mxu0
        %v3852 = vadd.f32 %v3683, %v3847
        %v3853 = vlaneseq
        %v3854 = vshrl.u32 %v3853, 7
        %v3855 = vsub.s32 3, %v3854
        %v3856 = vrot.slane %v2902, %v3855
        %v3857 = vadd.f32 %v3852, %v3856
        %v3858 = vadd.f32 %v2900, %v3857
        %3859 = vadd.xlane.f32.xlu0 %v3858
        %v3860 = vpop.xlane.xlu0 %3859
        %v3861 = vmul.f32 %v3860, %v1418
        %v3862 = vsub.f32 %v3858, %v3861
        %v3863 = vmul.f32 %v3862, %v3862
        %3864 = vadd.xlane.f32.xlu0 %v3863
        %v3865 = vpop.xlane.xlu0 %3864
        %v3866 = vmul.f32 %v3865, %v1418
        %v3867 = vadd.f32 %v3866, 1e-05
        %v3868 = vrsqrt.pop %v3867
        %v3869 = vmul.f32 %v3862, %v3868
        %v3870 = vlaneseq
        %v3871 = vshrl.u32 %v3870, 7
        %v3872 = vsub.s32 6, %v3871
        %v3873 = vrot.slane %v2902, %v3872
        %v3874 = vmul.f32 %v3869, %v3873
        %v3875 = vlaneseq
        %v3876 = vshrl.u32 %v3875, 7
        %v3877 = vsub.s32 7, %v3876
        %v3878 = vrot.slane %v2902, %v3877
        %v3879 = vadd.f32 %v3874, %v3878
        %v3880 = vpack.c.bf16 %v3879, %v3879
        %s3881 = scalar_lea.vmem [#allocation8], 128
        %v3882 = vld [vmem:[%s3881] sm:$0xf]
        %v3883 = vld [vmem:[%s3881 + $0x4] sm:$0xf]
        %v3884 = vld [vmem:[%s3881 + $0x8] sm:$0xf]
        %v3885 = vld [vmem:[%s3881 + $0xc] sm:$0xf]
        %v3886 = vld [vmem:[%s3881 + $0x10] sm:$0xf]
        %v3887 = vld [vmem:[%s3881 + $0x14] sm:$0xf]
        %v3888 = vld [vmem:[%s3881 + $0x18] sm:$0xf]
        %v3889 = vld [vmem:[%s3881 + $0x1c] sm:$0xf]
        %v3890 = vld [vmem:[%s3881 + $0x20] sm:$0xf]
        %v3891 = vld [vmem:[%s3881 + $0x24] sm:$0xf]
        %v3892 = vld [vmem:[%s3881 + $0x28] sm:$0xf]
        %v3893 = vld [vmem:[%s3881 + $0x2c] sm:$0xf]
        %v3894 = vld [vmem:[%s3881 + $0x30] sm:$0xf]
        %v3895 = vld [vmem:[%s3881 + $0x34] sm:$0xf]
        %v3896 = vld [vmem:[%s3881 + $0x38] sm:$0xf]
        %v3897 = vld [vmem:[%s3881 + $0x3c] sm:$0xf]
        %v3898 = vlaneseq
        %v3899 = vshrl.u32 %v3898, 7
        %v3900 = vsub.s32 4, %v3899
        %v3901 = vrot.slane %v2902, %v3900
        %v3918 = vunpack.c.l.b16 %v3882
        %v3919 = vunpack.c.l.b16 %v3883
        %v3920 = vunpack.c.l.b16 %v3884
        %v3921 = vunpack.c.l.b16 %v3885
        %v3922 = vunpack.c.l.b16 %v3886
        %v3923 = vunpack.c.l.b16 %v3887
        %v3924 = vunpack.c.l.b16 %v3888
        %v3925 = vunpack.c.l.b16 %v3889
        %v3926 = vunpack.c.l.b16 %v3890
        %v3927 = vunpack.c.l.b16 %v3891
        %v3928 = vunpack.c.l.b16 %v3892
        %v3929 = vunpack.c.l.b16 %v3893
        %v3930 = vunpack.c.l.b16 %v3894
        %v3931 = vunpack.c.l.b16 %v3895
        %v3932 = vunpack.c.l.b16 %v3896
        %v3933 = vunpack.c.l.b16 %v3897
        %v3934 = vpack.c.b16 %v3919, %v3918
        %v3935 = vpack.c.b16 %v3921, %v3920
        %v3936 = vpack.c.b16 %v3923, %v3922
        %v3937 = vpack.c.b16 %v3925, %v3924
        %v3938 = vpack.c.b16 %v3927, %v3926
        %v3939 = vpack.c.b16 %v3929, %v3928
        %v3940 = vpack.c.b16 %v3931, %v3930
        %v3941 = vpack.c.b16 %v3933, %v3932
        %3950 = vmatprep.subr.bf16.mxu0 0
        %3951 = vmatpush1.bf16.msra.mxu0 %v3934
        %3952 = vmatprep.subr.bf16.mxu0 0
        %3953 = vmatpush1.bf16.msra.mxu0 %v3935
        %3954 = vmatprep.subr.bf16.mxu0 0
        %3955 = vmatpush1.bf16.msra.mxu0 %v3936
        %3956 = vmatprep.subr.bf16.mxu0 0
        %3957 = vmatpush1.bf16.msra.mxu0 %v3937
        %3958 = vmatprep.subr.bf16.mxu0 0
        %3959 = vmatpush1.bf16.msra.mxu0 %v3938
        %3960 = vmatprep.subr.bf16.mxu0 0
        %3961 = vmatpush1.bf16.msra.mxu0 %v3939
        %3962 = vmatprep.subr.bf16.mxu0 0
        %3963 = vmatpush1.bf16.msra.mxu0 %v3940
        %3964 = vmatprep.subr.bf16.mxu0 0
        %3965 = vmatpush1.bf16.msra.mxu0 %v3941
        %3966 = vmatprep.subr.bf16.mxu0 0
        %3967 = vmatpush1.bf16.msra.mxu0 0
        %3968 = vmatprep.subr.bf16.mxu0 0
        %3969 = vmatpush1.bf16.msra.mxu0 0
        %3970 = vmatprep.subr.bf16.mxu0 0
        %3971 = vmatpush1.bf16.msra.mxu0 0
        %3972 = vmatprep.subr.bf16.mxu0 0
        %3973 = vmatpush1.bf16.msra.mxu0 0
        %3974 = vmatprep.subr.bf16.mxu0 0
        %3975 = vmatpush1.bf16.msra.mxu0 0
        %3976 = vmatprep.subr.bf16.mxu0 0
        %3977 = vmatpush1.bf16.msra.mxu0 0
        %3978 = vmatprep.subr.bf16.mxu0 0
        %3979 = vmatpush1.bf16.msra.mxu0 0
        %3980 = vmatprep.subr.bf16.mxu0 0
        %3981 = vmatpush1.bf16.msra.mxu0 0
        %3982 = vmatprep.mubr.bf16.mxu0 0
        %3983 = vmatmul.mubr.bf16.gmra.mrb[0].mxu0 %v3880
        %v3984 = vpop.f32.mrb[0].mxu0
        %v3985 = vadd.f32 %v3901, %v3984
        %v3986 = vpop.f32.mrb[0].mxu0
        %v3987 = vpop.f32.mrb[0].mxu0
        %v3988 = vpop.f32.mrb[0].mxu0
        %3989 = vdwg.mxu0
        %v3990 = vmax.f32 %v3985, 0.0
        %v3991 = vpack.c.bf16 %v3990, %v3990
        %s3992 = scalar_lea.vmem [#allocation10], 128
        %v3993 = vld [vmem:[%s3992] sm:$0xf]
        %v3994 = vld [vmem:[%s3992 + $0x4] sm:$0xf]
        %v3995 = vld [vmem:[%s3992 + $0x8] sm:$0xf]
        %v3996 = vld [vmem:[%s3992 + $0xc] sm:$0xf]
        %v3997 = vld [vmem:[%s3992 + $0x10] sm:$0xf]
        %v3998 = vld [vmem:[%s3992 + $0x14] sm:$0xf]
        %v3999 = vld [vmem:[%s3992 + $0x18] sm:$0xf]
        %v4000 = vld [vmem:[%s3992 + $0x1c] sm:$0xf]
        %v4001 = vld [vmem:[%s3992 + $0x20] sm:$0xf]
        %v4002 = vld [vmem:[%s3992 + $0x24] sm:$0xf]
        %v4003 = vld [vmem:[%s3992 + $0x28] sm:$0xf]
        %v4004 = vld [vmem:[%s3992 + $0x2c] sm:$0xf]
        %v4005 = vld [vmem:[%s3992 + $0x30] sm:$0xf]
        %v4006 = vld [vmem:[%s3992 + $0x34] sm:$0xf]
        %v4007 = vld [vmem:[%s3992 + $0x38] sm:$0xf]
        %v4008 = vld [vmem:[%s3992 + $0x3c] sm:$0xf]
        %v4009 = vlaneseq
        %v4010 = vshrl.u32 %v4009, 7
        %v4011 = vsub.s32 5, %v4010
        %v4012 = vrot.slane %v2902, %v4011
        %v4029 = vunpack.c.l.b16 %v3993
        %v4030 = vunpack.c.l.b16 %v3994
        %v4031 = vunpack.c.l.b16 %v3995
        %v4032 = vunpack.c.l.b16 %v3996
        %v4033 = vunpack.c.l.b16 %v3997
        %v4034 = vunpack.c.l.b16 %v3998
        %v4035 = vunpack.c.l.b16 %v3999
        %v4036 = vunpack.c.l.b16 %v4000
        %v4037 = vunpack.c.l.b16 %v4001
        %v4038 = vunpack.c.l.b16 %v4002
        %v4039 = vunpack.c.l.b16 %v4003
        %v4040 = vunpack.c.l.b16 %v4004
        %v4041 = vunpack.c.l.b16 %v4005
        %v4042 = vunpack.c.l.b16 %v4006
        %v4043 = vunpack.c.l.b16 %v4007
        %v4044 = vunpack.c.l.b16 %v4008
        %v4045 = vpack.c.b16 %v4030, %v4029
        %v4046 = vpack.c.b16 %v4032, %v4031
        %v4047 = vpack.c.b16 %v4034, %v4033
        %v4048 = vpack.c.b16 %v4036, %v4035
        %v4049 = vpack.c.b16 %v4038, %v4037
        %v4050 = vpack.c.b16 %v4040, %v4039
        %v4051 = vpack.c.b16 %v4042, %v4041
        %v4052 = vpack.c.b16 %v4044, %v4043
        %4061 = vmatprep.subr.bf16.mxu0 0
        %4062 = vmatpush1.bf16.msra.mxu0 %v4045
        %4063 = vmatprep.subr.bf16.mxu0 0
        %4064 = vmatpush1.bf16.msra.mxu0 %v4046
        %4065 = vmatprep.subr.bf16.mxu0 0
        %4066 = vmatpush1.bf16.msra.mxu0 %v4047
        %4067 = vmatprep.subr.bf16.mxu0 0
        %4068 = vmatpush1.bf16.msra.mxu0 %v4048
        %4069 = vmatprep.subr.bf16.mxu0 0
        %4070 = vmatpush1.bf16.msra.mxu0 %v4049
        %4071 = vmatprep.subr.bf16.mxu0 0
        %4072 = vmatpush1.bf16.msra.mxu0 %v4050
        %4073 = vmatprep.subr.bf16.mxu0 0
        %4074 = vmatpush1.bf16.msra.mxu0 %v4051
        %4075 = vmatprep.subr.bf16.mxu0 0
        %4076 = vmatpush1.bf16.msra.mxu0 %v4052
        %4077 = vmatprep.subr.bf16.mxu0 0
        %4078 = vmatpush1.bf16.msra.mxu0 0
        %4079 = vmatprep.subr.bf16.mxu0 0
        %4080 = vmatpush1.bf16.msra.mxu0 0
        %4081 = vmatprep.subr.bf16.mxu0 0
        %4082 = vmatpush1.bf16.msra.mxu0 0
        %4083 = vmatprep.subr.bf16.mxu0 0
        %4084 = vmatpush1.bf16.msra.mxu0 0
        %4085 = vmatprep.subr.bf16.mxu0 0
        %4086 = vmatpush1.bf16.msra.mxu0 0
        %4087 = vmatprep.subr.bf16.mxu0 0
        %4088 = vmatpush1.bf16.msra.mxu0 0
        %4089 = vmatprep.subr.bf16.mxu0 0
        %4090 = vmatpush1.bf16.msra.mxu0 0
        %4091 = vmatprep.subr.bf16.mxu0 0
        %4092 = vmatpush1.bf16.msra.mxu0 0
        %4093 = vmatprep.mubr.bf16.mxu0 0
        %4094 = vmatmul.mubr.bf16.gmra.mrb[0].mxu0 %v3991
        %v4095 = vpop.f32.mrb[0].mxu0
        %v4096 = vadd.f32 %v4012, %v4095
        %v4097 = vpop.f32.mrb[0].mxu0
        %v4098 = vpop.f32.mrb[0].mxu0
        %v4099 = vpop.f32.mrb[0].mxu0
        %4100 = vdwg.mxu0
        %v4101 = vadd.f32 %v3879, %v4096
        %4102 = vadd.xlane.f32.xlu0 %v4101
        %v4103 = vpop.xlane.xlu0 %4102
        %v4104 = vmul.f32 %v4103, %v1418
        %v4105 = vsub.f32 %v4101, %v4104
        %v4106 = vmul.f32 %v4105, %v4105
        %4107 = vadd.xlane.f32.xlu0 %v4106
        %v4108 = vpop.xlane.xlu0 %4107
        %v4109 = vmul.f32 %v4108, %v1418
        %v4110 = vadd.f32 %v4109, 1e-05
        %v4111 = vrsqrt.pop %v4110
        %v4112 = vmul.f32 %v4105, %v4111
        %v4113 = vlaneseq
        %v4114 = vshrl.u32 %v4113, 7
        %v4115 = vsub.s32 0, %v4114
        %v4116 = vrot.slane %v2903, %v4115
        %v4117 = vmul.f32 %v4112, %v4116
        %v4118 = vlaneseq
        %v4119 = vshrl.u32 %v4118, 7
        %v4120 = vsub.s32 1, %v4119
        %v4121 = vrot.slane %v2903, %v4120
        %v4122 = vadd.f32 %v4117, %v4121
        %s4123 = scalar_lea.vmem [#allocation11], 48
        %v4124 = vld [vmem:[%s4123] sm:$0xff]
        %v4125 = vld [vmem:[%s4123 + $0x8] sm:$0xff]
        %v4126 = vpack.c.bf16 %v4122, %v4122
        %s4127 = scalar_lea.vmem [#allocation5], 576
        %v4128 = vld [vmem:[%s4127] sm:$0xff]
        %v4129 = vld [vmem:[%s4127 + $0x8] sm:$0xf]
        %v4130 = vld [vmem:[%s4127 + $0xc] sm:$0xff]
        %v4131 = vld [vmem:[%s4127 + $0x14] sm:$0xf]
        %v4132 = vld [vmem:[%s4127 + $0x18] sm:$0xff]
        %v4133 = vld [vmem:[%s4127 + $0x20] sm:$0xf]
        %v4134 = vld [vmem:[%s4127 + $0x24] sm:$0xff]
        %v4135 = vld [vmem:[%s4127 + $0x2c] sm:$0xf]
        %v4136 = vld [vmem:[%s4127 + $0x30] sm:$0xff]
        %v4137 = vld [vmem:[%s4127 + $0x38] sm:$0xf]
        %v4138 = vld [vmem:[%s4127 + $0x3c] sm:$0xff]
        %v4139 = vld [vmem:[%s4127 + $0x44] sm:$0xf]
        %v4140 = vld [vmem:[%s4127 + $0x48] sm:$0xff]
        %v4141 = vld [vmem:[%s4127 + $0x50] sm:$0xf]
        %v4142 = vld [vmem:[%s4127 + $0x54] sm:$0xff]
        %v4143 = vld [vmem:[%s4127 + $0x5c] sm:$0xf]
        %v4144 = vld [vmem:[%s4127 + $0x60] sm:$0xff]
        %v4145 = vld [vmem:[%s4127 + $0x68] sm:$0xf]
        %v4146 = vld [vmem:[%s4127 + $0x6c] sm:$0xff]
        %v4147 = vld [vmem:[%s4127 + $0x74] sm:$0xf]
        %v4148 = vld [vmem:[%s4127 + $0x78] sm:$0xff]
        %v4149 = vld [vmem:[%s4127 + $0x80] sm:$0xf]
        %v4150 = vld [vmem:[%s4127 + $0x84] sm:$0xff]
        %v4151 = vld [vmem:[%s4127 + $0x8c] sm:$0xf]
        %v4152 = vld [vmem:[%s4127 + $0x90] sm:$0xff]
        %v4153 = vld [vmem:[%s4127 + $0x98] sm:$0xf]
        %v4154 = vld [vmem:[%s4127 + $0x9c] sm:$0xff]
        %v4155 = vld [vmem:[%s4127 + $0xa4] sm:$0xf]
        %v4156 = vld [vmem:[%s4127 + $0xa8] sm:$0xff]
        %v4157 = vld [vmem:[%s4127 + $0xb0] sm:$0xf]
        %v4158 = vld [vmem:[%s4127 + $0xb4] sm:$0xff]
        %v4159 = vld [vmem:[%s4127 + $0xbc] sm:$0xf]
        %v4192 = vunpack.c.l.b16 %v4128
        %v4193 = vunpack.c.h.b16 %v4128
        %v4194 = vunpack.c.l.b16 %v4129
        %v4195 = vunpack.c.l.b16 %v4130
        %v4196 = vunpack.c.h.b16 %v4130
        %v4197 = vunpack.c.l.b16 %v4131
        %v4198 = vunpack.c.l.b16 %v4132
        %v4199 = vunpack.c.h.b16 %v4132
        %v4200 = vunpack.c.l.b16 %v4133
        %v4201 = vunpack.c.l.b16 %v4134
        %v4202 = vunpack.c.h.b16 %v4134
        %v4203 = vunpack.c.l.b16 %v4135
        %v4204 = vunpack.c.l.b16 %v4136
        %v4205 = vunpack.c.h.b16 %v4136
        %v4206 = vunpack.c.l.b16 %v4137
        %v4207 = vunpack.c.l.b16 %v4138
        %v4208 = vunpack.c.h.b16 %v4138
        %v4209 = vunpack.c.l.b16 %v4139
        %v4210 = vunpack.c.l.b16 %v4140
        %v4211 = vunpack.c.h.b16 %v4140
        %v4212 = vunpack.c.l.b16 %v4141
        %v4213 = vunpack.c.l.b16 %v4142
        %v4214 = vunpack.c.h.b16 %v4142
        %v4215 = vunpack.c.l.b16 %v4143
        %v4216 = vunpack.c.l.b16 %v4144
        %v4217 = vunpack.c.h.b16 %v4144
        %v4218 = vunpack.c.l.b16 %v4145
        %v4219 = vunpack.c.l.b16 %v4146
        %v4220 = vunpack.c.h.b16 %v4146
        %v4221 = vunpack.c.l.b16 %v4147
        %v4222 = vunpack.c.l.b16 %v4148
        %v4223 = vunpack.c.h.b16 %v4148
        %v4224 = vunpack.c.l.b16 %v4149
        %v4225 = vunpack.c.l.b16 %v4150
        %v4226 = vunpack.c.h.b16 %v4150
        %v4227 = vunpack.c.l.b16 %v4151
        %v4228 = vunpack.c.l.b16 %v4152
        %v4229 = vunpack.c.h.b16 %v4152
        %v4230 = vunpack.c.l.b16 %v4153
        %v4231 = vunpack.c.l.b16 %v4154
        %v4232 = vunpack.c.h.b16 %v4154
        %v4233 = vunpack.c.l.b16 %v4155
        %v4234 = vunpack.c.l.b16 %v4156
        %v4235 = vunpack.c.h.b16 %v4156
        %v4236 = vunpack.c.l.b16 %v4157
        %v4237 = vunpack.c.l.b16 %v4158
        %v4238 = vunpack.c.h.b16 %v4158
        %v4239 = vunpack.c.l.b16 %v4159
        %v4240 = vpack.c.b16 %v4195, %v4192
        %v4241 = vpack.c.b16 %v4196, %v4193
        %v4242 = vpack.c.b16 %v4197, %v4194
        %v4243 = vpack.c.b16 %v4201, %v4198
        %v4244 = vpack.c.b16 %v4202, %v4199
        %v4245 = vpack.c.b16 %v4203, %v4200
        %v4246 = vpack.c.b16 %v4207, %v4204
        %v4247 = vpack.c.b16 %v4208, %v4205
        %v4248 = vpack.c.b16 %v4209, %v4206
        %v4249 = vpack.c.b16 %v4213, %v4210
        %v4250 = vpack.c.b16 %v4214, %v4211
        %v4251 = vpack.c.b16 %v4215, %v4212
        %v4252 = vpack.c.b16 %v4219, %v4216
        %v4253 = vpack.c.b16 %v4220, %v4217
        %v4254 = vpack.c.b16 %v4221, %v4218
        %v4255 = vpack.c.b16 %v4225, %v4222
        %v4256 = vpack.c.b16 %v4226, %v4223
        %v4257 = vpack.c.b16 %v4227, %v4224
        %v4258 = vpack.c.b16 %v4231, %v4228
        %v4259 = vpack.c.b16 %v4232, %v4229
        %v4260 = vpack.c.b16 %v4233, %v4230
        %v4261 = vpack.c.b16 %v4237, %v4234
        %v4262 = vpack.c.b16 %v4238, %v4235
        %v4263 = vpack.c.b16 %v4239, %v4236
        %4288 = vmatprep.subr.bf16.mxu0 %v4241
        %4289 = vmatpush1.bf16.msra.mxu0 %v4240
        %4290 = vmatprep.subr.bf16.mxu0 %v4244
        %4291 = vmatpush1.bf16.msra.mxu0 %v4243
        %4292 = vmatprep.subr.bf16.mxu0 %v4247
        %4293 = vmatpush1.bf16.msra.mxu0 %v4246
        %4294 = vmatprep.subr.bf16.mxu0 %v4250
        %4295 = vmatpush1.bf16.msra.mxu0 %v4249
        %4296 = vmatprep.subr.bf16.mxu0 %v4253
        %4297 = vmatpush1.bf16.msra.mxu0 %v4252
        %4298 = vmatprep.subr.bf16.mxu0 %v4256
        %4299 = vmatpush1.bf16.msra.mxu0 %v4255
        %4300 = vmatprep.subr.bf16.mxu0 %v4259
        %4301 = vmatpush1.bf16.msra.mxu0 %v4258
        %4302 = vmatprep.subr.bf16.mxu0 %v4262
        %4303 = vmatpush1.bf16.msra.mxu0 %v4261
        %4304 = vmatprep.subr.bf16.mxu0 0
        %4305 = vmatpush1.bf16.msra.mxu0 0
        %4306 = vmatprep.subr.bf16.mxu0 0
        %4307 = vmatpush1.bf16.msra.mxu0 0
        %4308 = vmatprep.subr.bf16.mxu0 0
        %4309 = vmatpush1.bf16.msra.mxu0 0
        %4310 = vmatprep.subr.bf16.mxu0 0
        %4311 = vmatpush1.bf16.msra.mxu0 0
        %4312 = vmatprep.subr.bf16.mxu0 0
        %4313 = vmatpush1.bf16.msra.mxu0 0
        %4314 = vmatprep.subr.bf16.mxu0 0
        %4315 = vmatpush1.bf16.msra.mxu0 0
        %4316 = vmatprep.subr.bf16.mxu0 0
        %4317 = vmatpush1.bf16.msra.mxu0 0
        %4318 = vmatprep.subr.bf16.mxu0 0
        %4319 = vmatpush1.bf16.msra.mxu0 0
        %4320 = vmatprep.mubr.bf16.mxu0 0
        %4321 = vmatmul.mubr.bf16.gmra.mrb[0].mxu0 %v4126
        %v4322 = vpop.f32.mrb[0].mxu0
        %v4323 = vadd.f32 0.0, %v4322
        %v4324 = vpop.f32.mrb[0].mxu0
        %v4325 = vadd.f32 0.0, %v4324
        %v4326 = vpop.f32.mrb[0].mxu0
        %v4327 = vpop.f32.mrb[0].mxu0
        %4328 = vdwg.mxu0
        %4329 = vmatprep.subr.bf16.mxu0 0
        %4330 = vmatpush1.bf16.msra.mxu0 %v4242
        %4331 = vmatprep.subr.bf16.mxu0 0
        %4332 = vmatpush1.bf16.msra.mxu0 %v4245
        %4333 = vmatprep.subr.bf16.mxu0 0
        %4334 = vmatpush1.bf16.msra.mxu0 %v4248
        %4335 = vmatprep.subr.bf16.mxu0 0
        %4336 = vmatpush1.bf16.msra.mxu0 %v4251
        %4337 = vmatprep.subr.bf16.mxu0 0
        %4338 = vmatpush1.bf16.msra.mxu0 %v4254
        %4339 = vmatprep.subr.bf16.mxu0 0
        %4340 = vmatpush1.bf16.msra.mxu0 %v4257
        %4341 = vmatprep.subr.bf16.mxu0 0
        %4342 = vmatpush1.bf16.msra.mxu0 %v4260
        %4343 = vmatprep.subr.bf16.mxu0 0
        %4344 = vmatpush1.bf16.msra.mxu0 %v4263
        %4345 = vmatprep.subr.bf16.mxu0 0
        %4346 = vmatpush1.bf16.msra.mxu0 0
        %4347 = vmatprep.subr.bf16.mxu0 0
        %4348 = vmatpush1.bf16.msra.mxu0 0
        %4349 = vmatprep.subr.bf16.mxu0 0
        %4350 = vmatpush1.bf16.msra.mxu0 0
        %4351 = vmatprep.subr.bf16.mxu0 0
        %4352 = vmatpush1.bf16.msra.mxu0 0
        %4353 = vmatprep.subr.bf16.mxu0 0
        %4354 = vmatpush1.bf16.msra.mxu0 0
        %4355 = vmatprep.subr.bf16.mxu0 0
        %4356 = vmatpush1.bf16.msra.mxu0 0
        %4357 = vmatprep.subr.bf16.mxu0 0
        %4358 = vmatpush1.bf16.msra.mxu0 0
        %4359 = vmatprep.subr.bf16.mxu0 0
        %4360 = vmatpush1.bf16.msra.mxu0 0
        %4361 = vmatprep.mubr.bf16.mxu0 0
        %4362 = vmatmul.mubr.bf16.gmra.mrb[0].mxu0 %v4126
        %v4363 = vpop.f32.mrb[0].mxu0
        %v4364 = vadd.f32 0.0, %v4363
        %v4365 = vpop.f32.mrb[0].mxu0
        %v4366 = vpop.f32.mrb[0].mxu0
        %v4367 = vpop.f32.mrb[0].mxu0
        %4368 = vdwg.mxu0
        %v4369 = vlaneseq
        %v4370 = vshrl.u32 %v4369, 7
        %v4371 = vsub.s32 0, %v4370
        %v4372 = vrot.slane %v4124, %v4371
        %v4373 = vadd.f32 %v4323, %v4372
        %v4374 = vlaneseq
        %v4375 = vshrl.u32 %v4374, 7
        %v4376 = vsub.s32 1, %v4375
        %v4377 = vrot.slane %v4124, %v4376
        %v4378 = vadd.f32 %v4325, %v4377
        %v4379 = vlaneseq
        %v4380 = vshrl.u32 %v4379, 7
        %v4381 = vsub.s32 2, %v4380
        %v4382 = vrot.slane %v4124, %v4381
        %v4383 = vadd.f32 %v4364, %v4382
        %s4384 = scalar_lea.vmem [#allocation7], 192
        %v4385 = vld [vmem:[%s4384] sm:$0xf]
        %v4386 = vld [vmem:[%s4384 + $0x4] sm:$0xf]
        %v4387 = vld [vmem:[%s4384 + $0x8] sm:$0xf]
        %v4388 = vld [vmem:[%s4384 + $0xc] sm:$0xf]
        %v4389 = vld [vmem:[%s4384 + $0x10] sm:$0xf]
        %v4390 = vld [vmem:[%s4384 + $0x14] sm:$0xf]
        %v4391 = vld [vmem:[%s4384 + $0x18] sm:$0xf]
        %v4392 = vld [vmem:[%s4384 + $0x1c] sm:$0xf]
        %v4393 = vld [vmem:[%s4384 + $0x20] sm:$0xf]
        %v4394 = vld [vmem:[%s4384 + $0x24] sm:$0xf]
        %v4395 = vld [vmem:[%s4384 + $0x28] sm:$0xf]
        %v4396 = vld [vmem:[%s4384 + $0x2c] sm:$0xf]
        %v4397 = vld [vmem:[%s4384 + $0x30] sm:$0xf]
        %v4398 = vld [vmem:[%s4384 + $0x34] sm:$0xf]
        %v4399 = vld [vmem:[%s4384 + $0x38] sm:$0xf]
        %v4400 = vld [vmem:[%s4384 + $0x3c] sm:$0xf]
        %v4401 = vpack.c.bf16 %v4373, %v4373
        %v4402 = vpack.c.bf16 %v4378, %v4378
        %v4403 = vpack.c.bf16 %v4383, %v4383
        %v4405 = vsel %vm730, %v4401, 0
        %v4408 = vsel %vm730, %v4402, 0
        %4410 = vmatprep.subr.bf16.mxu0 0
        %4411 = vmatpush1.bf16.xpose.msra.mxu0 %v4408
        %4412 = vmatprep.subr.bf16.mxu0 0
        %4413 = vmatpush1.bf16.xpose.msra.mxu0 0
        %4414 = vmatprep.subr.bf16.mxu0 0
        %4415 = vmatpush1.bf16.xpose.msra.mxu0 0
        %4416 = vmatprep.subr.bf16.mxu0 0
        %4417 = vmatpush1.bf16.xpose.msra.mxu0 0
        %4418 = vmatprep.subr.bf16.mxu0 0
        %4419 = vmatpush1.bf16.xpose.msra.mxu0 0
        %4420 = vmatprep.subr.bf16.mxu0 0
        %4421 = vmatpush1.bf16.xpose.msra.mxu0 0
        %4422 = vmatprep.subr.bf16.mxu0 0
        %4423 = vmatpush1.bf16.xpose.msra.mxu0 0
        %4424 = vmatprep.subr.bf16.mxu0 0
        %4425 = vmatpush1.bf16.xpose.msra.mxu0 0
        %4426 = vmatprep.subr.bf16.mxu0 0
        %4427 = vmatpush1.bf16.xpose.msra.mxu0 0
        %4428 = vmatprep.subr.bf16.mxu0 0
        %4429 = vmatpush1.bf16.xpose.msra.mxu0 0
        %4430 = vmatprep.subr.bf16.mxu0 0
        %4431 = vmatpush1.bf16.xpose.msra.mxu0 0
        %4432 = vmatprep.subr.bf16.mxu0 0
        %4433 = vmatpush1.bf16.xpose.msra.mxu0 0
        %4434 = vmatprep.subr.bf16.mxu0 0
        %4435 = vmatpush1.bf16.xpose.msra.mxu0 0
        %4436 = vmatprep.subr.bf16.mxu0 0
        %4437 = vmatpush1.bf16.xpose.msra.mxu0 0
        %4438 = vmatprep.subr.bf16.mxu0 0
        %4439 = vmatpush1.bf16.xpose.msra.mxu0 0
        %4440 = vmatprep.subr.bf16.mxu0 0
        %4441 = vmatpush1.bf16.xpose.msra.mxu0 0
        %4442 = vmatprep.mubr.bf16.mxu0 0
        %4443 = vmatmul.mubr.bf16.gmra.mrb[0].mxu0 %v4405
        %v4444 = vpop.f32.mrb[0].mxu0
        %v4445 = vadd.f32 0.0, %v4444
        %v4446 = vpop.f32.mrb[0].mxu0
        %v4447 = vpop.f32.mrb[0].mxu0
        %v4448 = vpop.f32.mrb[0].mxu0
        %4449 = vdwg.mxu0
        %v4450 = vmul.f32 %v4445, 0.17677669
        %v4451 = vadd.f32 %v4450, %v782
        %v4452 = vsel %vm785, %v4451, -inf
        %4453 = vmax.xlane.f32.xlu0 %v4452
        %v4454 = vpop.xlane.xlu0 %4453
        %v4455 = vsub.f32 %v4451, %v4454
        %v4456 = vmul.f32 %v4455, 1.442695
        %v4457 = vpow.pop %v4456
        %v4458 = vsel %vm785, %v4457, 0.0
        %4459 = vadd.xlane.f32.xlu0 %v4458
        %v4460 = vpop.xlane.xlu0 %4459
        %v4461 = vrcp.pop %v4460
        %v4462 = vmul.f32 %v4457, %v4461
        %v4463 = vpack.c.bf16 %v4462, %v4462
        %v4465 = vsel %vm785, %v4463, 0
        %v4468 = vsel %vm801, %v4403, 0
        %4470 = vmatprep.subr.bf16.mxu0 0
        %4471 = vmatpush1.bf16.msra.mxu0 %v4468
        %4472 = vmatprep.subr.bf16.mxu0 0
        %4473 = vmatpush1.bf16.msra.mxu0 0
        %4474 = vmatprep.subr.bf16.mxu0 0
        %4475 = vmatpush1.bf16.msra.mxu0 0
        %4476 = vmatprep.subr.bf16.mxu0 0
        %4477 = vmatpush1.bf16.msra.mxu0 0
        %4478 = vmatprep.subr.bf16.mxu0 0
        %4479 = vmatpush1.bf16.msra.mxu0 0
        %4480 = vmatprep.subr.bf16.mxu0 0
        %4481 = vmatpush1.bf16.msra.mxu0 0
        %4482 = vmatprep.subr.bf16.mxu0 0
        %4483 = vmatpush1.bf16.msra.mxu0 0
        %4484 = vmatprep.subr.bf16.mxu0 0
        %4485 = vmatpush1.bf16.msra.mxu0 0
        %4486 = vmatprep.subr.bf16.mxu0 0
        %4487 = vmatpush1.bf16.msra.mxu0 0
        %4488 = vmatprep.subr.bf16.mxu0 0
        %4489 = vmatpush1.bf16.msra.mxu0 0
        %4490 = vmatprep.subr.bf16.mxu0 0
        %4491 = vmatpush1.bf16.msra.mxu0 0
        %4492 = vmatprep.subr.bf16.mxu0 0
        %4493 = vmatpush1.bf16.msra.mxu0 0
        %4494 = vmatprep.subr.bf16.mxu0 0
        %4495 = vmatpush1.bf16.msra.mxu0 0
        %4496 = vmatprep.subr.bf16.mxu0 0
        %4497 = vmatpush1.bf16.msra.mxu0 0
        %4498 = vmatprep.subr.bf16.mxu0 0
        %4499 = vmatpush1.bf16.msra.mxu0 0
        %4500 = vmatprep.subr.bf16.mxu0 0
        %4501 = vmatpush1.bf16.msra.mxu0 0
        %4502 = vmatprep.mubr.bf16.mxu0 0
        %4503 = vmatmul.mubr.bf16.gmra.mrb[0].mxu0 %v4465
        %v4504 = vpop.f32.mrb[0].mxu0
        %v4505 = vadd.f32 0.0, %v4504
        %v4506 = vpop.f32.mrb[0].mxu0
        %v4507 = vpop.f32.mrb[0].mxu0
        %v4508 = vpop.f32.mrb[0].mxu0
        %4509 = vdwg.mxu0
        %v4510 = vpack.c.bf16 %v4505, %v4505
        %4512 = vrot.lane.b32.xlu0 %v4401, 96
        %v4513 = vpop.permute.xlu0 %4512
        %4515 = vrot.lane.b32.xlu0 %v4402, 96
        %v4516 = vpop.permute.xlu0 %4515
        %v4518 = vsel %vm730, %v4513, 0
        %v4521 = vsel %vm730, %v4516, 0
        %4523 = vmatprep.subr.bf16.mxu0 0
        %4524 = vmatpush1.bf16.xpose.msra.mxu0 %v4521
        %4525 = vmatprep.subr.bf16.mxu0 0
        %4526 = vmatpush1.bf16.xpose.msra.mxu0 0
        %4527 = vmatprep.subr.bf16.mxu0 0
        %4528 = vmatpush1.bf16.xpose.msra.mxu0 0
        %4529 = vmatprep.subr.bf16.mxu0 0
        %4530 = vmatpush1.bf16.xpose.msra.mxu0 0
        %4531 = vmatprep.subr.bf16.mxu0 0
        %4532 = vmatpush1.bf16.xpose.msra.mxu0 0
        %4533 = vmatprep.subr.bf16.mxu0 0
        %4534 = vmatpush1.bf16.xpose.msra.mxu0 0
        %4535 = vmatprep.subr.bf16.mxu0 0
        %4536 = vmatpush1.bf16.xpose.msra.mxu0 0
        %4537 = vmatprep.subr.bf16.mxu0 0
        %4538 = vmatpush1.bf16.xpose.msra.mxu0 0
        %4539 = vmatprep.subr.bf16.mxu0 0
        %4540 = vmatpush1.bf16.xpose.msra.mxu0 0
        %4541 = vmatprep.subr.bf16.mxu0 0
        %4542 = vmatpush1.bf16.xpose.msra.mxu0 0
        %4543 = vmatprep.subr.bf16.mxu0 0
        %4544 = vmatpush1.bf16.xpose.msra.mxu0 0
        %4545 = vmatprep.subr.bf16.mxu0 0
        %4546 = vmatpush1.bf16.xpose.msra.mxu0 0
        %4547 = vmatprep.subr.bf16.mxu0 0
        %4548 = vmatpush1.bf16.xpose.msra.mxu0 0
        %4549 = vmatprep.subr.bf16.mxu0 0
        %4550 = vmatpush1.bf16.xpose.msra.mxu0 0
        %4551 = vmatprep.subr.bf16.mxu0 0
        %4552 = vmatpush1.bf16.xpose.msra.mxu0 0
        %4553 = vmatprep.subr.bf16.mxu0 0
        %4554 = vmatpush1.bf16.xpose.msra.mxu0 0
        %4555 = vmatprep.mubr.bf16.mxu0 0
        %4556 = vmatmul.mubr.bf16.gmra.mrb[0].mxu0 %v4518
        %v4557 = vpop.f32.mrb[0].mxu0
        %v4558 = vadd.f32 0.0, %v4557
        %v4559 = vpop.f32.mrb[0].mxu0
        %v4560 = vpop.f32.mrb[0].mxu0
        %v4561 = vpop.f32.mrb[0].mxu0
        %4562 = vdwg.mxu0
        %v4563 = vmul.f32 %v4558, 0.17677669
        %v4564 = vadd.f32 %v4563, %v782
        %v4565 = vsel %vm785, %v4564, -inf
        %4566 = vmax.xlane.f32.xlu0 %v4565
        %v4567 = vpop.xlane.xlu0 %4566
        %v4568 = vsub.f32 %v4564, %v4567
        %v4569 = vmul.f32 %v4568, 1.442695
        %v4570 = vpow.pop %v4569
        %v4571 = vsel %vm785, %v4570, 0.0
        %4572 = vadd.xlane.f32.xlu0 %v4571
        %v4573 = vpop.xlane.xlu0 %4572
        %v4574 = vrcp.pop %v4573
        %v4575 = vmul.f32 %v4570, %v4574
        %v4576 = vpack.c.bf16 %v4575, %v4575
        %4578 = vrot.lane.b32.xlu0 %v4403, 96
        %v4579 = vpop.permute.xlu0 %4578
        %v4581 = vsel %vm785, %v4576, 0
        %v4584 = vsel %vm801, %v4579, 0
        %4586 = vmatprep.subr.bf16.mxu0 0
        %4587 = vmatpush1.bf16.msra.mxu0 %v4584
        %4588 = vmatprep.subr.bf16.mxu0 0
        %4589 = vmatpush1.bf16.msra.mxu0 0
        %4590 = vmatprep.subr.bf16.mxu0 0
        %4591 = vmatpush1.bf16.msra.mxu0 0
        %4592 = vmatprep.subr.bf16.mxu0 0
        %4593 = vmatpush1.bf16.msra.mxu0 0
        %4594 = vmatprep.subr.bf16.mxu0 0
        %4595 = vmatpush1.bf16.msra.mxu0 0
        %4596 = vmatprep.subr.bf16.mxu0 0
        %4597 = vmatpush1.bf16.msra.mxu0 0
        %4598 = vmatprep.subr.bf16.mxu0 0
        %4599 = vmatpush1.bf16.msra.mxu0 0
        %4600 = vmatprep.subr.bf16.mxu0 0
        %4601 = vmatpush1.bf16.msra.mxu0 0
        %4602 = vmatprep.subr.bf16.mxu0 0
        %4603 = vmatpush1.bf16.msra.mxu0 0
        %4604 = vmatprep.subr.bf16.mxu0 0
        %4605 = vmatpush1.bf16.msra.mxu0 0
        %4606 = vmatprep.subr.bf16.mxu0 0
        %4607 = vmatpush1.bf16.msra.mxu0 0
        %4608 = vmatprep.subr.bf16.mxu0 0
        %4609 = vmatpush1.bf16.msra.mxu0 0
        %4610 = vmatprep.subr.bf16.mxu0 0
        %4611 = vmatpush1.bf16.msra.mxu0 0
        %4612 = vmatprep.subr.bf16.mxu0 0
        %4613 = vmatpush1.bf16.msra.mxu0 0
        %4614 = vmatprep.subr.bf16.mxu0 0
        %4615 = vmatpush1.bf16.msra.mxu0 0
        %4616 = vmatprep.subr.bf16.mxu0 0
        %4617 = vmatpush1.bf16.msra.mxu0 0
        %4618 = vmatprep.mubr.bf16.mxu0 0
        %4619 = vmatmul.mubr.bf16.gmra.mrb[0].mxu0 %v4581
        %v4620 = vpop.f32.mrb[0].mxu0
        %v4621 = vadd.f32 0.0, %v4620
        %v4622 = vpop.f32.mrb[0].mxu0
        %v4623 = vpop.f32.mrb[0].mxu0
        %v4624 = vpop.f32.mrb[0].mxu0
        %4625 = vdwg.mxu0
        %v4626 = vpack.c.bf16 %v4621, %v4621
        %v4631 = vunpack.c.l.b16 %v4389
        %v4632 = vunpack.c.l.b16 %v4390
        %v4633 = vunpack.c.l.b16 %v4391
        %v4634 = vunpack.c.l.b16 %v4392
        %v4635 = vpack.c.b16 %v4632, %v4631
        %v4636 = vpack.c.b16 %v4634, %v4633
        %v4640 = vsel %vm730, %v4626, 0
        %4642 = vmatprep.subr.bf16.mxu0 0
        %4643 = vmatpush1.bf16.msra.mxu0 %v4635
        %4644 = vmatprep.subr.bf16.mxu0 0
        %4645 = vmatpush1.bf16.msra.mxu0 %v4636
        %4646 = vmatprep.subr.bf16.mxu0 0
        %4647 = vmatpush1.bf16.msra.mxu0 0
        %4648 = vmatprep.subr.bf16.mxu0 0
        %4649 = vmatpush1.bf16.msra.mxu0 0
        %4650 = vmatprep.subr.bf16.mxu0 0
        %4651 = vmatpush1.bf16.msra.mxu0 0
        %4652 = vmatprep.subr.bf16.mxu0 0
        %4653 = vmatpush1.bf16.msra.mxu0 0
        %4654 = vmatprep.subr.bf16.mxu0 0
        %4655 = vmatpush1.bf16.msra.mxu0 0
        %4656 = vmatprep.subr.bf16.mxu0 0
        %4657 = vmatpush1.bf16.msra.mxu0 0
        %4658 = vmatprep.subr.bf16.mxu0 0
        %4659 = vmatpush1.bf16.msra.mxu0 0
        %4660 = vmatprep.subr.bf16.mxu0 0
        %4661 = vmatpush1.bf16.msra.mxu0 0
        %4662 = vmatprep.subr.bf16.mxu0 0
        %4663 = vmatpush1.bf16.msra.mxu0 0
        %4664 = vmatprep.subr.bf16.mxu0 0
        %4665 = vmatpush1.bf16.msra.mxu0 0
        %4666 = vmatprep.subr.bf16.mxu0 0
        %4667 = vmatpush1.bf16.msra.mxu0 0
        %4668 = vmatprep.subr.bf16.mxu0 0
        %4669 = vmatpush1.bf16.msra.mxu0 0
        %4670 = vmatprep.subr.bf16.mxu0 0
        %4671 = vmatpush1.bf16.msra.mxu0 0
        %4672 = vmatprep.subr.bf16.mxu0 0
        %4673 = vmatpush1.bf16.msra.mxu0 0
        %4674 = vmatprep.mubr.bf16.mxu0 0
        %4675 = vmatmul.mubr.bf16.gmra.mrb[0].mxu0 %v4640
        %v4676 = vpop.f32.mrb[0].mxu0
        %v4677 = vadd.f32 0.0, %v4676
        %v4678 = vpop.f32.mrb[0].mxu0
        %v4679 = vpop.f32.mrb[0].mxu0
        %v4680 = vpop.f32.mrb[0].mxu0
        %4681 = vdwg.mxu0
        %v4686 = vunpack.c.l.b16 %v4385
        %v4687 = vunpack.c.l.b16 %v4386
        %v4688 = vunpack.c.l.b16 %v4387
        %v4689 = vunpack.c.l.b16 %v4388
        %v4690 = vpack.c.b16 %v4687, %v4686
        %v4691 = vpack.c.b16 %v4689, %v4688
        %v4695 = vsel %vm730, %v4510, 0
        %4697 = vmatprep.subr.bf16.mxu0 0
        %4698 = vmatpush1.bf16.msra.mxu0 %v4690
        %4699 = vmatprep.subr.bf16.mxu0 0
        %4700 = vmatpush1.bf16.msra.mxu0 %v4691
        %4701 = vmatprep.subr.bf16.mxu0 0
        %4702 = vmatpush1.bf16.msra.mxu0 0
        %4703 = vmatprep.subr.bf16.mxu0 0
        %4704 = vmatpush1.bf16.msra.mxu0 0
        %4705 = vmatprep.subr.bf16.mxu0 0
        %4706 = vmatpush1.bf16.msra.mxu0 0
        %4707 = vmatprep.subr.bf16.mxu0 0
        %4708 = vmatpush1.bf16.msra.mxu0 0
        %4709 = vmatprep.subr.bf16.mxu0 0
        %4710 = vmatpush1.bf16.msra.mxu0 0
        %4711 = vmatprep.subr.bf16.mxu0 0
        %4712 = vmatpush1.bf16.msra.mxu0 0
        %4713 = vmatprep.subr.bf16.mxu0 0
        %4714 = vmatpush1.bf16.msra.mxu0 0
        %4715 = vmatprep.subr.bf16.mxu0 0
        %4716 = vmatpush1.bf16.msra.mxu0 0
        %4717 = vmatprep.subr.bf16.mxu0 0
        %4718 = vmatpush1.bf16.msra.mxu0 0
        %4719 = vmatprep.subr.bf16.mxu0 0
        %4720 = vmatpush1.bf16.msra.mxu0 0
        %4721 = vmatprep.subr.bf16.mxu0 0
        %4722 = vmatpush1.bf16.msra.mxu0 0
        %4723 = vmatprep.subr.bf16.mxu0 0
        %4724 = vmatpush1.bf16.msra.mxu0 0
        %4725 = vmatprep.subr.bf16.mxu0 0
        %4726 = vmatpush1.bf16.msra.mxu0 0
        %4727 = vmatprep.subr.bf16.mxu0 0
        %4728 = vmatpush1.bf16.msra.mxu0 0
        %4729 = vmatprep.mubr.bf16.mxu0 0
        %4730 = vmatmul.mubr.bf16.gmra.mrb[0].mxu0 %v4695
        %v4731 = vpop.f32.mrb[0].mxu0
        %v4732 = vadd.f32 %v4677, %v4731
        %v4733 = vpop.f32.mrb[0].mxu0
        %v4734 = vpop.f32.mrb[0].mxu0
        %v4735 = vpop.f32.mrb[0].mxu0
        %4736 = vdwg.mxu0
        %4737 = vrot.lane.b32.xlu0 %v4401, 64
        %v4738 = vpop.permute.xlu0 %4737
        %4739 = vrot.lane.b32.xlu0 %v4402, 64
        %v4740 = vpop.permute.xlu0 %4739
        %v4742 = vsel %vm730, %v4738, 0
        %v4745 = vsel %vm730, %v4740, 0
        %4747 = vmatprep.subr.bf16.mxu0 0
        %4748 = vmatpush1.bf16.xpose.msra.mxu0 %v4745
        %4749 = vmatprep.subr.bf16.mxu0 0
        %4750 = vmatpush1.bf16.xpose.msra.mxu0 0
        %4751 = vmatprep.subr.bf16.mxu0 0
        %4752 = vmatpush1.bf16.xpose.msra.mxu0 0
        %4753 = vmatprep.subr.bf16.mxu0 0
        %4754 = vmatpush1.bf16.xpose.msra.mxu0 0
        %4755 = vmatprep.subr.bf16.mxu0 0
        %4756 = vmatpush1.bf16.xpose.msra.mxu0 0
        %4757 = vmatprep.subr.bf16.mxu0 0
        %4758 = vmatpush1.bf16.xpose.msra.mxu0 0
        %4759 = vmatprep.subr.bf16.mxu0 0
        %4760 = vmatpush1.bf16.xpose.msra.mxu0 0
        %4761 = vmatprep.subr.bf16.mxu0 0
        %4762 = vmatpush1.bf16.xpose.msra.mxu0 0
        %4763 = vmatprep.subr.bf16.mxu0 0
        %4764 = vmatpush1.bf16.xpose.msra.mxu0 0
        %4765 = vmatprep.subr.bf16.mxu0 0
        %4766 = vmatpush1.bf16.xpose.msra.mxu0 0
        %4767 = vmatprep.subr.bf16.mxu0 0
        %4768 = vmatpush1.bf16.xpose.msra.mxu0 0
        %4769 = vmatprep.subr.bf16.mxu0 0
        %4770 = vmatpush1.bf16.xpose.msra.mxu0 0
        %4771 = vmatprep.subr.bf16.mxu0 0
        %4772 = vmatpush1.bf16.xpose.msra.mxu0 0
        %4773 = vmatprep.subr.bf16.mxu0 0
        %4774 = vmatpush1.bf16.xpose.msra.mxu0 0
        %4775 = vmatprep.subr.bf16.mxu0 0
        %4776 = vmatpush1.bf16.xpose.msra.mxu0 0
        %4777 = vmatprep.subr.bf16.mxu0 0
        %4778 = vmatpush1.bf16.xpose.msra.mxu0 0
        %4779 = vmatprep.mubr.bf16.mxu0 0
        %4780 = vmatmul.mubr.bf16.gmra.mrb[0].mxu0 %v4742
        %v4781 = vpop.f32.mrb[0].mxu0
        %v4782 = vadd.f32 0.0, %v4781
        %v4783 = vpop.f32.mrb[0].mxu0
        %v4784 = vpop.f32.mrb[0].mxu0
        %v4785 = vpop.f32.mrb[0].mxu0
        %4786 = vdwg.mxu0
        %v4787 = vmul.f32 %v4782, 0.17677669
        %v4788 = vadd.f32 %v4787, %v782
        %v4789 = vsel %vm785, %v4788, -inf
        %4790 = vmax.xlane.f32.xlu0 %v4789
        %v4791 = vpop.xlane.xlu0 %4790
        %v4792 = vsub.f32 %v4788, %v4791
        %v4793 = vmul.f32 %v4792, 1.442695
        %v4794 = vpow.pop %v4793
        %v4795 = vsel %vm785, %v4794, 0.0
        %4796 = vadd.xlane.f32.xlu0 %v4795
        %v4797 = vpop.xlane.xlu0 %4796
        %v4798 = vrcp.pop %v4797
        %v4799 = vmul.f32 %v4794, %v4798
        %v4800 = vpack.c.bf16 %v4799, %v4799
        %4801 = vrot.lane.b32.xlu0 %v4403, 64
        %v4802 = vpop.permute.xlu0 %4801
        %v4804 = vsel %vm785, %v4800, 0
        %v4807 = vsel %vm801, %v4802, 0
        %4809 = vmatprep.subr.bf16.mxu0 0
        %4810 = vmatpush1.bf16.msra.mxu0 %v4807
        %4811 = vmatprep.subr.bf16.mxu0 0
        %4812 = vmatpush1.bf16.msra.mxu0 0
        %4813 = vmatprep.subr.bf16.mxu0 0
        %4814 = vmatpush1.bf16.msra.mxu0 0
        %4815 = vmatprep.subr.bf16.mxu0 0
        %4816 = vmatpush1.bf16.msra.mxu0 0
        %4817 = vmatprep.subr.bf16.mxu0 0
        %4818 = vmatpush1.bf16.msra.mxu0 0
        %4819 = vmatprep.subr.bf16.mxu0 0
        %4820 = vmatpush1.bf16.msra.mxu0 0
        %4821 = vmatprep.subr.bf16.mxu0 0
        %4822 = vmatpush1.bf16.msra.mxu0 0
        %4823 = vmatprep.subr.bf16.mxu0 0
        %4824 = vmatpush1.bf16.msra.mxu0 0
        %4825 = vmatprep.subr.bf16.mxu0 0
        %4826 = vmatpush1.bf16.msra.mxu0 0
        %4827 = vmatprep.subr.bf16.mxu0 0
        %4828 = vmatpush1.bf16.msra.mxu0 0
        %4829 = vmatprep.subr.bf16.mxu0 0
        %4830 = vmatpush1.bf16.msra.mxu0 0
        %4831 = vmatprep.subr.bf16.mxu0 0
        %4832 = vmatpush1.bf16.msra.mxu0 0
        %4833 = vmatprep.subr.bf16.mxu0 0
        %4834 = vmatpush1.bf16.msra.mxu0 0
        %4835 = vmatprep.subr.bf16.mxu0 0
        %4836 = vmatpush1.bf16.msra.mxu0 0
        %4837 = vmatprep.subr.bf16.mxu0 0
        %4838 = vmatpush1.bf16.msra.mxu0 0
        %4839 = vmatprep.subr.bf16.mxu0 0
        %4840 = vmatpush1.bf16.msra.mxu0 0
        %4841 = vmatprep.mubr.bf16.mxu0 0
        %4842 = vmatmul.mubr.bf16.gmra.mrb[0].mxu0 %v4804
        %v4843 = vpop.f32.mrb[0].mxu0
        %v4844 = vadd.f32 0.0, %v4843
        %v4845 = vpop.f32.mrb[0].mxu0
        %v4846 = vpop.f32.mrb[0].mxu0
        %v4847 = vpop.f32.mrb[0].mxu0
        %4848 = vdwg.mxu0
        %v4849 = vpack.c.bf16 %v4844, %v4844
        %v4854 = vunpack.c.l.b16 %v4393
        %v4855 = vunpack.c.l.b16 %v4394
        %v4856 = vunpack.c.l.b16 %v4395
        %v4857 = vunpack.c.l.b16 %v4396
        %v4858 = vpack.c.b16 %v4855, %v4854
        %v4859 = vpack.c.b16 %v4857, %v4856
        %v4863 = vsel %vm730, %v4849, 0
        %4865 = vmatprep.subr.bf16.mxu0 0
        %4866 = vmatpush1.bf16.msra.mxu0 %v4858
        %4867 = vmatprep.subr.bf16.mxu0 0
        %4868 = vmatpush1.bf16.msra.mxu0 %v4859
        %4869 = vmatprep.subr.bf16.mxu0 0
        %4870 = vmatpush1.bf16.msra.mxu0 0
        %4871 = vmatprep.subr.bf16.mxu0 0
        %4872 = vmatpush1.bf16.msra.mxu0 0
        %4873 = vmatprep.subr.bf16.mxu0 0
        %4874 = vmatpush1.bf16.msra.mxu0 0
        %4875 = vmatprep.subr.bf16.mxu0 0
        %4876 = vmatpush1.bf16.msra.mxu0 0
        %4877 = vmatprep.subr.bf16.mxu0 0
        %4878 = vmatpush1.bf16.msra.mxu0 0
        %4879 = vmatprep.subr.bf16.mxu0 0
        %4880 = vmatpush1.bf16.msra.mxu0 0
        %4881 = vmatprep.subr.bf16.mxu0 0
        %4882 = vmatpush1.bf16.msra.mxu0 0
        %4883 = vmatprep.subr.bf16.mxu0 0
        %4884 = vmatpush1.bf16.msra.mxu0 0
        %4885 = vmatprep.subr.bf16.mxu0 0
        %4886 = vmatpush1.bf16.msra.mxu0 0
        %4887 = vmatprep.subr.bf16.mxu0 0
        %4888 = vmatpush1.bf16.msra.mxu0 0
        %4889 = vmatprep.subr.bf16.mxu0 0
        %4890 = vmatpush1.bf16.msra.mxu0 0
        %4891 = vmatprep.subr.bf16.mxu0 0
        %4892 = vmatpush1.bf16.msra.mxu0 0
        %4893 = vmatprep.subr.bf16.mxu0 0
        %4894 = vmatpush1.bf16.msra.mxu0 0
        %4895 = vmatprep.subr.bf16.mxu0 0
        %4896 = vmatpush1.bf16.msra.mxu0 0
        %4897 = vmatprep.mubr.bf16.mxu0 0
        %4898 = vmatmul.mubr.bf16.gmra.mrb[0].mxu0 %v4863
        %v4899 = vpop.f32.mrb[0].mxu0
        %v4900 = vadd.f32 0.0, %v4899
        %v4901 = vpop.f32.mrb[0].mxu0
        %v4902 = vpop.f32.mrb[0].mxu0
        %v4903 = vpop.f32.mrb[0].mxu0
        %4904 = vdwg.mxu0
        %v4905 = vadd.f32 %v4732, %v4900
        %4906 = vrot.lane.b32.xlu0 %v4401, 32
        %v4907 = vpop.permute.xlu0 %4906
        %4908 = vrot.lane.b32.xlu0 %v4402, 32
        %v4909 = vpop.permute.xlu0 %4908
        %v4911 = vsel %vm730, %v4907, 0
        %v4914 = vsel %vm730, %v4909, 0
        %4916 = vmatprep.subr.bf16.mxu0 0
        %4917 = vmatpush1.bf16.xpose.msra.mxu0 %v4914
        %4918 = vmatprep.subr.bf16.mxu0 0
        %4919 = vmatpush1.bf16.xpose.msra.mxu0 0
        %4920 = vmatprep.subr.bf16.mxu0 0
        %4921 = vmatpush1.bf16.xpose.msra.mxu0 0
        %4922 = vmatprep.subr.bf16.mxu0 0
        %4923 = vmatpush1.bf16.xpose.msra.mxu0 0
        %4924 = vmatprep.subr.bf16.mxu0 0
        %4925 = vmatpush1.bf16.xpose.msra.mxu0 0
        %4926 = vmatprep.subr.bf16.mxu0 0
        %4927 = vmatpush1.bf16.xpose.msra.mxu0 0
        %4928 = vmatprep.subr.bf16.mxu0 0
        %4929 = vmatpush1.bf16.xpose.msra.mxu0 0
        %4930 = vmatprep.subr.bf16.mxu0 0
        %4931 = vmatpush1.bf16.xpose.msra.mxu0 0
        %4932 = vmatprep.subr.bf16.mxu0 0
        %4933 = vmatpush1.bf16.xpose.msra.mxu0 0
        %4934 = vmatprep.subr.bf16.mxu0 0
        %4935 = vmatpush1.bf16.xpose.msra.mxu0 0
        %4936 = vmatprep.subr.bf16.mxu0 0
        %4937 = vmatpush1.bf16.xpose.msra.mxu0 0
        %4938 = vmatprep.subr.bf16.mxu0 0
        %4939 = vmatpush1.bf16.xpose.msra.mxu0 0
        %4940 = vmatprep.subr.bf16.mxu0 0
        %4941 = vmatpush1.bf16.xpose.msra.mxu0 0
        %4942 = vmatprep.subr.bf16.mxu0 0
        %4943 = vmatpush1.bf16.xpose.msra.mxu0 0
        %4944 = vmatprep.subr.bf16.mxu0 0
        %4945 = vmatpush1.bf16.xpose.msra.mxu0 0
        %4946 = vmatprep.subr.bf16.mxu0 0
        %4947 = vmatpush1.bf16.xpose.msra.mxu0 0
        %4948 = vmatprep.mubr.bf16.mxu0 0
        %4949 = vmatmul.mubr.bf16.gmra.mrb[0].mxu0 %v4911
        %v4950 = vpop.f32.mrb[0].mxu0
        %v4951 = vadd.f32 0.0, %v4950
        %v4952 = vpop.f32.mrb[0].mxu0
        %v4953 = vpop.f32.mrb[0].mxu0
        %v4954 = vpop.f32.mrb[0].mxu0
        %4955 = vdwg.mxu0
        %v4956 = vmul.f32 %v4951, 0.17677669
        %v4957 = vadd.f32 %v4956, %v782
        %v4958 = vsel %vm785, %v4957, -inf
        %4959 = vmax.xlane.f32.xlu0 %v4958
        %v4960 = vpop.xlane.xlu0 %4959
        %v4961 = vsub.f32 %v4957, %v4960
        %v4962 = vmul.f32 %v4961, 1.442695
        %v4963 = vpow.pop %v4962
        %v4964 = vsel %vm785, %v4963, 0.0
        %4965 = vadd.xlane.f32.xlu0 %v4964
        %v4966 = vpop.xlane.xlu0 %4965
        %v4967 = vrcp.pop %v4966
        %v4968 = vmul.f32 %v4963, %v4967
        %v4969 = vpack.c.bf16 %v4968, %v4968
        %4970 = vrot.lane.b32.xlu0 %v4403, 32
        %v4971 = vpop.permute.xlu0 %4970
        %v4973 = vsel %vm785, %v4969, 0
        %v4976 = vsel %vm801, %v4971, 0
        %4978 = vmatprep.subr.bf16.mxu0 0
        %4979 = vmatpush1.bf16.msra.mxu0 %v4976
        %4980 = vmatprep.subr.bf16.mxu0 0
        %4981 = vmatpush1.bf16.msra.mxu0 0
        %4982 = vmatprep.subr.bf16.mxu0 0
        %4983 = vmatpush1.bf16.msra.mxu0 0
        %4984 = vmatprep.subr.bf16.mxu0 0
        %4985 = vmatpush1.bf16.msra.mxu0 0
        %4986 = vmatprep.subr.bf16.mxu0 0
        %4987 = vmatpush1.bf16.msra.mxu0 0
        %4988 = vmatprep.subr.bf16.mxu0 0
        %4989 = vmatpush1.bf16.msra.mxu0 0
        %4990 = vmatprep.subr.bf16.mxu0 0
        %4991 = vmatpush1.bf16.msra.mxu0 0
        %4992 = vmatprep.subr.bf16.mxu0 0
        %4993 = vmatpush1.bf16.msra.mxu0 0
        %4994 = vmatprep.subr.bf16.mxu0 0
        %4995 = vmatpush1.bf16.msra.mxu0 0
        %4996 = vmatprep.subr.bf16.mxu0 0
        %4997 = vmatpush1.bf16.msra.mxu0 0
        %4998 = vmatprep.subr.bf16.mxu0 0
        %4999 = vmatpush1.bf16.msra.mxu0 0
        %5000 = vmatprep.subr.bf16.mxu0 0
        %5001 = vmatpush1.bf16.msra.mxu0 0
        %5002 = vmatprep.subr.bf16.mxu0 0
        %5003 = vmatpush1.bf16.msra.mxu0 0
        %5004 = vmatprep.subr.bf16.mxu0 0
        %5005 = vmatpush1.bf16.msra.mxu0 0
        %5006 = vmatprep.subr.bf16.mxu0 0
        %5007 = vmatpush1.bf16.msra.mxu0 0
        %5008 = vmatprep.subr.bf16.mxu0 0
        %5009 = vmatpush1.bf16.msra.mxu0 0
        %5010 = vmatprep.mubr.bf16.mxu0 0
        %5011 = vmatmul.mubr.bf16.gmra.mrb[0].mxu0 %v4973
        %v5012 = vpop.f32.mrb[0].mxu0
        %v5013 = vadd.f32 0.0, %v5012
        %v5014 = vpop.f32.mrb[0].mxu0
        %v5015 = vpop.f32.mrb[0].mxu0
        %v5016 = vpop.f32.mrb[0].mxu0
        %5017 = vdwg.mxu0
        %v5018 = vpack.c.bf16 %v5013, %v5013
        %v5023 = vunpack.c.l.b16 %v4397
        %v5024 = vunpack.c.l.b16 %v4398
        %v5025 = vunpack.c.l.b16 %v4399
        %v5026 = vunpack.c.l.b16 %v4400
        %v5027 = vpack.c.b16 %v5024, %v5023
        %v5028 = vpack.c.b16 %v5026, %v5025
        %v5032 = vsel %vm730, %v5018, 0
        %5034 = vmatprep.subr.bf16.mxu0 0
        %5035 = vmatpush1.bf16.msra.mxu0 %v5027
        %5036 = vmatprep.subr.bf16.mxu0 0
        %5037 = vmatpush1.bf16.msra.mxu0 %v5028
        %5038 = vmatprep.subr.bf16.mxu0 0
        %5039 = vmatpush1.bf16.msra.mxu0 0
        %5040 = vmatprep.subr.bf16.mxu0 0
        %5041 = vmatpush1.bf16.msra.mxu0 0
        %5042 = vmatprep.subr.bf16.mxu0 0
        %5043 = vmatpush1.bf16.msra.mxu0 0
        %5044 = vmatprep.subr.bf16.mxu0 0
        %5045 = vmatpush1.bf16.msra.mxu0 0
        %5046 = vmatprep.subr.bf16.mxu0 0
        %5047 = vmatpush1.bf16.msra.mxu0 0
        %5048 = vmatprep.subr.bf16.mxu0 0
        %5049 = vmatpush1.bf16.msra.mxu0 0
        %5050 = vmatprep.subr.bf16.mxu0 0
        %5051 = vmatpush1.bf16.msra.mxu0 0
        %5052 = vmatprep.subr.bf16.mxu0 0
        %5053 = vmatpush1.bf16.msra.mxu0 0
        %5054 = vmatprep.subr.bf16.mxu0 0
        %5055 = vmatpush1.bf16.msra.mxu0 0
        %5056 = vmatprep.subr.bf16.mxu0 0
        %5057 = vmatpush1.bf16.msra.mxu0 0
        %5058 = vmatprep.subr.bf16.mxu0 0
        %5059 = vmatpush1.bf16.msra.mxu0 0
        %5060 = vmatprep.subr.bf16.mxu0 0
        %5061 = vmatpush1.bf16.msra.mxu0 0
        %5062 = vmatprep.subr.bf16.mxu0 0
        %5063 = vmatpush1.bf16.msra.mxu0 0
        %5064 = vmatprep.subr.bf16.mxu0 0
        %5065 = vmatpush1.bf16.msra.mxu0 0
        %5066 = vmatprep.mubr.bf16.mxu0 0
        %5067 = vmatmul.mubr.bf16.gmra.mrb[0].mxu0 %v5032
        %v5068 = vpop.f32.mrb[0].mxu0
        %v5069 = vadd.f32 0.0, %v5068
        %v5070 = vpop.f32.mrb[0].mxu0
        %v5071 = vpop.f32.mrb[0].mxu0
        %v5072 = vpop.f32.mrb[0].mxu0
        %5073 = vdwg.mxu0
        %v5074 = vadd.f32 %v4905, %v5069
        %v5075 = vlaneseq
        %v5076 = vshrl.u32 %v5075, 7
        %v5077 = vsub.s32 3, %v5076
        %v5078 = vrot.slane %v4124, %v5077
        %v5079 = vadd.f32 %v5074, %v5078
        %v5080 = vadd.f32 %v4122, %v5079
        %5081 = vadd.xlane.f32.xlu0 %v5080
        %v5082 = vpop.xlane.xlu0 %5081
        %v5083 = vmul.f32 %v5082, %v1418
        %v5084 = vsub.f32 %v5080, %v5083
        %v5085 = vmul.f32 %v5084, %v5084
        %5086 = vadd.xlane.f32.xlu0 %v5085
        %v5087 = vpop.xlane.xlu0 %5086
        %v5088 = vmul.f32 %v5087, %v1418
        %v5089 = vadd.f32 %v5088, 1e-05
        %v5090 = vrsqrt.pop %v5089
        %v5091 = vmul.f32 %v5084, %v5090
        %v5092 = vlaneseq
        %v5093 = vshrl.u32 %v5092, 7
        %v5094 = vsub.s32 6, %v5093
        %v5095 = vrot.slane %v4124, %v5094
        %v5096 = vmul.f32 %v5091, %v5095
        %v5097 = vlaneseq
        %v5098 = vshrl.u32 %v5097, 7
        %v5099 = vsub.s32 7, %v5098
        %v5100 = vrot.slane %v4124, %v5099
        %v5101 = vadd.f32 %v5096, %v5100
        %v5102 = vpack.c.bf16 %v5101, %v5101
        %s5103 = scalar_lea.vmem [#allocation8], 192
        %v5104 = vld [vmem:[%s5103] sm:$0xf]
        %v5105 = vld [vmem:[%s5103 + $0x4] sm:$0xf]
        %v5106 = vld [vmem:[%s5103 + $0x8] sm:$0xf]
        %v5107 = vld [vmem:[%s5103 + $0xc] sm:$0xf]
        %v5108 = vld [vmem:[%s5103 + $0x10] sm:$0xf]
        %v5109 = vld [vmem:[%s5103 + $0x14] sm:$0xf]
        %v5110 = vld [vmem:[%s5103 + $0x18] sm:$0xf]
        %v5111 = vld [vmem:[%s5103 + $0x1c] sm:$0xf]
        %v5112 = vld [vmem:[%s5103 + $0x20] sm:$0xf]
        %v5113 = vld [vmem:[%s5103 + $0x24] sm:$0xf]
        %v5114 = vld [vmem:[%s5103 + $0x28] sm:$0xf]
        %v5115 = vld [vmem:[%s5103 + $0x2c] sm:$0xf]
        %v5116 = vld [vmem:[%s5103 + $0x30] sm:$0xf]
        %v5117 = vld [vmem:[%s5103 + $0x34] sm:$0xf]
        %v5118 = vld [vmem:[%s5103 + $0x38] sm:$0xf]
        %v5119 = vld [vmem:[%s5103 + $0x3c] sm:$0xf]
        %v5120 = vlaneseq
        %v5121 = vshrl.u32 %v5120, 7
        %v5122 = vsub.s32 4, %v5121
        %v5123 = vrot.slane %v4124, %v5122
        %v5140 = vunpack.c.l.b16 %v5104
        %v5141 = vunpack.c.l.b16 %v5105
        %v5142 = vunpack.c.l.b16 %v5106
        %v5143 = vunpack.c.l.b16 %v5107
        %v5144 = vunpack.c.l.b16 %v5108
        %v5145 = vunpack.c.l.b16 %v5109
        %v5146 = vunpack.c.l.b16 %v5110
        %v5147 = vunpack.c.l.b16 %v5111
        %v5148 = vunpack.c.l.b16 %v5112
        %v5149 = vunpack.c.l.b16 %v5113
        %v5150 = vunpack.c.l.b16 %v5114
        %v5151 = vunpack.c.l.b16 %v5115
        %v5152 = vunpack.c.l.b16 %v5116
        %v5153 = vunpack.c.l.b16 %v5117
        %v5154 = vunpack.c.l.b16 %v5118
        %v5155 = vunpack.c.l.b16 %v5119
        %v5156 = vpack.c.b16 %v5141, %v5140
        %v5157 = vpack.c.b16 %v5143, %v5142
        %v5158 = vpack.c.b16 %v5145, %v5144
        %v5159 = vpack.c.b16 %v5147, %v5146
        %v5160 = vpack.c.b16 %v5149, %v5148
        %v5161 = vpack.c.b16 %v5151, %v5150
        %v5162 = vpack.c.b16 %v5153, %v5152
        %v5163 = vpack.c.b16 %v5155, %v5154
        %5172 = vmatprep.subr.bf16.mxu0 0
        %5173 = vmatpush1.bf16.msra.mxu0 %v5156
        %5174 = vmatprep.subr.bf16.mxu0 0
        %5175 = vmatpush1.bf16.msra.mxu0 %v5157
        %5176 = vmatprep.subr.bf16.mxu0 0
        %5177 = vmatpush1.bf16.msra.mxu0 %v5158
        %5178 = vmatprep.subr.bf16.mxu0 0
        %5179 = vmatpush1.bf16.msra.mxu0 %v5159
        %5180 = vmatprep.subr.bf16.mxu0 0
        %5181 = vmatpush1.bf16.msra.mxu0 %v5160
        %5182 = vmatprep.subr.bf16.mxu0 0
        %5183 = vmatpush1.bf16.msra.mxu0 %v5161
        %5184 = vmatprep.subr.bf16.mxu0 0
        %5185 = vmatpush1.bf16.msra.mxu0 %v5162
        %5186 = vmatprep.subr.bf16.mxu0 0
        %5187 = vmatpush1.bf16.msra.mxu0 %v5163
        %5188 = vmatprep.subr.bf16.mxu0 0
        %5189 = vmatpush1.bf16.msra.mxu0 0
        %5190 = vmatprep.subr.bf16.mxu0 0
        %5191 = vmatpush1.bf16.msra.mxu0 0
        %5192 = vmatprep.subr.bf16.mxu0 0
        %5193 = vmatpush1.bf16.msra.mxu0 0
        %5194 = vmatprep.subr.bf16.mxu0 0
        %5195 = vmatpush1.bf16.msra.mxu0 0
        %5196 = vmatprep.subr.bf16.mxu0 0
        %5197 = vmatpush1.bf16.msra.mxu0 0
        %5198 = vmatprep.subr.bf16.mxu0 0
        %5199 = vmatpush1.bf16.msra.mxu0 0
        %5200 = vmatprep.subr.bf16.mxu0 0
        %5201 = vmatpush1.bf16.msra.mxu0 0
        %5202 = vmatprep.subr.bf16.mxu0 0
        %5203 = vmatpush1.bf16.msra.mxu0 0
        %5204 = vmatprep.mubr.bf16.mxu0 0
        %5205 = vmatmul.mubr.bf16.gmra.mrb[0].mxu0 %v5102
        %v5206 = vpop.f32.mrb[0].mxu0
        %v5207 = vadd.f32 %v5123, %v5206
        %v5208 = vpop.f32.mrb[0].mxu0
        %v5209 = vpop.f32.mrb[0].mxu0
        %v5210 = vpop.f32.mrb[0].mxu0
        %5211 = vdwg.mxu0
        %v5212 = vmax.f32 %v5207, 0.0
        %v5213 = vpack.c.bf16 %v5212, %v5212
        %s5214 = scalar_lea.vmem [#allocation10], 192
        %v5215 = vld [vmem:[%s5214] sm:$0xf]
        %v5216 = vld [vmem:[%s5214 + $0x4] sm:$0xf]
        %v5217 = vld [vmem:[%s5214 + $0x8] sm:$0xf]
        %v5218 = vld [vmem:[%s5214 + $0xc] sm:$0xf]
        %v5219 = vld [vmem:[%s5214 + $0x10] sm:$0xf]
        %v5220 = vld [vmem:[%s5214 + $0x14] sm:$0xf]
        %v5221 = vld [vmem:[%s5214 + $0x18] sm:$0xf]
        %v5222 = vld [vmem:[%s5214 + $0x1c] sm:$0xf]
        %v5223 = vld [vmem:[%s5214 + $0x20] sm:$0xf]
        %v5224 = vld [vmem:[%s5214 + $0x24] sm:$0xf]
        %v5225 = vld [vmem:[%s5214 + $0x28] sm:$0xf]
        %v5226 = vld [vmem:[%s5214 + $0x2c] sm:$0xf]
        %v5227 = vld [vmem:[%s5214 + $0x30] sm:$0xf]
        %v5228 = vld [vmem:[%s5214 + $0x34] sm:$0xf]
        %v5229 = vld [vmem:[%s5214 + $0x38] sm:$0xf]
        %v5230 = vld [vmem:[%s5214 + $0x3c] sm:$0xf]
        %v5231 = vlaneseq
        %v5232 = vshrl.u32 %v5231, 7
        %v5233 = vsub.s32 5, %v5232
        %v5234 = vrot.slane %v4124, %v5233
        %v5251 = vunpack.c.l.b16 %v5215
        %v5252 = vunpack.c.l.b16 %v5216
        %v5253 = vunpack.c.l.b16 %v5217
        %v5254 = vunpack.c.l.b16 %v5218
        %v5255 = vunpack.c.l.b16 %v5219
        %v5256 = vunpack.c.l.b16 %v5220
        %v5257 = vunpack.c.l.b16 %v5221
        %v5258 = vunpack.c.l.b16 %v5222
        %v5259 = vunpack.c.l.b16 %v5223
        %v5260 = vunpack.c.l.b16 %v5224
        %v5261 = vunpack.c.l.b16 %v5225
        %v5262 = vunpack.c.l.b16 %v5226
        %v5263 = vunpack.c.l.b16 %v5227
        %v5264 = vunpack.c.l.b16 %v5228
        %v5265 = vunpack.c.l.b16 %v5229
        %v5266 = vunpack.c.l.b16 %v5230
        %v5267 = vpack.c.b16 %v5252, %v5251
        %v5268 = vpack.c.b16 %v5254, %v5253
        %v5269 = vpack.c.b16 %v5256, %v5255
        %v5270 = vpack.c.b16 %v5258, %v5257
        %v5271 = vpack.c.b16 %v5260, %v5259
        %v5272 = vpack.c.b16 %v5262, %v5261
        %v5273 = vpack.c.b16 %v5264, %v5263
        %v5274 = vpack.c.b16 %v5266, %v5265
        %5283 = vmatprep.subr.bf16.mxu0 0
        %5284 = vmatpush1.bf16.msra.mxu0 %v5267
        %5285 = vmatprep.subr.bf16.mxu0 0
        %5286 = vmatpush1.bf16.msra.mxu0 %v5268
        %5287 = vmatprep.subr.bf16.mxu0 0
        %5288 = vmatpush1.bf16.msra.mxu0 %v5269
        %5289 = vmatprep.subr.bf16.mxu0 0
        %5290 = vmatpush1.bf16.msra.mxu0 %v5270
        %5291 = vmatprep.subr.bf16.mxu0 0
        %5292 = vmatpush1.bf16.msra.mxu0 %v5271
        %5293 = vmatprep.subr.bf16.mxu0 0
        %5294 = vmatpush1.bf16.msra.mxu0 %v5272
        %5295 = vmatprep.subr.bf16.mxu0 0
        %5296 = vmatpush1.bf16.msra.mxu0 %v5273
        %5297 = vmatprep.subr.bf16.mxu0 0
        %5298 = vmatpush1.bf16.msra.mxu0 %v5274
        %5299 = vmatprep.subr.bf16.mxu0 0
        %5300 = vmatpush1.bf16.msra.mxu0 0
        %5301 = vmatprep.subr.bf16.mxu0 0
        %5302 = vmatpush1.bf16.msra.mxu0 0
        %5303 = vmatprep.subr.bf16.mxu0 0
        %5304 = vmatpush1.bf16.msra.mxu0 0
        %5305 = vmatprep.subr.bf16.mxu0 0
        %5306 = vmatpush1.bf16.msra.mxu0 0
        %5307 = vmatprep.subr.bf16.mxu0 0
        %5308 = vmatpush1.bf16.msra.mxu0 0
        %5309 = vmatprep.subr.bf16.mxu0 0
        %5310 = vmatpush1.bf16.msra.mxu0 0
        %5311 = vmatprep.subr.bf16.mxu0 0
        %5312 = vmatpush1.bf16.msra.mxu0 0
        %5313 = vmatprep.subr.bf16.mxu0 0
        %5314 = vmatpush1.bf16.msra.mxu0 0
        %5315 = vmatprep.mubr.bf16.mxu0 0
        %5316 = vmatmul.mubr.bf16.gmra.mrb[0].mxu0 %v5213
        %v5317 = vpop.f32.mrb[0].mxu0
        %v5318 = vadd.f32 %v5234, %v5317
        %v5319 = vpop.f32.mrb[0].mxu0
        %v5320 = vpop.f32.mrb[0].mxu0
        %v5321 = vpop.f32.mrb[0].mxu0
        %5322 = vdwg.mxu0
        %v5323 = vadd.f32 %v5101, %v5318
        %5324 = vadd.xlane.f32.xlu0 %v5323
        %v5325 = vpop.xlane.xlu0 %5324
        %v5326 = vmul.f32 %v5325, %v1418
        %v5327 = vsub.f32 %v5323, %v5326
        %v5328 = vmul.f32 %v5327, %v5327
        %5329 = vadd.xlane.f32.xlu0 %v5328
        %v5330 = vpop.xlane.xlu0 %5329
        %v5331 = vmul.f32 %v5330, %v1418
        %v5332 = vadd.f32 %v5331, 1e-05
        %v5333 = vrsqrt.pop %v5332
        %v5334 = vmul.f32 %v5327, %v5333
        %v5335 = vlaneseq
        %v5336 = vshrl.u32 %v5335, 7
        %v5337 = vsub.s32 0, %v5336
        %v5338 = vrot.slane %v4125, %v5337
        %v5339 = vmul.f32 %v5334, %v5338
        %v5340 = vlaneseq
        %v5341 = vshrl.u32 %v5340, 7
        %v5342 = vsub.s32 1, %v5341
        %v5343 = vrot.slane %v4125, %v5342
        %v5344 = vadd.f32 %v5339, %v5343
        %s5345 = scalar_lea.vmem [#allocation11], 64
        %v5346 = vld [vmem:[%s5345] sm:$0xff]
        %v5347 = vld [vmem:[%s5345 + $0x8] sm:$0xff]
        %v5348 = vpack.c.bf16 %v5344, %v5344
        %s5349 = scalar_lea.vmem [#allocation5], 768
        %v5350 = vld [vmem:[%s5349] sm:$0xff]
        %v5351 = vld [vmem:[%s5349 + $0x8] sm:$0xf]
        %v5352 = vld [vmem:[%s5349 + $0xc] sm:$0xff]
        %v5353 = vld [vmem:[%s5349 + $0x14] sm:$0xf]
        %v5354 = vld [vmem:[%s5349 + $0x18] sm:$0xff]
        %v5355 = vld [vmem:[%s5349 + $0x20] sm:$0xf]
        %v5356 = vld [vmem:[%s5349 + $0x24] sm:$0xff]
        %v5357 = vld [vmem:[%s5349 + $0x2c] sm:$0xf]
        %v5358 = vld [vmem:[%s5349 + $0x30] sm:$0xff]
        %v5359 = vld [vmem:[%s5349 + $0x38] sm:$0xf]
        %v5360 = vld [vmem:[%s5349 + $0x3c] sm:$0xff]
        %v5361 = vld [vmem:[%s5349 + $0x44] sm:$0xf]
        %v5362 = vld [vmem:[%s5349 + $0x48] sm:$0xff]
        %v5363 = vld [vmem:[%s5349 + $0x50] sm:$0xf]
        %v5364 = vld [vmem:[%s5349 + $0x54] sm:$0xff]
        %v5365 = vld [vmem:[%s5349 + $0x5c] sm:$0xf]
        %v5366 = vld [vmem:[%s5349 + $0x60] sm:$0xff]
        %v5367 = vld [vmem:[%s5349 + $0x68] sm:$0xf]
        %v5368 = vld [vmem:[%s5349 + $0x6c] sm:$0xff]
        %v5369 = vld [vmem:[%s5349 + $0x74] sm:$0xf]
        %v5370 = vld [vmem:[%s5349 + $0x78] sm:$0xff]
        %v5371 = vld [vmem:[%s5349 + $0x80] sm:$0xf]
        %v5372 = vld [vmem:[%s5349 + $0x84] sm:$0xff]
        %v5373 = vld [vmem:[%s5349 + $0x8c] sm:$0xf]
        %v5374 = vld [vmem:[%s5349 + $0x90] sm:$0xff]
        %v5375 = vld [vmem:[%s5349 + $0x98] sm:$0xf]
        %v5376 = vld [vmem:[%s5349 + $0x9c] sm:$0xff]
        %v5377 = vld [vmem:[%s5349 + $0xa4] sm:$0xf]
        %v5378 = vld [vmem:[%s5349 + $0xa8] sm:$0xff]
        %v5379 = vld [vmem:[%s5349 + $0xb0] sm:$0xf]
        %v5380 = vld [vmem:[%s5349 + $0xb4] sm:$0xff]
        %v5381 = vld [vmem:[%s5349 + $0xbc] sm:$0xf]
        %v5414 = vunpack.c.l.b16 %v5350
        %v5415 = vunpack.c.h.b16 %v5350
        %v5416 = vunpack.c.l.b16 %v5351
        %v5417 = vunpack.c.l.b16 %v5352
        %v5418 = vunpack.c.h.b16 %v5352
        %v5419 = vunpack.c.l.b16 %v5353
        %v5420 = vunpack.c.l.b16 %v5354
        %v5421 = vunpack.c.h.b16 %v5354
        %v5422 = vunpack.c.l.b16 %v5355
        %v5423 = vunpack.c.l.b16 %v5356
        %v5424 = vunpack.c.h.b16 %v5356
        %v5425 = vunpack.c.l.b16 %v5357
        %v5426 = vunpack.c.l.b16 %v5358
        %v5427 = vunpack.c.h.b16 %v5358
        %v5428 = vunpack.c.l.b16 %v5359
        %v5429 = vunpack.c.l.b16 %v5360
        %v5430 = vunpack.c.h.b16 %v5360
        %v5431 = vunpack.c.l.b16 %v5361
        %v5432 = vunpack.c.l.b16 %v5362
        %v5433 = vunpack.c.h.b16 %v5362
        %v5434 = vunpack.c.l.b16 %v5363
        %v5435 = vunpack.c.l.b16 %v5364
        %v5436 = vunpack.c.h.b16 %v5364
        %v5437 = vunpack.c.l.b16 %v5365
        %v5438 = vunpack.c.l.b16 %v5366
        %v5439 = vunpack.c.h.b16 %v5366
        %v5440 = vunpack.c.l.b16 %v5367
        %v5441 = vunpack.c.l.b16 %v5368
        %v5442 = vunpack.c.h.b16 %v5368
        %v5443 = vunpack.c.l.b16 %v5369
        %v5444 = vunpack.c.l.b16 %v5370
        %v5445 = vunpack.c.h.b16 %v5370
        %v5446 = vunpack.c.l.b16 %v5371
        %v5447 = vunpack.c.l.b16 %v5372
        %v5448 = vunpack.c.h.b16 %v5372
        %v5449 = vunpack.c.l.b16 %v5373
        %v5450 = vunpack.c.l.b16 %v5374
        %v5451 = vunpack.c.h.b16 %v5374
        %v5452 = vunpack.c.l.b16 %v5375
        %v5453 = vunpack.c.l.b16 %v5376
        %v5454 = vunpack.c.h.b16 %v5376
        %v5455 = vunpack.c.l.b16 %v5377
        %v5456 = vunpack.c.l.b16 %v5378
        %v5457 = vunpack.c.h.b16 %v5378
        %v5458 = vunpack.c.l.b16 %v5379
        %v5459 = vunpack.c.l.b16 %v5380
        %v5460 = vunpack.c.h.b16 %v5380
        %v5461 = vunpack.c.l.b16 %v5381
        %v5462 = vpack.c.b16 %v5417, %v5414
        %v5463 = vpack.c.b16 %v5418, %v5415
        %v5464 = vpack.c.b16 %v5419, %v5416
        %v5465 = vpack.c.b16 %v5423, %v5420
        %v5466 = vpack.c.b16 %v5424, %v5421
        %v5467 = vpack.c.b16 %v5425, %v5422
        %v5468 = vpack.c.b16 %v5429, %v5426
        %v5469 = vpack.c.b16 %v5430, %v5427
        %v5470 = vpack.c.b16 %v5431, %v5428
        %v5471 = vpack.c.b16 %v5435, %v5432
        %v5472 = vpack.c.b16 %v5436, %v5433
        %v5473 = vpack.c.b16 %v5437, %v5434
        %v5474 = vpack.c.b16 %v5441, %v5438
        %v5475 = vpack.c.b16 %v5442, %v5439
        %v5476 = vpack.c.b16 %v5443, %v5440
        %v5477 = vpack.c.b16 %v5447, %v5444
        %v5478 = vpack.c.b16 %v5448, %v5445
        %v5479 = vpack.c.b16 %v5449, %v5446
        %v5480 = vpack.c.b16 %v5453, %v5450
        %v5481 = vpack.c.b16 %v5454, %v5451
        %v5482 = vpack.c.b16 %v5455, %v5452
        %v5483 = vpack.c.b16 %v5459, %v5456
        %v5484 = vpack.c.b16 %v5460, %v5457
        %v5485 = vpack.c.b16 %v5461, %v5458
        %5510 = vmatprep.subr.bf16.mxu0 %v5463
        %5511 = vmatpush1.bf16.msra.mxu0 %v5462
        %5512 = vmatprep.subr.bf16.mxu0 %v5466
        %5513 = vmatpush1.bf16.msra.mxu0 %v5465
        %5514 = vmatprep.subr.bf16.mxu0 %v5469
        %5515 = vmatpush1.bf16.msra.mxu0 %v5468
        %5516 = vmatprep.subr.bf16.mxu0 %v5472
        %5517 = vmatpush1.bf16.msra.mxu0 %v5471
        %5518 = vmatprep.subr.bf16.mxu0 %v5475
        %5519 = vmatpush1.bf16.msra.mxu0 %v5474
        %5520 = vmatprep.subr.bf16.mxu0 %v5478
        %5521 = vmatpush1.bf16.msra.mxu0 %v5477
        %5522 = vmatprep.subr.bf16.mxu0 %v5481
        %5523 = vmatpush1.bf16.msra.mxu0 %v5480
        %5524 = vmatprep.subr.bf16.mxu0 %v5484
        %5525 = vmatpush1.bf16.msra.mxu0 %v5483
        %5526 = vmatprep.subr.bf16.mxu0 0
        %5527 = vmatpush1.bf16.msra.mxu0 0
        %5528 = vmatprep.subr.bf16.mxu0 0
        %5529 = vmatpush1.bf16.msra.mxu0 0
        %5530 = vmatprep.subr.bf16.mxu0 0
        %5531 = vmatpush1.bf16.msra.mxu0 0
        %5532 = vmatprep.subr.bf16.mxu0 0
        %5533 = vmatpush1.bf16.msra.mxu0 0
        %5534 = vmatprep.subr.bf16.mxu0 0
        %5535 = vmatpush1.bf16.msra.mxu0 0
        %5536 = vmatprep.subr.bf16.mxu0 0
        %5537 = vmatpush1.bf16.msra.mxu0 0
        %5538 = vmatprep.subr.bf16.mxu0 0
        %5539 = vmatpush1.bf16.msra.mxu0 0
        %5540 = vmatprep.subr.bf16.mxu0 0
        %5541 = vmatpush1.bf16.msra.mxu0 0
        %5542 = vmatprep.mubr.bf16.mxu0 0
        %5543 = vmatmul.mubr.bf16.gmra.mrb[0].mxu0 %v5348
        %v5544 = vpop.f32.mrb[0].mxu0
        %v5545 = vadd.f32 0.0, %v5544
        %v5546 = vpop.f32.mrb[0].mxu0
        %v5547 = vadd.f32 0.0, %v5546
        %v5548 = vpop.f32.mrb[0].mxu0
        %v5549 = vpop.f32.mrb[0].mxu0
        %5550 = vdwg.mxu0
        %5551 = vmatprep.subr.bf16.mxu0 0
        %5552 = vmatpush1.bf16.msra.mxu0 %v5464
        %5553 = vmatprep.subr.bf16.mxu0 0
        %5554 = vmatpush1.bf16.msra.mxu0 %v5467
        %5555 = vmatprep.subr.bf16.mxu0 0
        %5556 = vmatpush1.bf16.msra.mxu0 %v5470
        %5557 = vmatprep.subr.bf16.mxu0 0
        %5558 = vmatpush1.bf16.msra.mxu0 %v5473
        %5559 = vmatprep.subr.bf16.mxu0 0
        %5560 = vmatpush1.bf16.msra.mxu0 %v5476
        %5561 = vmatprep.subr.bf16.mxu0 0
        %5562 = vmatpush1.bf16.msra.mxu0 %v5479
        %5563 = vmatprep.subr.bf16.mxu0 0
        %5564 = vmatpush1.bf16.msra.mxu0 %v5482
        %5565 = vmatprep.subr.bf16.mxu0 0
        %5566 = vmatpush1.bf16.msra.mxu0 %v5485
        %5567 = vmatprep.subr.bf16.mxu0 0
        %5568 = vmatpush1.bf16.msra.mxu0 0
        %5569 = vmatprep.subr.bf16.mxu0 0
        %5570 = vmatpush1.bf16.msra.mxu0 0
        %5571 = vmatprep.subr.bf16.mxu0 0
        %5572 = vmatpush1.bf16.msra.mxu0 0
        %5573 = vmatprep.subr.bf16.mxu0 0
        %5574 = vmatpush1.bf16.msra.mxu0 0
        %5575 = vmatprep.subr.bf16.mxu0 0
        %5576 = vmatpush1.bf16.msra.mxu0 0
        %5577 = vmatprep.subr.bf16.mxu0 0
        %5578 = vmatpush1.bf16.msra.mxu0 0
        %5579 = vmatprep.subr.bf16.mxu0 0
        %5580 = vmatpush1.bf16.msra.mxu0 0
        %5581 = vmatprep.subr.bf16.mxu0 0
        %5582 = vmatpush1.bf16.msra.mxu0 0
        %5583 = vmatprep.mubr.bf16.mxu0 0
        %5584 = vmatmul.mubr.bf16.gmra.mrb[0].mxu0 %v5348
        %v5585 = vpop.f32.mrb[0].mxu0
        %v5586 = vadd.f32 0.0, %v5585
        %v5587 = vpop.f32.mrb[0].mxu0
        %v5588 = vpop.f32.mrb[0].mxu0
        %v5589 = vpop.f32.mrb[0].mxu0
        %5590 = vdwg.mxu0
        %v5591 = vlaneseq
        %v5592 = vshrl.u32 %v5591, 7
        %v5593 = vsub.s32 0, %v5592
        %v5594 = vrot.slane %v5346, %v5593
        %v5595 = vadd.f32 %v5545, %v5594
        %v5596 = vlaneseq
        %v5597 = vshrl.u32 %v5596, 7
        %v5598 = vsub.s32 1, %v5597
        %v5599 = vrot.slane %v5346, %v5598
        %v5600 = vadd.f32 %v5547, %v5599
        %v5601 = vlaneseq
        %v5602 = vshrl.u32 %v5601, 7
        %v5603 = vsub.s32 2, %v5602
        %v5604 = vrot.slane %v5346, %v5603
        %v5605 = vadd.f32 %v5586, %v5604
        %s5606 = scalar_lea.vmem [#allocation7], 256
        %v5607 = vld [vmem:[%s5606] sm:$0xf]
        %v5608 = vld [vmem:[%s5606 + $0x4] sm:$0xf]
        %v5609 = vld [vmem:[%s5606 + $0x8] sm:$0xf]
        %v5610 = vld [vmem:[%s5606 + $0xc] sm:$0xf]
        %v5611 = vld [vmem:[%s5606 + $0x10] sm:$0xf]
        %v5612 = vld [vmem:[%s5606 + $0x14] sm:$0xf]
        %v5613 = vld [vmem:[%s5606 + $0x18] sm:$0xf]
        %v5614 = vld [vmem:[%s5606 + $0x1c] sm:$0xf]
        %v5615 = vld [vmem:[%s5606 + $0x20] sm:$0xf]
        %v5616 = vld [vmem:[%s5606 + $0x24] sm:$0xf]
        %v5617 = vld [vmem:[%s5606 + $0x28] sm:$0xf]
        %v5618 = vld [vmem:[%s5606 + $0x2c] sm:$0xf]
        %v5619 = vld [vmem:[%s5606 + $0x30] sm:$0xf]
        %v5620 = vld [vmem:[%s5606 + $0x34] sm:$0xf]
        %v5621 = vld [vmem:[%s5606 + $0x38] sm:$0xf]
        %v5622 = vld [vmem:[%s5606 + $0x3c] sm:$0xf]
        %v5623 = vpack.c.bf16 %v5595, %v5595
        %v5624 = vpack.c.bf16 %v5600, %v5600
        %v5625 = vpack.c.bf16 %v5605, %v5605
        %v5627 = vsel %vm730, %v5623, 0
        %v5630 = vsel %vm730, %v5624, 0
        %5632 = vmatprep.subr.bf16.mxu0 0
        %5633 = vmatpush1.bf16.xpose.msra.mxu0 %v5630
        %5634 = vmatprep.subr.bf16.mxu0 0
        %5635 = vmatpush1.bf16.xpose.msra.mxu0 0
        %5636 = vmatprep.subr.bf16.mxu0 0
        %5637 = vmatpush1.bf16.xpose.msra.mxu0 0
        %5638 = vmatprep.subr.bf16.mxu0 0
        %5639 = vmatpush1.bf16.xpose.msra.mxu0 0
        %5640 = vmatprep.subr.bf16.mxu0 0
        %5641 = vmatpush1.bf16.xpose.msra.mxu0 0
        %5642 = vmatprep.subr.bf16.mxu0 0
        %5643 = vmatpush1.bf16.xpose.msra.mxu0 0
        %5644 = vmatprep.subr.bf16.mxu0 0
        %5645 = vmatpush1.bf16.xpose.msra.mxu0 0
        %5646 = vmatprep.subr.bf16.mxu0 0
        %5647 = vmatpush1.bf16.xpose.msra.mxu0 0
        %5648 = vmatprep.subr.bf16.mxu0 0
        %5649 = vmatpush1.bf16.xpose.msra.mxu0 0
        %5650 = vmatprep.subr.bf16.mxu0 0
        %5651 = vmatpush1.bf16.xpose.msra.mxu0 0
        %5652 = vmatprep.subr.bf16.mxu0 0
        %5653 = vmatpush1.bf16.xpose.msra.mxu0 0
        %5654 = vmatprep.subr.bf16.mxu0 0
        %5655 = vmatpush1.bf16.xpose.msra.mxu0 0
        %5656 = vmatprep.subr.bf16.mxu0 0
        %5657 = vmatpush1.bf16.xpose.msra.mxu0 0
        %5658 = vmatprep.subr.bf16.mxu0 0
        %5659 = vmatpush1.bf16.xpose.msra.mxu0 0
        %5660 = vmatprep.subr.bf16.mxu0 0
        %5661 = vmatpush1.bf16.xpose.msra.mxu0 0
        %5662 = vmatprep.subr.bf16.mxu0 0
        %5663 = vmatpush1.bf16.xpose.msra.mxu0 0
        %5664 = vmatprep.mubr.bf16.mxu0 0
        %5665 = vmatmul.mubr.bf16.gmra.mrb[0].mxu0 %v5627
        %v5666 = vpop.f32.mrb[0].mxu0
        %v5667 = vadd.f32 0.0, %v5666
        %v5668 = vpop.f32.mrb[0].mxu0
        %v5669 = vpop.f32.mrb[0].mxu0
        %v5670 = vpop.f32.mrb[0].mxu0
        %5671 = vdwg.mxu0
        %v5672 = vmul.f32 %v5667, 0.17677669
        %v5673 = vadd.f32 %v5672, %v782
        %v5674 = vsel %vm785, %v5673, -inf
        %5675 = vmax.xlane.f32.xlu0 %v5674
        %v5676 = vpop.xlane.xlu0 %5675
        %v5677 = vsub.f32 %v5673, %v5676
        %v5678 = vmul.f32 %v5677, 1.442695
        %v5679 = vpow.pop %v5678
        %v5680 = vsel %vm785, %v5679, 0.0
        %5681 = vadd.xlane.f32.xlu0 %v5680
        %v5682 = vpop.xlane.xlu0 %5681
        %v5683 = vrcp.pop %v5682
        %v5684 = vmul.f32 %v5679, %v5683
        %v5685 = vpack.c.bf16 %v5684, %v5684
        %v5687 = vsel %vm785, %v5685, 0
        %v5690 = vsel %vm801, %v5625, 0
        %5692 = vmatprep.subr.bf16.mxu0 0
        %5693 = vmatpush1.bf16.msra.mxu0 %v5690
        %5694 = vmatprep.subr.bf16.mxu0 0
        %5695 = vmatpush1.bf16.msra.mxu0 0
        %5696 = vmatprep.subr.bf16.mxu0 0
        %5697 = vmatpush1.bf16.msra.mxu0 0
        %5698 = vmatprep.subr.bf16.mxu0 0
        %5699 = vmatpush1.bf16.msra.mxu0 0
        %5700 = vmatprep.subr.bf16.mxu0 0
        %5701 = vmatpush1.bf16.msra.mxu0 0
        %5702 = vmatprep.subr.bf16.mxu0 0
        %5703 = vmatpush1.bf16.msra.mxu0 0
        %5704 = vmatprep.subr.bf16.mxu0 0
        %5705 = vmatpush1.bf16.msra.mxu0 0
        %5706 = vmatprep.subr.bf16.mxu0 0
        %5707 = vmatpush1.bf16.msra.mxu0 0
        %5708 = vmatprep.subr.bf16.mxu0 0
        %5709 = vmatpush1.bf16.msra.mxu0 0
        %5710 = vmatprep.subr.bf16.mxu0 0
        %5711 = vmatpush1.bf16.msra.mxu0 0
        %5712 = vmatprep.subr.bf16.mxu0 0
        %5713 = vmatpush1.bf16.msra.mxu0 0
        %5714 = vmatprep.subr.bf16.mxu0 0
        %5715 = vmatpush1.bf16.msra.mxu0 0
        %5716 = vmatprep.subr.bf16.mxu0 0
        %5717 = vmatpush1.bf16.msra.mxu0 0
        %5718 = vmatprep.subr.bf16.mxu0 0
        %5719 = vmatpush1.bf16.msra.mxu0 0
        %5720 = vmatprep.subr.bf16.mxu0 0
        %5721 = vmatpush1.bf16.msra.mxu0 0
        %5722 = vmatprep.subr.bf16.mxu0 0
        %5723 = vmatpush1.bf16.msra.mxu0 0
        %5724 = vmatprep.mubr.bf16.mxu0 0
        %5725 = vmatmul.mubr.bf16.gmra.mrb[0].mxu0 %v5687
        %v5726 = vpop.f32.mrb[0].mxu0
        %v5727 = vadd.f32 0.0, %v5726
        %v5728 = vpop.f32.mrb[0].mxu0
        %v5729 = vpop.f32.mrb[0].mxu0
        %v5730 = vpop.f32.mrb[0].mxu0
        %5731 = vdwg.mxu0
        %v5732 = vpack.c.bf16 %v5727, %v5727
        %5734 = vrot.lane.b32.xlu0 %v5623, 96
        %v5735 = vpop.permute.xlu0 %5734
        %5737 = vrot.lane.b32.xlu0 %v5624, 96
        %v5738 = vpop.permute.xlu0 %5737
        %v5740 = vsel %vm730, %v5735, 0
        %v5743 = vsel %vm730, %v5738, 0
        %5745 = vmatprep.subr.bf16.mxu0 0
        %5746 = vmatpush1.bf16.xpose.msra.mxu0 %v5743
        %5747 = vmatprep.subr.bf16.mxu0 0
        %5748 = vmatpush1.bf16.xpose.msra.mxu0 0
        %5749 = vmatprep.subr.bf16.mxu0 0
        %5750 = vmatpush1.bf16.xpose.msra.mxu0 0
        %5751 = vmatprep.subr.bf16.mxu0 0
        %5752 = vmatpush1.bf16.xpose.msra.mxu0 0
        %5753 = vmatprep.subr.bf16.mxu0 0
        %5754 = vmatpush1.bf16.xpose.msra.mxu0 0
        %5755 = vmatprep.subr.bf16.mxu0 0
        %5756 = vmatpush1.bf16.xpose.msra.mxu0 0
        %5757 = vmatprep.subr.bf16.mxu0 0
        %5758 = vmatpush1.bf16.xpose.msra.mxu0 0
        %5759 = vmatprep.subr.bf16.mxu0 0
        %5760 = vmatpush1.bf16.xpose.msra.mxu0 0
        %5761 = vmatprep.subr.bf16.mxu0 0
        %5762 = vmatpush1.bf16.xpose.msra.mxu0 0
        %5763 = vmatprep.subr.bf16.mxu0 0
        %5764 = vmatpush1.bf16.xpose.msra.mxu0 0
        %5765 = vmatprep.subr.bf16.mxu0 0
        %5766 = vmatpush1.bf16.xpose.msra.mxu0 0
        %5767 = vmatprep.subr.bf16.mxu0 0
        %5768 = vmatpush1.bf16.xpose.msra.mxu0 0
        %5769 = vmatprep.subr.bf16.mxu0 0
        %5770 = vmatpush1.bf16.xpose.msra.mxu0 0
        %5771 = vmatprep.subr.bf16.mxu0 0
        %5772 = vmatpush1.bf16.xpose.msra.mxu0 0
        %5773 = vmatprep.subr.bf16.mxu0 0
        %5774 = vmatpush1.bf16.xpose.msra.mxu0 0
        %5775 = vmatprep.subr.bf16.mxu0 0
        %5776 = vmatpush1.bf16.xpose.msra.mxu0 0
        %5777 = vmatprep.mubr.bf16.mxu0 0
        %5778 = vmatmul.mubr.bf16.gmra.mrb[0].mxu0 %v5740
        %v5779 = vpop.f32.mrb[0].mxu0
        %v5780 = vadd.f32 0.0, %v5779
        %v5781 = vpop.f32.mrb[0].mxu0
        %v5782 = vpop.f32.mrb[0].mxu0
        %v5783 = vpop.f32.mrb[0].mxu0
        %5784 = vdwg.mxu0
        %v5785 = vmul.f32 %v5780, 0.17677669
        %v5786 = vadd.f32 %v5785, %v782
        %v5787 = vsel %vm785, %v5786, -inf
        %5788 = vmax.xlane.f32.xlu0 %v5787
        %v5789 = vpop.xlane.xlu0 %5788
        %v5790 = vsub.f32 %v5786, %v5789
        %v5791 = vmul.f32 %v5790, 1.442695
        %v5792 = vpow.pop %v5791
        %v5793 = vsel %vm785, %v5792, 0.0
        %5794 = vadd.xlane.f32.xlu0 %v5793
        %v5795 = vpop.xlane.xlu0 %5794
        %v5796 = vrcp.pop %v5795
        %v5797 = vmul.f32 %v5792, %v5796
        %v5798 = vpack.c.bf16 %v5797, %v5797
        %5800 = vrot.lane.b32.xlu0 %v5625, 96
        %v5801 = vpop.permute.xlu0 %5800
        %v5803 = vsel %vm785, %v5798, 0
        %v5806 = vsel %vm801, %v5801, 0
        %5808 = vmatprep.subr.bf16.mxu0 0
        %5809 = vmatpush1.bf16.msra.mxu0 %v5806
        %5810 = vmatprep.subr.bf16.mxu0 0
        %5811 = vmatpush1.bf16.msra.mxu0 0
        %5812 = vmatprep.subr.bf16.mxu0 0
        %5813 = vmatpush1.bf16.msra.mxu0 0
        %5814 = vmatprep.subr.bf16.mxu0 0
        %5815 = vmatpush1.bf16.msra.mxu0 0
        %5816 = vmatprep.subr.bf16.mxu0 0
        %5817 = vmatpush1.bf16.msra.mxu0 0
        %5818 = vmatprep.subr.bf16.mxu0 0
        %5819 = vmatpush1.bf16.msra.mxu0 0
        %5820 = vmatprep.subr.bf16.mxu0 0
        %5821 = vmatpush1.bf16.msra.mxu0 0
        %5822 = vmatprep.subr.bf16.mxu0 0
        %5823 = vmatpush1.bf16.msra.mxu0 0
        %5824 = vmatprep.subr.bf16.mxu0 0
        %5825 = vmatpush1.bf16.msra.mxu0 0
        %5826 = vmatprep.subr.bf16.mxu0 0
        %5827 = vmatpush1.bf16.msra.mxu0 0
        %5828 = vmatprep.subr.bf16.mxu0 0
        %5829 = vmatpush1.bf16.msra.mxu0 0
        %5830 = vmatprep.subr.bf16.mxu0 0
        %5831 = vmatpush1.bf16.msra.mxu0 0
        %5832 = vmatprep.subr.bf16.mxu0 0
        %5833 = vmatpush1.bf16.msra.mxu0 0
        %5834 = vmatprep.subr.bf16.mxu0 0
        %5835 = vmatpush1.bf16.msra.mxu0 0
        %5836 = vmatprep.subr.bf16.mxu0 0
        %5837 = vmatpush1.bf16.msra.mxu0 0
        %5838 = vmatprep.subr.bf16.mxu0 0
        %5839 = vmatpush1.bf16.msra.mxu0 0
        %5840 = vmatprep.mubr.bf16.mxu0 0
        %5841 = vmatmul.mubr.bf16.gmra.mrb[0].mxu0 %v5803
        %v5842 = vpop.f32.mrb[0].mxu0
        %v5843 = vadd.f32 0.0, %v5842
        %v5844 = vpop.f32.mrb[0].mxu0
        %v5845 = vpop.f32.mrb[0].mxu0
        %v5846 = vpop.f32.mrb[0].mxu0
        %5847 = vdwg.mxu0
        %v5848 = vpack.c.bf16 %v5843, %v5843
        %v5853 = vunpack.c.l.b16 %v5611
        %v5854 = vunpack.c.l.b16 %v5612
        %v5855 = vunpack.c.l.b16 %v5613
        %v5856 = vunpack.c.l.b16 %v5614
        %v5857 = vpack.c.b16 %v5854, %v5853
        %v5858 = vpack.c.b16 %v5856, %v5855
        %v5862 = vsel %vm730, %v5848, 0
        %5864 = vmatprep.subr.bf16.mxu0 0
        %5865 = vmatpush1.bf16.msra.mxu0 %v5857
        %5866 = vmatprep.subr.bf16.mxu0 0
        %5867 = vmatpush1.bf16.msra.mxu0 %v5858
        %5868 = vmatprep.subr.bf16.mxu0 0
        %5869 = vmatpush1.bf16.msra.mxu0 0
        %5870 = vmatprep.subr.bf16.mxu0 0
        %5871 = vmatpush1.bf16.msra.mxu0 0
        %5872 = vmatprep.subr.bf16.mxu0 0
        %5873 = vmatpush1.bf16.msra.mxu0 0
        %5874 = vmatprep.subr.bf16.mxu0 0
        %5875 = vmatpush1.bf16.msra.mxu0 0
        %5876 = vmatprep.subr.bf16.mxu0 0
        %5877 = vmatpush1.bf16.msra.mxu0 0
        %5878 = vmatprep.subr.bf16.mxu0 0
        %5879 = vmatpush1.bf16.msra.mxu0 0
        %5880 = vmatprep.subr.bf16.mxu0 0
        %5881 = vmatpush1.bf16.msra.mxu0 0
        %5882 = vmatprep.subr.bf16.mxu0 0
        %5883 = vmatpush1.bf16.msra.mxu0 0
        %5884 = vmatprep.subr.bf16.mxu0 0
        %5885 = vmatpush1.bf16.msra.mxu0 0
        %5886 = vmatprep.subr.bf16.mxu0 0
        %5887 = vmatpush1.bf16.msra.mxu0 0
        %5888 = vmatprep.subr.bf16.mxu0 0
        %5889 = vmatpush1.bf16.msra.mxu0 0
        %5890 = vmatprep.subr.bf16.mxu0 0
        %5891 = vmatpush1.bf16.msra.mxu0 0
        %5892 = vmatprep.subr.bf16.mxu0 0
        %5893 = vmatpush1.bf16.msra.mxu0 0
        %5894 = vmatprep.subr.bf16.mxu0 0
        %5895 = vmatpush1.bf16.msra.mxu0 0
        %5896 = vmatprep.mubr.bf16.mxu0 0
        %5897 = vmatmul.mubr.bf16.gmra.mrb[0].mxu0 %v5862
        %v5898 = vpop.f32.mrb[0].mxu0
        %v5899 = vadd.f32 0.0, %v5898
        %v5900 = vpop.f32.mrb[0].mxu0
        %v5901 = vpop.f32.mrb[0].mxu0
        %v5902 = vpop.f32.mrb[0].mxu0
        %5903 = vdwg.mxu0
        %v5908 = vunpack.c.l.b16 %v5607
        %v5909 = vunpack.c.l.b16 %v5608
        %v5910 = vunpack.c.l.b16 %v5609
        %v5911 = vunpack.c.l.b16 %v5610
        %v5912 = vpack.c.b16 %v5909, %v5908
        %v5913 = vpack.c.b16 %v5911, %v5910
        %v5917 = vsel %vm730, %v5732, 0
        %5919 = vmatprep.subr.bf16.mxu0 0
        %5920 = vmatpush1.bf16.msra.mxu0 %v5912
        %5921 = vmatprep.subr.bf16.mxu0 0
        %5922 = vmatpush1.bf16.msra.mxu0 %v5913
        %5923 = vmatprep.subr.bf16.mxu0 0
        %5924 = vmatpush1.bf16.msra.mxu0 0
        %5925 = vmatprep.subr.bf16.mxu0 0
        %5926 = vmatpush1.bf16.msra.mxu0 0
        %5927 = vmatprep.subr.bf16.mxu0 0
        %5928 = vmatpush1.bf16.msra.mxu0 0
        %5929 = vmatprep.subr.bf16.mxu0 0
        %5930 = vmatpush1.bf16.msra.mxu0 0
        %5931 = vmatprep.subr.bf16.mxu0 0
        %5932 = vmatpush1.bf16.msra.mxu0 0
        %5933 = vmatprep.subr.bf16.mxu0 0
        %5934 = vmatpush1.bf16.msra.mxu0 0
        %5935 = vmatprep.subr.bf16.mxu0 0
        %5936 = vmatpush1.bf16.msra.mxu0 0
        %5937 = vmatprep.subr.bf16.mxu0 0
        %5938 = vmatpush1.bf16.msra.mxu0 0
        %5939 = vmatprep.subr.bf16.mxu0 0
        %5940 = vmatpush1.bf16.msra.mxu0 0
        %5941 = vmatprep.subr.bf16.mxu0 0
        %5942 = vmatpush1.bf16.msra.mxu0 0
        %5943 = vmatprep.subr.bf16.mxu0 0
        %5944 = vmatpush1.bf16.msra.mxu0 0
        %5945 = vmatprep.subr.bf16.mxu0 0
        %5946 = vmatpush1.bf16.msra.mxu0 0
        %5947 = vmatprep.subr.bf16.mxu0 0
        %5948 = vmatpush1.bf16.msra.mxu0 0
        %5949 = vmatprep.subr.bf16.mxu0 0
        %5950 = vmatpush1.bf16.msra.mxu0 0
        %5951 = vmatprep.mubr.bf16.mxu0 0
        %5952 = vmatmul.mubr.bf16.gmra.mrb[0].mxu0 %v5917
        %v5953 = vpop.f32.mrb[0].mxu0
        %v5954 = vadd.f32 %v5899, %v5953
        %v5955 = vpop.f32.mrb[0].mxu0
        %v5956 = vpop.f32.mrb[0].mxu0
        %v5957 = vpop.f32.mrb[0].mxu0
        %5958 = vdwg.mxu0
        %5959 = vrot.lane.b32.xlu0 %v5623, 64
        %v5960 = vpop.permute.xlu0 %5959
        %5961 = vrot.lane.b32.xlu0 %v5624, 64
        %v5962 = vpop.permute.xlu0 %5961
        %v5964 = vsel %vm730, %v5960, 0
        %v5967 = vsel %vm730, %v5962, 0
        %5969 = vmatprep.subr.bf16.mxu0 0
        %5970 = vmatpush1.bf16.xpose.msra.mxu0 %v5967
        %5971 = vmatprep.subr.bf16.mxu0 0
        %5972 = vmatpush1.bf16.xpose.msra.mxu0 0
        %5973 = vmatprep.subr.bf16.mxu0 0
        %5974 = vmatpush1.bf16.xpose.msra.mxu0 0
        %5975 = vmatprep.subr.bf16.mxu0 0
        %5976 = vmatpush1.bf16.xpose.msra.mxu0 0
        %5977 = vmatprep.subr.bf16.mxu0 0
        %5978 = vmatpush1.bf16.xpose.msra.mxu0 0
        %5979 = vmatprep.subr.bf16.mxu0 0
        %5980 = vmatpush1.bf16.xpose.msra.mxu0 0
        %5981 = vmatprep.subr.bf16.mxu0 0
        %5982 = vmatpush1.bf16.xpose.msra.mxu0 0
        %5983 = vmatprep.subr.bf16.mxu0 0
        %5984 = vmatpush1.bf16.xpose.msra.mxu0 0
        %5985 = vmatprep.subr.bf16.mxu0 0
        %5986 = vmatpush1.bf16.xpose.msra.mxu0 0
        %5987 = vmatprep.subr.bf16.mxu0 0
        %5988 = vmatpush1.bf16.xpose.msra.mxu0 0
        %5989 = vmatprep.subr.bf16.mxu0 0
        %5990 = vmatpush1.bf16.xpose.msra.mxu0 0
        %5991 = vmatprep.subr.bf16.mxu0 0
        %5992 = vmatpush1.bf16.xpose.msra.mxu0 0
        %5993 = vmatprep.subr.bf16.mxu0 0
        %5994 = vmatpush1.bf16.xpose.msra.mxu0 0
        %5995 = vmatprep.subr.bf16.mxu0 0
        %5996 = vmatpush1.bf16.xpose.msra.mxu0 0
        %5997 = vmatprep.subr.bf16.mxu0 0
        %5998 = vmatpush1.bf16.xpose.msra.mxu0 0
        %5999 = vmatprep.subr.bf16.mxu0 0
        %6000 = vmatpush1.bf16.xpose.msra.mxu0 0
        %6001 = vmatprep.mubr.bf16.mxu0 0
        %6002 = vmatmul.mubr.bf16.gmra.mrb[0].mxu0 %v5964
        %v6003 = vpop.f32.mrb[0].mxu0
        %v6004 = vadd.f32 0.0, %v6003
        %v6005 = vpop.f32.mrb[0].mxu0
        %v6006 = vpop.f32.mrb[0].mxu0
        %v6007 = vpop.f32.mrb[0].mxu0
        %6008 = vdwg.mxu0
        %v6009 = vmul.f32 %v6004, 0.17677669
        %v6010 = vadd.f32 %v6009, %v782
        %v6011 = vsel %vm785, %v6010, -inf
        %6012 = vmax.xlane.f32.xlu0 %v6011
        %v6013 = vpop.xlane.xlu0 %6012
        %v6014 = vsub.f32 %v6010, %v6013
        %v6015 = vmul.f32 %v6014, 1.442695
        %v6016 = vpow.pop %v6015
        %v6017 = vsel %vm785, %v6016, 0.0
        %6018 = vadd.xlane.f32.xlu0 %v6017
        %v6019 = vpop.xlane.xlu0 %6018
        %v6020 = vrcp.pop %v6019
        %v6021 = vmul.f32 %v6016, %v6020
        %v6022 = vpack.c.bf16 %v6021, %v6021
        %6023 = vrot.lane.b32.xlu0 %v5625, 64
        %v6024 = vpop.permute.xlu0 %6023
        %v6026 = vsel %vm785, %v6022, 0
        %v6029 = vsel %vm801, %v6024, 0
        %6031 = vmatprep.subr.bf16.mxu0 0
        %6032 = vmatpush1.bf16.msra.mxu0 %v6029
        %6033 = vmatprep.subr.bf16.mxu0 0
        %6034 = vmatpush1.bf16.msra.mxu0 0
        %6035 = vmatprep.subr.bf16.mxu0 0
        %6036 = vmatpush1.bf16.msra.mxu0 0
        %6037 = vmatprep.subr.bf16.mxu0 0
        %6038 = vmatpush1.bf16.msra.mxu0 0
        %6039 = vmatprep.subr.bf16.mxu0 0
        %6040 = vmatpush1.bf16.msra.mxu0 0
        %6041 = vmatprep.subr.bf16.mxu0 0
        %6042 = vmatpush1.bf16.msra.mxu0 0
        %6043 = vmatprep.subr.bf16.mxu0 0
        %6044 = vmatpush1.bf16.msra.mxu0 0
        %6045 = vmatprep.subr.bf16.mxu0 0
        %6046 = vmatpush1.bf16.msra.mxu0 0
        %6047 = vmatprep.subr.bf16.mxu0 0
        %6048 = vmatpush1.bf16.msra.mxu0 0
        %6049 = vmatprep.subr.bf16.mxu0 0
        %6050 = vmatpush1.bf16.msra.mxu0 0
        %6051 = vmatprep.subr.bf16.mxu0 0
        %6052 = vmatpush1.bf16.msra.mxu0 0
        %6053 = vmatprep.subr.bf16.mxu0 0
        %6054 = vmatpush1.bf16.msra.mxu0 0
        %6055 = vmatprep.subr.bf16.mxu0 0
        %6056 = vmatpush1.bf16.msra.mxu0 0
        %6057 = vmatprep.subr.bf16.mxu0 0
        %6058 = vmatpush1.bf16.msra.mxu0 0
        %6059 = vmatprep.subr.bf16.mxu0 0
        %6060 = vmatpush1.bf16.msra.mxu0 0
        %6061 = vmatprep.subr.bf16.mxu0 0
        %6062 = vmatpush1.bf16.msra.mxu0 0
        %6063 = vmatprep.mubr.bf16.mxu0 0
        %6064 = vmatmul.mubr.bf16.gmra.mrb[0].mxu0 %v6026
        %v6065 = vpop.f32.mrb[0].mxu0
        %v6066 = vadd.f32 0.0, %v6065
        %v6067 = vpop.f32.mrb[0].mxu0
        %v6068 = vpop.f32.mrb[0].mxu0
        %v6069 = vpop.f32.mrb[0].mxu0
        %6070 = vdwg.mxu0
        %v6071 = vpack.c.bf16 %v6066, %v6066
        %v6076 = vunpack.c.l.b16 %v5615
        %v6077 = vunpack.c.l.b16 %v5616
        %v6078 = vunpack.c.l.b16 %v5617
        %v6079 = vunpack.c.l.b16 %v5618
        %v6080 = vpack.c.b16 %v6077, %v6076
        %v6081 = vpack.c.b16 %v6079, %v6078
        %v6085 = vsel %vm730, %v6071, 0
        %6087 = vmatprep.subr.bf16.mxu0 0
        %6088 = vmatpush1.bf16.msra.mxu0 %v6080
        %6089 = vmatprep.subr.bf16.mxu0 0
        %6090 = vmatpush1.bf16.msra.mxu0 %v6081
        %6091 = vmatprep.subr.bf16.mxu0 0
        %6092 = vmatpush1.bf16.msra.mxu0 0
        %6093 = vmatprep.subr.bf16.mxu0 0
        %6094 = vmatpush1.bf16.msra.mxu0 0
        %6095 = vmatprep.subr.bf16.mxu0 0
        %6096 = vmatpush1.bf16.msra.mxu0 0
        %6097 = vmatprep.subr.bf16.mxu0 0
        %6098 = vmatpush1.bf16.msra.mxu0 0
        %6099 = vmatprep.subr.bf16.mxu0 0
        %6100 = vmatpush1.bf16.msra.mxu0 0
        %6101 = vmatprep.subr.bf16.mxu0 0
        %6102 = vmatpush1.bf16.msra.mxu0 0
        %6103 = vmatprep.subr.bf16.mxu0 0
        %6104 = vmatpush1.bf16.msra.mxu0 0
        %6105 = vmatprep.subr.bf16.mxu0 0
        %6106 = vmatpush1.bf16.msra.mxu0 0
        %6107 = vmatprep.subr.bf16.mxu0 0
        %6108 = vmatpush1.bf16.msra.mxu0 0
        %6109 = vmatprep.subr.bf16.mxu0 0
        %6110 = vmatpush1.bf16.msra.mxu0 0
        %6111 = vmatprep.subr.bf16.mxu0 0
        %6112 = vmatpush1.bf16.msra.mxu0 0
        %6113 = vmatprep.subr.bf16.mxu0 0
        %6114 = vmatpush1.bf16.msra.mxu0 0
        %6115 = vmatprep.subr.bf16.mxu0 0
        %6116 = vmatpush1.bf16.msra.mxu0 0
        %6117 = vmatprep.subr.bf16.mxu0 0
        %6118 = vmatpush1.bf16.msra.mxu0 0
        %6119 = vmatprep.mubr.bf16.mxu0 0
        %6120 = vmatmul.mubr.bf16.gmra.mrb[0].mxu0 %v6085
        %v6121 = vpop.f32.mrb[0].mxu0
        %v6122 = vadd.f32 0.0, %v6121
        %v6123 = vpop.f32.mrb[0].mxu0
        %v6124 = vpop.f32.mrb[0].mxu0
        %v6125 = vpop.f32.mrb[0].mxu0
        %6126 = vdwg.mxu0
        %v6127 = vadd.f32 %v5954, %v6122
        %6128 = vrot.lane.b32.xlu0 %v5623, 32
        %v6129 = vpop.permute.xlu0 %6128
        %6130 = vrot.lane.b32.xlu0 %v5624, 32
        %v6131 = vpop.permute.xlu0 %6130
        %v6133 = vsel %vm730, %v6129, 0
        %v6136 = vsel %vm730, %v6131, 0
        %6138 = vmatprep.subr.bf16.mxu0 0
        %6139 = vmatpush1.bf16.xpose.msra.mxu0 %v6136
        %6140 = vmatprep.subr.bf16.mxu0 0
        %6141 = vmatpush1.bf16.xpose.msra.mxu0 0
        %6142 = vmatprep.subr.bf16.mxu0 0
        %6143 = vmatpush1.bf16.xpose.msra.mxu0 0
        %6144 = vmatprep.subr.bf16.mxu0 0
        %6145 = vmatpush1.bf16.xpose.msra.mxu0 0
        %6146 = vmatprep.subr.bf16.mxu0 0
        %6147 = vmatpush1.bf16.xpose.msra.mxu0 0
        %6148 = vmatprep.subr.bf16.mxu0 0
        %6149 = vmatpush1.bf16.xpose.msra.mxu0 0
        %6150 = vmatprep.subr.bf16.mxu0 0
        %6151 = vmatpush1.bf16.xpose.msra.mxu0 0
        %6152 = vmatprep.subr.bf16.mxu0 0
        %6153 = vmatpush1.bf16.xpose.msra.mxu0 0
        %6154 = vmatprep.subr.bf16.mxu0 0
        %6155 = vmatpush1.bf16.xpose.msra.mxu0 0
        %6156 = vmatprep.subr.bf16.mxu0 0
        %6157 = vmatpush1.bf16.xpose.msra.mxu0 0
        %6158 = vmatprep.subr.bf16.mxu0 0
        %6159 = vmatpush1.bf16.xpose.msra.mxu0 0
        %6160 = vmatprep.subr.bf16.mxu0 0
        %6161 = vmatpush1.bf16.xpose.msra.mxu0 0
        %6162 = vmatprep.subr.bf16.mxu0 0
        %6163 = vmatpush1.bf16.xpose.msra.mxu0 0
        %6164 = vmatprep.subr.bf16.mxu0 0
        %6165 = vmatpush1.bf16.xpose.msra.mxu0 0
        %6166 = vmatprep.subr.bf16.mxu0 0
        %6167 = vmatpush1.bf16.xpose.msra.mxu0 0
        %6168 = vmatprep.subr.bf16.mxu0 0
        %6169 = vmatpush1.bf16.xpose.msra.mxu0 0
        %6170 = vmatprep.mubr.bf16.mxu0 0
        %6171 = vmatmul.mubr.bf16.gmra.mrb[0].mxu0 %v6133
        %v6172 = vpop.f32.mrb[0].mxu0
        %v6173 = vadd.f32 0.0, %v6172
        %v6174 = vpop.f32.mrb[0].mxu0
        %v6175 = vpop.f32.mrb[0].mxu0
        %v6176 = vpop.f32.mrb[0].mxu0
        %6177 = vdwg.mxu0
        %v6178 = vmul.f32 %v6173, 0.17677669
        %v6179 = vadd.f32 %v6178, %v782
        %v6180 = vsel %vm785, %v6179, -inf
        %6181 = vmax.xlane.f32.xlu0 %v6180
        %v6182 = vpop.xlane.xlu0 %6181
        %v6183 = vsub.f32 %v6179, %v6182
        %v6184 = vmul.f32 %v6183, 1.442695
        %v6185 = vpow.pop %v6184
        %v6186 = vsel %vm785, %v6185, 0.0
        %6187 = vadd.xlane.f32.xlu0 %v6186
        %v6188 = vpop.xlane.xlu0 %6187
        %v6189 = vrcp.pop %v6188
        %v6190 = vmul.f32 %v6185, %v6189
        %v6191 = vpack.c.bf16 %v6190, %v6190
        %6192 = vrot.lane.b32.xlu0 %v5625, 32
        %v6193 = vpop.permute.xlu0 %6192
        %v6195 = vsel %vm785, %v6191, 0
        %v6198 = vsel %vm801, %v6193, 0
        %6200 = vmatprep.subr.bf16.mxu0 0
        %6201 = vmatpush1.bf16.msra.mxu0 %v6198
        %6202 = vmatprep.subr.bf16.mxu0 0
        %6203 = vmatpush1.bf16.msra.mxu0 0
        %6204 = vmatprep.subr.bf16.mxu0 0
        %6205 = vmatpush1.bf16.msra.mxu0 0
        %6206 = vmatprep.subr.bf16.mxu0 0
        %6207 = vmatpush1.bf16.msra.mxu0 0
        %6208 = vmatprep.subr.bf16.mxu0 0
        %6209 = vmatpush1.bf16.msra.mxu0 0
        %6210 = vmatprep.subr.bf16.mxu0 0
        %6211 = vmatpush1.bf16.msra.mxu0 0
        %6212 = vmatprep.subr.bf16.mxu0 0
        %6213 = vmatpush1.bf16.msra.mxu0 0
        %6214 = vmatprep.subr.bf16.mxu0 0
        %6215 = vmatpush1.bf16.msra.mxu0 0
        %6216 = vmatprep.subr.bf16.mxu0 0
        %6217 = vmatpush1.bf16.msra.mxu0 0
        %6218 = vmatprep.subr.bf16.mxu0 0
        %6219 = vmatpush1.bf16.msra.mxu0 0
        %6220 = vmatprep.subr.bf16.mxu0 0
        %6221 = vmatpush1.bf16.msra.mxu0 0
        %6222 = vmatprep.subr.bf16.mxu0 0
        %6223 = vmatpush1.bf16.msra.mxu0 0
        %6224 = vmatprep.subr.bf16.mxu0 0
        %6225 = vmatpush1.bf16.msra.mxu0 0
        %6226 = vmatprep.subr.bf16.mxu0 0
        %6227 = vmatpush1.bf16.msra.mxu0 0
        %6228 = vmatprep.subr.bf16.mxu0 0
        %6229 = vmatpush1.bf16.msra.mxu0 0
        %6230 = vmatprep.subr.bf16.mxu0 0
        %6231 = vmatpush1.bf16.msra.mxu0 0
        %6232 = vmatprep.mubr.bf16.mxu0 0
        %6233 = vmatmul.mubr.bf16.gmra.mrb[0].mxu0 %v6195
        %v6234 = vpop.f32.mrb[0].mxu0
        %v6235 = vadd.f32 0.0, %v6234
        %v6236 = vpop.f32.mrb[0].mxu0
        %v6237 = vpop.f32.mrb[0].mxu0
        %v6238 = vpop.f32.mrb[0].mxu0
        %6239 = vdwg.mxu0
        %v6240 = vpack.c.bf16 %v6235, %v6235
        %v6245 = vunpack.c.l.b16 %v5619
        %v6246 = vunpack.c.l.b16 %v5620
        %v6247 = vunpack.c.l.b16 %v5621
        %v6248 = vunpack.c.l.b16 %v5622
        %v6249 = vpack.c.b16 %v6246, %v6245
        %v6250 = vpack.c.b16 %v6248, %v6247
        %v6254 = vsel %vm730, %v6240, 0
        %6256 = vmatprep.subr.bf16.mxu0 0
        %6257 = vmatpush1.bf16.msra.mxu0 %v6249
        %6258 = vmatprep.subr.bf16.mxu0 0
        %6259 = vmatpush1.bf16.msra.mxu0 %v6250
        %6260 = vmatprep.subr.bf16.mxu0 0
        %6261 = vmatpush1.bf16.msra.mxu0 0
        %6262 = vmatprep.subr.bf16.mxu0 0
        %6263 = vmatpush1.bf16.msra.mxu0 0
        %6264 = vmatprep.subr.bf16.mxu0 0
        %6265 = vmatpush1.bf16.msra.mxu0 0
        %6266 = vmatprep.subr.bf16.mxu0 0
        %6267 = vmatpush1.bf16.msra.mxu0 0
        %6268 = vmatprep.subr.bf16.mxu0 0
        %6269 = vmatpush1.bf16.msra.mxu0 0
        %6270 = vmatprep.subr.bf16.mxu0 0
        %6271 = vmatpush1.bf16.msra.mxu0 0
        %6272 = vmatprep.subr.bf16.mxu0 0
        %6273 = vmatpush1.bf16.msra.mxu0 0
        %6274 = vmatprep.subr.bf16.mxu0 0
        %6275 = vmatpush1.bf16.msra.mxu0 0
        %6276 = vmatprep.subr.bf16.mxu0 0
        %6277 = vmatpush1.bf16.msra.mxu0 0
        %6278 = vmatprep.subr.bf16.mxu0 0
        %6279 = vmatpush1.bf16.msra.mxu0 0
        %6280 = vmatprep.subr.bf16.mxu0 0
        %6281 = vmatpush1.bf16.msra.mxu0 0
        %6282 = vmatprep.subr.bf16.mxu0 0
        %6283 = vmatpush1.bf16.msra.mxu0 0
        %6284 = vmatprep.subr.bf16.mxu0 0
        %6285 = vmatpush1.bf16.msra.mxu0 0
        %6286 = vmatprep.subr.bf16.mxu0 0
        %6287 = vmatpush1.bf16.msra.mxu0 0
        %6288 = vmatprep.mubr.bf16.mxu0 0
        %6289 = vmatmul.mubr.bf16.gmra.mrb[0].mxu0 %v6254
        %v6290 = vpop.f32.mrb[0].mxu0
        %v6291 = vadd.f32 0.0, %v6290
        %v6292 = vpop.f32.mrb[0].mxu0
        %v6293 = vpop.f32.mrb[0].mxu0
        %v6294 = vpop.f32.mrb[0].mxu0
        %6295 = vdwg.mxu0
        %v6296 = vadd.f32 %v6127, %v6291
        %v6297 = vlaneseq
        %v6298 = vshrl.u32 %v6297, 7
        %v6299 = vsub.s32 3, %v6298
        %v6300 = vrot.slane %v5346, %v6299
        %v6301 = vadd.f32 %v6296, %v6300
        %v6302 = vadd.f32 %v5344, %v6301
        %6303 = vadd.xlane.f32.xlu0 %v6302
        %v6304 = vpop.xlane.xlu0 %6303
        %v6305 = vmul.f32 %v6304, %v1418
        %v6306 = vsub.f32 %v6302, %v6305
        %v6307 = vmul.f32 %v6306, %v6306
        %6308 = vadd.xlane.f32.xlu0 %v6307
        %v6309 = vpop.xlane.xlu0 %6308
        %v6310 = vmul.f32 %v6309, %v1418
        %v6311 = vadd.f32 %v6310, 1e-05
        %v6312 = vrsqrt.pop %v6311
        %v6313 = vmul.f32 %v6306, %v6312
        %v6314 = vlaneseq
        %v6315 = vshrl.u32 %v6314, 7
        %v6316 = vsub.s32 6, %v6315
        %v6317 = vrot.slane %v5346, %v6316
        %v6318 = vmul.f32 %v6313, %v6317
        %v6319 = vlaneseq
        %v6320 = vshrl.u32 %v6319, 7
        %v6321 = vsub.s32 7, %v6320
        %v6322 = vrot.slane %v5346, %v6321
        %v6323 = vadd.f32 %v6318, %v6322
        %v6324 = vpack.c.bf16 %v6323, %v6323
        %s6325 = scalar_lea.vmem [#allocation8], 256
        %v6326 = vld [vmem:[%s6325] sm:$0xf]
        %v6327 = vld [vmem:[%s6325 + $0x4] sm:$0xf]
        %v6328 = vld [vmem:[%s6325 + $0x8] sm:$0xf]
        %v6329 = vld [vmem:[%s6325 + $0xc] sm:$0xf]
        %v6330 = vld [vmem:[%s6325 + $0x10] sm:$0xf]
        %v6331 = vld [vmem:[%s6325 + $0x14] sm:$0xf]
        %v6332 = vld [vmem:[%s6325 + $0x18] sm:$0xf]
        %v6333 = vld [vmem:[%s6325 + $0x1c] sm:$0xf]
        %v6334 = vld [vmem:[%s6325 + $0x20] sm:$0xf]
        %v6335 = vld [vmem:[%s6325 + $0x24] sm:$0xf]
        %v6336 = vld [vmem:[%s6325 + $0x28] sm:$0xf]
        %v6337 = vld [vmem:[%s6325 + $0x2c] sm:$0xf]
        %v6338 = vld [vmem:[%s6325 + $0x30] sm:$0xf]
        %v6339 = vld [vmem:[%s6325 + $0x34] sm:$0xf]
        %v6340 = vld [vmem:[%s6325 + $0x38] sm:$0xf]
        %v6341 = vld [vmem:[%s6325 + $0x3c] sm:$0xf]
        %v6342 = vlaneseq
        %v6343 = vshrl.u32 %v6342, 7
        %v6344 = vsub.s32 4, %v6343
        %v6345 = vrot.slane %v5346, %v6344
        %v6362 = vunpack.c.l.b16 %v6326
        %v6363 = vunpack.c.l.b16 %v6327
        %v6364 = vunpack.c.l.b16 %v6328
        %v6365 = vunpack.c.l.b16 %v6329
        %v6366 = vunpack.c.l.b16 %v6330
        %v6367 = vunpack.c.l.b16 %v6331
        %v6368 = vunpack.c.l.b16 %v6332
        %v6369 = vunpack.c.l.b16 %v6333
        %v6370 = vunpack.c.l.b16 %v6334
        %v6371 = vunpack.c.l.b16 %v6335
        %v6372 = vunpack.c.l.b16 %v6336
        %v6373 = vunpack.c.l.b16 %v6337
        %v6374 = vunpack.c.l.b16 %v6338
        %v6375 = vunpack.c.l.b16 %v6339
        %v6376 = vunpack.c.l.b16 %v6340
        %v6377 = vunpack.c.l.b16 %v6341
        %v6378 = vpack.c.b16 %v6363, %v6362
        %v6379 = vpack.c.b16 %v6365, %v6364
        %v6380 = vpack.c.b16 %v6367, %v6366
        %v6381 = vpack.c.b16 %v6369, %v6368
        %v6382 = vpack.c.b16 %v6371, %v6370
        %v6383 = vpack.c.b16 %v6373, %v6372
        %v6384 = vpack.c.b16 %v6375, %v6374
        %v6385 = vpack.c.b16 %v6377, %v6376
        %6394 = vmatprep.subr.bf16.mxu0 0
        %6395 = vmatpush1.bf16.msra.mxu0 %v6378
        %6396 = vmatprep.subr.bf16.mxu0 0
        %6397 = vmatpush1.bf16.msra.mxu0 %v6379
        %6398 = vmatprep.subr.bf16.mxu0 0
        %6399 = vmatpush1.bf16.msra.mxu0 %v6380
        %6400 = vmatprep.subr.bf16.mxu0 0
        %6401 = vmatpush1.bf16.msra.mxu0 %v6381
        %6402 = vmatprep.subr.bf16.mxu0 0
        %6403 = vmatpush1.bf16.msra.mxu0 %v6382
        %6404 = vmatprep.subr.bf16.mxu0 0
        %6405 = vmatpush1.bf16.msra.mxu0 %v6383
        %6406 = vmatprep.subr.bf16.mxu0 0
        %6407 = vmatpush1.bf16.msra.mxu0 %v6384
        %6408 = vmatprep.subr.bf16.mxu0 0
        %6409 = vmatpush1.bf16.msra.mxu0 %v6385
        %6410 = vmatprep.subr.bf16.mxu0 0
        %6411 = vmatpush1.bf16.msra.mxu0 0
        %6412 = vmatprep.subr.bf16.mxu0 0
        %6413 = vmatpush1.bf16.msra.mxu0 0
        %6414 = vmatprep.subr.bf16.mxu0 0
        %6415 = vmatpush1.bf16.msra.mxu0 0
        %6416 = vmatprep.subr.bf16.mxu0 0
        %6417 = vmatpush1.bf16.msra.mxu0 0
        %6418 = vmatprep.subr.bf16.mxu0 0
        %6419 = vmatpush1.bf16.msra.mxu0 0
        %6420 = vmatprep.subr.bf16.mxu0 0
        %6421 = vmatpush1.bf16.msra.mxu0 0
        %6422 = vmatprep.subr.bf16.mxu0 0
        %6423 = vmatpush1.bf16.msra.mxu0 0
        %6424 = vmatprep.subr.bf16.mxu0 0
        %6425 = vmatpush1.bf16.msra.mxu0 0
        %6426 = vmatprep.mubr.bf16.mxu0 0
        %6427 = vmatmul.mubr.bf16.gmra.mrb[0].mxu0 %v6324
        %v6428 = vpop.f32.mrb[0].mxu0
        %v6429 = vadd.f32 %v6345, %v6428
        %v6430 = vpop.f32.mrb[0].mxu0
        %v6431 = vpop.f32.mrb[0].mxu0
        %v6432 = vpop.f32.mrb[0].mxu0
        %6433 = vdwg.mxu0
        %v6434 = vmax.f32 %v6429, 0.0
        %v6435 = vpack.c.bf16 %v6434, %v6434
        %s6436 = scalar_lea.vmem [#allocation10], 256
        %v6437 = vld [vmem:[%s6436] sm:$0xf]
        %v6438 = vld [vmem:[%s6436 + $0x4] sm:$0xf]
        %v6439 = vld [vmem:[%s6436 + $0x8] sm:$0xf]
        %v6440 = vld [vmem:[%s6436 + $0xc] sm:$0xf]
        %v6441 = vld [vmem:[%s6436 + $0x10] sm:$0xf]
        %v6442 = vld [vmem:[%s6436 + $0x14] sm:$0xf]
        %v6443 = vld [vmem:[%s6436 + $0x18] sm:$0xf]
        %v6444 = vld [vmem:[%s6436 + $0x1c] sm:$0xf]
        %v6445 = vld [vmem:[%s6436 + $0x20] sm:$0xf]
        %v6446 = vld [vmem:[%s6436 + $0x24] sm:$0xf]
        %v6447 = vld [vmem:[%s6436 + $0x28] sm:$0xf]
        %v6448 = vld [vmem:[%s6436 + $0x2c] sm:$0xf]
        %v6449 = vld [vmem:[%s6436 + $0x30] sm:$0xf]
        %v6450 = vld [vmem:[%s6436 + $0x34] sm:$0xf]
        %v6451 = vld [vmem:[%s6436 + $0x38] sm:$0xf]
        %v6452 = vld [vmem:[%s6436 + $0x3c] sm:$0xf]
        %v6453 = vlaneseq
        %v6454 = vshrl.u32 %v6453, 7
        %v6455 = vsub.s32 5, %v6454
        %v6456 = vrot.slane %v5346, %v6455
        %v6473 = vunpack.c.l.b16 %v6437
        %v6474 = vunpack.c.l.b16 %v6438
        %v6475 = vunpack.c.l.b16 %v6439
        %v6476 = vunpack.c.l.b16 %v6440
        %v6477 = vunpack.c.l.b16 %v6441
        %v6478 = vunpack.c.l.b16 %v6442
        %v6479 = vunpack.c.l.b16 %v6443
        %v6480 = vunpack.c.l.b16 %v6444
        %v6481 = vunpack.c.l.b16 %v6445
        %v6482 = vunpack.c.l.b16 %v6446
        %v6483 = vunpack.c.l.b16 %v6447
        %v6484 = vunpack.c.l.b16 %v6448
        %v6485 = vunpack.c.l.b16 %v6449
        %v6486 = vunpack.c.l.b16 %v6450
        %v6487 = vunpack.c.l.b16 %v6451
        %v6488 = vunpack.c.l.b16 %v6452
        %v6489 = vpack.c.b16 %v6474, %v6473
        %v6490 = vpack.c.b16 %v6476, %v6475
        %v6491 = vpack.c.b16 %v6478, %v6477
        %v6492 = vpack.c.b16 %v6480, %v6479
        %v6493 = vpack.c.b16 %v6482, %v6481
        %v6494 = vpack.c.b16 %v6484, %v6483
        %v6495 = vpack.c.b16 %v6486, %v6485
        %v6496 = vpack.c.b16 %v6488, %v6487
        %6505 = vmatprep.subr.bf16.mxu0 0
        %6506 = vmatpush1.bf16.msra.mxu0 %v6489
        %6507 = vmatprep.subr.bf16.mxu0 0
        %6508 = vmatpush1.bf16.msra.mxu0 %v6490
        %6509 = vmatprep.subr.bf16.mxu0 0
        %6510 = vmatpush1.bf16.msra.mxu0 %v6491
        %6511 = vmatprep.subr.bf16.mxu0 0
        %6512 = vmatpush1.bf16.msra.mxu0 %v6492
        %6513 = vmatprep.subr.bf16.mxu0 0
        %6514 = vmatpush1.bf16.msra.mxu0 %v6493
        %6515 = vmatprep.subr.bf16.mxu0 0
        %6516 = vmatpush1.bf16.msra.mxu0 %v6494
        %6517 = vmatprep.subr.bf16.mxu0 0
        %6518 = vmatpush1.bf16.msra.mxu0 %v6495
        %6519 = vmatprep.subr.bf16.mxu0 0
        %6520 = vmatpush1.bf16.msra.mxu0 %v6496
        %6521 = vmatprep.subr.bf16.mxu0 0
        %6522 = vmatpush1.bf16.msra.mxu0 0
        %6523 = vmatprep.subr.bf16.mxu0 0
        %6524 = vmatpush1.bf16.msra.mxu0 0
        %6525 = vmatprep.subr.bf16.mxu0 0
        %6526 = vmatpush1.bf16.msra.mxu0 0
        %6527 = vmatprep.subr.bf16.mxu0 0
        %6528 = vmatpush1.bf16.msra.mxu0 0
        %6529 = vmatprep.subr.bf16.mxu0 0
        %6530 = vmatpush1.bf16.msra.mxu0 0
        %6531 = vmatprep.subr.bf16.mxu0 0
        %6532 = vmatpush1.bf16.msra.mxu0 0
        %6533 = vmatprep.subr.bf16.mxu0 0
        %6534 = vmatpush1.bf16.msra.mxu0 0
        %6535 = vmatprep.subr.bf16.mxu0 0
        %6536 = vmatpush1.bf16.msra.mxu0 0
        %6537 = vmatprep.mubr.bf16.mxu0 0
        %6538 = vmatmul.mubr.bf16.gmra.mrb[0].mxu0 %v6435
        %v6539 = vpop.f32.mrb[0].mxu0
        %v6540 = vadd.f32 %v6456, %v6539
        %v6541 = vpop.f32.mrb[0].mxu0
        %v6542 = vpop.f32.mrb[0].mxu0
        %v6543 = vpop.f32.mrb[0].mxu0
        %6544 = vdwg.mxu0
        %v6545 = vadd.f32 %v6323, %v6540
        %6546 = vadd.xlane.f32.xlu0 %v6545
        %v6547 = vpop.xlane.xlu0 %6546
        %v6548 = vmul.f32 %v6547, %v1418
        %v6549 = vsub.f32 %v6545, %v6548
        %v6550 = vmul.f32 %v6549, %v6549
        %6551 = vadd.xlane.f32.xlu0 %v6550
        %v6552 = vpop.xlane.xlu0 %6551
        %v6553 = vmul.f32 %v6552, %v1418
        %v6554 = vadd.f32 %v6553, 1e-05
        %v6555 = vrsqrt.pop %v6554
        %v6556 = vmul.f32 %v6549, %v6555
        %v6557 = vlaneseq
        %v6558 = vshrl.u32 %v6557, 7
        %v6559 = vsub.s32 0, %v6558
        %v6560 = vrot.slane %v5347, %v6559
        %v6561 = vmul.f32 %v6556, %v6560
        %v6562 = vlaneseq
        %v6563 = vshrl.u32 %v6562, 7
        %v6564 = vsub.s32 1, %v6563
        %v6565 = vrot.slane %v5347, %v6564
        %v6566 = vadd.f32 %v6561, %v6565
        %s6567 = scalar_lea.vmem [#allocation11], 80
        %v6568 = vld [vmem:[%s6567] sm:$0xff]
        %v6569 = vld [vmem:[%s6567 + $0x8] sm:$0xff]
        %v6570 = vpack.c.bf16 %v6566, %v6566
        %s6571 = scalar_lea.vmem [#allocation5], 960
        %v6572 = vld [vmem:[%s6571] sm:$0xff]
        %v6573 = vld [vmem:[%s6571 + $0x8] sm:$0xf]
        %v6574 = vld [vmem:[%s6571 + $0xc] sm:$0xff]
        %v6575 = vld [vmem:[%s6571 + $0x14] sm:$0xf]
        %v6576 = vld [vmem:[%s6571 + $0x18] sm:$0xff]
        %v6577 = vld [vmem:[%s6571 + $0x20] sm:$0xf]
        %v6578 = vld [vmem:[%s6571 + $0x24] sm:$0xff]
        %v6579 = vld [vmem:[%s6571 + $0x2c] sm:$0xf]
        %v6580 = vld [vmem:[%s6571 + $0x30] sm:$0xff]
        %v6581 = vld [vmem:[%s6571 + $0x38] sm:$0xf]
        %v6582 = vld [vmem:[%s6571 + $0x3c] sm:$0xff]
        %v6583 = vld [vmem:[%s6571 + $0x44] sm:$0xf]
        %v6584 = vld [vmem:[%s6571 + $0x48] sm:$0xff]
        %v6585 = vld [vmem:[%s6571 + $0x50] sm:$0xf]
        %v6586 = vld [vmem:[%s6571 + $0x54] sm:$0xff]
        %v6587 = vld [vmem:[%s6571 + $0x5c] sm:$0xf]
        %v6588 = vld [vmem:[%s6571 + $0x60] sm:$0xff]
        %v6589 = vld [vmem:[%s6571 + $0x68] sm:$0xf]
        %v6590 = vld [vmem:[%s6571 + $0x6c] sm:$0xff]
        %v6591 = vld [vmem:[%s6571 + $0x74] sm:$0xf]
        %v6592 = vld [vmem:[%s6571 + $0x78] sm:$0xff]
        %v6593 = vld [vmem:[%s6571 + $0x80] sm:$0xf]
        %v6594 = vld [vmem:[%s6571 + $0x84] sm:$0xff]
        %v6595 = vld [vmem:[%s6571 + $0x8c] sm:$0xf]
        %v6596 = vld [vmem:[%s6571 + $0x90] sm:$0xff]
        %v6597 = vld [vmem:[%s6571 + $0x98] sm:$0xf]
        %v6598 = vld [vmem:[%s6571 + $0x9c] sm:$0xff]
        %v6599 = vld [vmem:[%s6571 + $0xa4] sm:$0xf]
        %v6600 = vld [vmem:[%s6571 + $0xa8] sm:$0xff]
        %v6601 = vld [vmem:[%s6571 + $0xb0] sm:$0xf]
        %v6602 = vld [vmem:[%s6571 + $0xb4] sm:$0xff]
        %v6603 = vld [vmem:[%s6571 + $0xbc] sm:$0xf]
        %v6636 = vunpack.c.l.b16 %v6572
        %v6637 = vunpack.c.h.b16 %v6572
        %v6638 = vunpack.c.l.b16 %v6573
        %v6639 = vunpack.c.l.b16 %v6574
        %v6640 = vunpack.c.h.b16 %v6574
        %v6641 = vunpack.c.l.b16 %v6575
        %v6642 = vunpack.c.l.b16 %v6576
        %v6643 = vunpack.c.h.b16 %v6576
        %v6644 = vunpack.c.l.b16 %v6577
        %v6645 = vunpack.c.l.b16 %v6578
        %v6646 = vunpack.c.h.b16 %v6578
        %v6647 = vunpack.c.l.b16 %v6579
        %v6648 = vunpack.c.l.b16 %v6580
        %v6649 = vunpack.c.h.b16 %v6580
        %v6650 = vunpack.c.l.b16 %v6581
        %v6651 = vunpack.c.l.b16 %v6582
        %v6652 = vunpack.c.h.b16 %v6582
        %v6653 = vunpack.c.l.b16 %v6583
        %v6654 = vunpack.c.l.b16 %v6584
        %v6655 = vunpack.c.h.b16 %v6584
        %v6656 = vunpack.c.l.b16 %v6585
        %v6657 = vunpack.c.l.b16 %v6586
        %v6658 = vunpack.c.h.b16 %v6586
        %v6659 = vunpack.c.l.b16 %v6587
        %v6660 = vunpack.c.l.b16 %v6588
        %v6661 = vunpack.c.h.b16 %v6588
        %v6662 = vunpack.c.l.b16 %v6589
        %v6663 = vunpack.c.l.b16 %v6590
        %v6664 = vunpack.c.h.b16 %v6590
        %v6665 = vunpack.c.l.b16 %v6591
        %v6666 = vunpack.c.l.b16 %v6592
        %v6667 = vunpack.c.h.b16 %v6592
        %v6668 = vunpack.c.l.b16 %v6593
        %v6669 = vunpack.c.l.b16 %v6594
        %v6670 = vunpack.c.h.b16 %v6594
        %v6671 = vunpack.c.l.b16 %v6595
        %v6672 = vunpack.c.l.b16 %v6596
        %v6673 = vunpack.c.h.b16 %v6596
        %v6674 = vunpack.c.l.b16 %v6597
        %v6675 = vunpack.c.l.b16 %v6598
        %v6676 = vunpack.c.h.b16 %v6598
        %v6677 = vunpack.c.l.b16 %v6599
        %v6678 = vunpack.c.l.b16 %v6600
        %v6679 = vunpack.c.h.b16 %v6600
        %v6680 = vunpack.c.l.b16 %v6601
        %v6681 = vunpack.c.l.b16 %v6602
        %v6682 = vunpack.c.h.b16 %v6602
        %v6683 = vunpack.c.l.b16 %v6603
        %v6684 = vpack.c.b16 %v6639, %v6636
        %v6685 = vpack.c.b16 %v6640, %v6637
        %v6686 = vpack.c.b16 %v6641, %v6638
        %v6687 = vpack.c.b16 %v6645, %v6642
        %v6688 = vpack.c.b16 %v6646, %v6643
        %v6689 = vpack.c.b16 %v6647, %v6644
        %v6690 = vpack.c.b16 %v6651, %v6648
        %v6691 = vpack.c.b16 %v6652, %v6649
        %v6692 = vpack.c.b16 %v6653, %v6650
        %v6693 = vpack.c.b16 %v6657, %v6654
        %v6694 = vpack.c.b16 %v6658, %v6655
        %v6695 = vpack.c.b16 %v6659, %v6656
        %v6696 = vpack.c.b16 %v6663, %v6660
        %v6697 = vpack.c.b16 %v6664, %v6661
        %v6698 = vpack.c.b16 %v6665, %v6662
        %v6699 = vpack.c.b16 %v6669, %v6666
        %v6700 = vpack.c.b16 %v6670, %v6667
        %v6701 = vpack.c.b16 %v6671, %v6668
        %v6702 = vpack.c.b16 %v6675, %v6672
        %v6703 = vpack.c.b16 %v6676, %v6673
        %v6704 = vpack.c.b16 %v6677, %v6674
        %v6705 = vpack.c.b16 %v6681, %v6678
        %v6706 = vpack.c.b16 %v6682, %v6679
        %v6707 = vpack.c.b16 %v6683, %v6680
        %6732 = vmatprep.subr.bf16.mxu0 %v6685
        %6733 = vmatpush1.bf16.msra.mxu0 %v6684
        %6734 = vmatprep.subr.bf16.mxu0 %v6688
        %6735 = vmatpush1.bf16.msra.mxu0 %v6687
        %6736 = vmatprep.subr.bf16.mxu0 %v6691
        %6737 = vmatpush1.bf16.msra.mxu0 %v6690
        %6738 = vmatprep.subr.bf16.mxu0 %v6694
        %6739 = vmatpush1.bf16.msra.mxu0 %v6693
        %6740 = vmatprep.subr.bf16.mxu0 %v6697
        %6741 = vmatpush1.bf16.msra.mxu0 %v6696
        %6742 = vmatprep.subr.bf16.mxu0 %v6700
        %6743 = vmatpush1.bf16.msra.mxu0 %v6699
        %6744 = vmatprep.subr.bf16.mxu0 %v6703
        %6745 = vmatpush1.bf16.msra.mxu0 %v6702
        %6746 = vmatprep.subr.bf16.mxu0 %v6706
        %6747 = vmatpush1.bf16.msra.mxu0 %v6705
        %6748 = vmatprep.subr.bf16.mxu0 0
        %6749 = vmatpush1.bf16.msra.mxu0 0
        %6750 = vmatprep.subr.bf16.mxu0 0
        %6751 = vmatpush1.bf16.msra.mxu0 0
        %6752 = vmatprep.subr.bf16.mxu0 0
        %6753 = vmatpush1.bf16.msra.mxu0 0
        %6754 = vmatprep.subr.bf16.mxu0 0
        %6755 = vmatpush1.bf16.msra.mxu0 0
        %6756 = vmatprep.subr.bf16.mxu0 0
        %6757 = vmatpush1.bf16.msra.mxu0 0
        %6758 = vmatprep.subr.bf16.mxu0 0
        %6759 = vmatpush1.bf16.msra.mxu0 0
        %6760 = vmatprep.subr.bf16.mxu0 0
        %6761 = vmatpush1.bf16.msra.mxu0 0
        %6762 = vmatprep.subr.bf16.mxu0 0
        %6763 = vmatpush1.bf16.msra.mxu0 0
        %6764 = vmatprep.mubr.bf16.mxu0 0
        %6765 = vmatmul.mubr.bf16.gmra.mrb[0].mxu0 %v6570
        %v6766 = vpop.f32.mrb[0].mxu0
        %v6767 = vadd.f32 0.0, %v6766
        %v6768 = vpop.f32.mrb[0].mxu0
        %v6769 = vadd.f32 0.0, %v6768
        %v6770 = vpop.f32.mrb[0].mxu0
        %v6771 = vpop.f32.mrb[0].mxu0
        %6772 = vdwg.mxu0
        %6773 = vmatprep.subr.bf16.mxu0 0
        %6774 = vmatpush1.bf16.msra.mxu0 %v6686
        %6775 = vmatprep.subr.bf16.mxu0 0
        %6776 = vmatpush1.bf16.msra.mxu0 %v6689
        %6777 = vmatprep.subr.bf16.mxu0 0
        %6778 = vmatpush1.bf16.msra.mxu0 %v6692
        %6779 = vmatprep.subr.bf16.mxu0 0
        %6780 = vmatpush1.bf16.msra.mxu0 %v6695
        %6781 = vmatprep.subr.bf16.mxu0 0
        %6782 = vmatpush1.bf16.msra.mxu0 %v6698
        %6783 = vmatprep.subr.bf16.mxu0 0
        %6784 = vmatpush1.bf16.msra.mxu0 %v6701
        %6785 = vmatprep.subr.bf16.mxu0 0
        %6786 = vmatpush1.bf16.msra.mxu0 %v6704
        %6787 = vmatprep.subr.bf16.mxu0 0
        %6788 = vmatpush1.bf16.msra.mxu0 %v6707
        %6789 = vmatprep.subr.bf16.mxu0 0
        %6790 = vmatpush1.bf16.msra.mxu0 0
        %6791 = vmatprep.subr.bf16.mxu0 0
        %6792 = vmatpush1.bf16.msra.mxu0 0
        %6793 = vmatprep.subr.bf16.mxu0 0
        %6794 = vmatpush1.bf16.msra.mxu0 0
        %6795 = vmatprep.subr.bf16.mxu0 0
        %6796 = vmatpush1.bf16.msra.mxu0 0
        %6797 = vmatprep.subr.bf16.mxu0 0
        %6798 = vmatpush1.bf16.msra.mxu0 0
        %6799 = vmatprep.subr.bf16.mxu0 0
        %6800 = vmatpush1.bf16.msra.mxu0 0
        %6801 = vmatprep.subr.bf16.mxu0 0
        %6802 = vmatpush1.bf16.msra.mxu0 0
        %6803 = vmatprep.subr.bf16.mxu0 0
        %6804 = vmatpush1.bf16.msra.mxu0 0
        %6805 = vmatprep.mubr.bf16.mxu0 0
        %6806 = vmatmul.mubr.bf16.gmra.mrb[0].mxu0 %v6570
        %v6807 = vpop.f32.mrb[0].mxu0
        %v6808 = vadd.f32 0.0, %v6807
        %v6809 = vpop.f32.mrb[0].mxu0
        %v6810 = vpop.f32.mrb[0].mxu0
        %v6811 = vpop.f32.mrb[0].mxu0
        %6812 = vdwg.mxu0
        %v6813 = vlaneseq
        %v6814 = vshrl.u32 %v6813, 7
        %v6815 = vsub.s32 0, %v6814
        %v6816 = vrot.slane %v6568, %v6815
        %v6817 = vadd.f32 %v6767, %v6816
        %v6818 = vlaneseq
        %v6819 = vshrl.u32 %v6818, 7
        %v6820 = vsub.s32 1, %v6819
        %v6821 = vrot.slane %v6568, %v6820
        %v6822 = vadd.f32 %v6769, %v6821
        %v6823 = vlaneseq
        %v6824 = vshrl.u32 %v6823, 7
        %v6825 = vsub.s32 2, %v6824
        %v6826 = vrot.slane %v6568, %v6825
        %v6827 = vadd.f32 %v6808, %v6826
        %s6828 = scalar_lea.vmem [#allocation7], 320
        %v6829 = vld [vmem:[%s6828] sm:$0xf]
        %v6830 = vld [vmem:[%s6828 + $0x4] sm:$0xf]
        %v6831 = vld [vmem:[%s6828 + $0x8] sm:$0xf]
        %v6832 = vld [vmem:[%s6828 + $0xc] sm:$0xf]
        %v6833 = vld [vmem:[%s6828 + $0x10] sm:$0xf]
        %v6834 = vld [vmem:[%s6828 + $0x14] sm:$0xf]
        %v6835 = vld [vmem:[%s6828 + $0x18] sm:$0xf]
        %v6836 = vld [vmem:[%s6828 + $0x1c] sm:$0xf]
        %v6837 = vld [vmem:[%s6828 + $0x20] sm:$0xf]
        %v6838 = vld [vmem:[%s6828 + $0x24] sm:$0xf]
        %v6839 = vld [vmem:[%s6828 + $0x28] sm:$0xf]
        %v6840 = vld [vmem:[%s6828 + $0x2c] sm:$0xf]
        %v6841 = vld [vmem:[%s6828 + $0x30] sm:$0xf]
        %v6842 = vld [vmem:[%s6828 + $0x34] sm:$0xf]
        %v6843 = vld [vmem:[%s6828 + $0x38] sm:$0xf]
        %v6844 = vld [vmem:[%s6828 + $0x3c] sm:$0xf]
        %v6845 = vpack.c.bf16 %v6817, %v6817
        %v6846 = vpack.c.bf16 %v6822, %v6822
        %v6847 = vpack.c.bf16 %v6827, %v6827
        %v6849 = vsel %vm730, %v6845, 0
        %v6852 = vsel %vm730, %v6846, 0
        %6854 = vmatprep.subr.bf16.mxu0 0
        %6855 = vmatpush1.bf16.xpose.msra.mxu0 %v6852
        %6856 = vmatprep.subr.bf16.mxu0 0
        %6857 = vmatpush1.bf16.xpose.msra.mxu0 0
        %6858 = vmatprep.subr.bf16.mxu0 0
        %6859 = vmatpush1.bf16.xpose.msra.mxu0 0
        %6860 = vmatprep.subr.bf16.mxu0 0
        %6861 = vmatpush1.bf16.xpose.msra.mxu0 0
        %6862 = vmatprep.subr.bf16.mxu0 0
        %6863 = vmatpush1.bf16.xpose.msra.mxu0 0
        %6864 = vmatprep.subr.bf16.mxu0 0
        %6865 = vmatpush1.bf16.xpose.msra.mxu0 0
        %6866 = vmatprep.subr.bf16.mxu0 0
        %6867 = vmatpush1.bf16.xpose.msra.mxu0 0
        %6868 = vmatprep.subr.bf16.mxu0 0
        %6869 = vmatpush1.bf16.xpose.msra.mxu0 0
        %6870 = vmatprep.subr.bf16.mxu0 0
        %6871 = vmatpush1.bf16.xpose.msra.mxu0 0
        %6872 = vmatprep.subr.bf16.mxu0 0
        %6873 = vmatpush1.bf16.xpose.msra.mxu0 0
        %6874 = vmatprep.subr.bf16.mxu0 0
        %6875 = vmatpush1.bf16.xpose.msra.mxu0 0
        %6876 = vmatprep.subr.bf16.mxu0 0
        %6877 = vmatpush1.bf16.xpose.msra.mxu0 0
        %6878 = vmatprep.subr.bf16.mxu0 0
        %6879 = vmatpush1.bf16.xpose.msra.mxu0 0
        %6880 = vmatprep.subr.bf16.mxu0 0
        %6881 = vmatpush1.bf16.xpose.msra.mxu0 0
        %6882 = vmatprep.subr.bf16.mxu0 0
        %6883 = vmatpush1.bf16.xpose.msra.mxu0 0
        %6884 = vmatprep.subr.bf16.mxu0 0
        %6885 = vmatpush1.bf16.xpose.msra.mxu0 0
        %6886 = vmatprep.mubr.bf16.mxu0 0
        %6887 = vmatmul.mubr.bf16.gmra.mrb[0].mxu0 %v6849
        %v6888 = vpop.f32.mrb[0].mxu0
        %v6889 = vadd.f32 0.0, %v6888
        %v6890 = vpop.f32.mrb[0].mxu0
        %v6891 = vpop.f32.mrb[0].mxu0
        %v6892 = vpop.f32.mrb[0].mxu0
        %6893 = vdwg.mxu0
        %v6894 = vmul.f32 %v6889, 0.17677669
        %v6895 = vadd.f32 %v6894, %v782
        %v6896 = vsel %vm785, %v6895, -inf
        %6897 = vmax.xlane.f32.xlu0 %v6896
        %v6898 = vpop.xlane.xlu0 %6897
        %v6899 = vsub.f32 %v6895, %v6898
        %v6900 = vmul.f32 %v6899, 1.442695
        %v6901 = vpow.pop %v6900
        %v6902 = vsel %vm785, %v6901, 0.0
        %6903 = vadd.xlane.f32.xlu0 %v6902
        %v6904 = vpop.xlane.xlu0 %6903
        %v6905 = vrcp.pop %v6904
        %v6906 = vmul.f32 %v6901, %v6905
        %v6907 = vpack.c.bf16 %v6906, %v6906
        %v6909 = vsel %vm785, %v6907, 0
        %v6912 = vsel %vm801, %v6847, 0
        %6914 = vmatprep.subr.bf16.mxu0 0
        %6915 = vmatpush1.bf16.msra.mxu0 %v6912
        %6916 = vmatprep.subr.bf16.mxu0 0
        %6917 = vmatpush1.bf16.msra.mxu0 0
        %6918 = vmatprep.subr.bf16.mxu0 0
        %6919 = vmatpush1.bf16.msra.mxu0 0
        %6920 = vmatprep.subr.bf16.mxu0 0
        %6921 = vmatpush1.bf16.msra.mxu0 0
        %6922 = vmatprep.subr.bf16.mxu0 0
        %6923 = vmatpush1.bf16.msra.mxu0 0
        %6924 = vmatprep.subr.bf16.mxu0 0
        %6925 = vmatpush1.bf16.msra.mxu0 0
        %6926 = vmatprep.subr.bf16.mxu0 0
        %6927 = vmatpush1.bf16.msra.mxu0 0
        %6928 = vmatprep.subr.bf16.mxu0 0
        %6929 = vmatpush1.bf16.msra.mxu0 0
        %6930 = vmatprep.subr.bf16.mxu0 0
        %6931 = vmatpush1.bf16.msra.mxu0 0
        %6932 = vmatprep.subr.bf16.mxu0 0
        %6933 = vmatpush1.bf16.msra.mxu0 0
        %6934 = vmatprep.subr.bf16.mxu0 0
        %6935 = vmatpush1.bf16.msra.mxu0 0
        %6936 = vmatprep.subr.bf16.mxu0 0
        %6937 = vmatpush1.bf16.msra.mxu0 0
        %6938 = vmatprep.subr.bf16.mxu0 0
        %6939 = vmatpush1.bf16.msra.mxu0 0
        %6940 = vmatprep.subr.bf16.mxu0 0
        %6941 = vmatpush1.bf16.msra.mxu0 0
        %6942 = vmatprep.subr.bf16.mxu0 0
        %6943 = vmatpush1.bf16.msra.mxu0 0
        %6944 = vmatprep.subr.bf16.mxu0 0
        %6945 = vmatpush1.bf16.msra.mxu0 0
        %6946 = vmatprep.mubr.bf16.mxu0 0
        %6947 = vmatmul.mubr.bf16.gmra.mrb[0].mxu0 %v6909
        %v6948 = vpop.f32.mrb[0].mxu0
        %v6949 = vadd.f32 0.0, %v6948
        %v6950 = vpop.f32.mrb[0].mxu0
        %v6951 = vpop.f32.mrb[0].mxu0
        %v6952 = vpop.f32.mrb[0].mxu0
        %6953 = vdwg.mxu0
        %v6954 = vpack.c.bf16 %v6949, %v6949
        %6956 = vrot.lane.b32.xlu0 %v6845, 96
        %v6957 = vpop.permute.xlu0 %6956
        %6959 = vrot.lane.b32.xlu0 %v6846, 96
        %v6960 = vpop.permute.xlu0 %6959
        %v6962 = vsel %vm730, %v6957, 0
        %v6965 = vsel %vm730, %v6960, 0
        %6967 = vmatprep.subr.bf16.mxu0 0
        %6968 = vmatpush1.bf16.xpose.msra.mxu0 %v6965
        %6969 = vmatprep.subr.bf16.mxu0 0
        %6970 = vmatpush1.bf16.xpose.msra.mxu0 0
        %6971 = vmatprep.subr.bf16.mxu0 0
        %6972 = vmatpush1.bf16.xpose.msra.mxu0 0
        %6973 = vmatprep.subr.bf16.mxu0 0
        %6974 = vmatpush1.bf16.xpose.msra.mxu0 0
        %6975 = vmatprep.subr.bf16.mxu0 0
        %6976 = vmatpush1.bf16.xpose.msra.mxu0 0
        %6977 = vmatprep.subr.bf16.mxu0 0
        %6978 = vmatpush1.bf16.xpose.msra.mxu0 0
        %6979 = vmatprep.subr.bf16.mxu0 0
        %6980 = vmatpush1.bf16.xpose.msra.mxu0 0
        %6981 = vmatprep.subr.bf16.mxu0 0
        %6982 = vmatpush1.bf16.xpose.msra.mxu0 0
        %6983 = vmatprep.subr.bf16.mxu0 0
        %6984 = vmatpush1.bf16.xpose.msra.mxu0 0
        %6985 = vmatprep.subr.bf16.mxu0 0
        %6986 = vmatpush1.bf16.xpose.msra.mxu0 0
        %6987 = vmatprep.subr.bf16.mxu0 0
        %6988 = vmatpush1.bf16.xpose.msra.mxu0 0
        %6989 = vmatprep.subr.bf16.mxu0 0
        %6990 = vmatpush1.bf16.xpose.msra.mxu0 0
        %6991 = vmatprep.subr.bf16.mxu0 0
        %6992 = vmatpush1.bf16.xpose.msra.mxu0 0
        %6993 = vmatprep.subr.bf16.mxu0 0
        %6994 = vmatpush1.bf16.xpose.msra.mxu0 0
        %6995 = vmatprep.subr.bf16.mxu0 0
        %6996 = vmatpush1.bf16.xpose.msra.mxu0 0
        %6997 = vmatprep.subr.bf16.mxu0 0
        %6998 = vmatpush1.bf16.xpose.msra.mxu0 0
        %6999 = vmatprep.mubr.bf16.mxu0 0
        %7000 = vmatmul.mubr.bf16.gmra.mrb[0].mxu0 %v6962
        %v7001 = vpop.f32.mrb[0].mxu0
        %v7002 = vadd.f32 0.0, %v7001
        %v7003 = vpop.f32.mrb[0].mxu0
        %v7004 = vpop.f32.mrb[0].mxu0
        %v7005 = vpop.f32.mrb[0].mxu0
        %7006 = vdwg.mxu0
        %v7007 = vmul.f32 %v7002, 0.17677669
        %v7008 = vadd.f32 %v7007, %v782
        %v7009 = vsel %vm785, %v7008, -inf
        %7010 = vmax.xlane.f32.xlu0 %v7009
        %v7011 = vpop.xlane.xlu0 %7010
        %v7012 = vsub.f32 %v7008, %v7011
        %v7013 = vmul.f32 %v7012, 1.442695
        %v7014 = vpow.pop %v7013
        %v7015 = vsel %vm785, %v7014, 0.0
        %7016 = vadd.xlane.f32.xlu0 %v7015
        %v7017 = vpop.xlane.xlu0 %7016
        %v7018 = vrcp.pop %v7017
        %v7019 = vmul.f32 %v7014, %v7018
        %v7020 = vpack.c.bf16 %v7019, %v7019
        %7022 = vrot.lane.b32.xlu0 %v6847, 96
        %v7023 = vpop.permute.xlu0 %7022
        %v7025 = vsel %vm785, %v7020, 0
        %v7028 = vsel %vm801, %v7023, 0
        %7030 = vmatprep.subr.bf16.mxu0 0
        %7031 = vmatpush1.bf16.msra.mxu0 %v7028
        %7032 = vmatprep.subr.bf16.mxu0 0
        %7033 = vmatpush1.bf16.msra.mxu0 0
        %7034 = vmatprep.subr.bf16.mxu0 0
        %7035 = vmatpush1.bf16.msra.mxu0 0
        %7036 = vmatprep.subr.bf16.mxu0 0
        %7037 = vmatpush1.bf16.msra.mxu0 0
        %7038 = vmatprep.subr.bf16.mxu0 0
        %7039 = vmatpush1.bf16.msra.mxu0 0
        %7040 = vmatprep.subr.bf16.mxu0 0
        %7041 = vmatpush1.bf16.msra.mxu0 0
        %7042 = vmatprep.subr.bf16.mxu0 0
        %7043 = vmatpush1.bf16.msra.mxu0 0
        %7044 = vmatprep.subr.bf16.mxu0 0
        %7045 = vmatpush1.bf16.msra.mxu0 0
        %7046 = vmatprep.subr.bf16.mxu0 0
        %7047 = vmatpush1.bf16.msra.mxu0 0
        %7048 = vmatprep.subr.bf16.mxu0 0
        %7049 = vmatpush1.bf16.msra.mxu0 0
        %7050 = vmatprep.subr.bf16.mxu0 0
        %7051 = vmatpush1.bf16.msra.mxu0 0
        %7052 = vmatprep.subr.bf16.mxu0 0
        %7053 = vmatpush1.bf16.msra.mxu0 0
        %7054 = vmatprep.subr.bf16.mxu0 0
        %7055 = vmatpush1.bf16.msra.mxu0 0
        %7056 = vmatprep.subr.bf16.mxu0 0
        %7057 = vmatpush1.bf16.msra.mxu0 0
        %7058 = vmatprep.subr.bf16.mxu0 0
        %7059 = vmatpush1.bf16.msra.mxu0 0
        %7060 = vmatprep.subr.bf16.mxu0 0
        %7061 = vmatpush1.bf16.msra.mxu0 0
        %7062 = vmatprep.mubr.bf16.mxu0 0
        %7063 = vmatmul.mubr.bf16.gmra.mrb[0].mxu0 %v7025
        %v7064 = vpop.f32.mrb[0].mxu0
        %v7065 = vadd.f32 0.0, %v7064
        %v7066 = vpop.f32.mrb[0].mxu0
        %v7067 = vpop.f32.mrb[0].mxu0
        %v7068 = vpop.f32.mrb[0].mxu0
        %7069 = vdwg.mxu0
        %v7070 = vpack.c.bf16 %v7065, %v7065
        %v7075 = vunpack.c.l.b16 %v6833
        %v7076 = vunpack.c.l.b16 %v6834
        %v7077 = vunpack.c.l.b16 %v6835
        %v7078 = vunpack.c.l.b16 %v6836
        %v7079 = vpack.c.b16 %v7076, %v7075
        %v7080 = vpack.c.b16 %v7078, %v7077
        %v7084 = vsel %vm730, %v7070, 0
        %7086 = vmatprep.subr.bf16.mxu0 0
        %7087 = vmatpush1.bf16.msra.mxu0 %v7079
        %7088 = vmatprep.subr.bf16.mxu0 0
        %7089 = vmatpush1.bf16.msra.mxu0 %v7080
        %7090 = vmatprep.subr.bf16.mxu0 0
        %7091 = vmatpush1.bf16.msra.mxu0 0
        %7092 = vmatprep.subr.bf16.mxu0 0
        %7093 = vmatpush1.bf16.msra.mxu0 0
        %7094 = vmatprep.subr.bf16.mxu0 0
        %7095 = vmatpush1.bf16.msra.mxu0 0
        %7096 = vmatprep.subr.bf16.mxu0 0
        %7097 = vmatpush1.bf16.msra.mxu0 0
        %7098 = vmatprep.subr.bf16.mxu0 0
        %7099 = vmatpush1.bf16.msra.mxu0 0
        %7100 = vmatprep.subr.bf16.mxu0 0
        %7101 = vmatpush1.bf16.msra.mxu0 0
        %7102 = vmatprep.subr.bf16.mxu0 0
        %7103 = vmatpush1.bf16.msra.mxu0 0
        %7104 = vmatprep.subr.bf16.mxu0 0
        %7105 = vmatpush1.bf16.msra.mxu0 0
        %7106 = vmatprep.subr.bf16.mxu0 0
        %7107 = vmatpush1.bf16.msra.mxu0 0
        %7108 = vmatprep.subr.bf16.mxu0 0
        %7109 = vmatpush1.bf16.msra.mxu0 0
        %7110 = vmatprep.subr.bf16.mxu0 0
        %7111 = vmatpush1.bf16.msra.mxu0 0
        %7112 = vmatprep.subr.bf16.mxu0 0
        %7113 = vmatpush1.bf16.msra.mxu0 0
        %7114 = vmatprep.subr.bf16.mxu0 0
        %7115 = vmatpush1.bf16.msra.mxu0 0
        %7116 = vmatprep.subr.bf16.mxu0 0
        %7117 = vmatpush1.bf16.msra.mxu0 0
        %7118 = vmatprep.mubr.bf16.mxu0 0
        %7119 = vmatmul.mubr.bf16.gmra.mrb[0].mxu0 %v7084
        %v7120 = vpop.f32.mrb[0].mxu0
        %v7121 = vadd.f32 0.0, %v7120
        %v7122 = vpop.f32.mrb[0].mxu0
        %v7123 = vpop.f32.mrb[0].mxu0
        %v7124 = vpop.f32.mrb[0].mxu0
        %7125 = vdwg.mxu0
        %v7130 = vunpack.c.l.b16 %v6829
        %v7131 = vunpack.c.l.b16 %v6830
        %v7132 = vunpack.c.l.b16 %v6831
        %v7133 = vunpack.c.l.b16 %v6832
        %v7134 = vpack.c.b16 %v7131, %v7130
        %v7135 = vpack.c.b16 %v7133, %v7132
        %v7139 = vsel %vm730, %v6954, 0
        %7141 = vmatprep.subr.bf16.mxu0 0
        %7142 = vmatpush1.bf16.msra.mxu0 %v7134
        %7143 = vmatprep.subr.bf16.mxu0 0
        %7144 = vmatpush1.bf16.msra.mxu0 %v7135
        %7145 = vmatprep.subr.bf16.mxu0 0
        %7146 = vmatpush1.bf16.msra.mxu0 0
        %7147 = vmatprep.subr.bf16.mxu0 0
        %7148 = vmatpush1.bf16.msra.mxu0 0
        %7149 = vmatprep.subr.bf16.mxu0 0
        %7150 = vmatpush1.bf16.msra.mxu0 0
        %7151 = vmatprep.subr.bf16.mxu0 0
        %7152 = vmatpush1.bf16.msra.mxu0 0
        %7153 = vmatprep.subr.bf16.mxu0 0
        %7154 = vmatpush1.bf16.msra.mxu0 0
        %7155 = vmatprep.subr.bf16.mxu0 0
        %7156 = vmatpush1.bf16.msra.mxu0 0
        %7157 = vmatprep.subr.bf16.mxu0 0
        %7158 = vmatpush1.bf16.msra.mxu0 0
        %7159 = vmatprep.subr.bf16.mxu0 0
        %7160 = vmatpush1.bf16.msra.mxu0 0
        %7161 = vmatprep.subr.bf16.mxu0 0
        %7162 = vmatpush1.bf16.msra.mxu0 0
        %7163 = vmatprep.subr.bf16.mxu0 0
        %7164 = vmatpush1.bf16.msra.mxu0 0
        %7165 = vmatprep.subr.bf16.mxu0 0
        %7166 = vmatpush1.bf16.msra.mxu0 0
        %7167 = vmatprep.subr.bf16.mxu0 0
        %7168 = vmatpush1.bf16.msra.mxu0 0
        %7169 = vmatprep.subr.bf16.mxu0 0
        %7170 = vmatpush1.bf16.msra.mxu0 0
        %7171 = vmatprep.subr.bf16.mxu0 0
        %7172 = vmatpush1.bf16.msra.mxu0 0
        %7173 = vmatprep.mubr.bf16.mxu0 0
        %7174 = vmatmul.mubr.bf16.gmra.mrb[0].mxu0 %v7139
        %v7175 = vpop.f32.mrb[0].mxu0
        %v7176 = vadd.f32 %v7121, %v7175
        %v7177 = vpop.f32.mrb[0].mxu0
        %v7178 = vpop.f32.mrb[0].mxu0
        %v7179 = vpop.f32.mrb[0].mxu0
        %7180 = vdwg.mxu0
        %7181 = vrot.lane.b32.xlu0 %v6845, 64
        %v7182 = vpop.permute.xlu0 %7181
        %7183 = vrot.lane.b32.xlu0 %v6846, 64
        %v7184 = vpop.permute.xlu0 %7183
        %v7186 = vsel %vm730, %v7182, 0
        %v7189 = vsel %vm730, %v7184, 0
        %7191 = vmatprep.subr.bf16.mxu0 0
        %7192 = vmatpush1.bf16.xpose.msra.mxu0 %v7189
        %7193 = vmatprep.subr.bf16.mxu0 0
        %7194 = vmatpush1.bf16.xpose.msra.mxu0 0
        %7195 = vmatprep.subr.bf16.mxu0 0
        %7196 = vmatpush1.bf16.xpose.msra.mxu0 0
        %7197 = vmatprep.subr.bf16.mxu0 0
        %7198 = vmatpush1.bf16.xpose.msra.mxu0 0
        %7199 = vmatprep.subr.bf16.mxu0 0
        %7200 = vmatpush1.bf16.xpose.msra.mxu0 0
        %7201 = vmatprep.subr.bf16.mxu0 0
        %7202 = vmatpush1.bf16.xpose.msra.mxu0 0
        %7203 = vmatprep.subr.bf16.mxu0 0
        %7204 = vmatpush1.bf16.xpose.msra.mxu0 0
        %7205 = vmatprep.subr.bf16.mxu0 0
        %7206 = vmatpush1.bf16.xpose.msra.mxu0 0
        %7207 = vmatprep.subr.bf16.mxu0 0
        %7208 = vmatpush1.bf16.xpose.msra.mxu0 0
        %7209 = vmatprep.subr.bf16.mxu0 0
        %7210 = vmatpush1.bf16.xpose.msra.mxu0 0
        %7211 = vmatprep.subr.bf16.mxu0 0
        %7212 = vmatpush1.bf16.xpose.msra.mxu0 0
        %7213 = vmatprep.subr.bf16.mxu0 0
        %7214 = vmatpush1.bf16.xpose.msra.mxu0 0
        %7215 = vmatprep.subr.bf16.mxu0 0
        %7216 = vmatpush1.bf16.xpose.msra.mxu0 0
        %7217 = vmatprep.subr.bf16.mxu0 0
        %7218 = vmatpush1.bf16.xpose.msra.mxu0 0
        %7219 = vmatprep.subr.bf16.mxu0 0
        %7220 = vmatpush1.bf16.xpose.msra.mxu0 0
        %7221 = vmatprep.subr.bf16.mxu0 0
        %7222 = vmatpush1.bf16.xpose.msra.mxu0 0
        %7223 = vmatprep.mubr.bf16.mxu0 0
        %7224 = vmatmul.mubr.bf16.gmra.mrb[0].mxu0 %v7186
        %v7225 = vpop.f32.mrb[0].mxu0
        %v7226 = vadd.f32 0.0, %v7225
        %v7227 = vpop.f32.mrb[0].mxu0
        %v7228 = vpop.f32.mrb[0].mxu0
        %v7229 = vpop.f32.mrb[0].mxu0
        %7230 = vdwg.mxu0
        %v7231 = vmul.f32 %v7226, 0.17677669
        %v7232 = vadd.f32 %v7231, %v782
        %v7233 = vsel %vm785, %v7232, -inf
        %7234 = vmax.xlane.f32.xlu0 %v7233
        %v7235 = vpop.xlane.xlu0 %7234
        %v7236 = vsub.f32 %v7232, %v7235
        %v7237 = vmul.f32 %v7236, 1.442695
        %v7238 = vpow.pop %v7237
        %v7239 = vsel %vm785, %v7238, 0.0
        %7240 = vadd.xlane.f32.xlu0 %v7239
        %v7241 = vpop.xlane.xlu0 %7240
        %v7242 = vrcp.pop %v7241
        %v7243 = vmul.f32 %v7238, %v7242
        %v7244 = vpack.c.bf16 %v7243, %v7243
        %7245 = vrot.lane.b32.xlu0 %v6847, 64
        %v7246 = vpop.permute.xlu0 %7245
        %v7248 = vsel %vm785, %v7244, 0
        %v7251 = vsel %vm801, %v7246, 0
        %7253 = vmatprep.subr.bf16.mxu0 0
        %7254 = vmatpush1.bf16.msra.mxu0 %v7251
        %7255 = vmatprep.subr.bf16.mxu0 0
        %7256 = vmatpush1.bf16.msra.mxu0 0
        %7257 = vmatprep.subr.bf16.mxu0 0
        %7258 = vmatpush1.bf16.msra.mxu0 0
        %7259 = vmatprep.subr.bf16.mxu0 0
        %7260 = vmatpush1.bf16.msra.mxu0 0
        %7261 = vmatprep.subr.bf16.mxu0 0
        %7262 = vmatpush1.bf16.msra.mxu0 0
        %7263 = vmatprep.subr.bf16.mxu0 0
        %7264 = vmatpush1.bf16.msra.mxu0 0
        %7265 = vmatprep.subr.bf16.mxu0 0
        %7266 = vmatpush1.bf16.msra.mxu0 0
        %7267 = vmatprep.subr.bf16.mxu0 0
        %7268 = vmatpush1.bf16.msra.mxu0 0
        %7269 = vmatprep.subr.bf16.mxu0 0
        %7270 = vmatpush1.bf16.msra.mxu0 0
        %7271 = vmatprep.subr.bf16.mxu0 0
        %7272 = vmatpush1.bf16.msra.mxu0 0
        %7273 = vmatprep.subr.bf16.mxu0 0
        %7274 = vmatpush1.bf16.msra.mxu0 0
        %7275 = vmatprep.subr.bf16.mxu0 0
        %7276 = vmatpush1.bf16.msra.mxu0 0
        %7277 = vmatprep.subr.bf16.mxu0 0
        %7278 = vmatpush1.bf16.msra.mxu0 0
        %7279 = vmatprep.subr.bf16.mxu0 0
        %7280 = vmatpush1.bf16.msra.mxu0 0
        %7281 = vmatprep.subr.bf16.mxu0 0
        %7282 = vmatpush1.bf16.msra.mxu0 0
        %7283 = vmatprep.subr.bf16.mxu0 0
        %7284 = vmatpush1.bf16.msra.mxu0 0
        %7285 = vmatprep.mubr.bf16.mxu0 0
        %7286 = vmatmul.mubr.bf16.gmra.mrb[0].mxu0 %v7248
        %v7287 = vpop.f32.mrb[0].mxu0
        %v7288 = vadd.f32 0.0, %v7287
        %v7289 = vpop.f32.mrb[0].mxu0
        %v7290 = vpop.f32.mrb[0].mxu0
        %v7291 = vpop.f32.mrb[0].mxu0
        %7292 = vdwg.mxu0
        %v7293 = vpack.c.bf16 %v7288, %v7288
        %v7298 = vunpack.c.l.b16 %v6837
        %v7299 = vunpack.c.l.b16 %v6838
        %v7300 = vunpack.c.l.b16 %v6839
        %v7301 = vunpack.c.l.b16 %v6840
        %v7302 = vpack.c.b16 %v7299, %v7298
        %v7303 = vpack.c.b16 %v7301, %v7300
        %v7307 = vsel %vm730, %v7293, 0
        %7309 = vmatprep.subr.bf16.mxu0 0
        %7310 = vmatpush1.bf16.msra.mxu0 %v7302
        %7311 = vmatprep.subr.bf16.mxu0 0
        %7312 = vmatpush1.bf16.msra.mxu0 %v7303
        %7313 = vmatprep.subr.bf16.mxu0 0
        %7314 = vmatpush1.bf16.msra.mxu0 0
        %7315 = vmatprep.subr.bf16.mxu0 0
        %7316 = vmatpush1.bf16.msra.mxu0 0
        %7317 = vmatprep.subr.bf16.mxu0 0
        %7318 = vmatpush1.bf16.msra.mxu0 0
        %7319 = vmatprep.subr.bf16.mxu0 0
        %7320 = vmatpush1.bf16.msra.mxu0 0
        %7321 = vmatprep.subr.bf16.mxu0 0
        %7322 = vmatpush1.bf16.msra.mxu0 0
        %7323 = vmatprep.subr.bf16.mxu0 0
        %7324 = vmatpush1.bf16.msra.mxu0 0
        %7325 = vmatprep.subr.bf16.mxu0 0
        %7326 = vmatpush1.bf16.msra.mxu0 0
        %7327 = vmatprep.subr.bf16.mxu0 0
        %7328 = vmatpush1.bf16.msra.mxu0 0
        %7329 = vmatprep.subr.bf16.mxu0 0
        %7330 = vmatpush1.bf16.msra.mxu0 0
        %7331 = vmatprep.subr.bf16.mxu0 0
        %7332 = vmatpush1.bf16.msra.mxu0 0
        %7333 = vmatprep.subr.bf16.mxu0 0
        %7334 = vmatpush1.bf16.msra.mxu0 0
        %7335 = vmatprep.subr.bf16.mxu0 0
        %7336 = vmatpush1.bf16.msra.mxu0 0
        %7337 = vmatprep.subr.bf16.mxu0 0
        %7338 = vmatpush1.bf16.msra.mxu0 0
        %7339 = vmatprep.subr.bf16.mxu0 0
        %7340 = vmatpush1.bf16.msra.mxu0 0
        %7341 = vmatprep.mubr.bf16.mxu0 0
        %7342 = vmatmul.mubr.bf16.gmra.mrb[0].mxu0 %v7307
        %v7343 = vpop.f32.mrb[0].mxu0
        %v7344 = vadd.f32 0.0, %v7343
        %v7345 = vpop.f32.mrb[0].mxu0
        %v7346 = vpop.f32.mrb[0].mxu0
        %v7347 = vpop.f32.mrb[0].mxu0
        %7348 = vdwg.mxu0
        %v7349 = vadd.f32 %v7176, %v7344
        %7350 = vrot.lane.b32.xlu0 %v6845, 32
        %v7351 = vpop.permute.xlu0 %7350
        %7352 = vrot.lane.b32.xlu0 %v6846, 32
        %v7353 = vpop.permute.xlu0 %7352
        %v7355 = vsel %vm730, %v7351, 0
        %v7358 = vsel %vm730, %v7353, 0
        %7360 = vmatprep.subr.bf16.mxu0 0
        %7361 = vmatpush1.bf16.xpose.msra.mxu0 %v7358
        %7362 = vmatprep.subr.bf16.mxu0 0
        %7363 = vmatpush1.bf16.xpose.msra.mxu0 0
        %7364 = vmatprep.subr.bf16.mxu0 0
        %7365 = vmatpush1.bf16.xpose.msra.mxu0 0
        %7366 = vmatprep.subr.bf16.mxu0 0
        %7367 = vmatpush1.bf16.xpose.msra.mxu0 0
        %7368 = vmatprep.subr.bf16.mxu0 0
        %7369 = vmatpush1.bf16.xpose.msra.mxu0 0
        %7370 = vmatprep.subr.bf16.mxu0 0
        %7371 = vmatpush1.bf16.xpose.msra.mxu0 0
        %7372 = vmatprep.subr.bf16.mxu0 0
        %7373 = vmatpush1.bf16.xpose.msra.mxu0 0
        %7374 = vmatprep.subr.bf16.mxu0 0
        %7375 = vmatpush1.bf16.xpose.msra.mxu0 0
        %7376 = vmatprep.subr.bf16.mxu0 0
        %7377 = vmatpush1.bf16.xpose.msra.mxu0 0
        %7378 = vmatprep.subr.bf16.mxu0 0
        %7379 = vmatpush1.bf16.xpose.msra.mxu0 0
        %7380 = vmatprep.subr.bf16.mxu0 0
        %7381 = vmatpush1.bf16.xpose.msra.mxu0 0
        %7382 = vmatprep.subr.bf16.mxu0 0
        %7383 = vmatpush1.bf16.xpose.msra.mxu0 0
        %7384 = vmatprep.subr.bf16.mxu0 0
        %7385 = vmatpush1.bf16.xpose.msra.mxu0 0
        %7386 = vmatprep.subr.bf16.mxu0 0
        %7387 = vmatpush1.bf16.xpose.msra.mxu0 0
        %7388 = vmatprep.subr.bf16.mxu0 0
        %7389 = vmatpush1.bf16.xpose.msra.mxu0 0
        %7390 = vmatprep.subr.bf16.mxu0 0
        %7391 = vmatpush1.bf16.xpose.msra.mxu0 0
        %7392 = vmatprep.mubr.bf16.mxu0 0
        %7393 = vmatmul.mubr.bf16.gmra.mrb[0].mxu0 %v7355
        %v7394 = vpop.f32.mrb[0].mxu0
        %v7395 = vadd.f32 0.0, %v7394
        %v7396 = vpop.f32.mrb[0].mxu0
        %v7397 = vpop.f32.mrb[0].mxu0
        %v7398 = vpop.f32.mrb[0].mxu0
        %7399 = vdwg.mxu0
        %v7400 = vmul.f32 %v7395, 0.17677669
        %v7401 = vadd.f32 %v7400, %v782
        %v7402 = vsel %vm785, %v7401, -inf
        %7403 = vmax.xlane.f32.xlu0 %v7402
        %v7404 = vpop.xlane.xlu0 %7403
        %v7405 = vsub.f32 %v7401, %v7404
        %v7406 = vmul.f32 %v7405, 1.442695
        %v7407 = vpow.pop %v7406
        %v7408 = vsel %vm785, %v7407, 0.0
        %7409 = vadd.xlane.f32.xlu0 %v7408
        %v7410 = vpop.xlane.xlu0 %7409
        %v7411 = vrcp.pop %v7410
        %v7412 = vmul.f32 %v7407, %v7411
        %v7413 = vpack.c.bf16 %v7412, %v7412
        %7414 = vrot.lane.b32.xlu0 %v6847, 32
        %v7415 = vpop.permute.xlu0 %7414
        %v7417 = vsel %vm785, %v7413, 0
        %v7420 = vsel %vm801, %v7415, 0
        %7422 = vmatprep.subr.bf16.mxu0 0
        %7423 = vmatpush1.bf16.msra.mxu0 %v7420
        %7424 = vmatprep.subr.bf16.mxu0 0
        %7425 = vmatpush1.bf16.msra.mxu0 0
        %7426 = vmatprep.subr.bf16.mxu0 0
        %7427 = vmatpush1.bf16.msra.mxu0 0
        %7428 = vmatprep.subr.bf16.mxu0 0
        %7429 = vmatpush1.bf16.msra.mxu0 0
        %7430 = vmatprep.subr.bf16.mxu0 0
        %7431 = vmatpush1.bf16.msra.mxu0 0
        %7432 = vmatprep.subr.bf16.mxu0 0
        %7433 = vmatpush1.bf16.msra.mxu0 0
        %7434 = vmatprep.subr.bf16.mxu0 0
        %7435 = vmatpush1.bf16.msra.mxu0 0
        %7436 = vmatprep.subr.bf16.mxu0 0
        %7437 = vmatpush1.bf16.msra.mxu0 0
        %7438 = vmatprep.subr.bf16.mxu0 0
        %7439 = vmatpush1.bf16.msra.mxu0 0
        %7440 = vmatprep.subr.bf16.mxu0 0
        %7441 = vmatpush1.bf16.msra.mxu0 0
        %7442 = vmatprep.subr.bf16.mxu0 0
        %7443 = vmatpush1.bf16.msra.mxu0 0
        %7444 = vmatprep.subr.bf16.mxu0 0
        %7445 = vmatpush1.bf16.msra.mxu0 0
        %7446 = vmatprep.subr.bf16.mxu0 0
        %7447 = vmatpush1.bf16.msra.mxu0 0
        %7448 = vmatprep.subr.bf16.mxu0 0
        %7449 = vmatpush1.bf16.msra.mxu0 0
        %7450 = vmatprep.subr.bf16.mxu0 0
        %7451 = vmatpush1.bf16.msra.mxu0 0
        %7452 = vmatprep.subr.bf16.mxu0 0
        %7453 = vmatpush1.bf16.msra.mxu0 0
        %7454 = vmatprep.mubr.bf16.mxu0 0
        %7455 = vmatmul.mubr.bf16.gmra.mrb[0].mxu0 %v7417
        %v7456 = vpop.f32.mrb[0].mxu0
        %v7457 = vadd.f32 0.0, %v7456
        %v7458 = vpop.f32.mrb[0].mxu0
        %v7459 = vpop.f32.mrb[0].mxu0
        %v7460 = vpop.f32.mrb[0].mxu0
        %7461 = vdwg.mxu0
        %v7462 = vpack.c.bf16 %v7457, %v7457
        %v7467 = vunpack.c.l.b16 %v6841
        %v7468 = vunpack.c.l.b16 %v6842
        %v7469 = vunpack.c.l.b16 %v6843
        %v7470 = vunpack.c.l.b16 %v6844
        %v7471 = vpack.c.b16 %v7468, %v7467
        %v7472 = vpack.c.b16 %v7470, %v7469
        %v7476 = vsel %vm730, %v7462, 0
        %7478 = vmatprep.subr.bf16.mxu0 0
        %7479 = vmatpush1.bf16.msra.mxu0 %v7471
        %7480 = vmatprep.subr.bf16.mxu0 0
        %7481 = vmatpush1.bf16.msra.mxu0 %v7472
        %7482 = vmatprep.subr.bf16.mxu0 0
        %7483 = vmatpush1.bf16.msra.mxu0 0
        %7484 = vmatprep.subr.bf16.mxu0 0
        %7485 = vmatpush1.bf16.msra.mxu0 0
        %7486 = vmatprep.subr.bf16.mxu0 0
        %7487 = vmatpush1.bf16.msra.mxu0 0
        %7488 = vmatprep.subr.bf16.mxu0 0
        %7489 = vmatpush1.bf16.msra.mxu0 0
        %7490 = vmatprep.subr.bf16.mxu0 0
        %7491 = vmatpush1.bf16.msra.mxu0 0
        %7492 = vmatprep.subr.bf16.mxu0 0
        %7493 = vmatpush1.bf16.msra.mxu0 0
        %7494 = vmatprep.subr.bf16.mxu0 0
        %7495 = vmatpush1.bf16.msra.mxu0 0
        %7496 = vmatprep.subr.bf16.mxu0 0
        %7497 = vmatpush1.bf16.msra.mxu0 0
        %7498 = vmatprep.subr.bf16.mxu0 0
        %7499 = vmatpush1.bf16.msra.mxu0 0
        %7500 = vmatprep.subr.bf16.mxu0 0
        %7501 = vmatpush1.bf16.msra.mxu0 0
        %7502 = vmatprep.subr.bf16.mxu0 0
        %7503 = vmatpush1.bf16.msra.mxu0 0
        %7504 = vmatprep.subr.bf16.mxu0 0
        %7505 = vmatpush1.bf16.msra.mxu0 0
        %7506 = vmatprep.subr.bf16.mxu0 0
        %7507 = vmatpush1.bf16.msra.mxu0 0
        %7508 = vmatprep.subr.bf16.mxu0 0
        %7509 = vmatpush1.bf16.msra.mxu0 0
        %7510 = vmatprep.mubr.bf16.mxu0 0
        %7511 = vmatmul.mubr.bf16.gmra.mrb[0].mxu0 %v7476
        %v7512 = vpop.f32.mrb[0].mxu0
        %v7513 = vadd.f32 0.0, %v7512
        %v7514 = vpop.f32.mrb[0].mxu0
        %v7515 = vpop.f32.mrb[0].mxu0
        %v7516 = vpop.f32.mrb[0].mxu0
        %7517 = vdwg.mxu0
        %v7518 = vadd.f32 %v7349, %v7513
        %v7519 = vlaneseq
        %v7520 = vshrl.u32 %v7519, 7
        %v7521 = vsub.s32 3, %v7520
        %v7522 = vrot.slane %v6568, %v7521
        %v7523 = vadd.f32 %v7518, %v7522
        %v7524 = vadd.f32 %v6566, %v7523
        %7525 = vadd.xlane.f32.xlu0 %v7524
        %v7526 = vpop.xlane.xlu0 %7525
        %v7527 = vmul.f32 %v7526, %v1418
        %v7528 = vsub.f32 %v7524, %v7527
        %v7529 = vmul.f32 %v7528, %v7528
        %7530 = vadd.xlane.f32.xlu0 %v7529
        %v7531 = vpop.xlane.xlu0 %7530
        %v7532 = vmul.f32 %v7531, %v1418
        %v7533 = vadd.f32 %v7532, 1e-05
        %v7534 = vrsqrt.pop %v7533
        %v7535 = vmul.f32 %v7528, %v7534
        %v7536 = vlaneseq
        %v7537 = vshrl.u32 %v7536, 7
        %v7538 = vsub.s32 6, %v7537
        %v7539 = vrot.slane %v6568, %v7538
        %v7540 = vmul.f32 %v7535, %v7539
        %v7541 = vlaneseq
        %v7542 = vshrl.u32 %v7541, 7
        %v7543 = vsub.s32 7, %v7542
        %v7544 = vrot.slane %v6568, %v7543
        %v7545 = vadd.f32 %v7540, %v7544
        %v7546 = vpack.c.bf16 %v7545, %v7545
        %s7547 = scalar_lea.vmem [#allocation8], 320
        %v7548 = vld [vmem:[%s7547] sm:$0xf]
        %v7549 = vld [vmem:[%s7547 + $0x4] sm:$0xf]
        %v7550 = vld [vmem:[%s7547 + $0x8] sm:$0xf]
        %v7551 = vld [vmem:[%s7547 + $0xc] sm:$0xf]
        %v7552 = vld [vmem:[%s7547 + $0x10] sm:$0xf]
        %v7553 = vld [vmem:[%s7547 + $0x14] sm:$0xf]
        %v7554 = vld [vmem:[%s7547 + $0x18] sm:$0xf]
        %v7555 = vld [vmem:[%s7547 + $0x1c] sm:$0xf]
        %v7556 = vld [vmem:[%s7547 + $0x20] sm:$0xf]
        %v7557 = vld [vmem:[%s7547 + $0x24] sm:$0xf]
        %v7558 = vld [vmem:[%s7547 + $0x28] sm:$0xf]
        %v7559 = vld [vmem:[%s7547 + $0x2c] sm:$0xf]
        %v7560 = vld [vmem:[%s7547 + $0x30] sm:$0xf]
        %v7561 = vld [vmem:[%s7547 + $0x34] sm:$0xf]
        %v7562 = vld [vmem:[%s7547 + $0x38] sm:$0xf]
        %v7563 = vld [vmem:[%s7547 + $0x3c] sm:$0xf]
        %v7564 = vlaneseq
        %v7565 = vshrl.u32 %v7564, 7
        %v7566 = vsub.s32 4, %v7565
        %v7567 = vrot.slane %v6568, %v7566
        %v7584 = vunpack.c.l.b16 %v7548
        %v7585 = vunpack.c.l.b16 %v7549
        %v7586 = vunpack.c.l.b16 %v7550
        %v7587 = vunpack.c.l.b16 %v7551
        %v7588 = vunpack.c.l.b16 %v7552
        %v7589 = vunpack.c.l.b16 %v7553
        %v7590 = vunpack.c.l.b16 %v7554
        %v7591 = vunpack.c.l.b16 %v7555
        %v7592 = vunpack.c.l.b16 %v7556
        %v7593 = vunpack.c.l.b16 %v7557
        %v7594 = vunpack.c.l.b16 %v7558
        %v7595 = vunpack.c.l.b16 %v7559
        %v7596 = vunpack.c.l.b16 %v7560
        %v7597 = vunpack.c.l.b16 %v7561
        %v7598 = vunpack.c.l.b16 %v7562
        %v7599 = vunpack.c.l.b16 %v7563
        %v7600 = vpack.c.b16 %v7585, %v7584
        %v7601 = vpack.c.b16 %v7587, %v7586
        %v7602 = vpack.c.b16 %v7589, %v7588
        %v7603 = vpack.c.b16 %v7591, %v7590
        %v7604 = vpack.c.b16 %v7593, %v7592
        %v7605 = vpack.c.b16 %v7595, %v7594
        %v7606 = vpack.c.b16 %v7597, %v7596
        %v7607 = vpack.c.b16 %v7599, %v7598
        %7616 = vmatprep.subr.bf16.mxu0 0
        %7617 = vmatpush1.bf16.msra.mxu0 %v7600
        %7618 = vmatprep.subr.bf16.mxu0 0
        %7619 = vmatpush1.bf16.msra.mxu0 %v7601
        %7620 = vmatprep.subr.bf16.mxu0 0
        %7621 = vmatpush1.bf16.msra.mxu0 %v7602
        %7622 = vmatprep.subr.bf16.mxu0 0
        %7623 = vmatpush1.bf16.msra.mxu0 %v7603
        %7624 = vmatprep.subr.bf16.mxu0 0
        %7625 = vmatpush1.bf16.msra.mxu0 %v7604
        %7626 = vmatprep.subr.bf16.mxu0 0
        %7627 = vmatpush1.bf16.msra.mxu0 %v7605
        %7628 = vmatprep.subr.bf16.mxu0 0
        %7629 = vmatpush1.bf16.msra.mxu0 %v7606
        %7630 = vmatprep.subr.bf16.mxu0 0
        %7631 = vmatpush1.bf16.msra.mxu0 %v7607
        %7632 = vmatprep.subr.bf16.mxu0 0
        %7633 = vmatpush1.bf16.msra.mxu0 0
        %7634 = vmatprep.subr.bf16.mxu0 0
        %7635 = vmatpush1.bf16.msra.mxu0 0
        %7636 = vmatprep.subr.bf16.mxu0 0
        %7637 = vmatpush1.bf16.msra.mxu0 0
        %7638 = vmatprep.subr.bf16.mxu0 0
        %7639 = vmatpush1.bf16.msra.mxu0 0
        %7640 = vmatprep.subr.bf16.mxu0 0
        %7641 = vmatpush1.bf16.msra.mxu0 0
        %7642 = vmatprep.subr.bf16.mxu0 0
        %7643 = vmatpush1.bf16.msra.mxu0 0
        %7644 = vmatprep.subr.bf16.mxu0 0
        %7645 = vmatpush1.bf16.msra.mxu0 0
        %7646 = vmatprep.subr.bf16.mxu0 0
        %7647 = vmatpush1.bf16.msra.mxu0 0
        %7648 = vmatprep.mubr.bf16.mxu0 0
        %7649 = vmatmul.mubr.bf16.gmra.mrb[0].mxu0 %v7546
        %v7650 = vpop.f32.mrb[0].mxu0
        %v7651 = vadd.f32 %v7567, %v7650
        %v7652 = vpop.f32.mrb[0].mxu0
        %v7653 = vpop.f32.mrb[0].mxu0
        %v7654 = vpop.f32.mrb[0].mxu0
        %7655 = vdwg.mxu0
        %v7656 = vmax.f32 %v7651, 0.0
        %v7657 = vpack.c.bf16 %v7656, %v7656
        %s7658 = scalar_lea.vmem [#allocation10], 320
        %v7659 = vld [vmem:[%s7658] sm:$0xf]
        %v7660 = vld [vmem:[%s7658 + $0x4] sm:$0xf]
        %v7661 = vld [vmem:[%s7658 + $0x8] sm:$0xf]
        %v7662 = vld [vmem:[%s7658 + $0xc] sm:$0xf]
        %v7663 = vld [vmem:[%s7658 + $0x10] sm:$0xf]
        %v7664 = vld [vmem:[%s7658 + $0x14] sm:$0xf]
        %v7665 = vld [vmem:[%s7658 + $0x18] sm:$0xf]
        %v7666 = vld [vmem:[%s7658 + $0x1c] sm:$0xf]
        %v7667 = vld [vmem:[%s7658 + $0x20] sm:$0xf]
        %v7668 = vld [vmem:[%s7658 + $0x24] sm:$0xf]
        %v7669 = vld [vmem:[%s7658 + $0x28] sm:$0xf]
        %v7670 = vld [vmem:[%s7658 + $0x2c] sm:$0xf]
        %v7671 = vld [vmem:[%s7658 + $0x30] sm:$0xf]
        %v7672 = vld [vmem:[%s7658 + $0x34] sm:$0xf]
        %v7673 = vld [vmem:[%s7658 + $0x38] sm:$0xf]
        %v7674 = vld [vmem:[%s7658 + $0x3c] sm:$0xf]
        %v7675 = vlaneseq
        %v7676 = vshrl.u32 %v7675, 7
        %v7677 = vsub.s32 5, %v7676
        %v7678 = vrot.slane %v6568, %v7677
        %v7695 = vunpack.c.l.b16 %v7659
        %v7696 = vunpack.c.l.b16 %v7660
        %v7697 = vunpack.c.l.b16 %v7661
        %v7698 = vunpack.c.l.b16 %v7662
        %v7699 = vunpack.c.l.b16 %v7663
        %v7700 = vunpack.c.l.b16 %v7664
        %v7701 = vunpack.c.l.b16 %v7665
        %v7702 = vunpack.c.l.b16 %v7666
        %v7703 = vunpack.c.l.b16 %v7667
        %v7704 = vunpack.c.l.b16 %v7668
        %v7705 = vunpack.c.l.b16 %v7669
        %v7706 = vunpack.c.l.b16 %v7670
        %v7707 = vunpack.c.l.b16 %v7671
        %v7708 = vunpack.c.l.b16 %v7672
        %v7709 = vunpack.c.l.b16 %v7673
        %v7710 = vunpack.c.l.b16 %v7674
        %v7711 = vpack.c.b16 %v7696, %v7695
        %v7712 = vpack.c.b16 %v7698, %v7697
        %v7713 = vpack.c.b16 %v7700, %v7699
        %v7714 = vpack.c.b16 %v7702, %v7701
        %v7715 = vpack.c.b16 %v7704, %v7703
        %v7716 = vpack.c.b16 %v7706, %v7705
        %v7717 = vpack.c.b16 %v7708, %v7707
        %v7718 = vpack.c.b16 %v7710, %v7709
        %7727 = vmatprep.subr.bf16.mxu0 0
        %7728 = vmatpush1.bf16.msra.mxu0 %v7711
        %7729 = vmatprep.subr.bf16.mxu0 0
        %7730 = vmatpush1.bf16.msra.mxu0 %v7712
        %7731 = vmatprep.subr.bf16.mxu0 0
        %7732 = vmatpush1.bf16.msra.mxu0 %v7713
        %7733 = vmatprep.subr.bf16.mxu0 0
        %7734 = vmatpush1.bf16.msra.mxu0 %v7714
        %7735 = vmatprep.subr.bf16.mxu0 0
        %7736 = vmatpush1.bf16.msra.mxu0 %v7715
        %7737 = vmatprep.subr.bf16.mxu0 0
        %7738 = vmatpush1.bf16.msra.mxu0 %v7716
        %7739 = vmatprep.subr.bf16.mxu0 0
        %7740 = vmatpush1.bf16.msra.mxu0 %v7717
        %7741 = vmatprep.subr.bf16.mxu0 0
        %7742 = vmatpush1.bf16.msra.mxu0 %v7718
        %7743 = vmatprep.subr.bf16.mxu0 0
        %7744 = vmatpush1.bf16.msra.mxu0 0
        %7745 = vmatprep.subr.bf16.mxu0 0
        %7746 = vmatpush1.bf16.msra.mxu0 0
        %7747 = vmatprep.subr.bf16.mxu0 0
        %7748 = vmatpush1.bf16.msra.mxu0 0
        %7749 = vmatprep.subr.bf16.mxu0 0
        %7750 = vmatpush1.bf16.msra.mxu0 0
        %7751 = vmatprep.subr.bf16.mxu0 0
        %7752 = vmatpush1.bf16.msra.mxu0 0
        %7753 = vmatprep.subr.bf16.mxu0 0
        %7754 = vmatpush1.bf16.msra.mxu0 0
        %7755 = vmatprep.subr.bf16.mxu0 0
        %7756 = vmatpush1.bf16.msra.mxu0 0
        %7757 = vmatprep.subr.bf16.mxu0 0
        %7758 = vmatpush1.bf16.msra.mxu0 0
        %7759 = vmatprep.mubr.bf16.mxu0 0
        %7760 = vmatmul.mubr.bf16.gmra.mrb[0].mxu0 %v7657
        %v7761 = vpop.f32.mrb[0].mxu0
        %v7762 = vadd.f32 %v7678, %v7761
        %v7763 = vpop.f32.mrb[0].mxu0
        %v7764 = vpop.f32.mrb[0].mxu0
        %v7765 = vpop.f32.mrb[0].mxu0
        %7766 = vdwg.mxu0
        %v7767 = vadd.f32 %v7545, %v7762
        %7768 = vadd.xlane.f32.xlu0 %v7767
        %v7769 = vpop.xlane.xlu0 %7768
        %v7770 = vmul.f32 %v7769, %v1418
        %v7771 = vsub.f32 %v7767, %v7770
        %v7772 = vmul.f32 %v7771, %v7771
        %7773 = vadd.xlane.f32.xlu0 %v7772
        %v7774 = vpop.xlane.xlu0 %7773
        %v7775 = vmul.f32 %v7774, %v1418
        %v7776 = vadd.f32 %v7775, 1e-05
        %v7777 = vrsqrt.pop %v7776
        %v7778 = vmul.f32 %v7771, %v7777
        %v7779 = vlaneseq
        %v7780 = vshrl.u32 %v7779, 7
        %v7781 = vsub.s32 0, %v7780
        %v7782 = vrot.slane %v6569, %v7781
        %v7783 = vmul.f32 %v7778, %v7782
        %v7784 = vlaneseq
        %v7785 = vshrl.u32 %v7784, 7
        %v7786 = vsub.s32 1, %v7785
        %v7787 = vrot.slane %v6569, %v7786
        %v7788 = vadd.f32 %v7783, %v7787
        %v7789 = vpack.c.bf16 %v7788, %v7788
        %v7790 = vld [vmem:[#allocation13] sm:$0xff]
        %v7791 = vld [vmem:[#allocation13 + $0x8] sm:$0xff]
        %v7792 = vld [vmem:[#allocation13 + $0x10] sm:$0xff]
        %v7793 = vld [vmem:[#allocation13 + $0x18] sm:$0xff]
        %v7794 = vld [vmem:[#allocation13 + $0x20] sm:$0xff]
        %v7795 = vld [vmem:[#allocation13 + $0x28] sm:$0xff]
        %v7796 = vld [vmem:[#allocation13 + $0x30] sm:$0xff]
        %v7797 = vld [vmem:[#allocation13 + $0x38] sm:$0xff]
        %v7798 = vld [vmem:[#allocation13 + $0x40] sm:$0xff]
        %v7799 = vld [vmem:[#allocation13 + $0x48] sm:$0xff]
        %v7800 = vld [vmem:[#allocation13 + $0x50] sm:$0xff]
        %v7801 = vld [vmem:[#allocation13 + $0x58] sm:$0xff]
        %v7802 = vld [vmem:[#allocation13 + $0x60] sm:$0xff]
        %v7803 = vld [vmem:[#allocation13 + $0x68] sm:$0xff]
        %v7804 = vld [vmem:[#allocation13 + $0x70] sm:$0xff]
        %v7805 = vld [vmem:[#allocation13 + $0x78] sm:$0xff]
        %v7806 = vld [vmem:[#allocation13 + $0x80] sm:$0xff]
        %v7807 = vld [vmem:[#allocation13 + $0x88] sm:$0xff]
        %v7808 = vld [vmem:[#allocation13 + $0x90] sm:$0xff]
        %v7809 = vld [vmem:[#allocation13 + $0x98] sm:$0xff]
        %v7810 = vld [vmem:[#allocation13 + $0xa0] sm:$0xff]
        %v7811 = vld [vmem:[#allocation13 + $0xa8] sm:$0xff]
        %v7812 = vld [vmem:[#allocation13 + $0xb0] sm:$0xff]
        %v7813 = vld [vmem:[#allocation13 + $0xb8] sm:$0xff]
        %v7814 = vld [vmem:[#allocation13 + $0xc0] sm:$0xff]
        %v7815 = vld [vmem:[#allocation13 + $0xc8] sm:$0xff]
        %v7816 = vld [vmem:[#allocation13 + $0xd0] sm:$0xff]
        %v7817 = vld [vmem:[#allocation13 + $0xd8] sm:$0xff]
        %v7818 = vld [vmem:[#allocation13 + $0xe0] sm:$0xff]
        %v7819 = vld [vmem:[#allocation13 + $0xe8] sm:$0xff]
        %v7820 = vld [vmem:[#allocation13 + $0xf0] sm:$0xff]
        %v7821 = vld [vmem:[#allocation13 + $0xf8] sm:$0xff]
        %v7822 = vld [vmem:[#allocation13 + $0x100] sm:$0xff]
        %v7823 = vld [vmem:[#allocation13 + $0x108] sm:$0xff]
        %v7824 = vld [vmem:[#allocation13 + $0x110] sm:$0xff]
        %v7825 = vld [vmem:[#allocation13 + $0x118] sm:$0xff]
        %v7826 = vld [vmem:[#allocation13 + $0x120] sm:$0xff]
        %v7827 = vld [vmem:[#allocation13 + $0x128] sm:$0xff]
        %v7828 = vld [vmem:[#allocation13 + $0x130] sm:$0xff]
        %v7829 = vld [vmem:[#allocation13 + $0x138] sm:$0xff]
        %v7830 = vld [vmem:[#allocation13 + $0x140] sm:$0xff]
        %v7831 = vld [vmem:[#allocation13 + $0x148] sm:$0xff]
        %v7832 = vld [vmem:[#allocation13 + $0x150] sm:$0xff]
        %v7833 = vld [vmem:[#allocation13 + $0x158] sm:$0xff]
        %v7834 = vld [vmem:[#allocation13 + $0x160] sm:$0xff]
        %v7835 = vld [vmem:[#allocation13 + $0x168] sm:$0xff]
        %v7836 = vld [vmem:[#allocation13 + $0x170] sm:$0xff]
        %v7837 = vld [vmem:[#allocation13 + $0x178] sm:$0xff]
        %v7838 = vld [vmem:[#allocation13 + $0x180] sm:$0xff]
        %v7839 = vld [vmem:[#allocation13 + $0x188] sm:$0xff]
        %v7840 = vld [vmem:[#allocation13 + $0x190] sm:$0xff]
        %v7841 = vld [vmem:[#allocation13 + $0x198] sm:$0xff]
        %v7842 = vld [vmem:[#allocation13 + $0x1a0] sm:$0xff]
        %v7843 = vld [vmem:[#allocation13 + $0x1a8] sm:$0xff]
        %v7844 = vld [vmem:[#allocation13 + $0x1b0] sm:$0xff]
        %v7845 = vld [vmem:[#allocation13 + $0x1b8] sm:$0xff]
        %v7846 = vld [vmem:[#allocation13 + $0x1c0] sm:$0xff]
        %v7847 = vld [vmem:[#allocation13 + $0x1c8] sm:$0xff]
        %v7848 = vld [vmem:[#allocation13 + $0x1d0] sm:$0xff]
        %v7849 = vld [vmem:[#allocation13 + $0x1d8] sm:$0xff]
        %v7850 = vld [vmem:[#allocation13 + $0x1e0] sm:$0xff]
        %v7851 = vld [vmem:[#allocation13 + $0x1e8] sm:$0xff]
        %v7852 = vld [vmem:[#allocation13 + $0x1f0] sm:$0xff]
        %v7853 = vld [vmem:[#allocation13 + $0x1f8] sm:$0xff]
        %v7854 = vld [vmem:[%s8] sm:$0xff]
        %v7856 = vlaneseq
        %v7857 = vshrl.u32 %v7856, 7
        %v7858 = vsub.s32 0, %v7857
        %v7859 = vrot.slane %v7854, %v7858
        %v7860 = vlaneseq
        %v7861 = vshrl.u32 %v7860, 7
        %v7862 = vsub.s32 1, %v7861
        %v7863 = vrot.slane %v7854, %v7862
        %v7864 = vlaneseq
        %v7865 = vshrl.u32 %v7864, 7
        %v7866 = vsub.s32 2, %v7865
        %v7867 = vrot.slane %v7854, %v7866
        %v7868 = vlaneseq
        %v7869 = vshrl.u32 %v7868, 7
        %v7870 = vsub.s32 3, %v7869
        %v7871 = vrot.slane %v7854, %v7870
        %v7872 = vlaneseq
        %v7873 = vshrl.u32 %v7872, 7
        %v7874 = vsub.s32 4, %v7873
        %v7875 = vrot.slane %v7854, %v7874
        %v7876 = vlaneseq
        %v7877 = vshrl.u32 %v7876, 7
        %v7878 = vsub.s32 5, %v7877
        %v7879 = vrot.slane %v7854, %v7878
        %v7880 = vlaneseq
        %v7881 = vshrl.u32 %v7880, 7
        %v7882 = vsub.s32 6, %v7881
        %v7883 = vrot.slane %v7854, %v7882
        %v7884 = vlaneseq
        %v7885 = vshrl.u32 %v7884, 7
        %v7886 = vsub.s32 7, %v7885
        %v7887 = vrot.slane %v7854, %v7886
        %v7960 = vunpack.c.l.b16 %v7790
        %v7961 = vunpack.c.h.b16 %v7790
        %v7962 = vunpack.c.l.b16 %v7791
        %v7963 = vunpack.c.h.b16 %v7791
        %v7964 = vunpack.c.l.b16 %v7792
        %v7965 = vunpack.c.h.b16 %v7792
        %v7966 = vunpack.c.l.b16 %v7793
        %v7967 = vunpack.c.h.b16 %v7793
        %v7968 = vunpack.c.l.b16 %v7794
        %v7969 = vunpack.c.h.b16 %v7794
        %v7970 = vunpack.c.l.b16 %v7795
        %v7971 = vunpack.c.h.b16 %v7795
        %v7972 = vunpack.c.l.b16 %v7796
        %v7973 = vunpack.c.h.b16 %v7796
        %v7974 = vunpack.c.l.b16 %v7797
        %v7975 = vunpack.c.h.b16 %v7797
        %v7976 = vunpack.c.l.b16 %v7798
        %v7977 = vunpack.c.h.b16 %v7798
        %v7978 = vunpack.c.l.b16 %v7799
        %v7979 = vunpack.c.h.b16 %v7799
        %v7980 = vunpack.c.l.b16 %v7800
        %v7981 = vunpack.c.h.b16 %v7800
        %v7982 = vunpack.c.l.b16 %v7801
        %v7983 = vunpack.c.h.b16 %v7801
        %v7984 = vunpack.c.l.b16 %v7802
        %v7985 = vunpack.c.h.b16 %v7802
        %v7986 = vunpack.c.l.b16 %v7803
        %v7987 = vunpack.c.h.b16 %v7803
        %v7988 = vunpack.c.l.b16 %v7804
        %v7989 = vunpack.c.h.b16 %v7804
        %v7990 = vunpack.c.l.b16 %v7805
        %v7991 = vunpack.c.h.b16 %v7805
        %v7992 = vunpack.c.l.b16 %v7806
        %v7993 = vunpack.c.h.b16 %v7806
        %v7994 = vunpack.c.l.b16 %v7807
        %v7995 = vunpack.c.h.b16 %v7807
        %v7996 = vunpack.c.l.b16 %v7808
        %v7997 = vunpack.c.h.b16 %v7808
        %v7998 = vunpack.c.l.b16 %v7809
        %v7999 = vunpack.c.h.b16 %v7809
        %v8000 = vunpack.c.l.b16 %v7810
        %v8001 = vunpack.c.h.b16 %v7810
        %v8002 = vunpack.c.l.b16 %v7811
        %v8003 = vunpack.c.h.b16 %v7811
        %v8004 = vunpack.c.l.b16 %v7812
        %v8005 = vunpack.c.h.b16 %v7812
        %v8006 = vunpack.c.l.b16 %v7813
        %v8007 = vunpack.c.h.b16 %v7813
        %v8008 = vunpack.c.l.b16 %v7814
        %v8009 = vunpack.c.h.b16 %v7814
        %v8010 = vunpack.c.l.b16 %v7815
        %v8011 = vunpack.c.h.b16 %v7815
        %v8012 = vunpack.c.l.b16 %v7816
        %v8013 = vunpack.c.h.b16 %v7816
        %v8014 = vunpack.c.l.b16 %v7817
        %v8015 = vunpack.c.h.b16 %v7817
        %v8016 = vunpack.c.l.b16 %v7818
        %v8017 = vunpack.c.h.b16 %v7818
        %v8018 = vunpack.c.l.b16 %v7819
        %v8019 = vunpack.c.h.b16 %v7819
        %v8020 = vunpack.c.l.b16 %v7820
        %v8021 = vunpack.c.h.b16 %v7820
        %v8022 = vunpack.c.l.b16 %v7821
        %v8023 = vunpack.c.h.b16 %v7821
        %v8024 = vunpack.c.l.b16 %v7822
        %v8025 = vunpack.c.h.b16 %v7822
        %v8026 = vunpack.c.l.b16 %v7823
        %v8027 = vunpack.c.h.b16 %v7823
        %v8028 = vunpack.c.l.b16 %v7824
        %v8029 = vunpack.c.h.b16 %v7824
        %v8030 = vunpack.c.l.b16 %v7825
        %v8031 = vunpack.c.h.b16 %v7825
        %v8032 = vunpack.c.l.b16 %v7826
        %v8033 = vunpack.c.h.b16 %v7826
        %v8034 = vunpack.c.l.b16 %v7827
        %v8035 = vunpack.c.h.b16 %v7827
        %v8036 = vunpack.c.l.b16 %v7828
        %v8037 = vunpack.c.h.b16 %v7828
        %v8038 = vunpack.c.l.b16 %v7829
        %v8039 = vunpack.c.h.b16 %v7829
        %v8040 = vunpack.c.l.b16 %v7830
        %v8041 = vunpack.c.h.b16 %v7830
        %v8042 = vunpack.c.l.b16 %v7831
        %v8043 = vunpack.c.h.b16 %v7831
        %v8044 = vunpack.c.l.b16 %v7832
        %v8045 = vunpack.c.h.b16 %v7832
        %v8046 = vunpack.c.l.b16 %v7833
        %v8047 = vunpack.c.h.b16 %v7833
        %v8048 = vunpack.c.l.b16 %v7834
        %v8049 = vunpack.c.h.b16 %v7834
        %v8050 = vunpack.c.l.b16 %v7835
        %v8051 = vunpack.c.h.b16 %v7835
        %v8052 = vunpack.c.l.b16 %v7836
        %v8053 = vunpack.c.h.b16 %v7836
        %v8054 = vunpack.c.l.b16 %v7837
        %v8055 = vunpack.c.h.b16 %v7837
        %v8056 = vunpack.c.l.b16 %v7838
        %v8057 = vunpack.c.h.b16 %v7838
        %v8058 = vunpack.c.l.b16 %v7839
        %v8059 = vunpack.c.h.b16 %v7839
        %v8060 = vunpack.c.l.b16 %v7840
        %v8061 = vunpack.c.h.b16 %v7840
        %v8062 = vunpack.c.l.b16 %v7841
        %v8063 = vunpack.c.h.b16 %v7841
        %v8064 = vunpack.c.l.b16 %v7842
        %v8065 = vunpack.c.h.b16 %v7842
        %v8066 = vunpack.c.l.b16 %v7843
        %v8067 = vunpack.c.h.b16 %v7843
        %v8068 = vunpack.c.l.b16 %v7844
        %v8069 = vunpack.c.h.b16 %v7844
        %v8070 = vunpack.c.l.b16 %v7845
        %v8071 = vunpack.c.h.b16 %v7845
        %v8072 = vunpack.c.l.b16 %v7846
        %v8073 = vunpack.c.h.b16 %v7846
        %v8074 = vunpack.c.l.b16 %v7847
        %v8075 = vunpack.c.h.b16 %v7847
        %v8076 = vunpack.c.l.b16 %v7848
        %v8077 = vunpack.c.h.b16 %v7848
        %v8078 = vunpack.c.l.b16 %v7849
        %v8079 = vunpack.c.h.b16 %v7849
        %v8080 = vunpack.c.l.b16 %v7850
        %v8081 = vunpack.c.h.b16 %v7850
        %v8082 = vunpack.c.l.b16 %v7851
        %v8083 = vunpack.c.h.b16 %v7851
        %v8084 = vunpack.c.l.b16 %v7852
        %v8085 = vunpack.c.h.b16 %v7852
        %v8086 = vunpack.c.l.b16 %v7853
        %v8087 = vunpack.c.h.b16 %v7853
        %v8088 = vpack.c.b16 %v7968, %v7960
        %v8089 = vpack.c.b16 %v7969, %v7961
        %v8090 = vpack.c.b16 %v7970, %v7962
        %v8091 = vpack.c.b16 %v7971, %v7963
        %v8092 = vpack.c.b16 %v7972, %v7964
        %v8093 = vpack.c.b16 %v7973, %v7965
        %v8094 = vpack.c.b16 %v7974, %v7966
        %v8095 = vpack.c.b16 %v7975, %v7967
        %v8096 = vpack.c.b16 %v7984, %v7976
        %v8097 = vpack.c.b16 %v7985, %v7977
        %v8098 = vpack.c.b16 %v7986, %v7978
        %v8099 = vpack.c.b16 %v7987, %v7979
        %v8100 = vpack.c.b16 %v7988, %v7980
        %v8101 = vpack.c.b16 %v7989, %v7981
        %v8102 = vpack.c.b16 %v7990, %v7982
        %v8103 = vpack.c.b16 %v7991, %v7983
        %v8104 = vpack.c.b16 %v8000, %v7992
        %v8105 = vpack.c.b16 %v8001, %v7993
        %v8106 = vpack.c.b16 %v8002, %v7994
        %v8107 = vpack.c.b16 %v8003, %v7995
        %v8108 = vpack.c.b16 %v8004, %v7996
        %v8109 = vpack.c.b16 %v8005, %v7997
        %v8110 = vpack.c.b16 %v8006, %v7998
        %v8111 = vpack.c.b16 %v8007, %v7999
        %v8112 = vpack.c.b16 %v8016, %v8008
        %v8113 = vpack.c.b16 %v8017, %v8009
        %v8114 = vpack.c.b16 %v8018, %v8010
        %v8115 = vpack.c.b16 %v8019, %v8011
        %v8116 = vpack.c.b16 %v8020, %v8012
        %v8117 = vpack.c.b16 %v8021, %v8013
        %v8118 = vpack.c.b16 %v8022, %v8014
        %v8119 = vpack.c.b16 %v8023, %v8015
        %v8120 = vpack.c.b16 %v8032, %v8024
        %v8121 = vpack.c.b16 %v8033, %v8025
        %v8122 = vpack.c.b16 %v8034, %v8026
        %v8123 = vpack.c.b16 %v8035, %v8027
        %v8124 = vpack.c.b16 %v8036, %v8028
        %v8125 = vpack.c.b16 %v8037, %v8029
        %v8126 = vpack.c.b16 %v8038, %v8030
        %v8127 = vpack.c.b16 %v8039, %v8031
        %v8128 = vpack.c.b16 %v8048, %v8040
        %v8129 = vpack.c.b16 %v8049, %v8041
        %v8130 = vpack.c.b16 %v8050, %v8042
        %v8131 = vpack.c.b16 %v8051, %v8043
        %v8132 = vpack.c.b16 %v8052, %v8044
        %v8133 = vpack.c.b16 %v8053, %v8045
        %v8134 = vpack.c.b16 %v8054, %v8046
        %v8135 = vpack.c.b16 %v8055, %v8047
        %v8136 = vpack.c.b16 %v8064, %v8056
        %v8137 = vpack.c.b16 %v8065, %v8057
        %v8138 = vpack.c.b16 %v8066, %v8058
        %v8139 = vpack.c.b16 %v8067, %v8059
        %v8140 = vpack.c.b16 %v8068, %v8060
        %v8141 = vpack.c.b16 %v8069, %v8061
        %v8142 = vpack.c.b16 %v8070, %v8062
        %v8143 = vpack.c.b16 %v8071, %v8063
        %v8144 = vpack.c.b16 %v8080, %v8072
        %v8145 = vpack.c.b16 %v8081, %v8073
        %v8146 = vpack.c.b16 %v8082, %v8074
        %v8147 = vpack.c.b16 %v8083, %v8075
        %v8148 = vpack.c.b16 %v8084, %v8076
        %v8149 = vpack.c.b16 %v8085, %v8077
        %v8150 = vpack.c.b16 %v8086, %v8078
        %v8151 = vpack.c.b16 %v8087, %v8079
        %8216 = vmatprep.subr.bf16.mxu0 %v8089
        %8217 = vmatpush1.bf16.msra.mxu0 %v8088
        %8218 = vmatprep.subr.bf16.mxu0 %v8097
        %8219 = vmatpush1.bf16.msra.mxu0 %v8096
        %8220 = vmatprep.subr.bf16.mxu0 %v8105
        %8221 = vmatpush1.bf16.msra.mxu0 %v8104
        %8222 = vmatprep.subr.bf16.mxu0 %v8113
        %8223 = vmatpush1.bf16.msra.mxu0 %v8112
        %8224 = vmatprep.subr.bf16.mxu0 %v8121
        %8225 = vmatpush1.bf16.msra.mxu0 %v8120
        %8226 = vmatprep.subr.bf16.mxu0 %v8129
        %8227 = vmatpush1.bf16.msra.mxu0 %v8128
        %8228 = vmatprep.subr.bf16.mxu0 %v8137
        %8229 = vmatpush1.bf16.msra.mxu0 %v8136
        %8230 = vmatprep.subr.bf16.mxu0 %v8145
        %8231 = vmatpush1.bf16.msra.mxu0 %v8144
        %8232 = vmatprep.subr.bf16.mxu0 0
        %8233 = vmatpush1.bf16.msra.mxu0 0
        %8234 = vmatprep.subr.bf16.mxu0 0
        %8235 = vmatpush1.bf16.msra.mxu0 0
        %8236 = vmatprep.subr.bf16.mxu0 0
        %8237 = vmatpush1.bf16.msra.mxu0 0
        %8238 = vmatprep.subr.bf16.mxu0 0
        %8239 = vmatpush1.bf16.msra.mxu0 0
        %8240 = vmatprep.subr.bf16.mxu0 0
        %8241 = vmatpush1.bf16.msra.mxu0 0
        %8242 = vmatprep.subr.bf16.mxu0 0
        %8243 = vmatpush1.bf16.msra.mxu0 0
        %8244 = vmatprep.subr.bf16.mxu0 0
        %8245 = vmatpush1.bf16.msra.mxu0 0
        %8246 = vmatprep.subr.bf16.mxu0 0
        %8247 = vmatpush1.bf16.msra.mxu0 0
        %8248 = vmatprep.mubr.bf16.mxu0 0
        %8249 = vmatmul.mubr.bf16.gmra.mrb[0].mxu0 %v7789
        %v8250 = vpop.f32.mrb[0].mxu0
        %v8251 = vadd.f32 %v7859, %v8250
        %v8252 = vpop.f32.mrb[0].mxu0
        %v8253 = vadd.f32 %v7863, %v8252
        %v8254 = vpop.f32.mrb[0].mxu0
        %v8255 = vpop.f32.mrb[0].mxu0
        %8256 = vdwg.mxu0
        %8257 = vmatprep.subr.bf16.mxu0 %v8091
        %8258 = vmatpush1.bf16.msra.mxu0 %v8090
        %8259 = vmatprep.subr.bf16.mxu0 %v8099
        %8260 = vmatpush1.bf16.msra.mxu0 %v8098
        %8261 = vmatprep.subr.bf16.mxu0 %v8107
        %8262 = vmatpush1.bf16.msra.mxu0 %v8106
        %8263 = vmatprep.subr.bf16.mxu0 %v8115
        %8264 = vmatpush1.bf16.msra.mxu0 %v8114
        %8265 = vmatprep.subr.bf16.mxu0 %v8123
        %8266 = vmatpush1.bf16.msra.mxu0 %v8122
        %8267 = vmatprep.subr.bf16.mxu0 %v8131
        %8268 = vmatpush1.bf16.msra.mxu0 %v8130
        %8269 = vmatprep.subr.bf16.mxu0 %v8139
        %8270 = vmatpush1.bf16.msra.mxu0 %v8138
        %8271 = vmatprep.subr.bf16.mxu0 %v8147
        %8272 = vmatpush1.bf16.msra.mxu0 %v8146
        %8273 = vmatprep.subr.bf16.mxu0 0
        %8274 = vmatpush1.bf16.msra.mxu0 0
        %8275 = vmatprep.subr.bf16.mxu0 0
        %8276 = vmatpush1.bf16.msra.mxu0 0
        %8277 = vmatprep.subr.bf16.mxu0 0
        %8278 = vmatpush1.bf16.msra.mxu0 0
        %8279 = vmatprep.subr.bf16.mxu0 0
        %8280 = vmatpush1.bf16.msra.mxu0 0
        %8281 = vmatprep.subr.bf16.mxu0 0
        %8282 = vmatpush1.bf16.msra.mxu0 0
        %8283 = vmatprep.subr.bf16.mxu0 0
        %8284 = vmatpush1.bf16.msra.mxu0 0
        %8285 = vmatprep.subr.bf16.mxu0 0
        %8286 = vmatpush1.bf16.msra.mxu0 0
        %8287 = vmatprep.subr.bf16.mxu0 0
        %8288 = vmatpush1.bf16.msra.mxu0 0
        %8289 = vmatprep.mubr.bf16.mxu0 0
        %8290 = vmatmul.mubr.bf16.gmra.mrb[0].mxu0 %v7789
        %v8291 = vpop.f32.mrb[0].mxu0
        %v8292 = vadd.f32 %v7867, %v8291
        %v8293 = vpop.f32.mrb[0].mxu0
        %v8294 = vadd.f32 %v7871, %v8293
        %v8295 = vpop.f32.mrb[0].mxu0
        %v8296 = vpop.f32.mrb[0].mxu0
        %8297 = vdwg.mxu0
        %8298 = vmatprep.subr.bf16.mxu0 %v8093
        %8299 = vmatpush1.bf16.msra.mxu0 %v8092
        %8300 = vmatprep.subr.bf16.mxu0 %v8101
        %8301 = vmatpush1.bf16.msra.mxu0 %v8100
        %8302 = vmatprep.subr.bf16.mxu0 %v8109
        %8303 = vmatpush1.bf16.msra.mxu0 %v8108
        %8304 = vmatprep.subr.bf16.mxu0 %v8117
        %8305 = vmatpush1.bf16.msra.mxu0 %v8116
        %8306 = vmatprep.subr.bf16.mxu0 %v8125
        %8307 = vmatpush1.bf16.msra.mxu0 %v8124
        %8308 = vmatprep.subr.bf16.mxu0 %v8133
        %8309 = vmatpush1.bf16.msra.mxu0 %v8132
        %8310 = vmatprep.subr.bf16.mxu0 %v8141
        %8311 = vmatpush1.bf16.msra.mxu0 %v8140
        %8312 = vmatprep.subr.bf16.mxu0 %v8149
        %8313 = vmatpush1.bf16.msra.mxu0 %v8148
        %8314 = vmatprep.subr.bf16.mxu0 0
        %8315 = vmatpush1.bf16.msra.mxu0 0
        %8316 = vmatprep.subr.bf16.mxu0 0
        %8317 = vmatpush1.bf16.msra.mxu0 0
        %8318 = vmatprep.subr.bf16.mxu0 0
        %8319 = vmatpush1.bf16.msra.mxu0 0
        %8320 = vmatprep.subr.bf16.mxu0 0
        %8321 = vmatpush1.bf16.msra.mxu0 0
        %8322 = vmatprep.subr.bf16.mxu0 0
        %8323 = vmatpush1.bf16.msra.mxu0 0
        %8324 = vmatprep.subr.bf16.mxu0 0
        %8325 = vmatpush1.bf16.msra.mxu0 0
        %8326 = vmatprep.subr.bf16.mxu0 0
        %8327 = vmatpush1.bf16.msra.mxu0 0
        %8328 = vmatprep.subr.bf16.mxu0 0
        %8329 = vmatpush1.bf16.msra.mxu0 0
        %8330 = vmatprep.mubr.bf16.mxu0 0
        %8331 = vmatmul.mubr.bf16.gmra.mrb[0].mxu0 %v7789
        %v8332 = vpop.f32.mrb[0].mxu0
        %v8333 = vadd.f32 %v7875, %v8332
        %v8334 = vpop.f32.mrb[0].mxu0
        %v8335 = vadd.f32 %v7879, %v8334
        %v8336 = vpop.f32.mrb[0].mxu0
        %v8337 = vpop.f32.mrb[0].mxu0
        %8338 = vdwg.mxu0
        %8339 = vmatprep.subr.bf16.mxu0 %v8095
        %8340 = vmatpush1.bf16.msra.mxu0 %v8094
        %8341 = vmatprep.subr.bf16.mxu0 %v8103
        %8342 = vmatpush1.bf16.msra.mxu0 %v8102
        %8343 = vmatprep.subr.bf16.mxu0 %v8111
        %8344 = vmatpush1.bf16.msra.mxu0 %v8110
        %8345 = vmatprep.subr.bf16.mxu0 %v8119
        %8346 = vmatpush1.bf16.msra.mxu0 %v8118
        %8347 = vmatprep.subr.bf16.mxu0 %v8127
        %8348 = vmatpush1.bf16.msra.mxu0 %v8126
        %8349 = vmatprep.subr.bf16.mxu0 %v8135
        %8350 = vmatpush1.bf16.msra.mxu0 %v8134
        %8351 = vmatprep.subr.bf16.mxu0 %v8143
        %8352 = vmatpush1.bf16.msra.mxu0 %v8142
        %8353 = vmatprep.subr.bf16.mxu0 %v8151
        %8354 = vmatpush1.bf16.msra.mxu0 %v8150
        %8355 = vmatprep.subr.bf16.mxu0 0
        %8356 = vmatpush1.bf16.msra.mxu0 0
        %8357 = vmatprep.subr.bf16.mxu0 0
        %8358 = vmatpush1.bf16.msra.mxu0 0
        %8359 = vmatprep.subr.bf16.mxu0 0
        %8360 = vmatpush1.bf16.msra.mxu0 0
        %8361 = vmatprep.subr.bf16.mxu0 0
        %8362 = vmatpush1.bf16.msra.mxu0 0
        %8363 = vmatprep.subr.bf16.mxu0 0
        %8364 = vmatpush1.bf16.msra.mxu0 0
        %8365 = vmatprep.subr.bf16.mxu0 0
        %8366 = vmatpush1.bf16.msra.mxu0 0
        %8367 = vmatprep.subr.bf16.mxu0 0
        %8368 = vmatpush1.bf16.msra.mxu0 0
        %8369 = vmatprep.subr.bf16.mxu0 0
        %8370 = vmatpush1.bf16.msra.mxu0 0
        %8371 = vmatprep.mubr.bf16.mxu0 0
        %8372 = vmatmul.mubr.bf16.gmra.mrb[0].mxu0 %v7789
        %v8373 = vpop.f32.mrb[0].mxu0
        %v8374 = vadd.f32 %v7883, %v8373
        %v8375 = vpop.f32.mrb[0].mxu0
        %v8376 = vadd.f32 %v7887, %v8375
        %v8377 = vpop.f32.mrb[0].mxu0
        %v8378 = vpop.f32.mrb[0].mxu0
        %8379 = vdwg.mxu0
        %v8380 = vmax.f32 %v8251, 0.0
        %v8381 = vmax.f32 %v8253, 0.0
        %v8382 = vmax.f32 %v8292, 0.0
        %v8383 = vmax.f32 %v8294, 0.0
        %v8384 = vmax.f32 %v8333, 0.0
        %v8385 = vmax.f32 %v8335, 0.0
        %v8386 = vmax.f32 %v8374, 0.0
        %v8387 = vmax.f32 %v8376, 0.0
        %8388 = vst [vmem:[%s445] sm:$0xff] %v8380
        %8389 = vst [vmem:[%s445 + $0x8] sm:$0xff] %v8381
        %8390 = vst [vmem:[%s445 + $0x10] sm:$0xff] %v8382
        %8391 = vst [vmem:[%s445 + $0x18] sm:$0xff] %v8383
        %8392 = vst [vmem:[%s445 + $0x20] sm:$0xff] %v8384
        %8393 = vst [vmem:[%s445 + $0x28] sm:$0xff] %v8385
        %8394 = vst [vmem:[%s445 + $0x30] sm:$0xff] %v8386
        %8395 = vst [vmem:[%s445 + $0x38] sm:$0xff] %v8387
        %s8396 = sand.u32 %s236, 1
        %s8397 = scalar_lea.sflag [#allocation4], %s8396
        %s8398 = sand.u32 %s236, 1
        %s8399 = smul.addr %s8398, 64
        %s8400 = scalar_lea.vmem [#allocation14], %s8399
        // Predicated region
        $region85: #{tpu_custom_call.1} parent=55 // pred_check
          %p8401 = pneg %p246
        $region86: #{tpu_custom_call.1} parent=55 // pred_check_branch
          %8403 = sbr.rel (%p8401) target = $region88
        $region87: #{tpu_custom_call.1} parent=55 // pred_region
          %s8405 = ssub.s32 1024, 1024
          %8406 = vsyncadd %s8397, %s8405
          %s8407 = smul.addr %s29, 8
          %s8408 = smul.addr %s8407, 128
          %s8409 = scalar_lea.hbm %s9, %s8408
          %s8411 = sshll.u32 %s8400, 4
          %s8412 = int_to_ptr.vmem [resolvable:$true] %s8411
          %8414 = dma.vmem_to_hbm [thread:$0]  %s8412, 1024, %s8409, %s8397
        $region88: #{tpu_custom_call.1} parent=55 // pred_fallthru
          _
      $region56: #{tpu_custom_call.1} parent=5 // pred_fallthru
        _
      %p8415 = scmp.le.s32.totalorder 2, %s24
      // Predicated region
      $region89: #{tpu_custom_call.1} parent=5 // pred_check
        %p8416 = pneg %p8415
      $region90: #{tpu_custom_call.1} parent=5 // pred_check_branch
        %8418 = sbr.rel (%p8416) target = $region92
      $region91: #{tpu_custom_call.1} parent=5 // pred_region
        %s8419 = ssub.s32 %s24, 2
        // Predicated region
        $region93: #{tpu_custom_call.1} parent=91 // pred_check
          %p8420 = pneg %p252
        $region94: #{tpu_custom_call.1} parent=91 // pred_check_branch
          %8422 = sbr.rel (%p8420) target = $region96
        $region95: #{tpu_custom_call.1} parent=91 // pred_region
          %s8423 = sand.u32 %s237, 1
          %s8424 = scalar_lea.sflag [#allocation4], %s8423
          %s8425 = sand.u32 %s237, 1
          %s8426 = smul.addr %s8425, 64
          %s8427 = scalar_lea.vmem [#allocation14], %s8426
          %8428 = dma.done %s8424, 1024
        $region96: #{tpu_custom_call.1} parent=91 // pred_fallthru
          _
      $region92: #{tpu_custom_call.1} parent=5 // pred_fallthru
        _
    $region6: #{tpu_custom_call.1} parent=1 // loop_footer
      %s28 = sadd.s32 1, %s24
    $region7: #{tpu_custom_call.1} parent=1 // loop_footer_branch
      %23 = sbr.rel target = $region3
    $region8: #{tpu_custom_call.1} parent=1 // loop_exit
      _
    %8429 = vsyncpa [#allocation3], 1
    %s8430 = scalar_lea.sflag [#allocation3], 1
    %8431 = vsyncpa %s8430, 1
    %8432 = vsyncpa [#allocation6], 1
    %8433 = vsyncpa [#allocation9], 1
    %8434 = vsyncpa [#allocation12], 1
    %8435 = vsyncpa [#allocation4], 1
    %s8436 = scalar_lea.sflag [#allocation4], 1
    %8437 = vsyncpa %s8436, 1

</llo_original>
